<compile_context>
chip_gen: v5e
topology: v5e:2x2
jax: 0.10.0
libtpu: 0.0.40
codegen_flags: <defaults>
</compile_context>

<pallas_src>
import jax
import jax.numpy as jnp
from jax.experimental import pallas as pl
from jax.experimental.pallas import tpu as pltpu


def residual_block_nobn(x_nchw, w1, b1, w2, b2):
    """x_nchw: (N, C, H, W); w*: (Cout, Cin, 3, 3); b*: (C,). Returns NCHW."""
    N, C, H, W = x_nchw.shape
    Wp = W + 2                      # padded width
    SRC = (H + 2) * Wp              # flattened padded image rows
    M = H * Wp                      # rows computed per conv (incl. 2 dead cols/row)
    EXTRA = 8                       # slack so the farthest tap slice stays in bounds
    L = (-(Wp + 1)) % 16            # leading pad => interior store is 16-sublane aligned
    store_off = L + Wp + 1          # where relu(conv1) row 0 lands in the staging buffer
    mid_rows = L + SRC + EXTRA      # staging buffer rows
    tail_off = store_off + M
    tail_len = mid_rows - tail_off

    # ---- host-side prep (plain JAX glue) ----
    x_nhwc = jnp.transpose(x_nchw, (0, 2, 3, 1))
    xpad = jnp.pad(x_nhwc, ((0, 0), (1, 1), (1, 1), (0, 0)))
    xflat = xpad.reshape(N, SRC, C)
    xflat = jnp.pad(xflat, ((0, 0), (0, EXTRA), (0, 0))).astype(jnp.bfloat16)

    # (Cout, Cin, kh, kw) -> (kh*3+kw, Cin, Cout), bf16 once in the wrapper
    w1s = jnp.transpose(w1, (2, 3, 1, 0)).reshape(9, C, C).astype(jnp.bfloat16)
    w2s = jnp.transpose(w2, (2, 3, 1, 0)).reshape(9, C, C).astype(jnp.bfloat16)
    b1r = b1.reshape(1, C).astype(jnp.float32)
    b2r = b2.reshape(1, C).astype(jnp.float32)

    # 1.0 for valid columns (w < W), 0.0 for the 2 dead wrap columns of each row
    mask = (jnp.arange(M, dtype=jnp.int32) % Wp < W)
    mask = mask.astype(jnp.float32).reshape(M, 1)

    def kernel(x_ref, w1_ref, b1_ref, w2_ref, b2_ref, mask_ref, o_ref, mid_ref):
        # Zero only the halo rows of the staging buffer that conv2's taps read
        # but the aligned interior store never overwrites (instead of zeroing
        # the whole scratch every step).
        mid_ref[pl.ds(0, store_off), :] = jnp.zeros((store_off, C), jnp.bfloat16)
        mid_ref[pl.ds(tail_off, tail_len), :] = jnp.zeros((tail_len, C), jnp.bfloat16)

        def conv9(src_ref, base, w_ref, init):
            # 9 contiguous-slice taps -> 9 MXU matmuls with f32 accumulation.
            acc = init
            for kh in range(3):
                for kw in range(3):
                    patch = src_ref[pl.ds(base + kh * Wp + kw, M), :]   # (M, C) bf16
                    acc = acc + jnp.dot(patch, w_ref[kh * 3 + kw],
                                        preferred_element_type=jnp.float32)
            return acc

        # ---- conv1 + bias + relu, dead wrap-columns masked to zero ----
        acc1 = conv9(x_ref, 0, w1_ref, jnp.broadcast_to(b1_ref[...], (M, C)))
        relu1 = jnp.maximum(acc1, 0.0) * mask_ref[...]
        # aligned, full-tile store of the interior of the padded staging buffer
        mid_ref[pl.ds(store_off, M), :] = relu1.astype(jnp.bfloat16)

        # ---- conv2: bias + residual identity folded into the accumulator init ----
        identity = x_ref[pl.ds(Wp + 1, M), :].astype(jnp.float32)
        acc2 = conv9(mid_ref, L, w2_ref, identity + b2_ref[...])
        o_ref[...] = acc2.astype(o_ref.dtype)

    # Advisory cost hint for XLA's scheduler around the custom call.
    flops = 2 * 2 * 9 * N * M * C * C
    bytes_accessed = int(xflat.size) * 2 + N * M * C * 4 \
        + (int(w1s.size) + int(w2s.size)) * 2 \
        + (int(b1r.size) + int(b2r.size) + int(mask.size)) * 4
    cost = pl.CostEstimate(flops=flops, transcendentals=0,
                           bytes_accessed=bytes_accessed)

    out_flat = pl.pallas_call(
        kernel,
        out_shape=jax.ShapeDtypeStruct((N, M, C), x_nchw.dtype),
        grid_spec=pltpu.PrefetchScalarGridSpec(
            num_scalar_prefetch=0,
            grid=(N,),
            in_specs=[
                pl.BlockSpec((None, SRC + EXTRA, C), lambda n: (n, 0, 0)),
                pl.BlockSpec((9, C, C), lambda n: (0, 0, 0)),
                pl.BlockSpec((1, C), lambda n: (0, 0)),
                pl.BlockSpec((9, C, C), lambda n: (0, 0, 0)),
                pl.BlockSpec((1, C), lambda n: (0, 0)),
                pl.BlockSpec((M, 1), lambda n: (0, 0)),
            ],
            out_specs=pl.BlockSpec((None, M, C), lambda n: (n, 0, 0)),
            scratch_shapes=[pltpu.VMEM((mid_rows, C), jnp.bfloat16)],
        ),
        compiler_params=pltpu.CompilerParams(
            dimension_semantics=("parallel",),
            vmem_limit_bytes=32 * 1024 * 1024,
        ),
        cost_estimate=cost,
    )(xflat, w1s, b1r, w2s, b2r, mask)

    # drop the 2 dead wrap columns per row and go back to NCHW
    out = out_flat.reshape(N, H, Wp, C)[:, :, :W, :]
    return jnp.transpose(out, (0, 3, 1, 2))


def _ref_forward(x, w1, b1, w2, b2):
    """Pure-JAX f32 reference matching the PyTorch forward (NCHW)."""
    def conv(inp, w, b):
        y = jax.lax.conv_general_dilated(
            inp, w, window_strides=(1, 1), padding=((1, 1), (1, 1)),
            dimension_numbers=("NCHW", "OIHW", "NCHW"))
        return y + b[None, :, None, None]
    out = jax.nn.relu(conv(x, w1, b1))
    out = conv(out, w2, b2)
    return x + out


if __name__ == "__main__":
    N, nf, H, W = 2, 64, 16, 16
    key = jax.random.PRNGKey(0)
    kx, k1, k2 = jax.random.split(key, 3)

    x = jax.random.normal(kx, (N, nf, H, W), dtype=jnp.float32)

    # Deterministic Kaiming-normal (fan_in, a=0) init scaled by 0.1, zero bias
    # — mirrors initialize_weights([conv1, conv2], 0.1).
    fan_in = nf * 3 * 3
    std = (2.0 / fan_in) ** 0.5
    w1 = jax.random.normal(k1, (nf, nf, 3, 3), dtype=jnp.float32) * std * 0.1
    w2 = jax.random.normal(k2, (nf, nf, 3, 3), dtype=jnp.float32) * std * 0.1
    b1 = jnp.zeros((nf,), jnp.float32)
    b2 = jnp.zeros((nf,), jnp.float32)

    out = jax.block_until_ready(residual_block_nobn(x, w1, b1, w2, b2))

    ref = jax.block_until_ready(_ref_forward(x, w1, b1, w2, b2))
    assert out.shape == ref.shape == (N, nf, H, W)
    # bf16 MXU operands / bf16 identity => relaxed tolerance vs the f32 reference.
    assert jnp.allclose(out, ref, rtol=2e-2, atol=2e-2), (
        float(jnp.max(jnp.abs(out - ref))))

    print("KERNEL_OK")
</pallas_src>

<mosaic_0001>
module attributes {stable_mosaic.version = 11 : i64} {
  func.func @kernel(%arg0: i32, %arg1: memref<1x332x64xbf16, #tpu.memory_space<vmem>>, %arg2: memref<9x64x64xbf16, #tpu.memory_space<vmem>>, %arg3: memref<1x64xf32, #tpu.memory_space<vmem>>, %arg4: memref<9x64x64xbf16, #tpu.memory_space<vmem>>, %arg5: memref<1x64xf32, #tpu.memory_space<vmem>>, %arg6: memref<288x1xf32, #tpu.memory_space<vmem>>, %arg7: memref<1x288x64xf32, #tpu.memory_space<vmem>>, %arg8: memref<345x64xbf16, #tpu.memory_space<vmem>>) attributes {dimension_semantics = [#tpu.dimension_semantics<parallel>], iteration_bounds = array<i64: 2>, scalar_prefetch = 0 : i64, scratch_operands = 1 : i64, tpu.core_type = #tpu.core_type<tc>, window_params = [{transform_indices = @transform_0, window_bounds = array<i64: 1, 332, 64>}, {pipeline_mode = #tpu.pipeline_mode<synchronous>, transform_indices = @transform_1, window_bounds = array<i64: 9, 64, 64>}, {pipeline_mode = #tpu.pipeline_mode<synchronous>, transform_indices = @transform_2, window_bounds = array<i64: 1, 64>}, {pipeline_mode = #tpu.pipeline_mode<synchronous>, transform_indices = @transform_3, window_bounds = array<i64: 9, 64, 64>}, {pipeline_mode = #tpu.pipeline_mode<synchronous>, transform_indices = @transform_4, window_bounds = array<i64: 1, 64>}, {pipeline_mode = #tpu.pipeline_mode<synchronous>, transform_indices = @transform_5, window_bounds = array<i64: 288, 1>}, {transform_indices = @transform_6, window_bounds = array<i64: 1, 288, 64>}]} {
    %cst = arith.constant 0.000000e+00 : bf16
    %0 = vector.broadcast %cst : bf16 to vector<32x64xbf16>
    %c0 = arith.constant 0 : index
    %c0_0 = arith.constant 0 : index
    %1 = vector.load %arg8[%c0, %c0_0] : memref<345x64xbf16, #tpu.memory_space<vmem>>, vector<32x64xbf16>
    tpu.vector_store %arg8[%c0, %c0_0], %0 {strides = array<i32>} : memref<345x64xbf16, #tpu.memory_space<vmem>>, vector<32x64xbf16>,
    %cst_1 = arith.constant 0.000000e+00 : bf16
    %2 = vector.broadcast %cst_1 : bf16 to vector<25x64xbf16>
    %c320 = arith.constant 320 : index
    %c0_2 = arith.constant 0 : index
    %3 = vector.load %arg8[%c320, %c0_2] : memref<345x64xbf16, #tpu.memory_space<vmem>>, vector<25x64xbf16>
    tpu.vector_store %arg8[%c320, %c0_2], %2 {strides = array<i32>} : memref<345x64xbf16, #tpu.memory_space<vmem>>, vector<25x64xbf16>,
    %c0_3 = arith.constant 0 : index
    %c0_4 = arith.constant 0 : index
    %4 = vector.load %arg3[%c0_3, %c0_4] : memref<1x64xf32, #tpu.memory_space<vmem>>, vector<1x64xf32>
    %5 = vector.shape_cast %4 : vector<1x64xf32> to vector<1x64xf32>
    %6 = vector.broadcast %5 : vector<1x64xf32> to vector<288x64xf32>
    %c0_5 = arith.constant 0 : index
    %c0_6 = arith.constant 0 : index
    %c0_7 = arith.constant 0 : index
    %7 = vector.load %arg1[%c0_5, %c0_6, %c0_7] : memref<1x332x64xbf16, #tpu.memory_space<vmem>>, vector<1x288x64xbf16>
    %8 = vector.shape_cast %7 : vector<1x288x64xbf16> to vector<288x64xbf16>
    %c0_8 = arith.constant 0 : index
    %c0_9 = arith.constant 0 : index
    %c0_10 = arith.constant 0 : index
    %9 = vector.load %arg2[%c0_8, %c0_9, %c0_10] : memref<9x64x64xbf16, #tpu.memory_space<vmem>>, vector<1x64x64xbf16>
    %10 = vector.shape_cast %9 : vector<1x64x64xbf16> to vector<64x64xbf16>
    %cst_11 = arith.constant dense<0.000000e+00> : vector<288x64xf32>
    %11 = tpu.matmul %8, %10, %cst_11 {dimension_numbers = #tpu.dot_dimension_numbers<[1], [0], [0], [1], [0, 0, 1, 1], [], []>} : vector<288x64xbf16>, vector<64x64xbf16>, vector<288x64xf32> -> vector<288x64xf32>
    %12 = arith.addf %6, %11 : vector<288x64xf32>
    %c0_12 = arith.constant 0 : index
    %c1 = arith.constant 1 : index
    %c0_13 = arith.constant 0 : index
    %13 = vector.load %arg1[%c0_12, %c1, %c0_13] : memref<1x332x64xbf16, #tpu.memory_space<vmem>>, vector<1x288x64xbf16>
    %14 = vector.shape_cast %13 : vector<1x288x64xbf16> to vector<288x64xbf16>
    %c1_14 = arith.constant 1 : index
    %c0_15 = arith.constant 0 : index
    %c0_16 = arith.constant 0 : index
    %15 = vector.load %arg2[%c1_14, %c0_15, %c0_16] : memref<9x64x64xbf16, #tpu.memory_space<vmem>>, vector<1x64x64xbf16>
    %16 = vector.shape_cast %15 : vector<1x64x64xbf16> to vector<64x64xbf16>
    %cst_17 = arith.constant dense<0.000000e+00> : vector<288x64xf32>
    %17 = tpu.matmul %14, %16, %cst_17 {dimension_numbers = #tpu.dot_dimension_numbers<[1], [0], [0], [1], [0, 0, 1, 1], [], []>} : vector<288x64xbf16>, vector<64x64xbf16>, vector<288x64xf32> -> vector<288x64xf32>
    %18 = arith.addf %12, %17 : vector<288x64xf32>
    %c0_18 = arith.constant 0 : index
    %c2 = arith.constant 2 : index
    %c0_19 = arith.constant 0 : index
    %19 = vector.load %arg1[%c0_18, %c2, %c0_19] : memref<1x332x64xbf16, #tpu.memory_space<vmem>>, vector<1x288x64xbf16>
    %20 = vector.shape_cast %19 : vector<1x288x64xbf16> to vector<288x64xbf16>
    %c2_20 = arith.constant 2 : index
    %c0_21 = arith.constant 0 : index
    %c0_22 = arith.constant 0 : index
    %21 = vector.load %arg2[%c2_20, %c0_21, %c0_22] : memref<9x64x64xbf16, #tpu.memory_space<vmem>>, vector<1x64x64xbf16>
    %22 = vector.shape_cast %21 : vector<1x64x64xbf16> to vector<64x64xbf16>
    %cst_23 = arith.constant dense<0.000000e+00> : vector<288x64xf32>
    %23 = tpu.matmul %20, %22, %cst_23 {dimension_numbers = #tpu.dot_dimension_numbers<[1], [0], [0], [1], [0, 0, 1, 1], [], []>} : vector<288x64xbf16>, vector<64x64xbf16>, vector<288x64xf32> -> vector<288x64xf32>
    %24 = arith.addf %18, %23 : vector<288x64xf32>
    %c0_24 = arith.constant 0 : index
    %c18 = arith.constant 18 : index
    %c0_25 = arith.constant 0 : index
    %25 = vector.load %arg1[%c0_24, %c18, %c0_25] : memref<1x332x64xbf16, #tpu.memory_space<vmem>>, vector<1x288x64xbf16>
    %26 = vector.shape_cast %25 : vector<1x288x64xbf16> to vector<288x64xbf16>
    %c3 = arith.constant 3 : index
    %c0_26 = arith.constant 0 : index
    %c0_27 = arith.constant 0 : index
    %27 = vector.load %arg2[%c3, %c0_26, %c0_27] : memref<9x64x64xbf16, #tpu.memory_space<vmem>>, vector<1x64x64xbf16>
    %28 = vector.shape_cast %27 : vector<1x64x64xbf16> to vector<64x64xbf16>
    %cst_28 = arith.constant dense<0.000000e+00> : vector<288x64xf32>
    %29 = tpu.matmul %26, %28, %cst_28 {dimension_numbers = #tpu.dot_dimension_numbers<[1], [0], [0], [1], [0, 0, 1, 1], [], []>} : vector<288x64xbf16>, vector<64x64xbf16>, vector<288x64xf32> -> vector<288x64xf32>
    %30 = arith.addf %24, %29 : vector<288x64xf32>
    %c0_29 = arith.constant 0 : index
    %c19 = arith.constant 19 : index
    %c0_30 = arith.constant 0 : index
    %31 = vector.load %arg1[%c0_29, %c19, %c0_30] : memref<1x332x64xbf16, #tpu.memory_space<vmem>>, vector<1x288x64xbf16>
    %32 = vector.shape_cast %31 : vector<1x288x64xbf16> to vector<288x64xbf16>
    %c4 = arith.constant 4 : index
    %c0_31 = arith.constant 0 : index
    %c0_32 = arith.constant 0 : index
    %33 = vector.load %arg2[%c4, %c0_31, %c0_32] : memref<9x64x64xbf16, #tpu.memory_space<vmem>>, vector<1x64x64xbf16>
    %34 = vector.shape_cast %33 : vector<1x64x64xbf16> to vector<64x64xbf16>
    %cst_33 = arith.constant dense<0.000000e+00> : vector<288x64xf32>
    %35 = tpu.matmul %32, %34, %cst_33 {dimension_numbers = #tpu.dot_dimension_numbers<[1], [0], [0], [1], [0, 0, 1, 1], [], []>} : vector<288x64xbf16>, vector<64x64xbf16>, vector<288x64xf32> -> vector<288x64xf32>
    %36 = arith.addf %30, %35 : vector<288x64xf32>
    %c0_34 = arith.constant 0 : index
    %c20 = arith.constant 20 : index
    %c0_35 = arith.constant 0 : index
    %37 = vector.load %arg1[%c0_34, %c20, %c0_35] : memref<1x332x64xbf16, #tpu.memory_space<vmem>>, vector<1x288x64xbf16>
    %38 = vector.shape_cast %37 : vector<1x288x64xbf16> to vector<288x64xbf16>
    %c5 = arith.constant 5 : index
    %c0_36 = arith.constant 0 : index
    %c0_37 = arith.constant 0 : index
    %39 = vector.load %arg2[%c5, %c0_36, %c0_37] : memref<9x64x64xbf16, #tpu.memory_space<vmem>>, vector<1x64x64xbf16>
    %40 = vector.shape_cast %39 : vector<1x64x64xbf16> to vector<64x64xbf16>
    %cst_38 = arith.constant dense<0.000000e+00> : vector<288x64xf32>
    %41 = tpu.matmul %38, %40, %cst_38 {dimension_numbers = #tpu.dot_dimension_numbers<[1], [0], [0], [1], [0, 0, 1, 1], [], []>} : vector<288x64xbf16>, vector<64x64xbf16>, vector<288x64xf32> -> vector<288x64xf32>
    %42 = arith.addf %36, %41 : vector<288x64xf32>
    %c0_39 = arith.constant 0 : index
    %c36 = arith.constant 36 : index
    %c0_40 = arith.constant 0 : index
    %43 = vector.load %arg1[%c0_39, %c36, %c0_40] : memref<1x332x64xbf16, #tpu.memory_space<vmem>>, vector<1x288x64xbf16>
    %44 = vector.shape_cast %43 : vector<1x288x64xbf16> to vector<288x64xbf16>
    %c6 = arith.constant 6 : index
    %c0_41 = arith.constant 0 : index
    %c0_42 = arith.constant 0 : index
    %45 = vector.load %arg2[%c6, %c0_41, %c0_42] : memref<9x64x64xbf16, #tpu.memory_space<vmem>>, vector<1x64x64xbf16>
    %46 = vector.shape_cast %45 : vector<1x64x64xbf16> to vector<64x64xbf16>
    %cst_43 = arith.constant dense<0.000000e+00> : vector<288x64xf32>
    %47 = tpu.matmul %44, %46, %cst_43 {dimension_numbers = #tpu.dot_dimension_numbers<[1], [0], [0], [1], [0, 0, 1, 1], [], []>} : vector<288x64xbf16>, vector<64x64xbf16>, vector<288x64xf32> -> vector<288x64xf32>
    %48 = arith.addf %42, %47 : vector<288x64xf32>
    %c0_44 = arith.constant 0 : index
    %c37 = arith.constant 37 : index
    %c0_45 = arith.constant 0 : index
    %49 = vector.load %arg1[%c0_44, %c37, %c0_45] : memref<1x332x64xbf16, #tpu.memory_space<vmem>>, vector<1x288x64xbf16>
    %50 = vector.shape_cast %49 : vector<1x288x64xbf16> to vector<288x64xbf16>
    %c7 = arith.constant 7 : index
    %c0_46 = arith.constant 0 : index
    %c0_47 = arith.constant 0 : index
    %51 = vector.load %arg2[%c7, %c0_46, %c0_47] : memref<9x64x64xbf16, #tpu.memory_space<vmem>>, vector<1x64x64xbf16>
    %52 = vector.shape_cast %51 : vector<1x64x64xbf16> to vector<64x64xbf16>
    %cst_48 = arith.constant dense<0.000000e+00> : vector<288x64xf32>
    %53 = tpu.matmul %50, %52, %cst_48 {dimension_numbers = #tpu.dot_dimension_numbers<[1], [0], [0], [1], [0, 0, 1, 1], [], []>} : vector<288x64xbf16>, vector<64x64xbf16>, vector<288x64xf32> -> vector<288x64xf32>
    %54 = arith.addf %48, %53 : vector<288x64xf32>
    %c0_49 = arith.constant 0 : index
    %c38 = arith.constant 38 : index
    %c0_50 = arith.constant 0 : index
    %55 = vector.load %arg1[%c0_49, %c38, %c0_50] : memref<1x332x64xbf16, #tpu.memory_space<vmem>>, vector<1x288x64xbf16>
    %56 = vector.shape_cast %55 : vector<1x288x64xbf16> to vector<288x64xbf16>
    %c8 = arith.constant 8 : index
    %c0_51 = arith.constant 0 : index
    %c0_52 = arith.constant 0 : index
    %57 = vector.load %arg2[%c8, %c0_51, %c0_52] : memref<9x64x64xbf16, #tpu.memory_space<vmem>>, vector<1x64x64xbf16>
    %58 = vector.shape_cast %57 : vector<1x64x64xbf16> to vector<64x64xbf16>
    %cst_53 = arith.constant dense<0.000000e+00> : vector<288x64xf32>
    %59 = tpu.matmul %56, %58, %cst_53 {dimension_numbers = #tpu.dot_dimension_numbers<[1], [0], [0], [1], [0, 0, 1, 1], [], []>} : vector<288x64xbf16>, vector<64x64xbf16>, vector<288x64xf32> -> vector<288x64xf32>
    %60 = arith.addf %54, %59 : vector<288x64xf32>
    %cst_54 = arith.constant 0.000000e+00 : f32
    %61 = vector.broadcast %cst_54 : f32 to vector<288x64xf32>
    %62 = arith.maximumf %60, %61 : vector<288x64xf32>
    %c0_55 = arith.constant 0 : index
    %c0_56 = arith.constant 0 : index
    %63 = vector.load %arg6[%c0_55, %c0_56] : memref<288x1xf32, #tpu.memory_space<vmem>>, vector<288x1xf32>
    %64 = vector.broadcast %63 : vector<288x1xf32> to vector<288x64xf32>
    %65 = arith.mulf %62, %64 : vector<288x64xf32>
    %66 = arith.truncf %65 : vector<288x64xf32> to vector<288x64xbf16>
    %c32 = arith.constant 32 : index
    %c0_57 = arith.constant 0 : index
    %67 = vector.load %arg8[%c32, %c0_57] : memref<345x64xbf16, #tpu.memory_space<vmem>>, vector<288x64xbf16>
    tpu.vector_store %arg8[%c32, %c0_57], %66 {strides = array<i32>} : memref<345x64xbf16, #tpu.memory_space<vmem>>, vector<288x64xbf16>,
    %c0_58 = arith.constant 0 : index
    %c19_59 = arith.constant 19 : index
    %c0_60 = arith.constant 0 : index
    %68 = vector.load %arg1[%c0_58, %c19_59, %c0_60] : memref<1x332x64xbf16, #tpu.memory_space<vmem>>, vector<1x288x64xbf16>
    %69 = vector.shape_cast %68 : vector<1x288x64xbf16> to vector<288x64xbf16>
    %70 = arith.extf %69 : vector<288x64xbf16> to vector<288x64xf32>
    %c0_61 = arith.constant 0 : index
    %c0_62 = arith.constant 0 : index
    %71 = vector.load %arg5[%c0_61, %c0_62] : memref<1x64xf32, #tpu.memory_space<vmem>>, vector<1x64xf32>
    %72 = vector.broadcast %71 : vector<1x64xf32> to vector<288x64xf32>
    %73 = arith.addf %70, %72 : vector<288x64xf32>
    %c13 = arith.constant 13 : index
    %c0_63 = arith.constant 0 : index
    %74 = vector.load %arg8[%c13, %c0_63] : memref<345x64xbf16, #tpu.memory_space<vmem>>, vector<288x64xbf16>
    %c0_64 = arith.constant 0 : index
    %c0_65 = arith.constant 0 : index
    %c0_66 = arith.constant 0 : index
    %75 = vector.load %arg4[%c0_64, %c0_65, %c0_66] : memref<9x64x64xbf16, #tpu.memory_space<vmem>>, vector<1x64x64xbf16>
    %76 = vector.shape_cast %75 : vector<1x64x64xbf16> to vector<64x64xbf16>
    %cst_67 = arith.constant dense<0.000000e+00> : vector<288x64xf32>
    %77 = tpu.matmul %74, %76, %cst_67 {dimension_numbers = #tpu.dot_dimension_numbers<[1], [0], [0], [1], [0, 0, 1, 1], [], []>} : vector<288x64xbf16>, vector<64x64xbf16>, vector<288x64xf32> -> vector<288x64xf32>
    %78 = arith.addf %73, %77 : vector<288x64xf32>
    %c14 = arith.constant 14 : index
    %c0_68 = arith.constant 0 : index
    %79 = vector.load %arg8[%c14, %c0_68] : memref<345x64xbf16, #tpu.memory_space<vmem>>, vector<288x64xbf16>
    %c1_69 = arith.constant 1 : index
    %c0_70 = arith.constant 0 : index
    %c0_71 = arith.constant 0 : index
    %80 = vector.load %arg4[%c1_69, %c0_70, %c0_71] : memref<9x64x64xbf16, #tpu.memory_space<vmem>>, vector<1x64x64xbf16>
    %81 = vector.shape_cast %80 : vector<1x64x64xbf16> to vector<64x64xbf16>
    %cst_72 = arith.constant dense<0.000000e+00> : vector<288x64xf32>
    %82 = tpu.matmul %79, %81, %cst_72 {dimension_numbers = #tpu.dot_dimension_numbers<[1], [0], [0], [1], [0, 0, 1, 1], [], []>} : vector<288x64xbf16>, vector<64x64xbf16>, vector<288x64xf32> -> vector<288x64xf32>
    %83 = arith.addf %78, %82 : vector<288x64xf32>
    %c15 = arith.constant 15 : index
    %c0_73 = arith.constant 0 : index
    %84 = vector.load %arg8[%c15, %c0_73] : memref<345x64xbf16, #tpu.memory_space<vmem>>, vector<288x64xbf16>
    %c2_74 = arith.constant 2 : index
    %c0_75 = arith.constant 0 : index
    %c0_76 = arith.constant 0 : index
    %85 = vector.load %arg4[%c2_74, %c0_75, %c0_76] : memref<9x64x64xbf16, #tpu.memory_space<vmem>>, vector<1x64x64xbf16>
    %86 = vector.shape_cast %85 : vector<1x64x64xbf16> to vector<64x64xbf16>
    %cst_77 = arith.constant dense<0.000000e+00> : vector<288x64xf32>
    %87 = tpu.matmul %84, %86, %cst_77 {dimension_numbers = #tpu.dot_dimension_numbers<[1], [0], [0], [1], [0, 0, 1, 1], [], []>} : vector<288x64xbf16>, vector<64x64xbf16>, vector<288x64xf32> -> vector<288x64xf32>
    %88 = arith.addf %83, %87 : vector<288x64xf32>
    %c31 = arith.constant 31 : index
    %c0_78 = arith.constant 0 : index
    %89 = vector.load %arg8[%c31, %c0_78] : memref<345x64xbf16, #tpu.memory_space<vmem>>, vector<288x64xbf16>
    %c3_79 = arith.constant 3 : index
    %c0_80 = arith.constant 0 : index
    %c0_81 = arith.constant 0 : index
    %90 = vector.load %arg4[%c3_79, %c0_80, %c0_81] : memref<9x64x64xbf16, #tpu.memory_space<vmem>>, vector<1x64x64xbf16>
    %91 = vector.shape_cast %90 : vector<1x64x64xbf16> to vector<64x64xbf16>
    %cst_82 = arith.constant dense<0.000000e+00> : vector<288x64xf32>
    %92 = tpu.matmul %89, %91, %cst_82 {dimension_numbers = #tpu.dot_dimension_numbers<[1], [0], [0], [1], [0, 0, 1, 1], [], []>} : vector<288x64xbf16>, vector<64x64xbf16>, vector<288x64xf32> -> vector<288x64xf32>
    %93 = arith.addf %88, %92 : vector<288x64xf32>
    %c32_83 = arith.constant 32 : index
    %c0_84 = arith.constant 0 : index
    %94 = vector.load %arg8[%c32_83, %c0_84] : memref<345x64xbf16, #tpu.memory_space<vmem>>, vector<288x64xbf16>
    %c4_85 = arith.constant 4 : index
    %c0_86 = arith.constant 0 : index
    %c0_87 = arith.constant 0 : index
    %95 = vector.load %arg4[%c4_85, %c0_86, %c0_87] : memref<9x64x64xbf16, #tpu.memory_space<vmem>>, vector<1x64x64xbf16>
    %96 = vector.shape_cast %95 : vector<1x64x64xbf16> to vector<64x64xbf16>
    %cst_88 = arith.constant dense<0.000000e+00> : vector<288x64xf32>
    %97 = tpu.matmul %94, %96, %cst_88 {dimension_numbers = #tpu.dot_dimension_numbers<[1], [0], [0], [1], [0, 0, 1, 1], [], []>} : vector<288x64xbf16>, vector<64x64xbf16>, vector<288x64xf32> -> vector<288x64xf32>
    %98 = arith.addf %93, %97 : vector<288x64xf32>
    %c33 = arith.constant 33 : index
    %c0_89 = arith.constant 0 : index
    %99 = vector.load %arg8[%c33, %c0_89] : memref<345x64xbf16, #tpu.memory_space<vmem>>, vector<288x64xbf16>
    %c5_90 = arith.constant 5 : index
    %c0_91 = arith.constant 0 : index
    %c0_92 = arith.constant 0 : index
    %100 = vector.load %arg4[%c5_90, %c0_91, %c0_92] : memref<9x64x64xbf16, #tpu.memory_space<vmem>>, vector<1x64x64xbf16>
    %101 = vector.shape_cast %100 : vector<1x64x64xbf16> to vector<64x64xbf16>
    %cst_93 = arith.constant dense<0.000000e+00> : vector<288x64xf32>
    %102 = tpu.matmul %99, %101, %cst_93 {dimension_numbers = #tpu.dot_dimension_numbers<[1], [0], [0], [1], [0, 0, 1, 1], [], []>} : vector<288x64xbf16>, vector<64x64xbf16>, vector<288x64xf32> -> vector<288x64xf32>
    %103 = arith.addf %98, %102 : vector<288x64xf32>
    %c49 = arith.constant 49 : index
    %c0_94 = arith.constant 0 : index
    %104 = vector.load %arg8[%c49, %c0_94] : memref<345x64xbf16, #tpu.memory_space<vmem>>, vector<288x64xbf16>
    %c6_95 = arith.constant 6 : index
    %c0_96 = arith.constant 0 : index
    %c0_97 = arith.constant 0 : index
    %105 = vector.load %arg4[%c6_95, %c0_96, %c0_97] : memref<9x64x64xbf16, #tpu.memory_space<vmem>>, vector<1x64x64xbf16>
    %106 = vector.shape_cast %105 : vector<1x64x64xbf16> to vector<64x64xbf16>
    %cst_98 = arith.constant dense<0.000000e+00> : vector<288x64xf32>
    %107 = tpu.matmul %104, %106, %cst_98 {dimension_numbers = #tpu.dot_dimension_numbers<[1], [0], [0], [1], [0, 0, 1, 1], [], []>} : vector<288x64xbf16>, vector<64x64xbf16>, vector<288x64xf32> -> vector<288x64xf32>
    %108 = arith.addf %103, %107 : vector<288x64xf32>
    %c50 = arith.constant 50 : index
    %c0_99 = arith.constant 0 : index
    %109 = vector.load %arg8[%c50, %c0_99] : memref<345x64xbf16, #tpu.memory_space<vmem>>, vector<288x64xbf16>
    %c7_100 = arith.constant 7 : index
    %c0_101 = arith.constant 0 : index
    %c0_102 = arith.constant 0 : index
    %110 = vector.load %arg4[%c7_100, %c0_101, %c0_102] : memref<9x64x64xbf16, #tpu.memory_space<vmem>>, vector<1x64x64xbf16>
    %111 = vector.shape_cast %110 : vector<1x64x64xbf16> to vector<64x64xbf16>
    %cst_103 = arith.constant dense<0.000000e+00> : vector<288x64xf32>
    %112 = tpu.matmul %109, %111, %cst_103 {dimension_numbers = #tpu.dot_dimension_numbers<[1], [0], [0], [1], [0, 0, 1, 1], [], []>} : vector<288x64xbf16>, vector<64x64xbf16>, vector<288x64xf32> -> vector<288x64xf32>
    %113 = arith.addf %108, %112 : vector<288x64xf32>
    %c51 = arith.constant 51 : index
    %c0_104 = arith.constant 0 : index
    %114 = vector.load %arg8[%c51, %c0_104] : memref<345x64xbf16, #tpu.memory_space<vmem>>, vector<288x64xbf16>
    %c8_105 = arith.constant 8 : index
    %c0_106 = arith.constant 0 : index
    %c0_107 = arith.constant 0 : index
    %115 = vector.load %arg4[%c8_105, %c0_106, %c0_107] : memref<9x64x64xbf16, #tpu.memory_space<vmem>>, vector<1x64x64xbf16>
    %116 = vector.shape_cast %115 : vector<1x64x64xbf16> to vector<64x64xbf16>
    %cst_108 = arith.constant dense<0.000000e+00> : vector<288x64xf32>
    %117 = tpu.matmul %114, %116, %cst_108 {dimension_numbers = #tpu.dot_dimension_numbers<[1], [0], [0], [1], [0, 0, 1, 1], [], []>} : vector<288x64xbf16>, vector<64x64xbf16>, vector<288x64xf32> -> vector<288x64xf32>
    %118 = arith.addf %113, %117 : vector<288x64xf32>
    %c0_109 = arith.constant 0 : index
    %c0_110 = arith.constant 0 : index
    %c0_111 = arith.constant 0 : index
    %119 = vector.load %arg7[%c0_109, %c0_110, %c0_111] : memref<1x288x64xf32, #tpu.memory_space<vmem>>, vector<1x288x64xf32>
    %120 = vector.shape_cast %119 : vector<1x288x64xf32> to vector<288x64xf32>
    %121 = vector.shape_cast %118 : vector<288x64xf32> to vector<1x288x64xf32>
    tpu.vector_store %arg7[%c0_109, %c0_110, %c0_111], %121 {strides = array<i32>} : memref<1x288x64xf32, #tpu.memory_space<vmem>>, vector<1x288x64xf32>,
    return
  }
  func.func @transform_0(%arg0: i32) -> (i32, i32, i32) {
    %c0_i32 = arith.constant 0 : i32
    %c0_i32_0 = arith.constant 0 : i32
    %c0_i32_1 = arith.constant 0 : i32
    return %arg0, %c0_i32, %c0_i32_0 : i32, i32, i32
  }
  func.func @transform_1(%arg0: i32) -> (i32, i32, i32) {
    %c0_i32 = arith.constant 0 : i32
    %c0_i32_0 = arith.constant 0 : i32
    %c0_i32_1 = arith.constant 0 : i32
    %c0_i32_2 = arith.constant 0 : i32
    return %c0_i32, %c0_i32_0, %c0_i32_1 : i32, i32, i32
  }
  func.func @transform_2(%arg0: i32) -> (i32, i32) {
    %c0_i32 = arith.constant 0 : i32
    %c0_i32_0 = arith.constant 0 : i32
    %c0_i32_1 = arith.constant 0 : i32
    return %c0_i32, %c0_i32_0 : i32, i32
  }
  func.func @transform_3(%arg0: i32) -> (i32, i32, i32) {
    %c0_i32 = arith.constant 0 : i32
    %c0_i32_0 = arith.constant 0 : i32
    %c0_i32_1 = arith.constant 0 : i32
    %c0_i32_2 = arith.constant 0 : i32
    return %c0_i32, %c0_i32_0, %c0_i32_1 : i32, i32, i32
  }
  func.func @transform_4(%arg0: i32) -> (i32, i32) {
    %c0_i32 = arith.constant 0 : i32
    %c0_i32_0 = arith.constant 0 : i32
    %c0_i32_1 = arith.constant 0 : i32
    return %c0_i32, %c0_i32_0 : i32, i32
  }
  func.func @transform_5(%arg0: i32) -> (i32, i32) {
    %c0_i32 = arith.constant 0 : i32
    %c0_i32_0 = arith.constant 0 : i32
    %c0_i32_1 = arith.constant 0 : i32
    return %c0_i32, %c0_i32_0 : i32, i32
  }
  func.func @transform_6(%arg0: i32) -> (i32, i32, i32) {
    %c0_i32 = arith.constant 0 : i32
    %c0_i32_0 = arith.constant 0 : i32
    %c0_i32_1 = arith.constant 0 : i32
    return %arg0, %c0_i32, %c0_i32_0 : i32, i32, i32
  }
}

</mosaic_0001>

<llo_original>
// kernel: tpu_custom_call.1
$region0: #{tpu_custom_call.1}
  #allocation0 [shape = 'u32[]', space=smem, size = 0x4, offset = 0x4, fixed_abs, tag = 'smem constant byte address 0x4 - core index']
  #allocation1 [shape = 'u32[72,128]{1,0:T(1,128)}', space=vmem, size = 0x9000, scoped, tag = 'internal scratch']
  #allocation2 [shape = 'bf16[345,64]{1,0:T(8,128)(2,1)}', space=vmem, size = 0x16000, scoped, tag = 'scratch operand']
  %s0 = inlined_call_operand.vmem [shape: bf16[2,332,64], index: 0, kind: input, shape index: {}]
  %s1 = inlined_call_operand.vmem [shape: bf16[9,64,64], index: 1, kind: input, shape index: {}]
  %s2 = inlined_call_operand.vmem [shape: f32[1,64], index: 2, kind: input, shape index: {}]
  %s3 = inlined_call_operand.vmem [shape: bf16[9,64,64], index: 3, kind: input, shape index: {}]
  %s4 = inlined_call_operand.vmem [shape: f32[1,64], index: 4, kind: input, shape index: {}]
  %s5 = inlined_call_operand.vmem [shape: f32[288,1], index: 5, kind: input, shape index: {}]
  %s6 = inlined_call_operand.vmem [shape: f32[2,288,64], index: 6, kind: output, shape index: {}]
  %s7 = sld [smem:[#allocation0]]
  $region57: #{tpu_custom_call.1} parent=0
    _
  %s9 = ssub.s32 1, %s7
  %s10 = scalar_select 0, %s9, %s7
  loop: start=0, step=1, limit=4
  $region2: #{tpu_custom_call.1} parent=0 // loop_pre_header
    _
  $region3: #{tpu_custom_call.1} parent=0 // loop_header
    %s12 = sphi 0, %s16
    %p13 = scmp.ge.s32.totalorder %s12, 4
    %s22 = sphi 0, %s24
    %s25 = sphi 0, %s22
    %s26 = sphi 0, %s25
    %s42 = sphi 0, %s26
    %s46 = sphi 0, %s46
    %s48 = sphi 0, %s46
    %s49 = sphi 0, %s48
    %s63 = sphi 0, %s49
    %s67 = sphi 0, %s67
    %s69 = sphi 0, %s67
    %s70 = sphi 0, %s69
    %s84 = sphi 0, %s70
    %s88 = sphi 0, %s88
    %s90 = sphi 0, %s88
    %s91 = sphi 0, %s90
    %s105 = sphi 0, %s91
    %s109 = sphi 0, %s109
    %s111 = sphi 0, %s109
    %s112 = sphi 0, %s111
    %s126 = sphi 0, %s112
    %s130 = sphi 0, %s130
    %s132 = sphi 0, %s130
    %s133 = sphi 0, %s132
    %s147 = sphi 0, %s133
    %s153 = sphi 0, %s155
    %s156 = sphi 0, %s153
    %s157 = sphi 0, %s156
    %s173 = sphi 0, %s157
  $region4: #{tpu_custom_call.1} parent=0 // loop_header_branch
    %15 = sbr.rel (%p13) target = $region8
  $region5: #{tpu_custom_call.1} parent=0 // loop_body
    %s17 = ssub.s32 %s12, 1
    %s18 = ssub.s32 %s12, 2
    %s19 = sadd.s32 %s12, 1
    %s20 = ssub.s32 %s12, %s19
    %p21 = scmp.eq.s32.totalorder %s20, 0
    %s23 = sadd.s32 %s22, 1
    %s24 = scalar_select %p21, %s22, %s23
    %p27 = pneg %p21
    %p28 = scmp.eq.s32.totalorder %s12, 1
    %p29 = por %p27, %p28
    %p30 = scmp.ne.s32.totalorder %s22, %s25
    %p31 = scmp.eq.s32.totalorder %s12, 0
    %p32 = por %p30, %p31
    %p33 = scmp.ne.s32.totalorder %s22, %s25
    %p34 = scmp.eq.s32.totalorder %s17, 1
    %p35 = por %p33, %p34
    %p36 = scmp.ne.s32.totalorder %s25, %s26
    %p37 = scmp.eq.s32.totalorder %s17, 0
    %p38 = por %p36, %p37
    %p39 = scmp.ne.s32.totalorder %s25, %s26
    %p40 = scmp.eq.s32.totalorder %s18, 1
    %p41 = por %p39, %p40
    %p43 = scmp.ne.s32.totalorder %s26, %s42
    %p44 = scmp.eq.s32.totalorder %s18, 0
    %p45 = por %p43, %p44
    %s47 = sadd.s32 %s46, 1
    %p50 = scmp.eq.s32.totalorder %s12, 1
    %p51 = scmp.ne.s32.totalorder %s46, %s48
    %p52 = scmp.eq.s32.totalorder %s12, 0
    %p53 = por %p51, %p52
    %p54 = scmp.ne.s32.totalorder %s46, %s48
    %p55 = scmp.eq.s32.totalorder %s17, 1
    %p56 = por %p54, %p55
    %p57 = scmp.ne.s32.totalorder %s48, %s49
    %p58 = scmp.eq.s32.totalorder %s17, 0
    %p59 = por %p57, %p58
    %p60 = scmp.ne.s32.totalorder %s48, %s49
    %p61 = scmp.eq.s32.totalorder %s18, 1
    %p62 = por %p60, %p61
    %p64 = scmp.ne.s32.totalorder %s49, %s63
    %p65 = scmp.eq.s32.totalorder %s18, 0
    %p66 = por %p64, %p65
    %s68 = sadd.s32 %s67, 1
    %p71 = scmp.eq.s32.totalorder %s12, 1
    %p72 = scmp.ne.s32.totalorder %s67, %s69
    %p73 = scmp.eq.s32.totalorder %s12, 0
    %p74 = por %p72, %p73
    %p75 = scmp.ne.s32.totalorder %s67, %s69
    %p76 = scmp.eq.s32.totalorder %s17, 1
    %p77 = por %p75, %p76
    %p78 = scmp.ne.s32.totalorder %s69, %s70
    %p79 = scmp.eq.s32.totalorder %s17, 0
    %p80 = por %p78, %p79
    %p81 = scmp.ne.s32.totalorder %s69, %s70
    %p82 = scmp.eq.s32.totalorder %s18, 1
    %p83 = por %p81, %p82
    %p85 = scmp.ne.s32.totalorder %s70, %s84
    %p86 = scmp.eq.s32.totalorder %s18, 0
    %p87 = por %p85, %p86
    %s89 = sadd.s32 %s88, 1
    %p92 = scmp.eq.s32.totalorder %s12, 1
    %p93 = scmp.ne.s32.totalorder %s88, %s90
    %p94 = scmp.eq.s32.totalorder %s12, 0
    %p95 = por %p93, %p94
    %p96 = scmp.ne.s32.totalorder %s88, %s90
    %p97 = scmp.eq.s32.totalorder %s17, 1
    %p98 = por %p96, %p97
    %p99 = scmp.ne.s32.totalorder %s90, %s91
    %p100 = scmp.eq.s32.totalorder %s17, 0
    %p101 = por %p99, %p100
    %p102 = scmp.ne.s32.totalorder %s90, %s91
    %p103 = scmp.eq.s32.totalorder %s18, 1
    %p104 = por %p102, %p103
    %p106 = scmp.ne.s32.totalorder %s91, %s105
    %p107 = scmp.eq.s32.totalorder %s18, 0
    %p108 = por %p106, %p107
    %s110 = sadd.s32 %s109, 1
    %p113 = scmp.eq.s32.totalorder %s12, 1
    %p114 = scmp.ne.s32.totalorder %s109, %s111
    %p115 = scmp.eq.s32.totalorder %s12, 0
    %p116 = por %p114, %p115
    %p117 = scmp.ne.s32.totalorder %s109, %s111
    %p118 = scmp.eq.s32.totalorder %s17, 1
    %p119 = por %p117, %p118
    %p120 = scmp.ne.s32.totalorder %s111, %s112
    %p121 = scmp.eq.s32.totalorder %s17, 0
    %p122 = por %p120, %p121
    %p123 = scmp.ne.s32.totalorder %s111, %s112
    %p124 = scmp.eq.s32.totalorder %s18, 1
    %p125 = por %p123, %p124
    %p127 = scmp.ne.s32.totalorder %s112, %s126
    %p128 = scmp.eq.s32.totalorder %s18, 0
    %p129 = por %p127, %p128
    %s131 = sadd.s32 %s130, 1
    %p134 = scmp.eq.s32.totalorder %s12, 1
    %p135 = scmp.ne.s32.totalorder %s130, %s132
    %p136 = scmp.eq.s32.totalorder %s12, 0
    %p137 = por %p135, %p136
    %p138 = scmp.ne.s32.totalorder %s130, %s132
    %p139 = scmp.eq.s32.totalorder %s17, 1
    %p140 = por %p138, %p139
    %p141 = scmp.ne.s32.totalorder %s132, %s133
    %p142 = scmp.eq.s32.totalorder %s17, 0
    %p143 = por %p141, %p142
    %p144 = scmp.ne.s32.totalorder %s132, %s133
    %p145 = scmp.eq.s32.totalorder %s18, 1
    %p146 = por %p144, %p145
    %p148 = scmp.ne.s32.totalorder %s133, %s147
    %p149 = scmp.eq.s32.totalorder %s18, 0
    %p150 = por %p148, %p149
    %s151 = ssub.s32 %s12, %s19
    %p152 = scmp.eq.s32.totalorder %s151, 0
    %s154 = sadd.s32 %s153, 1
    %s155 = scalar_select %p152, %s153, %s154
    %p158 = pneg %p152
    %p159 = scmp.eq.s32.totalorder %s12, 1
    %p160 = por %p158, %p159
    %p161 = scmp.ne.s32.totalorder %s153, %s156
    %p162 = scmp.eq.s32.totalorder %s12, 0
    %p163 = por %p161, %p162
    %p164 = scmp.ne.s32.totalorder %s153, %s156
    %p165 = scmp.eq.s32.totalorder %s17, 1
    %p166 = por %p164, %p165
    %p167 = scmp.ne.s32.totalorder %s156, %s157
    %p168 = scmp.eq.s32.totalorder %s17, 0
    %p169 = por %p167, %p168
    %p170 = scmp.ne.s32.totalorder %s156, %s157
    %p171 = scmp.eq.s32.totalorder %s18, 1
    %p172 = por %p170, %p171
    %p174 = scmp.ne.s32.totalorder %s157, %s173
    %p175 = scmp.eq.s32.totalorder %s18, 0
    %p176 = por %p174, %p175
    %p177 = scmp.le.s32.totalorder 1, %s12
    %p178 = scmp.lt.s32.totalorder %s12, 3
    %p179 = pnand %p177, %p178
    %p180 = pneg %p179
    // Predicated region
    $region9: #{tpu_custom_call.1} parent=5 // pred_check
      _
    $region10: #{tpu_custom_call.1} parent=5 // pred_check_branch
      %182 = sbr.rel (%p179) target = $region12
    $region11: #{tpu_custom_call.1} parent=5 // pred_region
      %s183 = ssub.s32 %s12, 1
      // Predicated region
      $region13: #{tpu_custom_call.1} parent=11 // pred_check
        %p184 = pneg %p59
      $region14: #{tpu_custom_call.1} parent=11 // pred_check_branch
        %186 = sbr.rel (%p184) target = $region16
      $region15: #{tpu_custom_call.1} parent=11 // pred_region
        _
      $region16: #{tpu_custom_call.1} parent=11 // pred_fallthru
        _
      // Predicated region
      $region17: #{tpu_custom_call.1} parent=11 // pred_check
        %p187 = pneg %p80
      $region18: #{tpu_custom_call.1} parent=11 // pred_check_branch
        %189 = sbr.rel (%p187) target = $region20
      $region19: #{tpu_custom_call.1} parent=11 // pred_region
        _
      $region20: #{tpu_custom_call.1} parent=11 // pred_fallthru
        _
      // Predicated region
      $region21: #{tpu_custom_call.1} parent=11 // pred_check
        %p190 = pneg %p101
      $region22: #{tpu_custom_call.1} parent=11 // pred_check_branch
        %192 = sbr.rel (%p190) target = $region24
      $region23: #{tpu_custom_call.1} parent=11 // pred_region
        _
      $region24: #{tpu_custom_call.1} parent=11 // pred_fallthru
        _
      // Predicated region
      $region25: #{tpu_custom_call.1} parent=11 // pred_check
        %p193 = pneg %p122
      $region26: #{tpu_custom_call.1} parent=11 // pred_check_branch
        %195 = sbr.rel (%p193) target = $region28
      $region27: #{tpu_custom_call.1} parent=11 // pred_region
        _
      $region28: #{tpu_custom_call.1} parent=11 // pred_fallthru
        _
      // Predicated region
      $region29: #{tpu_custom_call.1} parent=11 // pred_check
        %p196 = pneg %p143
      $region30: #{tpu_custom_call.1} parent=11 // pred_check_branch
        %198 = sbr.rel (%p196) target = $region32
      $region31: #{tpu_custom_call.1} parent=11 // pred_region
        _
      $region32: #{tpu_custom_call.1} parent=11 // pred_fallthru
        _
    $region12: #{tpu_custom_call.1} parent=5 // pred_fallthru
      _
    %p199 = scmp.lt.s32.totalorder %s12, 2
    // Predicated region
    $region33: #{tpu_custom_call.1} parent=5 // pred_check
      %p200 = pneg %p199
    $region34: #{tpu_custom_call.1} parent=5 // pred_check_branch
      %202 = sbr.rel (%p200) target = $region36
    $region35: #{tpu_custom_call.1} parent=5 // pred_region
      // Predicated region
      $region37: #{tpu_custom_call.1} parent=35 // pred_check
        %p203 = pneg %p32
      $region38: #{tpu_custom_call.1} parent=35 // pred_check_branch
        %205 = sbr.rel (%p203) target = $region40
      $region39: #{tpu_custom_call.1} parent=35 // pred_region
        %p206 = scmp.lt.s32.totalorder %s12, 1
        %s207 = scalar_select %p206, %s12, 1
        %s208 = smul.addr %s207, 42
        %s209 = smul.addr %s208, 4
        %s210 = scalar_lea.vmem %s0, %s209
      $region40: #{tpu_custom_call.1} parent=35 // pred_fallthru
        _
    $region36: #{tpu_custom_call.1} parent=5 // pred_fallthru
      _
    %p211 = scmp.le.s32.totalorder 1, %s12
    %p212 = scmp.lt.s32.totalorder %s12, 3
    %p213 = pnand %p211, %p212
    %p214 = pneg %p213
    // Predicated region
    $region41: #{tpu_custom_call.1} parent=5 // pred_check
      _
    $region42: #{tpu_custom_call.1} parent=5 // pred_check_branch
      %216 = sbr.rel (%p213) target = $region44
    $region43: #{tpu_custom_call.1} parent=5 // pred_region
      %s217 = ssub.s32 %s12, 1
      %p218 = scmp.lt.s32.totalorder %s17, 1
      %s219 = scalar_select %p218, %s17, 1
      %s220 = smul.addr %s219, 42
      %s221 = smul.addr %s220, 4
      %s222 = scalar_lea.vmem %s0, %s221
      %p223 = pneg %p38
      %p224 = pneg %p35
      %p225 = pneg %p59
      %p226 = pneg %p56
      %p227 = pneg %p80
      %p228 = pneg %p77
      %p229 = pneg %p101
      %p230 = pneg %p98
      %p231 = pneg %p122
      %p232 = pneg %p119
      %p233 = pneg %p143
      %p234 = pneg %p140
      %p235 = pneg %p169
      %p236 = pneg %p166
      %p237 = scmp.lt.s32.totalorder %s17, 1
      %s238 = scalar_select %p237, %s17, 1
      %s239 = smul.addr %s238, 36
      %s240 = smul.addr %s239, 8
      %s241 = scalar_lea.vmem %s6, %s240
      %p242 = scmp.lt.s32.totalorder %s17, 1
      %s243 = scalar_select %p242, %s17, 1
      %s244 = smul.addr %s243, 42
      %s245 = smul.addr %s244, 4
      %s246 = scalar_lea.vmem %s0, %s245
      %p247 = scmp.lt.s32.totalorder %s17, 1
      %s248 = scalar_select %p247, %s17, 1
      %s249 = smul.addr %s248, 36
      %s250 = smul.addr %s249, 8
      %s251 = scalar_lea.vmem %s6, %s250
      %vm253 = vcmask 519168
      %254 = vst.msk [vmem:[#allocation2] sm:$0xf] %vm253, 0
      %255 = vst.msk [vmem:[#allocation2 + $0x4] sm:$0xf] %vm253, 0
      %256 = vst.msk [vmem:[#allocation2 + $0x8] sm:$0xf] %vm253, 0
      %257 = vst.msk [vmem:[#allocation2 + $0xc] sm:$0xf] %vm253, 0
      %258 = vst.msk [vmem:[#allocation2 + $0xa0] sm:$0xf] %vm253, 0
      %259 = vst.msk [vmem:[#allocation2 + $0xa4] sm:$0xf] %vm253, 0
      %260 = vst.msk [vmem:[#allocation2 + $0xa8] sm:$0xf] %vm253, 0
      %vm261 = vcmask 516096
      %vm262 = vsmask.f32 256
      %vm263 = vmand %vm261, %vm262
      %v264 = vld [vmem:[#allocation2 + $0xac] sm:$0x1]
      %v265 = vsel %vm263, 0, %v264
      %266 = vst [vmem:[#allocation2 + $0xac] sm:$0x1] %v265
      %v267 = vld [vmem:[%s2] sm:$0x1]
      %v269 = vperm.slane %v267, 0
      %v271 = vld [vmem:[%s246] sm:$0xf]
      %v272 = vld [vmem:[%s246 + $0x4] sm:$0xf]
      %v273 = vld [vmem:[%s246 + $0x8] sm:$0xf]
      %v274 = vld [vmem:[%s246 + $0xc] sm:$0xf]
      %v275 = vld [vmem:[%s246 + $0x10] sm:$0xf]
      %v276 = vld [vmem:[%s246 + $0x14] sm:$0xf]
      %v277 = vld [vmem:[%s246 + $0x18] sm:$0xf]
      %v278 = vld [vmem:[%s246 + $0x1c] sm:$0xf]
      %v279 = vld [vmem:[%s246 + $0x20] sm:$0xf]
      %v280 = vld [vmem:[%s246 + $0x24] sm:$0xf]
      %v281 = vld [vmem:[%s246 + $0x28] sm:$0xf]
      %v282 = vld [vmem:[%s246 + $0x2c] sm:$0xf]
      %v283 = vld [vmem:[%s246 + $0x30] sm:$0xf]
      %v284 = vld [vmem:[%s246 + $0x34] sm:$0xf]
      %v285 = vld [vmem:[%s246 + $0x38] sm:$0xf]
      %v286 = vld [vmem:[%s246 + $0x3c] sm:$0xf]
      %v287 = vld [vmem:[%s246 + $0x40] sm:$0xf]
      %v288 = vld [vmem:[%s246 + $0x44] sm:$0xf]
      %v289 = vld [vmem:[%s246 + $0x48] sm:$0xf]
      %v290 = vld [vmem:[%s246 + $0x4c] sm:$0xf]
      %v291 = vld [vmem:[%s246 + $0x50] sm:$0xf]
      %v292 = vld [vmem:[%s246 + $0x54] sm:$0xf]
      %v293 = vld [vmem:[%s246 + $0x58] sm:$0xf]
      %v294 = vld [vmem:[%s246 + $0x5c] sm:$0xf]
      %v295 = vld [vmem:[%s246 + $0x60] sm:$0xf]
      %v296 = vld [vmem:[%s246 + $0x64] sm:$0xf]
      %v297 = vld [vmem:[%s246 + $0x68] sm:$0xf]
      %v298 = vld [vmem:[%s246 + $0x6c] sm:$0xf]
      %v299 = vld [vmem:[%s246 + $0x70] sm:$0xf]
      %v300 = vld [vmem:[%s246 + $0x74] sm:$0xf]
      %v301 = vld [vmem:[%s246 + $0x78] sm:$0xf]
      %v302 = vld [vmem:[%s246 + $0x7c] sm:$0xf]
      %v303 = vld [vmem:[%s246 + $0x80] sm:$0xf]
      %v304 = vld [vmem:[%s246 + $0x84] sm:$0xf]
      %v305 = vld [vmem:[%s246 + $0x88] sm:$0xf]
      %v306 = vld [vmem:[%s246 + $0x8c] sm:$0xf]
      %v307 = vld [vmem:[%s1] sm:$0xf]
      %v308 = vld [vmem:[%s1 + $0x4] sm:$0xf]
      %v309 = vld [vmem:[%s1 + $0x8] sm:$0xf]
      %v310 = vld [vmem:[%s1 + $0xc] sm:$0xf]
      %v311 = vld [vmem:[%s1 + $0x10] sm:$0xf]
      %v312 = vld [vmem:[%s1 + $0x14] sm:$0xf]
      %v313 = vld [vmem:[%s1 + $0x18] sm:$0xf]
      %v314 = vld [vmem:[%s1 + $0x1c] sm:$0xf]
      %v351 = vunpack.c.l.b16 %v271
      %v352 = vunpack.c.l.b16 %v272
      %v353 = vunpack.c.l.b16 %v273
      %v354 = vunpack.c.l.b16 %v274
      %v355 = vunpack.c.l.b16 %v275
      %v356 = vunpack.c.l.b16 %v276
      %v357 = vunpack.c.l.b16 %v277
      %v358 = vunpack.c.l.b16 %v278
      %v359 = vunpack.c.l.b16 %v279
      %v360 = vunpack.c.l.b16 %v280
      %v361 = vunpack.c.l.b16 %v281
      %v362 = vunpack.c.l.b16 %v282
      %v363 = vunpack.c.l.b16 %v283
      %v364 = vunpack.c.l.b16 %v284
      %v365 = vunpack.c.l.b16 %v285
      %v366 = vunpack.c.l.b16 %v286
      %v367 = vunpack.c.l.b16 %v287
      %v368 = vunpack.c.l.b16 %v288
      %v369 = vunpack.c.l.b16 %v289
      %v370 = vunpack.c.l.b16 %v290
      %v371 = vunpack.c.l.b16 %v291
      %v372 = vunpack.c.l.b16 %v292
      %v373 = vunpack.c.l.b16 %v293
      %v374 = vunpack.c.l.b16 %v294
      %v375 = vunpack.c.l.b16 %v295
      %v376 = vunpack.c.l.b16 %v296
      %v377 = vunpack.c.l.b16 %v297
      %v378 = vunpack.c.l.b16 %v298
      %v379 = vunpack.c.l.b16 %v299
      %v380 = vunpack.c.l.b16 %v300
      %v381 = vunpack.c.l.b16 %v301
      %v382 = vunpack.c.l.b16 %v302
      %v383 = vunpack.c.l.b16 %v303
      %v384 = vunpack.c.l.b16 %v304
      %v385 = vunpack.c.l.b16 %v305
      %v386 = vunpack.c.l.b16 %v306
      %v387 = vpack.c.b16 %v352, %v351
      %v388 = vpack.c.b16 %v354, %v353
      %v389 = vpack.c.b16 %v356, %v355
      %v390 = vpack.c.b16 %v358, %v357
      %v391 = vpack.c.b16 %v360, %v359
      %v392 = vpack.c.b16 %v362, %v361
      %v393 = vpack.c.b16 %v364, %v363
      %v394 = vpack.c.b16 %v366, %v365
      %v395 = vpack.c.b16 %v368, %v367
      %v396 = vpack.c.b16 %v370, %v369
      %v397 = vpack.c.b16 %v372, %v371
      %v398 = vpack.c.b16 %v374, %v373
      %v399 = vpack.c.b16 %v376, %v375
      %v400 = vpack.c.b16 %v378, %v377
      %v401 = vpack.c.b16 %v380, %v379
      %v402 = vpack.c.b16 %v382, %v381
      %v403 = vpack.c.b16 %v384, %v383
      %v404 = vpack.c.b16 %v386, %v385
      %v413 = vunpack.c.l.b16 %v307
      %v414 = vunpack.c.l.b16 %v308
      %v415 = vunpack.c.l.b16 %v309
      %v416 = vunpack.c.l.b16 %v310
      %v417 = vunpack.c.l.b16 %v311
      %v418 = vunpack.c.l.b16 %v312
      %v419 = vunpack.c.l.b16 %v313
      %v420 = vunpack.c.l.b16 %v314
      %v421 = vpack.c.b16 %v414, %v413
      %v422 = vpack.c.b16 %v416, %v415
      %v423 = vpack.c.b16 %v418, %v417
      %v424 = vpack.c.b16 %v420, %v419
      %vm429 = vcmask 523264
      %v431 = vsel %vm429, %v387, 0
      %v434 = vsel %vm429, %v388, 0
      %v437 = vsel %vm429, %v389, 0
      %v440 = vsel %vm429, %v390, 0
      %v443 = vsel %vm429, %v391, 0
      %v446 = vsel %vm429, %v392, 0
      %v449 = vsel %vm429, %v393, 0
      %v452 = vsel %vm429, %v394, 0
      %v455 = vsel %vm429, %v395, 0
      %v458 = vsel %vm429, %v396, 0
      %v461 = vsel %vm429, %v397, 0
      %v464 = vsel %vm429, %v398, 0
      %v467 = vsel %vm429, %v399, 0
      %v470 = vsel %vm429, %v400, 0
      %v473 = vsel %vm429, %v401, 0
      %v476 = vsel %vm429, %v402, 0
      %v479 = vsel %vm429, %v403, 0
      %v482 = vsel %vm429, %v404, 0
      %484 = vmatpush.bf16.msra.mxu0 0
      %485 = vmatpush.bf16.msra.mxu0 0
      %486 = vmatpush.bf16.msra.mxu0 0
      %487 = vmatpush.bf16.msra.mxu0 0
      %488 = vmatpush.bf16.msra.mxu0 %v424
      %489 = vmatpush.bf16.msra.mxu0 %v423
      %490 = vmatpush.bf16.msra.mxu0 %v422
      %491 = vmatpush.bf16.msra.mxu0 %v421
      %492 = vmatmul.bf16.gmra.mxu0 %v431
      %v493 = vpop.f32.mrf.mxu0
      %v494 = vadd.f32 0.0, %v493
      %v495 = vpop.f32.mrf.mxu0
      %v496 = vadd.f32 0.0, %v495
      %497 = vmatmul.bf16.gmra.mxu0 %v434
      %v498 = vpop.f32.mrf.mxu0
      %v499 = vadd.f32 0.0, %v498
      %v500 = vpop.f32.mrf.mxu0
      %v501 = vadd.f32 0.0, %v500
      %502 = vmatmul.bf16.gmra.mxu0 %v437
      %v503 = vpop.f32.mrf.mxu0
      %v504 = vadd.f32 0.0, %v503
      %v505 = vpop.f32.mrf.mxu0
      %v506 = vadd.f32 0.0, %v505
      %507 = vmatmul.bf16.gmra.mxu0 %v440
      %v508 = vpop.f32.mrf.mxu0
      %v509 = vadd.f32 0.0, %v508
      %v510 = vpop.f32.mrf.mxu0
      %v511 = vadd.f32 0.0, %v510
      %512 = vmatmul.bf16.gmra.mxu0 %v443
      %v513 = vpop.f32.mrf.mxu0
      %v514 = vadd.f32 0.0, %v513
      %v515 = vpop.f32.mrf.mxu0
      %v516 = vadd.f32 0.0, %v515
      %517 = vmatmul.bf16.gmra.mxu0 %v446
      %v518 = vpop.f32.mrf.mxu0
      %v519 = vadd.f32 0.0, %v518
      %v520 = vpop.f32.mrf.mxu0
      %v521 = vadd.f32 0.0, %v520
      %522 = vmatmul.bf16.gmra.mxu0 %v449
      %v523 = vpop.f32.mrf.mxu0
      %v524 = vadd.f32 0.0, %v523
      %v525 = vpop.f32.mrf.mxu0
      %v526 = vadd.f32 0.0, %v525
      %527 = vmatmul.bf16.gmra.mxu0 %v452
      %v528 = vpop.f32.mrf.mxu0
      %v529 = vadd.f32 0.0, %v528
      %v530 = vpop.f32.mrf.mxu0
      %v531 = vadd.f32 0.0, %v530
      %532 = vmatmul.bf16.gmra.mxu0 %v455
      %v533 = vpop.f32.mrf.mxu0
      %v534 = vadd.f32 0.0, %v533
      %v535 = vpop.f32.mrf.mxu0
      %v536 = vadd.f32 0.0, %v535
      %537 = vmatmul.bf16.gmra.mxu0 %v458
      %v538 = vpop.f32.mrf.mxu0
      %v539 = vadd.f32 0.0, %v538
      %v540 = vpop.f32.mrf.mxu0
      %v541 = vadd.f32 0.0, %v540
      %542 = vmatmul.bf16.gmra.mxu0 %v461
      %v543 = vpop.f32.mrf.mxu0
      %v544 = vadd.f32 0.0, %v543
      %v545 = vpop.f32.mrf.mxu0
      %v546 = vadd.f32 0.0, %v545
      %547 = vmatmul.bf16.gmra.mxu0 %v464
      %v548 = vpop.f32.mrf.mxu0
      %v549 = vadd.f32 0.0, %v548
      %v550 = vpop.f32.mrf.mxu0
      %v551 = vadd.f32 0.0, %v550
      %552 = vmatmul.bf16.gmra.mxu0 %v467
      %v553 = vpop.f32.mrf.mxu0
      %v554 = vadd.f32 0.0, %v553
      %v555 = vpop.f32.mrf.mxu0
      %v556 = vadd.f32 0.0, %v555
      %557 = vmatmul.bf16.gmra.mxu0 %v470
      %v558 = vpop.f32.mrf.mxu0
      %v559 = vadd.f32 0.0, %v558
      %v560 = vpop.f32.mrf.mxu0
      %v561 = vadd.f32 0.0, %v560
      %562 = vmatmul.bf16.gmra.mxu0 %v473
      %v563 = vpop.f32.mrf.mxu0
      %v564 = vadd.f32 0.0, %v563
      %v565 = vpop.f32.mrf.mxu0
      %v566 = vadd.f32 0.0, %v565
      %567 = vmatmul.bf16.gmra.mxu0 %v476
      %v568 = vpop.f32.mrf.mxu0
      %v569 = vadd.f32 0.0, %v568
      %v570 = vpop.f32.mrf.mxu0
      %v571 = vadd.f32 0.0, %v570
      %572 = vmatmul.bf16.gmra.mxu0 %v479
      %v573 = vpop.f32.mrf.mxu0
      %v574 = vadd.f32 0.0, %v573
      %v575 = vpop.f32.mrf.mxu0
      %v576 = vadd.f32 0.0, %v575
      %577 = vmatmul.bf16.gmra.mxu0 %v482
      %v578 = vpop.f32.mrf.mxu0
      %v579 = vadd.f32 0.0, %v578
      %v580 = vpop.f32.mrf.mxu0
      %v581 = vadd.f32 0.0, %v580
      %582 = vdwg.mxu0
      %v583 = vadd.f32 %v269, %v494
      %v584 = vadd.f32 %v269, %v496
      %v585 = vadd.f32 %v269, %v499
      %v586 = vadd.f32 %v269, %v501
      %v587 = vadd.f32 %v269, %v504
      %v588 = vadd.f32 %v269, %v506
      %v589 = vadd.f32 %v269, %v509
      %v590 = vadd.f32 %v269, %v511
      %v591 = vadd.f32 %v269, %v514
      %v592 = vadd.f32 %v269, %v516
      %v593 = vadd.f32 %v269, %v519
      %v594 = vadd.f32 %v269, %v521
      %v595 = vadd.f32 %v269, %v524
      %v596 = vadd.f32 %v269, %v526
      %v597 = vadd.f32 %v269, %v529
      %v598 = vadd.f32 %v269, %v531
      %v599 = vadd.f32 %v269, %v534
      %v600 = vadd.f32 %v269, %v536
      %v601 = vadd.f32 %v269, %v539
      %v602 = vadd.f32 %v269, %v541
      %v603 = vadd.f32 %v269, %v544
      %v604 = vadd.f32 %v269, %v546
      %v605 = vadd.f32 %v269, %v549
      %v606 = vadd.f32 %v269, %v551
      %v607 = vadd.f32 %v269, %v554
      %v608 = vadd.f32 %v269, %v556
      %v609 = vadd.f32 %v269, %v559
      %v610 = vadd.f32 %v269, %v561
      %v611 = vadd.f32 %v269, %v564
      %v612 = vadd.f32 %v269, %v566
      %v613 = vadd.f32 %v269, %v569
      %v614 = vadd.f32 %v269, %v571
      %v615 = vadd.f32 %v269, %v574
      %v616 = vadd.f32 %v269, %v576
      %v617 = vadd.f32 %v269, %v579
      %v618 = vadd.f32 %v269, %v581
      %v619 = vld [vmem:[%s246] sm:$0xf]
      %v620 = vld [vmem:[%s246 + $0x4] sm:$0xf]
      %v621 = vld [vmem:[%s246 + $0x8] sm:$0xf]
      %v622 = vld [vmem:[%s246 + $0xc] sm:$0xf]
      %v623 = vld [vmem:[%s246 + $0x10] sm:$0xf]
      %v624 = vld [vmem:[%s246 + $0x14] sm:$0xf]
      %v625 = vld [vmem:[%s246 + $0x18] sm:$0xf]
      %v626 = vld [vmem:[%s246 + $0x1c] sm:$0xf]
      %v627 = vld [vmem:[%s246 + $0x20] sm:$0xf]
      %v628 = vld [vmem:[%s246 + $0x24] sm:$0xf]
      %v629 = vld [vmem:[%s246 + $0x28] sm:$0xf]
      %v630 = vld [vmem:[%s246 + $0x2c] sm:$0xf]
      %v631 = vld [vmem:[%s246 + $0x30] sm:$0xf]
      %v632 = vld [vmem:[%s246 + $0x34] sm:$0xf]
      %v633 = vld [vmem:[%s246 + $0x38] sm:$0xf]
      %v634 = vld [vmem:[%s246 + $0x3c] sm:$0xf]
      %v635 = vld [vmem:[%s246 + $0x40] sm:$0xf]
      %v636 = vld [vmem:[%s246 + $0x44] sm:$0xf]
      %v637 = vld [vmem:[%s246 + $0x48] sm:$0xf]
      %v638 = vld [vmem:[%s246 + $0x4c] sm:$0xf]
      %v639 = vld [vmem:[%s246 + $0x50] sm:$0xf]
      %v640 = vld [vmem:[%s246 + $0x54] sm:$0xf]
      %v641 = vld [vmem:[%s246 + $0x58] sm:$0xf]
      %v642 = vld [vmem:[%s246 + $0x5c] sm:$0xf]
      %v643 = vld [vmem:[%s246 + $0x60] sm:$0xf]
      %v644 = vld [vmem:[%s246 + $0x64] sm:$0xf]
      %v645 = vld [vmem:[%s246 + $0x68] sm:$0xf]
      %v646 = vld [vmem:[%s246 + $0x6c] sm:$0xf]
      %v647 = vld [vmem:[%s246 + $0x70] sm:$0xf]
      %v648 = vld [vmem:[%s246 + $0x74] sm:$0xf]
      %v649 = vld [vmem:[%s246 + $0x78] sm:$0xf]
      %v650 = vld [vmem:[%s246 + $0x7c] sm:$0xf]
      %v651 = vld [vmem:[%s246 + $0x80] sm:$0xf]
      %v652 = vld [vmem:[%s246 + $0x84] sm:$0xf]
      %v653 = vld [vmem:[%s246 + $0x88] sm:$0xf]
      %v654 = vld [vmem:[%s246 + $0x8c] sm:$0xf]
      %v655 = vld [vmem:[%s246 + $0x90] sm:$0x1]
      %s656 = scalar_lea.vmem %s1, 32
      %v657 = vld [vmem:[%s656] sm:$0xf]
      %v658 = vld [vmem:[%s656 + $0x4] sm:$0xf]
      %v659 = vld [vmem:[%s656 + $0x8] sm:$0xf]
      %v660 = vld [vmem:[%s656 + $0xc] sm:$0xf]
      %v661 = vld [vmem:[%s656 + $0x10] sm:$0xf]
      %v662 = vld [vmem:[%s656 + $0x14] sm:$0xf]
      %v663 = vld [vmem:[%s656 + $0x18] sm:$0xf]
      %v664 = vld [vmem:[%s656 + $0x1c] sm:$0xf]
      %v702 = vunpack.c.l.b16 %v619
      %v703 = vunpack.c.l.b16 %v620
      %v704 = vunpack.c.l.b16 %v621
      %v705 = vunpack.c.l.b16 %v622
      %v706 = vunpack.c.l.b16 %v623
      %v707 = vunpack.c.l.b16 %v624
      %v708 = vunpack.c.l.b16 %v625
      %v709 = vunpack.c.l.b16 %v626
      %v710 = vunpack.c.l.b16 %v627
      %v711 = vunpack.c.l.b16 %v628
      %v712 = vunpack.c.l.b16 %v629
      %v713 = vunpack.c.l.b16 %v630
      %v714 = vunpack.c.l.b16 %v631
      %v715 = vunpack.c.l.b16 %v632
      %v716 = vunpack.c.l.b16 %v633
      %v717 = vunpack.c.l.b16 %v634
      %v718 = vunpack.c.l.b16 %v635
      %v719 = vunpack.c.l.b16 %v636
      %v720 = vunpack.c.l.b16 %v637
      %v721 = vunpack.c.l.b16 %v638
      %v722 = vunpack.c.l.b16 %v639
      %v723 = vunpack.c.l.b16 %v640
      %v724 = vunpack.c.l.b16 %v641
      %v725 = vunpack.c.l.b16 %v642
      %v726 = vunpack.c.l.b16 %v643
      %v727 = vunpack.c.l.b16 %v644
      %v728 = vunpack.c.l.b16 %v645
      %v729 = vunpack.c.l.b16 %v646
      %v730 = vunpack.c.l.b16 %v647
      %v731 = vunpack.c.l.b16 %v648
      %v732 = vunpack.c.l.b16 %v649
      %v733 = vunpack.c.l.b16 %v650
      %v734 = vunpack.c.l.b16 %v651
      %v735 = vunpack.c.l.b16 %v652
      %v736 = vunpack.c.l.b16 %v653
      %v737 = vunpack.c.l.b16 %v654
      %v738 = vunpack.c.l.b16 %v655
      %v739 = vpack.c.b16 %v703, %v702
      %v740 = vpack.c.b16 %v705, %v704
      %v741 = vpack.c.b16 %v707, %v706
      %v742 = vpack.c.b16 %v709, %v708
      %v743 = vpack.c.b16 %v711, %v710
      %v744 = vpack.c.b16 %v713, %v712
      %v745 = vpack.c.b16 %v715, %v714
      %v746 = vpack.c.b16 %v717, %v716
      %v747 = vpack.c.b16 %v719, %v718
      %v748 = vpack.c.b16 %v721, %v720
      %v749 = vpack.c.b16 %v723, %v722
      %v750 = vpack.c.b16 %v725, %v724
      %v751 = vpack.c.b16 %v727, %v726
      %v752 = vpack.c.b16 %v729, %v728
      %v753 = vpack.c.b16 %v731, %v730
      %v754 = vpack.c.b16 %v733, %v732
      %v755 = vpack.c.b16 %v735, %v734
      %v756 = vpack.c.b16 %v737, %v736
      %v757 = vpack.c.b16 %v738, %v738
      %vm758 = vsmask.f32 7424
      %v760 = vshrl.u32 %v739, 16
      %v762 = vshll.u32 %v739, 16
      %v764 = vrot.slane %v762, 1
      %v765 = vor.u32 %v760, %v764
      %v767 = vshll.u32 %v740, 16
      %v769 = vrot.slane %v767, 1
      %v770 = vsel %vm758, %v765, %v769
      %v771 = vshrl.u32 %v740, 16
      %v773 = vor.u32 %v771, %v769
      %v775 = vshll.u32 %v741, 16
      %v777 = vrot.slane %v775, 1
      %v778 = vsel %vm758, %v773, %v777
      %v779 = vshrl.u32 %v741, 16
      %v781 = vor.u32 %v779, %v777
      %v783 = vshll.u32 %v742, 16
      %v785 = vrot.slane %v783, 1
      %v786 = vsel %vm758, %v781, %v785
      %v787 = vshrl.u32 %v742, 16
      %v789 = vor.u32 %v787, %v785
      %v791 = vshll.u32 %v743, 16
      %v793 = vrot.slane %v791, 1
      %v794 = vsel %vm758, %v789, %v793
      %v795 = vshrl.u32 %v743, 16
      %v797 = vor.u32 %v795, %v793
      %v799 = vshll.u32 %v744, 16
      %v801 = vrot.slane %v799, 1
      %v802 = vsel %vm758, %v797, %v801
      %v803 = vshrl.u32 %v744, 16
      %v805 = vor.u32 %v803, %v801
      %v807 = vshll.u32 %v745, 16
      %v809 = vrot.slane %v807, 1
      %v810 = vsel %vm758, %v805, %v809
      %v811 = vshrl.u32 %v745, 16
      %v813 = vor.u32 %v811, %v809
      %v815 = vshll.u32 %v746, 16
      %v817 = vrot.slane %v815, 1
      %v818 = vsel %vm758, %v813, %v817
      %v819 = vshrl.u32 %v746, 16
      %v821 = vor.u32 %v819, %v817
      %v823 = vshll.u32 %v747, 16
      %v825 = vrot.slane %v823, 1
      %v826 = vsel %vm758, %v821, %v825
      %v827 = vshrl.u32 %v747, 16
      %v829 = vor.u32 %v827, %v825
      %v831 = vshll.u32 %v748, 16
      %v833 = vrot.slane %v831, 1
      %v834 = vsel %vm758, %v829, %v833
      %v835 = vshrl.u32 %v748, 16
      %v837 = vor.u32 %v835, %v833
      %v839 = vshll.u32 %v749, 16
      %v841 = vrot.slane %v839, 1
      %v842 = vsel %vm758, %v837, %v841
      %v843 = vshrl.u32 %v749, 16
      %v845 = vor.u32 %v843, %v841
      %v847 = vshll.u32 %v750, 16
      %v849 = vrot.slane %v847, 1
      %v850 = vsel %vm758, %v845, %v849
      %v851 = vshrl.u32 %v750, 16
      %v853 = vor.u32 %v851, %v849
      %v855 = vshll.u32 %v751, 16
      %v857 = vrot.slane %v855, 1
      %v858 = vsel %vm758, %v853, %v857
      %v859 = vshrl.u32 %v751, 16
      %v861 = vor.u32 %v859, %v857
      %v863 = vshll.u32 %v752, 16
      %v865 = vrot.slane %v863, 1
      %v866 = vsel %vm758, %v861, %v865
      %v867 = vshrl.u32 %v752, 16
      %v869 = vor.u32 %v867, %v865
      %v871 = vshll.u32 %v753, 16
      %v873 = vrot.slane %v871, 1
      %v874 = vsel %vm758, %v869, %v873
      %v875 = vshrl.u32 %v753, 16
      %v877 = vor.u32 %v875, %v873
      %v879 = vshll.u32 %v754, 16
      %v881 = vrot.slane %v879, 1
      %v882 = vsel %vm758, %v877, %v881
      %v883 = vshrl.u32 %v754, 16
      %v885 = vor.u32 %v883, %v881
      %v887 = vshll.u32 %v755, 16
      %v889 = vrot.slane %v887, 1
      %v890 = vsel %vm758, %v885, %v889
      %v891 = vshrl.u32 %v755, 16
      %v893 = vor.u32 %v891, %v889
      %v895 = vshll.u32 %v756, 16
      %v897 = vrot.slane %v895, 1
      %v898 = vsel %vm758, %v893, %v897
      %v899 = vshrl.u32 %v756, 16
      %v901 = vor.u32 %v899, %v897
      %v903 = vshll.u32 %v757, 16
      %v905 = vrot.slane %v903, 1
      %v906 = vsel %vm758, %v901, %v905
      %v915 = vunpack.c.l.b16 %v657
      %v916 = vunpack.c.l.b16 %v658
      %v917 = vunpack.c.l.b16 %v659
      %v918 = vunpack.c.l.b16 %v660
      %v919 = vunpack.c.l.b16 %v661
      %v920 = vunpack.c.l.b16 %v662
      %v921 = vunpack.c.l.b16 %v663
      %v922 = vunpack.c.l.b16 %v664
      %v923 = vpack.c.b16 %v916, %v915
      %v924 = vpack.c.b16 %v918, %v917
      %v925 = vpack.c.b16 %v920, %v919
      %v926 = vpack.c.b16 %v922, %v921
      %v932 = vsel %vm429, %v770, 0
      %v935 = vsel %vm429, %v778, 0
      %v938 = vsel %vm429, %v786, 0
      %v941 = vsel %vm429, %v794, 0
      %v944 = vsel %vm429, %v802, 0
      %v947 = vsel %vm429, %v810, 0
      %v950 = vsel %vm429, %v818, 0
      %v953 = vsel %vm429, %v826, 0
      %v956 = vsel %vm429, %v834, 0
      %v959 = vsel %vm429, %v842, 0
      %v962 = vsel %vm429, %v850, 0
      %v965 = vsel %vm429, %v858, 0
      %v968 = vsel %vm429, %v866, 0
      %v971 = vsel %vm429, %v874, 0
      %v974 = vsel %vm429, %v882, 0
      %v977 = vsel %vm429, %v890, 0
      %v980 = vsel %vm429, %v898, 0
      %v983 = vsel %vm429, %v906, 0
      %985 = vmatpush.bf16.msra.mxu0 0
      %986 = vmatpush.bf16.msra.mxu0 0
      %987 = vmatpush.bf16.msra.mxu0 0
      %988 = vmatpush.bf16.msra.mxu0 0
      %989 = vmatpush.bf16.msra.mxu0 %v926
      %990 = vmatpush.bf16.msra.mxu0 %v925
      %991 = vmatpush.bf16.msra.mxu0 %v924
      %992 = vmatpush.bf16.msra.mxu0 %v923
      %993 = vmatmul.bf16.gmra.mxu0 %v932
      %v994 = vpop.f32.mrf.mxu0
      %v995 = vadd.f32 0.0, %v994
      %v996 = vpop.f32.mrf.mxu0
      %v997 = vadd.f32 0.0, %v996
      %998 = vmatmul.bf16.gmra.mxu0 %v935
      %v999 = vpop.f32.mrf.mxu0
      %v1000 = vadd.f32 0.0, %v999
      %v1001 = vpop.f32.mrf.mxu0
      %v1002 = vadd.f32 0.0, %v1001
      %1003 = vmatmul.bf16.gmra.mxu0 %v938
      %v1004 = vpop.f32.mrf.mxu0
      %v1005 = vadd.f32 0.0, %v1004
      %v1006 = vpop.f32.mrf.mxu0
      %v1007 = vadd.f32 0.0, %v1006
      %1008 = vmatmul.bf16.gmra.mxu0 %v941
      %v1009 = vpop.f32.mrf.mxu0
      %v1010 = vadd.f32 0.0, %v1009
      %v1011 = vpop.f32.mrf.mxu0
      %v1012 = vadd.f32 0.0, %v1011
      %1013 = vmatmul.bf16.gmra.mxu0 %v944
      %v1014 = vpop.f32.mrf.mxu0
      %v1015 = vadd.f32 0.0, %v1014
      %v1016 = vpop.f32.mrf.mxu0
      %v1017 = vadd.f32 0.0, %v1016
      %1018 = vmatmul.bf16.gmra.mxu0 %v947
      %v1019 = vpop.f32.mrf.mxu0
      %v1020 = vadd.f32 0.0, %v1019
      %v1021 = vpop.f32.mrf.mxu0
      %v1022 = vadd.f32 0.0, %v1021
      %1023 = vmatmul.bf16.gmra.mxu0 %v950
      %v1024 = vpop.f32.mrf.mxu0
      %v1025 = vadd.f32 0.0, %v1024
      %v1026 = vpop.f32.mrf.mxu0
      %v1027 = vadd.f32 0.0, %v1026
      %1028 = vmatmul.bf16.gmra.mxu0 %v953
      %v1029 = vpop.f32.mrf.mxu0
      %v1030 = vadd.f32 0.0, %v1029
      %v1031 = vpop.f32.mrf.mxu0
      %v1032 = vadd.f32 0.0, %v1031
      %1033 = vmatmul.bf16.gmra.mxu0 %v956
      %v1034 = vpop.f32.mrf.mxu0
      %v1035 = vadd.f32 0.0, %v1034
      %v1036 = vpop.f32.mrf.mxu0
      %v1037 = vadd.f32 0.0, %v1036
      %1038 = vmatmul.bf16.gmra.mxu0 %v959
      %v1039 = vpop.f32.mrf.mxu0
      %v1040 = vadd.f32 0.0, %v1039
      %v1041 = vpop.f32.mrf.mxu0
      %v1042 = vadd.f32 0.0, %v1041
      %1043 = vmatmul.bf16.gmra.mxu0 %v962
      %v1044 = vpop.f32.mrf.mxu0
      %v1045 = vadd.f32 0.0, %v1044
      %v1046 = vpop.f32.mrf.mxu0
      %v1047 = vadd.f32 0.0, %v1046
      %1048 = vmatmul.bf16.gmra.mxu0 %v965
      %v1049 = vpop.f32.mrf.mxu0
      %v1050 = vadd.f32 0.0, %v1049
      %v1051 = vpop.f32.mrf.mxu0
      %v1052 = vadd.f32 0.0, %v1051
      %1053 = vmatmul.bf16.gmra.mxu0 %v968
      %v1054 = vpop.f32.mrf.mxu0
      %v1055 = vadd.f32 0.0, %v1054
      %v1056 = vpop.f32.mrf.mxu0
      %v1057 = vadd.f32 0.0, %v1056
      %1058 = vmatmul.bf16.gmra.mxu0 %v971
      %v1059 = vpop.f32.mrf.mxu0
      %v1060 = vadd.f32 0.0, %v1059
      %v1061 = vpop.f32.mrf.mxu0
      %v1062 = vadd.f32 0.0, %v1061
      %1063 = vmatmul.bf16.gmra.mxu0 %v974
      %v1064 = vpop.f32.mrf.mxu0
      %v1065 = vadd.f32 0.0, %v1064
      %v1066 = vpop.f32.mrf.mxu0
      %v1067 = vadd.f32 0.0, %v1066
      %1068 = vmatmul.bf16.gmra.mxu0 %v977
      %v1069 = vpop.f32.mrf.mxu0
      %v1070 = vadd.f32 0.0, %v1069
      %v1071 = vpop.f32.mrf.mxu0
      %v1072 = vadd.f32 0.0, %v1071
      %1073 = vmatmul.bf16.gmra.mxu0 %v980
      %v1074 = vpop.f32.mrf.mxu0
      %v1075 = vadd.f32 0.0, %v1074
      %v1076 = vpop.f32.mrf.mxu0
      %v1077 = vadd.f32 0.0, %v1076
      %1078 = vmatmul.bf16.gmra.mxu0 %v983
      %v1079 = vpop.f32.mrf.mxu0
      %v1080 = vadd.f32 0.0, %v1079
      %v1081 = vpop.f32.mrf.mxu0
      %v1082 = vadd.f32 0.0, %v1081
      %1083 = vdwg.mxu0
      %v1084 = vadd.f32 %v583, %v995
      %v1085 = vadd.f32 %v584, %v997
      %v1086 = vadd.f32 %v585, %v1000
      %v1087 = vadd.f32 %v586, %v1002
      %v1088 = vadd.f32 %v587, %v1005
      %v1089 = vadd.f32 %v588, %v1007
      %v1090 = vadd.f32 %v589, %v1010
      %v1091 = vadd.f32 %v590, %v1012
      %v1092 = vadd.f32 %v591, %v1015
      %v1093 = vadd.f32 %v592, %v1017
      %v1094 = vadd.f32 %v593, %v1020
      %v1095 = vadd.f32 %v594, %v1022
      %v1096 = vadd.f32 %v595, %v1025
      %v1097 = vadd.f32 %v596, %v1027
      %v1098 = vadd.f32 %v597, %v1030
      %v1099 = vadd.f32 %v598, %v1032
      %v1100 = vadd.f32 %v599, %v1035
      %v1101 = vadd.f32 %v600, %v1037
      %v1102 = vadd.f32 %v601, %v1040
      %v1103 = vadd.f32 %v602, %v1042
      %v1104 = vadd.f32 %v603, %v1045
      %v1105 = vadd.f32 %v604, %v1047
      %v1106 = vadd.f32 %v605, %v1050
      %v1107 = vadd.f32 %v606, %v1052
      %v1108 = vadd.f32 %v607, %v1055
      %v1109 = vadd.f32 %v608, %v1057
      %v1110 = vadd.f32 %v609, %v1060
      %v1111 = vadd.f32 %v610, %v1062
      %v1112 = vadd.f32 %v611, %v1065
      %v1113 = vadd.f32 %v612, %v1067
      %v1114 = vadd.f32 %v613, %v1070
      %v1115 = vadd.f32 %v614, %v1072
      %v1116 = vadd.f32 %v615, %v1075
      %v1117 = vadd.f32 %v616, %v1077
      %v1118 = vadd.f32 %v617, %v1080
      %v1119 = vadd.f32 %v618, %v1082
      %v1120 = vld [vmem:[%s246] sm:$0xe]
      %s1121 = scalar_lea.vmem %s1, 64
      %v1122 = vld [vmem:[%s1121] sm:$0xf]
      %v1123 = vld [vmem:[%s1121 + $0x4] sm:$0xf]
      %v1124 = vld [vmem:[%s1121 + $0x8] sm:$0xf]
      %v1125 = vld [vmem:[%s1121 + $0xc] sm:$0xf]
      %v1126 = vld [vmem:[%s1121 + $0x10] sm:$0xf]
      %v1127 = vld [vmem:[%s1121 + $0x14] sm:$0xf]
      %v1128 = vld [vmem:[%s1121 + $0x18] sm:$0xf]
      %v1129 = vld [vmem:[%s1121 + $0x1c] sm:$0xf]
      %v1131 = vunpack.c.l.b16 %v1120
      %v1132 = vpack.c.b16 %v703, %v1131
      %vm1133 = vcmask 1046528
      %v1134 = vrot.slane %v1132, 1
      %v1135 = vrot.slane %v740, 1
      %v1136 = vsel %vm1133, %v1134, %v1135
      %v1137 = vrot.slane %v741, 1
      %v1138 = vsel %vm1133, %v1135, %v1137
      %v1139 = vrot.slane %v742, 1
      %v1140 = vsel %vm1133, %v1137, %v1139
      %v1141 = vrot.slane %v743, 1
      %v1142 = vsel %vm1133, %v1139, %v1141
      %v1143 = vrot.slane %v744, 1
      %v1144 = vsel %vm1133, %v1141, %v1143
      %v1145 = vrot.slane %v745, 1
      %v1146 = vsel %vm1133, %v1143, %v1145
      %v1147 = vrot.slane %v746, 1
      %v1148 = vsel %vm1133, %v1145, %v1147
      %v1149 = vrot.slane %v747, 1
      %v1150 = vsel %vm1133, %v1147, %v1149
      %v1151 = vrot.slane %v748, 1
      %v1152 = vsel %vm1133, %v1149, %v1151
      %v1153 = vrot.slane %v749, 1
      %v1154 = vsel %vm1133, %v1151, %v1153
      %v1155 = vrot.slane %v750, 1
      %v1156 = vsel %vm1133, %v1153, %v1155
      %v1157 = vrot.slane %v751, 1
      %v1158 = vsel %vm1133, %v1155, %v1157
      %v1159 = vrot.slane %v752, 1
      %v1160 = vsel %vm1133, %v1157, %v1159
      %v1161 = vrot.slane %v753, 1
      %v1162 = vsel %vm1133, %v1159, %v1161
      %v1163 = vrot.slane %v754, 1
      %v1164 = vsel %vm1133, %v1161, %v1163
      %v1165 = vrot.slane %v755, 1
      %v1166 = vsel %vm1133, %v1163, %v1165
      %v1167 = vrot.slane %v756, 1
      %v1168 = vsel %vm1133, %v1165, %v1167
      %v1169 = vrot.slane %v757, 1
      %v1170 = vsel %vm1133, %v1167, %v1169
      %v1179 = vunpack.c.l.b16 %v1122
      %v1180 = vunpack.c.l.b16 %v1123
      %v1181 = vunpack.c.l.b16 %v1124
      %v1182 = vunpack.c.l.b16 %v1125
      %v1183 = vunpack.c.l.b16 %v1126
      %v1184 = vunpack.c.l.b16 %v1127
      %v1185 = vunpack.c.l.b16 %v1128
      %v1186 = vunpack.c.l.b16 %v1129
      %v1187 = vpack.c.b16 %v1180, %v1179
      %v1188 = vpack.c.b16 %v1182, %v1181
      %v1189 = vpack.c.b16 %v1184, %v1183
      %v1190 = vpack.c.b16 %v1186, %v1185
      %v1196 = vsel %vm429, %v1136, 0
      %v1199 = vsel %vm429, %v1138, 0
      %v1202 = vsel %vm429, %v1140, 0
      %v1205 = vsel %vm429, %v1142, 0
      %v1208 = vsel %vm429, %v1144, 0
      %v1211 = vsel %vm429, %v1146, 0
      %v1214 = vsel %vm429, %v1148, 0
      %v1217 = vsel %vm429, %v1150, 0
      %v1220 = vsel %vm429, %v1152, 0
      %v1223 = vsel %vm429, %v1154, 0
      %v1226 = vsel %vm429, %v1156, 0
      %v1229 = vsel %vm429, %v1158, 0
      %v1232 = vsel %vm429, %v1160, 0
      %v1235 = vsel %vm429, %v1162, 0
      %v1238 = vsel %vm429, %v1164, 0
      %v1241 = vsel %vm429, %v1166, 0
      %v1244 = vsel %vm429, %v1168, 0
      %v1247 = vsel %vm429, %v1170, 0
      %1249 = vmatpush.bf16.msra.mxu0 0
      %1250 = vmatpush.bf16.msra.mxu0 0
      %1251 = vmatpush.bf16.msra.mxu0 0
      %1252 = vmatpush.bf16.msra.mxu0 0
      %1253 = vmatpush.bf16.msra.mxu0 %v1190
      %1254 = vmatpush.bf16.msra.mxu0 %v1189
      %1255 = vmatpush.bf16.msra.mxu0 %v1188
      %1256 = vmatpush.bf16.msra.mxu0 %v1187
      %1257 = vmatmul.bf16.gmra.mxu0 %v1196
      %v1258 = vpop.f32.mrf.mxu0
      %v1259 = vadd.f32 0.0, %v1258
      %v1260 = vpop.f32.mrf.mxu0
      %v1261 = vadd.f32 0.0, %v1260
      %1262 = vmatmul.bf16.gmra.mxu0 %v1199
      %v1263 = vpop.f32.mrf.mxu0
      %v1264 = vadd.f32 0.0, %v1263
      %v1265 = vpop.f32.mrf.mxu0
      %v1266 = vadd.f32 0.0, %v1265
      %1267 = vmatmul.bf16.gmra.mxu0 %v1202
      %v1268 = vpop.f32.mrf.mxu0
      %v1269 = vadd.f32 0.0, %v1268
      %v1270 = vpop.f32.mrf.mxu0
      %v1271 = vadd.f32 0.0, %v1270
      %1272 = vmatmul.bf16.gmra.mxu0 %v1205
      %v1273 = vpop.f32.mrf.mxu0
      %v1274 = vadd.f32 0.0, %v1273
      %v1275 = vpop.f32.mrf.mxu0
      %v1276 = vadd.f32 0.0, %v1275
      %1277 = vmatmul.bf16.gmra.mxu0 %v1208
      %v1278 = vpop.f32.mrf.mxu0
      %v1279 = vadd.f32 0.0, %v1278
      %v1280 = vpop.f32.mrf.mxu0
      %v1281 = vadd.f32 0.0, %v1280
      %1282 = vmatmul.bf16.gmra.mxu0 %v1211
      %v1283 = vpop.f32.mrf.mxu0
      %v1284 = vadd.f32 0.0, %v1283
      %v1285 = vpop.f32.mrf.mxu0
      %v1286 = vadd.f32 0.0, %v1285
      %1287 = vmatmul.bf16.gmra.mxu0 %v1214
      %v1288 = vpop.f32.mrf.mxu0
      %v1289 = vadd.f32 0.0, %v1288
      %v1290 = vpop.f32.mrf.mxu0
      %v1291 = vadd.f32 0.0, %v1290
      %1292 = vmatmul.bf16.gmra.mxu0 %v1217
      %v1293 = vpop.f32.mrf.mxu0
      %v1294 = vadd.f32 0.0, %v1293
      %v1295 = vpop.f32.mrf.mxu0
      %v1296 = vadd.f32 0.0, %v1295
      %1297 = vmatmul.bf16.gmra.mxu0 %v1220
      %v1298 = vpop.f32.mrf.mxu0
      %v1299 = vadd.f32 0.0, %v1298
      %v1300 = vpop.f32.mrf.mxu0
      %v1301 = vadd.f32 0.0, %v1300
      %1302 = vmatmul.bf16.gmra.mxu0 %v1223
      %v1303 = vpop.f32.mrf.mxu0
      %v1304 = vadd.f32 0.0, %v1303
      %v1305 = vpop.f32.mrf.mxu0
      %v1306 = vadd.f32 0.0, %v1305
      %1307 = vmatmul.bf16.gmra.mxu0 %v1226
      %v1308 = vpop.f32.mrf.mxu0
      %v1309 = vadd.f32 0.0, %v1308
      %v1310 = vpop.f32.mrf.mxu0
      %v1311 = vadd.f32 0.0, %v1310
      %1312 = vmatmul.bf16.gmra.mxu0 %v1229
      %v1313 = vpop.f32.mrf.mxu0
      %v1314 = vadd.f32 0.0, %v1313
      %v1315 = vpop.f32.mrf.mxu0
      %v1316 = vadd.f32 0.0, %v1315
      %1317 = vmatmul.bf16.gmra.mxu0 %v1232
      %v1318 = vpop.f32.mrf.mxu0
      %v1319 = vadd.f32 0.0, %v1318
      %v1320 = vpop.f32.mrf.mxu0
      %v1321 = vadd.f32 0.0, %v1320
      %1322 = vmatmul.bf16.gmra.mxu0 %v1235
      %v1323 = vpop.f32.mrf.mxu0
      %v1324 = vadd.f32 0.0, %v1323
      %v1325 = vpop.f32.mrf.mxu0
      %v1326 = vadd.f32 0.0, %v1325
      %1327 = vmatmul.bf16.gmra.mxu0 %v1238
      %v1328 = vpop.f32.mrf.mxu0
      %v1329 = vadd.f32 0.0, %v1328
      %v1330 = vpop.f32.mrf.mxu0
      %v1331 = vadd.f32 0.0, %v1330
      %1332 = vmatmul.bf16.gmra.mxu0 %v1241
      %v1333 = vpop.f32.mrf.mxu0
      %v1334 = vadd.f32 0.0, %v1333
      %v1335 = vpop.f32.mrf.mxu0
      %v1336 = vadd.f32 0.0, %v1335
      %1337 = vmatmul.bf16.gmra.mxu0 %v1244
      %v1338 = vpop.f32.mrf.mxu0
      %v1339 = vadd.f32 0.0, %v1338
      %v1340 = vpop.f32.mrf.mxu0
      %v1341 = vadd.f32 0.0, %v1340
      %1342 = vmatmul.bf16.gmra.mxu0 %v1247
      %v1343 = vpop.f32.mrf.mxu0
      %v1344 = vadd.f32 0.0, %v1343
      %v1345 = vpop.f32.mrf.mxu0
      %v1346 = vadd.f32 0.0, %v1345
      %1347 = vdwg.mxu0
      %v1348 = vadd.f32 %v1084, %v1259
      %v1349 = vadd.f32 %v1085, %v1261
      %v1350 = vadd.f32 %v1086, %v1264
      %v1351 = vadd.f32 %v1087, %v1266
      %v1352 = vadd.f32 %v1088, %v1269
      %v1353 = vadd.f32 %v1089, %v1271
      %v1354 = vadd.f32 %v1090, %v1274
      %v1355 = vadd.f32 %v1091, %v1276
      %v1356 = vadd.f32 %v1092, %v1279
      %v1357 = vadd.f32 %v1093, %v1281
      %v1358 = vadd.f32 %v1094, %v1284
      %v1359 = vadd.f32 %v1095, %v1286
      %v1360 = vadd.f32 %v1096, %v1289
      %v1361 = vadd.f32 %v1097, %v1291
      %v1362 = vadd.f32 %v1098, %v1294
      %v1363 = vadd.f32 %v1099, %v1296
      %v1364 = vadd.f32 %v1100, %v1299
      %v1365 = vadd.f32 %v1101, %v1301
      %v1366 = vadd.f32 %v1102, %v1304
      %v1367 = vadd.f32 %v1103, %v1306
      %v1368 = vadd.f32 %v1104, %v1309
      %v1369 = vadd.f32 %v1105, %v1311
      %v1370 = vadd.f32 %v1106, %v1314
      %v1371 = vadd.f32 %v1107, %v1316
      %v1372 = vadd.f32 %v1108, %v1319
      %v1373 = vadd.f32 %v1109, %v1321
      %v1374 = vadd.f32 %v1110, %v1324
      %v1375 = vadd.f32 %v1111, %v1326
      %v1376 = vadd.f32 %v1112, %v1329
      %v1377 = vadd.f32 %v1113, %v1331
      %v1378 = vadd.f32 %v1114, %v1334
      %v1379 = vadd.f32 %v1115, %v1336
      %v1380 = vadd.f32 %v1116, %v1339
      %v1381 = vadd.f32 %v1117, %v1341
      %v1382 = vadd.f32 %v1118, %v1344
      %v1383 = vadd.f32 %v1119, %v1346
      %v1384 = vld [vmem:[%s246 + $0x8] sm:$0xe]
      %v1385 = vld [vmem:[%s246 + $0xc] sm:$0xf]
      %v1386 = vld [vmem:[%s246 + $0x10] sm:$0xf]
      %v1387 = vld [vmem:[%s246 + $0x14] sm:$0xf]
      %v1388 = vld [vmem:[%s246 + $0x18] sm:$0xf]
      %v1389 = vld [vmem:[%s246 + $0x1c] sm:$0xf]
      %v1390 = vld [vmem:[%s246 + $0x20] sm:$0xf]
      %v1391 = vld [vmem:[%s246 + $0x24] sm:$0xf]
      %v1392 = vld [vmem:[%s246 + $0x28] sm:$0xf]
      %v1393 = vld [vmem:[%s246 + $0x2c] sm:$0xf]
      %v1394 = vld [vmem:[%s246 + $0x30] sm:$0xf]
      %v1395 = vld [vmem:[%s246 + $0x34] sm:$0xf]
      %v1396 = vld [vmem:[%s246 + $0x38] sm:$0xf]
      %v1397 = vld [vmem:[%s246 + $0x3c] sm:$0xf]
      %v1398 = vld [vmem:[%s246 + $0x40] sm:$0xf]
      %v1399 = vld [vmem:[%s246 + $0x44] sm:$0xf]
      %v1400 = vld [vmem:[%s246 + $0x48] sm:$0xf]
      %v1401 = vld [vmem:[%s246 + $0x4c] sm:$0xf]
      %v1402 = vld [vmem:[%s246 + $0x50] sm:$0xf]
      %v1403 = vld [vmem:[%s246 + $0x54] sm:$0xf]
      %v1404 = vld [vmem:[%s246 + $0x58] sm:$0xf]
      %v1405 = vld [vmem:[%s246 + $0x5c] sm:$0xf]
      %v1406 = vld [vmem:[%s246 + $0x60] sm:$0xf]
      %v1407 = vld [vmem:[%s246 + $0x64] sm:$0xf]
      %v1408 = vld [vmem:[%s246 + $0x68] sm:$0xf]
      %v1409 = vld [vmem:[%s246 + $0x6c] sm:$0xf]
      %v1410 = vld [vmem:[%s246 + $0x70] sm:$0xf]
      %v1411 = vld [vmem:[%s246 + $0x74] sm:$0xf]
      %v1412 = vld [vmem:[%s246 + $0x78] sm:$0xf]
      %v1413 = vld [vmem:[%s246 + $0x7c] sm:$0xf]
      %v1414 = vld [vmem:[%s246 + $0x80] sm:$0xf]
      %v1415 = vld [vmem:[%s246 + $0x84] sm:$0xf]
      %v1416 = vld [vmem:[%s246 + $0x88] sm:$0xf]
      %v1417 = vld [vmem:[%s246 + $0x8c] sm:$0xf]
      %v1418 = vld [vmem:[%s246 + $0x90] sm:$0xf]
      %v1419 = vld [vmem:[%s246 + $0x94] sm:$0xf]
      %v1420 = vld [vmem:[%s246 + $0x98] sm:$0x1]
      %s1421 = scalar_lea.vmem %s1, 96
      %v1422 = vld [vmem:[%s1421] sm:$0xf]
      %v1423 = vld [vmem:[%s1421 + $0x4] sm:$0xf]
      %v1424 = vld [vmem:[%s1421 + $0x8] sm:$0xf]
      %v1425 = vld [vmem:[%s1421 + $0xc] sm:$0xf]
      %v1426 = vld [vmem:[%s1421 + $0x10] sm:$0xf]
      %v1427 = vld [vmem:[%s1421 + $0x14] sm:$0xf]
      %v1428 = vld [vmem:[%s1421 + $0x18] sm:$0xf]
      %v1429 = vld [vmem:[%s1421 + $0x1c] sm:$0xf]
      %v1467 = vunpack.c.l.b16 %v1384
      %v1468 = vunpack.c.l.b16 %v1385
      %v1469 = vunpack.c.l.b16 %v1386
      %v1470 = vunpack.c.l.b16 %v1387
      %v1471 = vunpack.c.l.b16 %v1388
      %v1472 = vunpack.c.l.b16 %v1389
      %v1473 = vunpack.c.l.b16 %v1390
      %v1474 = vunpack.c.l.b16 %v1391
      %v1475 = vunpack.c.l.b16 %v1392
      %v1476 = vunpack.c.l.b16 %v1393
      %v1477 = vunpack.c.l.b16 %v1394
      %v1478 = vunpack.c.l.b16 %v1395
      %v1479 = vunpack.c.l.b16 %v1396
      %v1480 = vunpack.c.l.b16 %v1397
      %v1481 = vunpack.c.l.b16 %v1398
      %v1482 = vunpack.c.l.b16 %v1399
      %v1483 = vunpack.c.l.b16 %v1400
      %v1484 = vunpack.c.l.b16 %v1401
      %v1485 = vunpack.c.l.b16 %v1402
      %v1486 = vunpack.c.l.b16 %v1403
      %v1487 = vunpack.c.l.b16 %v1404
      %v1488 = vunpack.c.l.b16 %v1405
      %v1489 = vunpack.c.l.b16 %v1406
      %v1490 = vunpack.c.l.b16 %v1407
      %v1491 = vunpack.c.l.b16 %v1408
      %v1492 = vunpack.c.l.b16 %v1409
      %v1493 = vunpack.c.l.b16 %v1410
      %v1494 = vunpack.c.l.b16 %v1411
      %v1495 = vunpack.c.l.b16 %v1412
      %v1496 = vunpack.c.l.b16 %v1413
      %v1497 = vunpack.c.l.b16 %v1414
      %v1498 = vunpack.c.l.b16 %v1415
      %v1499 = vunpack.c.l.b16 %v1416
      %v1500 = vunpack.c.l.b16 %v1417
      %v1501 = vunpack.c.l.b16 %v1418
      %v1502 = vunpack.c.l.b16 %v1419
      %v1503 = vunpack.c.l.b16 %v1420
      %v1504 = vpack.c.b16 %v1468, %v1467
      %v1505 = vpack.c.b16 %v1470, %v1469
      %v1506 = vpack.c.b16 %v1472, %v1471
      %v1507 = vpack.c.b16 %v1474, %v1473
      %v1508 = vpack.c.b16 %v1476, %v1475
      %v1509 = vpack.c.b16 %v1478, %v1477
      %v1510 = vpack.c.b16 %v1480, %v1479
      %v1511 = vpack.c.b16 %v1482, %v1481
      %v1512 = vpack.c.b16 %v1484, %v1483
      %v1513 = vpack.c.b16 %v1486, %v1485
      %v1514 = vpack.c.b16 %v1488, %v1487
      %v1515 = vpack.c.b16 %v1490, %v1489
      %v1516 = vpack.c.b16 %v1492, %v1491
      %v1517 = vpack.c.b16 %v1494, %v1493
      %v1518 = vpack.c.b16 %v1496, %v1495
      %v1519 = vpack.c.b16 %v1498, %v1497
      %v1520 = vpack.c.b16 %v1500, %v1499
      %v1521 = vpack.c.b16 %v1502, %v1501
      %v1522 = vpack.c.b16 %v1503, %v1503
      %v1523 = vrot.slane %v1504, 1
      %v1524 = vrot.slane %v1505, 1
      %v1525 = vsel %vm1133, %v1523, %v1524
      %v1526 = vrot.slane %v1506, 1
      %v1527 = vsel %vm1133, %v1524, %v1526
      %v1528 = vrot.slane %v1507, 1
      %v1529 = vsel %vm1133, %v1526, %v1528
      %v1530 = vrot.slane %v1508, 1
      %v1531 = vsel %vm1133, %v1528, %v1530
      %v1532 = vrot.slane %v1509, 1
      %v1533 = vsel %vm1133, %v1530, %v1532
      %v1534 = vrot.slane %v1510, 1
      %v1535 = vsel %vm1133, %v1532, %v1534
      %v1536 = vrot.slane %v1511, 1
      %v1537 = vsel %vm1133, %v1534, %v1536
      %v1538 = vrot.slane %v1512, 1
      %v1539 = vsel %vm1133, %v1536, %v1538
      %v1540 = vrot.slane %v1513, 1
      %v1541 = vsel %vm1133, %v1538, %v1540
      %v1542 = vrot.slane %v1514, 1
      %v1543 = vsel %vm1133, %v1540, %v1542
      %v1544 = vrot.slane %v1515, 1
      %v1545 = vsel %vm1133, %v1542, %v1544
      %v1546 = vrot.slane %v1516, 1
      %v1547 = vsel %vm1133, %v1544, %v1546
      %v1548 = vrot.slane %v1517, 1
      %v1549 = vsel %vm1133, %v1546, %v1548
      %v1550 = vrot.slane %v1518, 1
      %v1551 = vsel %vm1133, %v1548, %v1550
      %v1552 = vrot.slane %v1519, 1
      %v1553 = vsel %vm1133, %v1550, %v1552
      %v1554 = vrot.slane %v1520, 1
      %v1555 = vsel %vm1133, %v1552, %v1554
      %v1556 = vrot.slane %v1521, 1
      %v1557 = vsel %vm1133, %v1554, %v1556
      %v1558 = vrot.slane %v1522, 1
      %v1559 = vsel %vm1133, %v1556, %v1558
      %v1568 = vunpack.c.l.b16 %v1422
      %v1569 = vunpack.c.l.b16 %v1423
      %v1570 = vunpack.c.l.b16 %v1424
      %v1571 = vunpack.c.l.b16 %v1425
      %v1572 = vunpack.c.l.b16 %v1426
      %v1573 = vunpack.c.l.b16 %v1427
      %v1574 = vunpack.c.l.b16 %v1428
      %v1575 = vunpack.c.l.b16 %v1429
      %v1576 = vpack.c.b16 %v1569, %v1568
      %v1577 = vpack.c.b16 %v1571, %v1570
      %v1578 = vpack.c.b16 %v1573, %v1572
      %v1579 = vpack.c.b16 %v1575, %v1574
      %v1585 = vsel %vm429, %v1525, 0
      %v1588 = vsel %vm429, %v1527, 0
      %v1591 = vsel %vm429, %v1529, 0
      %v1594 = vsel %vm429, %v1531, 0
      %v1597 = vsel %vm429, %v1533, 0
      %v1600 = vsel %vm429, %v1535, 0
      %v1603 = vsel %vm429, %v1537, 0
      %v1606 = vsel %vm429, %v1539, 0
      %v1609 = vsel %vm429, %v1541, 0
      %v1612 = vsel %vm429, %v1543, 0
      %v1615 = vsel %vm429, %v1545, 0
      %v1618 = vsel %vm429, %v1547, 0
      %v1621 = vsel %vm429, %v1549, 0
      %v1624 = vsel %vm429, %v1551, 0
      %v1627 = vsel %vm429, %v1553, 0
      %v1630 = vsel %vm429, %v1555, 0
      %v1633 = vsel %vm429, %v1557, 0
      %v1636 = vsel %vm429, %v1559, 0
      %1638 = vmatpush.bf16.msra.mxu0 0
      %1639 = vmatpush.bf16.msra.mxu0 0
      %1640 = vmatpush.bf16.msra.mxu0 0
      %1641 = vmatpush.bf16.msra.mxu0 0
      %1642 = vmatpush.bf16.msra.mxu0 %v1579
      %1643 = vmatpush.bf16.msra.mxu0 %v1578
      %1644 = vmatpush.bf16.msra.mxu0 %v1577
      %1645 = vmatpush.bf16.msra.mxu0 %v1576
      %1646 = vmatmul.bf16.gmra.mxu0 %v1585
      %v1647 = vpop.f32.mrf.mxu0
      %v1648 = vadd.f32 0.0, %v1647
      %v1649 = vpop.f32.mrf.mxu0
      %v1650 = vadd.f32 0.0, %v1649
      %1651 = vmatmul.bf16.gmra.mxu0 %v1588
      %v1652 = vpop.f32.mrf.mxu0
      %v1653 = vadd.f32 0.0, %v1652
      %v1654 = vpop.f32.mrf.mxu0
      %v1655 = vadd.f32 0.0, %v1654
      %1656 = vmatmul.bf16.gmra.mxu0 %v1591
      %v1657 = vpop.f32.mrf.mxu0
      %v1658 = vadd.f32 0.0, %v1657
      %v1659 = vpop.f32.mrf.mxu0
      %v1660 = vadd.f32 0.0, %v1659
      %1661 = vmatmul.bf16.gmra.mxu0 %v1594
      %v1662 = vpop.f32.mrf.mxu0
      %v1663 = vadd.f32 0.0, %v1662
      %v1664 = vpop.f32.mrf.mxu0
      %v1665 = vadd.f32 0.0, %v1664
      %1666 = vmatmul.bf16.gmra.mxu0 %v1597
      %v1667 = vpop.f32.mrf.mxu0
      %v1668 = vadd.f32 0.0, %v1667
      %v1669 = vpop.f32.mrf.mxu0
      %v1670 = vadd.f32 0.0, %v1669
      %1671 = vmatmul.bf16.gmra.mxu0 %v1600
      %v1672 = vpop.f32.mrf.mxu0
      %v1673 = vadd.f32 0.0, %v1672
      %v1674 = vpop.f32.mrf.mxu0
      %v1675 = vadd.f32 0.0, %v1674
      %1676 = vmatmul.bf16.gmra.mxu0 %v1603
      %v1677 = vpop.f32.mrf.mxu0
      %v1678 = vadd.f32 0.0, %v1677
      %v1679 = vpop.f32.mrf.mxu0
      %v1680 = vadd.f32 0.0, %v1679
      %1681 = vmatmul.bf16.gmra.mxu0 %v1606
      %v1682 = vpop.f32.mrf.mxu0
      %v1683 = vadd.f32 0.0, %v1682
      %v1684 = vpop.f32.mrf.mxu0
      %v1685 = vadd.f32 0.0, %v1684
      %1686 = vmatmul.bf16.gmra.mxu0 %v1609
      %v1687 = vpop.f32.mrf.mxu0
      %v1688 = vadd.f32 0.0, %v1687
      %v1689 = vpop.f32.mrf.mxu0
      %v1690 = vadd.f32 0.0, %v1689
      %1691 = vmatmul.bf16.gmra.mxu0 %v1612
      %v1692 = vpop.f32.mrf.mxu0
      %v1693 = vadd.f32 0.0, %v1692
      %v1694 = vpop.f32.mrf.mxu0
      %v1695 = vadd.f32 0.0, %v1694
      %1696 = vmatmul.bf16.gmra.mxu0 %v1615
      %v1697 = vpop.f32.mrf.mxu0
      %v1698 = vadd.f32 0.0, %v1697
      %v1699 = vpop.f32.mrf.mxu0
      %v1700 = vadd.f32 0.0, %v1699
      %1701 = vmatmul.bf16.gmra.mxu0 %v1618
      %v1702 = vpop.f32.mrf.mxu0
      %v1703 = vadd.f32 0.0, %v1702
      %v1704 = vpop.f32.mrf.mxu0
      %v1705 = vadd.f32 0.0, %v1704
      %1706 = vmatmul.bf16.gmra.mxu0 %v1621
      %v1707 = vpop.f32.mrf.mxu0
      %v1708 = vadd.f32 0.0, %v1707
      %v1709 = vpop.f32.mrf.mxu0
      %v1710 = vadd.f32 0.0, %v1709
      %1711 = vmatmul.bf16.gmra.mxu0 %v1624
      %v1712 = vpop.f32.mrf.mxu0
      %v1713 = vadd.f32 0.0, %v1712
      %v1714 = vpop.f32.mrf.mxu0
      %v1715 = vadd.f32 0.0, %v1714
      %1716 = vmatmul.bf16.gmra.mxu0 %v1627
      %v1717 = vpop.f32.mrf.mxu0
      %v1718 = vadd.f32 0.0, %v1717
      %v1719 = vpop.f32.mrf.mxu0
      %v1720 = vadd.f32 0.0, %v1719
      %1721 = vmatmul.bf16.gmra.mxu0 %v1630
      %v1722 = vpop.f32.mrf.mxu0
      %v1723 = vadd.f32 0.0, %v1722
      %v1724 = vpop.f32.mrf.mxu0
      %v1725 = vadd.f32 0.0, %v1724
      %1726 = vmatmul.bf16.gmra.mxu0 %v1633
      %v1727 = vpop.f32.mrf.mxu0
      %v1728 = vadd.f32 0.0, %v1727
      %v1729 = vpop.f32.mrf.mxu0
      %v1730 = vadd.f32 0.0, %v1729
      %1731 = vmatmul.bf16.gmra.mxu0 %v1636
      %v1732 = vpop.f32.mrf.mxu0
      %v1733 = vadd.f32 0.0, %v1732
      %v1734 = vpop.f32.mrf.mxu0
      %v1735 = vadd.f32 0.0, %v1734
      %1736 = vdwg.mxu0
      %v1737 = vadd.f32 %v1348, %v1648
      %v1738 = vadd.f32 %v1349, %v1650
      %v1739 = vadd.f32 %v1350, %v1653
      %v1740 = vadd.f32 %v1351, %v1655
      %v1741 = vadd.f32 %v1352, %v1658
      %v1742 = vadd.f32 %v1353, %v1660
      %v1743 = vadd.f32 %v1354, %v1663
      %v1744 = vadd.f32 %v1355, %v1665
      %v1745 = vadd.f32 %v1356, %v1668
      %v1746 = vadd.f32 %v1357, %v1670
      %v1747 = vadd.f32 %v1358, %v1673
      %v1748 = vadd.f32 %v1359, %v1675
      %v1749 = vadd.f32 %v1360, %v1678
      %v1750 = vadd.f32 %v1361, %v1680
      %v1751 = vadd.f32 %v1362, %v1683
      %v1752 = vadd.f32 %v1363, %v1685
      %v1753 = vadd.f32 %v1364, %v1688
      %v1754 = vadd.f32 %v1365, %v1690
      %v1755 = vadd.f32 %v1366, %v1693
      %v1756 = vadd.f32 %v1367, %v1695
      %v1757 = vadd.f32 %v1368, %v1698
      %v1758 = vadd.f32 %v1369, %v1700
      %v1759 = vadd.f32 %v1370, %v1703
      %v1760 = vadd.f32 %v1371, %v1705
      %v1761 = vadd.f32 %v1372, %v1708
      %v1762 = vadd.f32 %v1373, %v1710
      %v1763 = vadd.f32 %v1374, %v1713
      %v1764 = vadd.f32 %v1375, %v1715
      %v1765 = vadd.f32 %v1376, %v1718
      %v1766 = vadd.f32 %v1377, %v1720
      %v1767 = vadd.f32 %v1378, %v1723
      %v1768 = vadd.f32 %v1379, %v1725
      %v1769 = vadd.f32 %v1380, %v1728
      %v1770 = vadd.f32 %v1381, %v1730
      %v1771 = vadd.f32 %v1382, %v1733
      %v1772 = vadd.f32 %v1383, %v1735
      %v1773 = vld [vmem:[%s246 + $0x98] sm:$0x3]
      %s1774 = scalar_lea.vmem %s1, 128
      %v1775 = vld [vmem:[%s1774] sm:$0xf]
      %v1776 = vld [vmem:[%s1774 + $0x4] sm:$0xf]
      %v1777 = vld [vmem:[%s1774 + $0x8] sm:$0xf]
      %v1778 = vld [vmem:[%s1774 + $0xc] sm:$0xf]
      %v1779 = vld [vmem:[%s1774 + $0x10] sm:$0xf]
      %v1780 = vld [vmem:[%s1774 + $0x14] sm:$0xf]
      %v1781 = vld [vmem:[%s1774 + $0x18] sm:$0xf]
      %v1782 = vld [vmem:[%s1774 + $0x1c] sm:$0xf]
      %v1784 = vunpack.c.l.b16 %v1773
      %v1785 = vpack.c.b16 %v1784, %v1784
      %vm1786 = vsmask.f32 6400
      %v1788 = vshrl.u32 %v1504, 16
      %v1790 = vrot.slane %v1788, 1
      %v1791 = vshll.u32 %v1504, 16
      %v1793 = vrot.slane %v1791, 2
      %v1794 = vor.u32 %v1790, %v1793
      %v1796 = vshrl.u32 %v1505, 16
      %v1798 = vrot.slane %v1796, 1
      %v1799 = vshll.u32 %v1505, 16
      %v1801 = vrot.slane %v1799, 2
      %v1802 = vor.u32 %v1798, %v1801
      %v1803 = vsel %vm1786, %v1794, %v1802
      %v1805 = vshrl.u32 %v1506, 16
      %v1807 = vrot.slane %v1805, 1
      %v1808 = vshll.u32 %v1506, 16
      %v1810 = vrot.slane %v1808, 2
      %v1811 = vor.u32 %v1807, %v1810
      %v1812 = vsel %vm1786, %v1802, %v1811
      %v1814 = vshrl.u32 %v1507, 16
      %v1816 = vrot.slane %v1814, 1
      %v1817 = vshll.u32 %v1507, 16
      %v1819 = vrot.slane %v1817, 2
      %v1820 = vor.u32 %v1816, %v1819
      %v1821 = vsel %vm1786, %v1811, %v1820
      %v1823 = vshrl.u32 %v1508, 16
      %v1825 = vrot.slane %v1823, 1
      %v1826 = vshll.u32 %v1508, 16
      %v1828 = vrot.slane %v1826, 2
      %v1829 = vor.u32 %v1825, %v1828
      %v1830 = vsel %vm1786, %v1820, %v1829
      %v1832 = vshrl.u32 %v1509, 16
      %v1834 = vrot.slane %v1832, 1
      %v1835 = vshll.u32 %v1509, 16
      %v1837 = vrot.slane %v1835, 2
      %v1838 = vor.u32 %v1834, %v1837
      %v1839 = vsel %vm1786, %v1829, %v1838
      %v1841 = vshrl.u32 %v1510, 16
      %v1843 = vrot.slane %v1841, 1
      %v1844 = vshll.u32 %v1510, 16
      %v1846 = vrot.slane %v1844, 2
      %v1847 = vor.u32 %v1843, %v1846
      %v1848 = vsel %vm1786, %v1838, %v1847
      %v1850 = vshrl.u32 %v1511, 16
      %v1852 = vrot.slane %v1850, 1
      %v1853 = vshll.u32 %v1511, 16
      %v1855 = vrot.slane %v1853, 2
      %v1856 = vor.u32 %v1852, %v1855
      %v1857 = vsel %vm1786, %v1847, %v1856
      %v1859 = vshrl.u32 %v1512, 16
      %v1861 = vrot.slane %v1859, 1
      %v1862 = vshll.u32 %v1512, 16
      %v1864 = vrot.slane %v1862, 2
      %v1865 = vor.u32 %v1861, %v1864
      %v1866 = vsel %vm1786, %v1856, %v1865
      %v1868 = vshrl.u32 %v1513, 16
      %v1870 = vrot.slane %v1868, 1
      %v1871 = vshll.u32 %v1513, 16
      %v1873 = vrot.slane %v1871, 2
      %v1874 = vor.u32 %v1870, %v1873
      %v1875 = vsel %vm1786, %v1865, %v1874
      %v1877 = vshrl.u32 %v1514, 16
      %v1879 = vrot.slane %v1877, 1
      %v1880 = vshll.u32 %v1514, 16
      %v1882 = vrot.slane %v1880, 2
      %v1883 = vor.u32 %v1879, %v1882
      %v1884 = vsel %vm1786, %v1874, %v1883
      %v1886 = vshrl.u32 %v1515, 16
      %v1888 = vrot.slane %v1886, 1
      %v1889 = vshll.u32 %v1515, 16
      %v1891 = vrot.slane %v1889, 2
      %v1892 = vor.u32 %v1888, %v1891
      %v1893 = vsel %vm1786, %v1883, %v1892
      %v1895 = vshrl.u32 %v1516, 16
      %v1897 = vrot.slane %v1895, 1
      %v1898 = vshll.u32 %v1516, 16
      %v1900 = vrot.slane %v1898, 2
      %v1901 = vor.u32 %v1897, %v1900
      %v1902 = vsel %vm1786, %v1892, %v1901
      %v1904 = vshrl.u32 %v1517, 16
      %v1906 = vrot.slane %v1904, 1
      %v1907 = vshll.u32 %v1517, 16
      %v1909 = vrot.slane %v1907, 2
      %v1910 = vor.u32 %v1906, %v1909
      %v1911 = vsel %vm1786, %v1901, %v1910
      %v1913 = vshrl.u32 %v1518, 16
      %v1915 = vrot.slane %v1913, 1
      %v1916 = vshll.u32 %v1518, 16
      %v1918 = vrot.slane %v1916, 2
      %v1919 = vor.u32 %v1915, %v1918
      %v1920 = vsel %vm1786, %v1910, %v1919
      %v1922 = vshrl.u32 %v1519, 16
      %v1924 = vrot.slane %v1922, 1
      %v1925 = vshll.u32 %v1519, 16
      %v1927 = vrot.slane %v1925, 2
      %v1928 = vor.u32 %v1924, %v1927
      %v1929 = vsel %vm1786, %v1919, %v1928
      %v1931 = vshrl.u32 %v1520, 16
      %v1933 = vrot.slane %v1931, 1
      %v1934 = vshll.u32 %v1520, 16
      %v1936 = vrot.slane %v1934, 2
      %v1937 = vor.u32 %v1933, %v1936
      %v1938 = vsel %vm1786, %v1928, %v1937
      %v1940 = vshrl.u32 %v1521, 16
      %v1942 = vrot.slane %v1940, 1
      %v1943 = vshll.u32 %v1521, 16
      %v1945 = vrot.slane %v1943, 2
      %v1946 = vor.u32 %v1942, %v1945
      %v1947 = vsel %vm1786, %v1937, %v1946
      %v1949 = vshrl.u32 %v1785, 16
      %v1951 = vrot.slane %v1949, 1
      %v1952 = vshll.u32 %v1785, 16
      %v1954 = vrot.slane %v1952, 2
      %v1955 = vor.u32 %v1951, %v1954
      %v1956 = vsel %vm1786, %v1946, %v1955
      %v1965 = vunpack.c.l.b16 %v1775
      %v1966 = vunpack.c.l.b16 %v1776
      %v1967 = vunpack.c.l.b16 %v1777
      %v1968 = vunpack.c.l.b16 %v1778
      %v1969 = vunpack.c.l.b16 %v1779
      %v1970 = vunpack.c.l.b16 %v1780
      %v1971 = vunpack.c.l.b16 %v1781
      %v1972 = vunpack.c.l.b16 %v1782
      %v1973 = vpack.c.b16 %v1966, %v1965
      %v1974 = vpack.c.b16 %v1968, %v1967
      %v1975 = vpack.c.b16 %v1970, %v1969
      %v1976 = vpack.c.b16 %v1972, %v1971
      %v1982 = vsel %vm429, %v1803, 0
      %v1985 = vsel %vm429, %v1812, 0
      %v1988 = vsel %vm429, %v1821, 0
      %v1991 = vsel %vm429, %v1830, 0
      %v1994 = vsel %vm429, %v1839, 0
      %v1997 = vsel %vm429, %v1848, 0
      %v2000 = vsel %vm429, %v1857, 0
      %v2003 = vsel %vm429, %v1866, 0
      %v2006 = vsel %vm429, %v1875, 0
      %v2009 = vsel %vm429, %v1884, 0
      %v2012 = vsel %vm429, %v1893, 0
      %v2015 = vsel %vm429, %v1902, 0
      %v2018 = vsel %vm429, %v1911, 0
      %v2021 = vsel %vm429, %v1920, 0
      %v2024 = vsel %vm429, %v1929, 0
      %v2027 = vsel %vm429, %v1938, 0
      %v2030 = vsel %vm429, %v1947, 0
      %v2033 = vsel %vm429, %v1956, 0
      %2035 = vmatpush.bf16.msra.mxu0 0
      %2036 = vmatpush.bf16.msra.mxu0 0
      %2037 = vmatpush.bf16.msra.mxu0 0
      %2038 = vmatpush.bf16.msra.mxu0 0
      %2039 = vmatpush.bf16.msra.mxu0 %v1976
      %2040 = vmatpush.bf16.msra.mxu0 %v1975
      %2041 = vmatpush.bf16.msra.mxu0 %v1974
      %2042 = vmatpush.bf16.msra.mxu0 %v1973
      %2043 = vmatmul.bf16.gmra.mxu0 %v1982
      %v2044 = vpop.f32.mrf.mxu0
      %v2045 = vadd.f32 0.0, %v2044
      %v2046 = vpop.f32.mrf.mxu0
      %v2047 = vadd.f32 0.0, %v2046
      %2048 = vmatmul.bf16.gmra.mxu0 %v1985
      %v2049 = vpop.f32.mrf.mxu0
      %v2050 = vadd.f32 0.0, %v2049
      %v2051 = vpop.f32.mrf.mxu0
      %v2052 = vadd.f32 0.0, %v2051
      %2053 = vmatmul.bf16.gmra.mxu0 %v1988
      %v2054 = vpop.f32.mrf.mxu0
      %v2055 = vadd.f32 0.0, %v2054
      %v2056 = vpop.f32.mrf.mxu0
      %v2057 = vadd.f32 0.0, %v2056
      %2058 = vmatmul.bf16.gmra.mxu0 %v1991
      %v2059 = vpop.f32.mrf.mxu0
      %v2060 = vadd.f32 0.0, %v2059
      %v2061 = vpop.f32.mrf.mxu0
      %v2062 = vadd.f32 0.0, %v2061
      %2063 = vmatmul.bf16.gmra.mxu0 %v1994
      %v2064 = vpop.f32.mrf.mxu0
      %v2065 = vadd.f32 0.0, %v2064
      %v2066 = vpop.f32.mrf.mxu0
      %v2067 = vadd.f32 0.0, %v2066
      %2068 = vmatmul.bf16.gmra.mxu0 %v1997
      %v2069 = vpop.f32.mrf.mxu0
      %v2070 = vadd.f32 0.0, %v2069
      %v2071 = vpop.f32.mrf.mxu0
      %v2072 = vadd.f32 0.0, %v2071
      %2073 = vmatmul.bf16.gmra.mxu0 %v2000
      %v2074 = vpop.f32.mrf.mxu0
      %v2075 = vadd.f32 0.0, %v2074
      %v2076 = vpop.f32.mrf.mxu0
      %v2077 = vadd.f32 0.0, %v2076
      %2078 = vmatmul.bf16.gmra.mxu0 %v2003
      %v2079 = vpop.f32.mrf.mxu0
      %v2080 = vadd.f32 0.0, %v2079
      %v2081 = vpop.f32.mrf.mxu0
      %v2082 = vadd.f32 0.0, %v2081
      %2083 = vmatmul.bf16.gmra.mxu0 %v2006
      %v2084 = vpop.f32.mrf.mxu0
      %v2085 = vadd.f32 0.0, %v2084
      %v2086 = vpop.f32.mrf.mxu0
      %v2087 = vadd.f32 0.0, %v2086
      %2088 = vmatmul.bf16.gmra.mxu0 %v2009
      %v2089 = vpop.f32.mrf.mxu0
      %v2090 = vadd.f32 0.0, %v2089
      %v2091 = vpop.f32.mrf.mxu0
      %v2092 = vadd.f32 0.0, %v2091
      %2093 = vmatmul.bf16.gmra.mxu0 %v2012
      %v2094 = vpop.f32.mrf.mxu0
      %v2095 = vadd.f32 0.0, %v2094
      %v2096 = vpop.f32.mrf.mxu0
      %v2097 = vadd.f32 0.0, %v2096
      %2098 = vmatmul.bf16.gmra.mxu0 %v2015
      %v2099 = vpop.f32.mrf.mxu0
      %v2100 = vadd.f32 0.0, %v2099
      %v2101 = vpop.f32.mrf.mxu0
      %v2102 = vadd.f32 0.0, %v2101
      %2103 = vmatmul.bf16.gmra.mxu0 %v2018
      %v2104 = vpop.f32.mrf.mxu0
      %v2105 = vadd.f32 0.0, %v2104
      %v2106 = vpop.f32.mrf.mxu0
      %v2107 = vadd.f32 0.0, %v2106
      %2108 = vmatmul.bf16.gmra.mxu0 %v2021
      %v2109 = vpop.f32.mrf.mxu0
      %v2110 = vadd.f32 0.0, %v2109
      %v2111 = vpop.f32.mrf.mxu0
      %v2112 = vadd.f32 0.0, %v2111
      %2113 = vmatmul.bf16.gmra.mxu0 %v2024
      %v2114 = vpop.f32.mrf.mxu0
      %v2115 = vadd.f32 0.0, %v2114
      %v2116 = vpop.f32.mrf.mxu0
      %v2117 = vadd.f32 0.0, %v2116
      %2118 = vmatmul.bf16.gmra.mxu0 %v2027
      %v2119 = vpop.f32.mrf.mxu0
      %v2120 = vadd.f32 0.0, %v2119
      %v2121 = vpop.f32.mrf.mxu0
      %v2122 = vadd.f32 0.0, %v2121
      %2123 = vmatmul.bf16.gmra.mxu0 %v2030
      %v2124 = vpop.f32.mrf.mxu0
      %v2125 = vadd.f32 0.0, %v2124
      %v2126 = vpop.f32.mrf.mxu0
      %v2127 = vadd.f32 0.0, %v2126
      %2128 = vmatmul.bf16.gmra.mxu0 %v2033
      %v2129 = vpop.f32.mrf.mxu0
      %v2130 = vadd.f32 0.0, %v2129
      %v2131 = vpop.f32.mrf.mxu0
      %v2132 = vadd.f32 0.0, %v2131
      %2133 = vdwg.mxu0
      %v2134 = vadd.f32 %v1737, %v2045
      %v2135 = vadd.f32 %v1738, %v2047
      %v2136 = vadd.f32 %v1739, %v2050
      %v2137 = vadd.f32 %v1740, %v2052
      %v2138 = vadd.f32 %v1741, %v2055
      %v2139 = vadd.f32 %v1742, %v2057
      %v2140 = vadd.f32 %v1743, %v2060
      %v2141 = vadd.f32 %v1744, %v2062
      %v2142 = vadd.f32 %v1745, %v2065
      %v2143 = vadd.f32 %v1746, %v2067
      %v2144 = vadd.f32 %v1747, %v2070
      %v2145 = vadd.f32 %v1748, %v2072
      %v2146 = vadd.f32 %v1749, %v2075
      %v2147 = vadd.f32 %v1750, %v2077
      %v2148 = vadd.f32 %v1751, %v2080
      %v2149 = vadd.f32 %v1752, %v2082
      %v2150 = vadd.f32 %v1753, %v2085
      %v2151 = vadd.f32 %v1754, %v2087
      %v2152 = vadd.f32 %v1755, %v2090
      %v2153 = vadd.f32 %v1756, %v2092
      %v2154 = vadd.f32 %v1757, %v2095
      %v2155 = vadd.f32 %v1758, %v2097
      %v2156 = vadd.f32 %v1759, %v2100
      %v2157 = vadd.f32 %v1760, %v2102
      %v2158 = vadd.f32 %v1761, %v2105
      %v2159 = vadd.f32 %v1762, %v2107
      %v2160 = vadd.f32 %v1763, %v2110
      %v2161 = vadd.f32 %v1764, %v2112
      %v2162 = vadd.f32 %v1765, %v2115
      %v2163 = vadd.f32 %v1766, %v2117
      %v2164 = vadd.f32 %v1767, %v2120
      %v2165 = vadd.f32 %v1768, %v2122
      %v2166 = vadd.f32 %v1769, %v2125
      %v2167 = vadd.f32 %v1770, %v2127
      %v2168 = vadd.f32 %v1771, %v2130
      %v2169 = vadd.f32 %v1772, %v2132
      %v2170 = vld [vmem:[%s246 + $0x8] sm:$0xc]
      %s2171 = scalar_lea.vmem %s1, 160
      %v2172 = vld [vmem:[%s2171] sm:$0xf]
      %v2173 = vld [vmem:[%s2171 + $0x4] sm:$0xf]
      %v2174 = vld [vmem:[%s2171 + $0x8] sm:$0xf]
      %v2175 = vld [vmem:[%s2171 + $0xc] sm:$0xf]
      %v2176 = vld [vmem:[%s2171 + $0x10] sm:$0xf]
      %v2177 = vld [vmem:[%s2171 + $0x14] sm:$0xf]
      %v2178 = vld [vmem:[%s2171 + $0x18] sm:$0xf]
      %v2179 = vld [vmem:[%s2171 + $0x1c] sm:$0xf]
      %v2181 = vunpack.c.l.b16 %v2170
      %v2182 = vpack.c.b16 %v1468, %v2181
      %vm2183 = vcmask 1045504
      %v2184 = vrot.slane %v2182, 2
      %v2185 = vrot.slane %v1505, 2
      %v2186 = vsel %vm2183, %v2184, %v2185
      %v2187 = vrot.slane %v1506, 2
      %v2188 = vsel %vm2183, %v2185, %v2187
      %v2189 = vrot.slane %v1507, 2
      %v2190 = vsel %vm2183, %v2187, %v2189
      %v2191 = vrot.slane %v1508, 2
      %v2192 = vsel %vm2183, %v2189, %v2191
      %v2193 = vrot.slane %v1509, 2
      %v2194 = vsel %vm2183, %v2191, %v2193
      %v2195 = vrot.slane %v1510, 2
      %v2196 = vsel %vm2183, %v2193, %v2195
      %v2197 = vrot.slane %v1511, 2
      %v2198 = vsel %vm2183, %v2195, %v2197
      %v2199 = vrot.slane %v1512, 2
      %v2200 = vsel %vm2183, %v2197, %v2199
      %v2201 = vrot.slane %v1513, 2
      %v2202 = vsel %vm2183, %v2199, %v2201
      %v2203 = vrot.slane %v1514, 2
      %v2204 = vsel %vm2183, %v2201, %v2203
      %v2205 = vrot.slane %v1515, 2
      %v2206 = vsel %vm2183, %v2203, %v2205
      %v2207 = vrot.slane %v1516, 2
      %v2208 = vsel %vm2183, %v2205, %v2207
      %v2209 = vrot.slane %v1517, 2
      %v2210 = vsel %vm2183, %v2207, %v2209
      %v2211 = vrot.slane %v1518, 2
      %v2212 = vsel %vm2183, %v2209, %v2211
      %v2213 = vrot.slane %v1519, 2
      %v2214 = vsel %vm2183, %v2211, %v2213
      %v2215 = vrot.slane %v1520, 2
      %v2216 = vsel %vm2183, %v2213, %v2215
      %v2217 = vrot.slane %v1521, 2
      %v2218 = vsel %vm2183, %v2215, %v2217
      %v2219 = vrot.slane %v1785, 2
      %v2220 = vsel %vm2183, %v2217, %v2219
      %v2229 = vunpack.c.l.b16 %v2172
      %v2230 = vunpack.c.l.b16 %v2173
      %v2231 = vunpack.c.l.b16 %v2174
      %v2232 = vunpack.c.l.b16 %v2175
      %v2233 = vunpack.c.l.b16 %v2176
      %v2234 = vunpack.c.l.b16 %v2177
      %v2235 = vunpack.c.l.b16 %v2178
      %v2236 = vunpack.c.l.b16 %v2179
      %v2237 = vpack.c.b16 %v2230, %v2229
      %v2238 = vpack.c.b16 %v2232, %v2231
      %v2239 = vpack.c.b16 %v2234, %v2233
      %v2240 = vpack.c.b16 %v2236, %v2235
      %v2246 = vsel %vm429, %v2186, 0
      %v2249 = vsel %vm429, %v2188, 0
      %v2252 = vsel %vm429, %v2190, 0
      %v2255 = vsel %vm429, %v2192, 0
      %v2258 = vsel %vm429, %v2194, 0
      %v2261 = vsel %vm429, %v2196, 0
      %v2264 = vsel %vm429, %v2198, 0
      %v2267 = vsel %vm429, %v2200, 0
      %v2270 = vsel %vm429, %v2202, 0
      %v2273 = vsel %vm429, %v2204, 0
      %v2276 = vsel %vm429, %v2206, 0
      %v2279 = vsel %vm429, %v2208, 0
      %v2282 = vsel %vm429, %v2210, 0
      %v2285 = vsel %vm429, %v2212, 0
      %v2288 = vsel %vm429, %v2214, 0
      %v2291 = vsel %vm429, %v2216, 0
      %v2294 = vsel %vm429, %v2218, 0
      %v2297 = vsel %vm429, %v2220, 0
      %2299 = vmatpush.bf16.msra.mxu0 0
      %2300 = vmatpush.bf16.msra.mxu0 0
      %2301 = vmatpush.bf16.msra.mxu0 0
      %2302 = vmatpush.bf16.msra.mxu0 0
      %2303 = vmatpush.bf16.msra.mxu0 %v2240
      %2304 = vmatpush.bf16.msra.mxu0 %v2239
      %2305 = vmatpush.bf16.msra.mxu0 %v2238
      %2306 = vmatpush.bf16.msra.mxu0 %v2237
      %2307 = vmatmul.bf16.gmra.mxu0 %v2246
      %v2308 = vpop.f32.mrf.mxu0
      %v2309 = vadd.f32 0.0, %v2308
      %v2310 = vpop.f32.mrf.mxu0
      %v2311 = vadd.f32 0.0, %v2310
      %2312 = vmatmul.bf16.gmra.mxu0 %v2249
      %v2313 = vpop.f32.mrf.mxu0
      %v2314 = vadd.f32 0.0, %v2313
      %v2315 = vpop.f32.mrf.mxu0
      %v2316 = vadd.f32 0.0, %v2315
      %2317 = vmatmul.bf16.gmra.mxu0 %v2252
      %v2318 = vpop.f32.mrf.mxu0
      %v2319 = vadd.f32 0.0, %v2318
      %v2320 = vpop.f32.mrf.mxu0
      %v2321 = vadd.f32 0.0, %v2320
      %2322 = vmatmul.bf16.gmra.mxu0 %v2255
      %v2323 = vpop.f32.mrf.mxu0
      %v2324 = vadd.f32 0.0, %v2323
      %v2325 = vpop.f32.mrf.mxu0
      %v2326 = vadd.f32 0.0, %v2325
      %2327 = vmatmul.bf16.gmra.mxu0 %v2258
      %v2328 = vpop.f32.mrf.mxu0
      %v2329 = vadd.f32 0.0, %v2328
      %v2330 = vpop.f32.mrf.mxu0
      %v2331 = vadd.f32 0.0, %v2330
      %2332 = vmatmul.bf16.gmra.mxu0 %v2261
      %v2333 = vpop.f32.mrf.mxu0
      %v2334 = vadd.f32 0.0, %v2333
      %v2335 = vpop.f32.mrf.mxu0
      %v2336 = vadd.f32 0.0, %v2335
      %2337 = vmatmul.bf16.gmra.mxu0 %v2264
      %v2338 = vpop.f32.mrf.mxu0
      %v2339 = vadd.f32 0.0, %v2338
      %v2340 = vpop.f32.mrf.mxu0
      %v2341 = vadd.f32 0.0, %v2340
      %2342 = vmatmul.bf16.gmra.mxu0 %v2267
      %v2343 = vpop.f32.mrf.mxu0
      %v2344 = vadd.f32 0.0, %v2343
      %v2345 = vpop.f32.mrf.mxu0
      %v2346 = vadd.f32 0.0, %v2345
      %2347 = vmatmul.bf16.gmra.mxu0 %v2270
      %v2348 = vpop.f32.mrf.mxu0
      %v2349 = vadd.f32 0.0, %v2348
      %v2350 = vpop.f32.mrf.mxu0
      %v2351 = vadd.f32 0.0, %v2350
      %2352 = vmatmul.bf16.gmra.mxu0 %v2273
      %v2353 = vpop.f32.mrf.mxu0
      %v2354 = vadd.f32 0.0, %v2353
      %v2355 = vpop.f32.mrf.mxu0
      %v2356 = vadd.f32 0.0, %v2355
      %2357 = vmatmul.bf16.gmra.mxu0 %v2276
      %v2358 = vpop.f32.mrf.mxu0
      %v2359 = vadd.f32 0.0, %v2358
      %v2360 = vpop.f32.mrf.mxu0
      %v2361 = vadd.f32 0.0, %v2360
      %2362 = vmatmul.bf16.gmra.mxu0 %v2279
      %v2363 = vpop.f32.mrf.mxu0
      %v2364 = vadd.f32 0.0, %v2363
      %v2365 = vpop.f32.mrf.mxu0
      %v2366 = vadd.f32 0.0, %v2365
      %2367 = vmatmul.bf16.gmra.mxu0 %v2282
      %v2368 = vpop.f32.mrf.mxu0
      %v2369 = vadd.f32 0.0, %v2368
      %v2370 = vpop.f32.mrf.mxu0
      %v2371 = vadd.f32 0.0, %v2370
      %2372 = vmatmul.bf16.gmra.mxu0 %v2285
      %v2373 = vpop.f32.mrf.mxu0
      %v2374 = vadd.f32 0.0, %v2373
      %v2375 = vpop.f32.mrf.mxu0
      %v2376 = vadd.f32 0.0, %v2375
      %2377 = vmatmul.bf16.gmra.mxu0 %v2288
      %v2378 = vpop.f32.mrf.mxu0
      %v2379 = vadd.f32 0.0, %v2378
      %v2380 = vpop.f32.mrf.mxu0
      %v2381 = vadd.f32 0.0, %v2380
      %2382 = vmatmul.bf16.gmra.mxu0 %v2291
      %v2383 = vpop.f32.mrf.mxu0
      %v2384 = vadd.f32 0.0, %v2383
      %v2385 = vpop.f32.mrf.mxu0
      %v2386 = vadd.f32 0.0, %v2385
      %2387 = vmatmul.bf16.gmra.mxu0 %v2294
      %v2388 = vpop.f32.mrf.mxu0
      %v2389 = vadd.f32 0.0, %v2388
      %v2390 = vpop.f32.mrf.mxu0
      %v2391 = vadd.f32 0.0, %v2390
      %2392 = vmatmul.bf16.gmra.mxu0 %v2297
      %v2393 = vpop.f32.mrf.mxu0
      %v2394 = vadd.f32 0.0, %v2393
      %v2395 = vpop.f32.mrf.mxu0
      %v2396 = vadd.f32 0.0, %v2395
      %2397 = vdwg.mxu0
      %v2398 = vadd.f32 %v2134, %v2309
      %v2399 = vadd.f32 %v2135, %v2311
      %v2400 = vadd.f32 %v2136, %v2314
      %v2401 = vadd.f32 %v2137, %v2316
      %v2402 = vadd.f32 %v2138, %v2319
      %v2403 = vadd.f32 %v2139, %v2321
      %v2404 = vadd.f32 %v2140, %v2324
      %v2405 = vadd.f32 %v2141, %v2326
      %v2406 = vadd.f32 %v2142, %v2329
      %v2407 = vadd.f32 %v2143, %v2331
      %v2408 = vadd.f32 %v2144, %v2334
      %v2409 = vadd.f32 %v2145, %v2336
      %v2410 = vadd.f32 %v2146, %v2339
      %v2411 = vadd.f32 %v2147, %v2341
      %v2412 = vadd.f32 %v2148, %v2344
      %v2413 = vadd.f32 %v2149, %v2346
      %v2414 = vadd.f32 %v2150, %v2349
      %v2415 = vadd.f32 %v2151, %v2351
      %v2416 = vadd.f32 %v2152, %v2354
      %v2417 = vadd.f32 %v2153, %v2356
      %v2418 = vadd.f32 %v2154, %v2359
      %v2419 = vadd.f32 %v2155, %v2361
      %v2420 = vadd.f32 %v2156, %v2364
      %v2421 = vadd.f32 %v2157, %v2366
      %v2422 = vadd.f32 %v2158, %v2369
      %v2423 = vadd.f32 %v2159, %v2371
      %v2424 = vadd.f32 %v2160, %v2374
      %v2425 = vadd.f32 %v2161, %v2376
      %v2426 = vadd.f32 %v2162, %v2379
      %v2427 = vadd.f32 %v2163, %v2381
      %v2428 = vadd.f32 %v2164, %v2384
      %v2429 = vadd.f32 %v2165, %v2386
      %v2430 = vadd.f32 %v2166, %v2389
      %v2431 = vadd.f32 %v2167, %v2391
      %v2432 = vadd.f32 %v2168, %v2394
      %v2433 = vadd.f32 %v2169, %v2396
      %v2434 = vld [vmem:[%s246 + $0x10] sm:$0xc]
      %v2435 = vld [vmem:[%s246 + $0x14] sm:$0xf]
      %v2436 = vld [vmem:[%s246 + $0x18] sm:$0xf]
      %v2437 = vld [vmem:[%s246 + $0x1c] sm:$0xf]
      %v2438 = vld [vmem:[%s246 + $0x20] sm:$0xf]
      %v2439 = vld [vmem:[%s246 + $0x24] sm:$0xf]
      %v2440 = vld [vmem:[%s246 + $0x28] sm:$0xf]
      %v2441 = vld [vmem:[%s246 + $0x2c] sm:$0xf]
      %v2442 = vld [vmem:[%s246 + $0x30] sm:$0xf]
      %v2443 = vld [vmem:[%s246 + $0x34] sm:$0xf]
      %v2444 = vld [vmem:[%s246 + $0x38] sm:$0xf]
      %v2445 = vld [vmem:[%s246 + $0x3c] sm:$0xf]
      %v2446 = vld [vmem:[%s246 + $0x40] sm:$0xf]
      %v2447 = vld [vmem:[%s246 + $0x44] sm:$0xf]
      %v2448 = vld [vmem:[%s246 + $0x48] sm:$0xf]
      %v2449 = vld [vmem:[%s246 + $0x4c] sm:$0xf]
      %v2450 = vld [vmem:[%s246 + $0x50] sm:$0xf]
      %v2451 = vld [vmem:[%s246 + $0x54] sm:$0xf]
      %v2452 = vld [vmem:[%s246 + $0x58] sm:$0xf]
      %v2453 = vld [vmem:[%s246 + $0x5c] sm:$0xf]
      %v2454 = vld [vmem:[%s246 + $0x60] sm:$0xf]
      %v2455 = vld [vmem:[%s246 + $0x64] sm:$0xf]
      %v2456 = vld [vmem:[%s246 + $0x68] sm:$0xf]
      %v2457 = vld [vmem:[%s246 + $0x6c] sm:$0xf]
      %v2458 = vld [vmem:[%s246 + $0x70] sm:$0xf]
      %v2459 = vld [vmem:[%s246 + $0x74] sm:$0xf]
      %v2460 = vld [vmem:[%s246 + $0x78] sm:$0xf]
      %v2461 = vld [vmem:[%s246 + $0x7c] sm:$0xf]
      %v2462 = vld [vmem:[%s246 + $0x80] sm:$0xf]
      %v2463 = vld [vmem:[%s246 + $0x84] sm:$0xf]
      %v2464 = vld [vmem:[%s246 + $0x88] sm:$0xf]
      %v2465 = vld [vmem:[%s246 + $0x8c] sm:$0xf]
      %v2466 = vld [vmem:[%s246 + $0x90] sm:$0xf]
      %v2467 = vld [vmem:[%s246 + $0x94] sm:$0xf]
      %v2468 = vld [vmem:[%s246 + $0x98] sm:$0xf]
      %v2469 = vld [vmem:[%s246 + $0x9c] sm:$0xf]
      %v2470 = vld [vmem:[%s246 + $0xa0] sm:$0x3]
      %s2471 = scalar_lea.vmem %s1, 192
      %v2472 = vld [vmem:[%s2471] sm:$0xf]
      %v2473 = vld [vmem:[%s2471 + $0x4] sm:$0xf]
      %v2474 = vld [vmem:[%s2471 + $0x8] sm:$0xf]
      %v2475 = vld [vmem:[%s2471 + $0xc] sm:$0xf]
      %v2476 = vld [vmem:[%s2471 + $0x10] sm:$0xf]
      %v2477 = vld [vmem:[%s2471 + $0x14] sm:$0xf]
      %v2478 = vld [vmem:[%s2471 + $0x18] sm:$0xf]
      %v2479 = vld [vmem:[%s2471 + $0x1c] sm:$0xf]
      %v2517 = vunpack.c.l.b16 %v2434
      %v2518 = vunpack.c.l.b16 %v2435
      %v2519 = vunpack.c.l.b16 %v2436
      %v2520 = vunpack.c.l.b16 %v2437
      %v2521 = vunpack.c.l.b16 %v2438
      %v2522 = vunpack.c.l.b16 %v2439
      %v2523 = vunpack.c.l.b16 %v2440
      %v2524 = vunpack.c.l.b16 %v2441
      %v2525 = vunpack.c.l.b16 %v2442
      %v2526 = vunpack.c.l.b16 %v2443
      %v2527 = vunpack.c.l.b16 %v2444
      %v2528 = vunpack.c.l.b16 %v2445
      %v2529 = vunpack.c.l.b16 %v2446
      %v2530 = vunpack.c.l.b16 %v2447
      %v2531 = vunpack.c.l.b16 %v2448
      %v2532 = vunpack.c.l.b16 %v2449
      %v2533 = vunpack.c.l.b16 %v2450
      %v2534 = vunpack.c.l.b16 %v2451
      %v2535 = vunpack.c.l.b16 %v2452
      %v2536 = vunpack.c.l.b16 %v2453
      %v2537 = vunpack.c.l.b16 %v2454
      %v2538 = vunpack.c.l.b16 %v2455
      %v2539 = vunpack.c.l.b16 %v2456
      %v2540 = vunpack.c.l.b16 %v2457
      %v2541 = vunpack.c.l.b16 %v2458
      %v2542 = vunpack.c.l.b16 %v2459
      %v2543 = vunpack.c.l.b16 %v2460
      %v2544 = vunpack.c.l.b16 %v2461
      %v2545 = vunpack.c.l.b16 %v2462
      %v2546 = vunpack.c.l.b16 %v2463
      %v2547 = vunpack.c.l.b16 %v2464
      %v2548 = vunpack.c.l.b16 %v2465
      %v2549 = vunpack.c.l.b16 %v2466
      %v2550 = vunpack.c.l.b16 %v2467
      %v2551 = vunpack.c.l.b16 %v2468
      %v2552 = vunpack.c.l.b16 %v2469
      %v2553 = vunpack.c.l.b16 %v2470
      %v2554 = vpack.c.b16 %v2518, %v2517
      %v2555 = vpack.c.b16 %v2520, %v2519
      %v2556 = vpack.c.b16 %v2522, %v2521
      %v2557 = vpack.c.b16 %v2524, %v2523
      %v2558 = vpack.c.b16 %v2526, %v2525
      %v2559 = vpack.c.b16 %v2528, %v2527
      %v2560 = vpack.c.b16 %v2530, %v2529
      %v2561 = vpack.c.b16 %v2532, %v2531
      %v2562 = vpack.c.b16 %v2534, %v2533
      %v2563 = vpack.c.b16 %v2536, %v2535
      %v2564 = vpack.c.b16 %v2538, %v2537
      %v2565 = vpack.c.b16 %v2540, %v2539
      %v2566 = vpack.c.b16 %v2542, %v2541
      %v2567 = vpack.c.b16 %v2544, %v2543
      %v2568 = vpack.c.b16 %v2546, %v2545
      %v2569 = vpack.c.b16 %v2548, %v2547
      %v2570 = vpack.c.b16 %v2550, %v2549
      %v2571 = vpack.c.b16 %v2552, %v2551
      %v2572 = vpack.c.b16 %v2553, %v2553
      %v2573 = vrot.slane %v2554, 2
      %v2574 = vrot.slane %v2555, 2
      %v2575 = vsel %vm2183, %v2573, %v2574
      %v2576 = vrot.slane %v2556, 2
      %v2577 = vsel %vm2183, %v2574, %v2576
      %v2578 = vrot.slane %v2557, 2
      %v2579 = vsel %vm2183, %v2576, %v2578
      %v2580 = vrot.slane %v2558, 2
      %v2581 = vsel %vm2183, %v2578, %v2580
      %v2582 = vrot.slane %v2559, 2
      %v2583 = vsel %vm2183, %v2580, %v2582
      %v2584 = vrot.slane %v2560, 2
      %v2585 = vsel %vm2183, %v2582, %v2584
      %v2586 = vrot.slane %v2561, 2
      %v2587 = vsel %vm2183, %v2584, %v2586
      %v2588 = vrot.slane %v2562, 2
      %v2589 = vsel %vm2183, %v2586, %v2588
      %v2590 = vrot.slane %v2563, 2
      %v2591 = vsel %vm2183, %v2588, %v2590
      %v2592 = vrot.slane %v2564, 2
      %v2593 = vsel %vm2183, %v2590, %v2592
      %v2594 = vrot.slane %v2565, 2
      %v2595 = vsel %vm2183, %v2592, %v2594
      %v2596 = vrot.slane %v2566, 2
      %v2597 = vsel %vm2183, %v2594, %v2596
      %v2598 = vrot.slane %v2567, 2
      %v2599 = vsel %vm2183, %v2596, %v2598
      %v2600 = vrot.slane %v2568, 2
      %v2601 = vsel %vm2183, %v2598, %v2600
      %v2602 = vrot.slane %v2569, 2
      %v2603 = vsel %vm2183, %v2600, %v2602
      %v2604 = vrot.slane %v2570, 2
      %v2605 = vsel %vm2183, %v2602, %v2604
      %v2606 = vrot.slane %v2571, 2
      %v2607 = vsel %vm2183, %v2604, %v2606
      %v2608 = vrot.slane %v2572, 2
      %v2609 = vsel %vm2183, %v2606, %v2608
      %v2618 = vunpack.c.l.b16 %v2472
      %v2619 = vunpack.c.l.b16 %v2473
      %v2620 = vunpack.c.l.b16 %v2474
      %v2621 = vunpack.c.l.b16 %v2475
      %v2622 = vunpack.c.l.b16 %v2476
      %v2623 = vunpack.c.l.b16 %v2477
      %v2624 = vunpack.c.l.b16 %v2478
      %v2625 = vunpack.c.l.b16 %v2479
      %v2626 = vpack.c.b16 %v2619, %v2618
      %v2627 = vpack.c.b16 %v2621, %v2620
      %v2628 = vpack.c.b16 %v2623, %v2622
      %v2629 = vpack.c.b16 %v2625, %v2624
      %v2635 = vsel %vm429, %v2575, 0
      %v2638 = vsel %vm429, %v2577, 0
      %v2641 = vsel %vm429, %v2579, 0
      %v2644 = vsel %vm429, %v2581, 0
      %v2647 = vsel %vm429, %v2583, 0
      %v2650 = vsel %vm429, %v2585, 0
      %v2653 = vsel %vm429, %v2587, 0
      %v2656 = vsel %vm429, %v2589, 0
      %v2659 = vsel %vm429, %v2591, 0
      %v2662 = vsel %vm429, %v2593, 0
      %v2665 = vsel %vm429, %v2595, 0
      %v2668 = vsel %vm429, %v2597, 0
      %v2671 = vsel %vm429, %v2599, 0
      %v2674 = vsel %vm429, %v2601, 0
      %v2677 = vsel %vm429, %v2603, 0
      %v2680 = vsel %vm429, %v2605, 0
      %v2683 = vsel %vm429, %v2607, 0
      %v2686 = vsel %vm429, %v2609, 0
      %2688 = vmatpush.bf16.msra.mxu0 0
      %2689 = vmatpush.bf16.msra.mxu0 0
      %2690 = vmatpush.bf16.msra.mxu0 0
      %2691 = vmatpush.bf16.msra.mxu0 0
      %2692 = vmatpush.bf16.msra.mxu0 %v2629
      %2693 = vmatpush.bf16.msra.mxu0 %v2628
      %2694 = vmatpush.bf16.msra.mxu0 %v2627
      %2695 = vmatpush.bf16.msra.mxu0 %v2626
      %2696 = vmatmul.bf16.gmra.mxu0 %v2635
      %v2697 = vpop.f32.mrf.mxu0
      %v2698 = vadd.f32 0.0, %v2697
      %v2699 = vpop.f32.mrf.mxu0
      %v2700 = vadd.f32 0.0, %v2699
      %2701 = vmatmul.bf16.gmra.mxu0 %v2638
      %v2702 = vpop.f32.mrf.mxu0
      %v2703 = vadd.f32 0.0, %v2702
      %v2704 = vpop.f32.mrf.mxu0
      %v2705 = vadd.f32 0.0, %v2704
      %2706 = vmatmul.bf16.gmra.mxu0 %v2641
      %v2707 = vpop.f32.mrf.mxu0
      %v2708 = vadd.f32 0.0, %v2707
      %v2709 = vpop.f32.mrf.mxu0
      %v2710 = vadd.f32 0.0, %v2709
      %2711 = vmatmul.bf16.gmra.mxu0 %v2644
      %v2712 = vpop.f32.mrf.mxu0
      %v2713 = vadd.f32 0.0, %v2712
      %v2714 = vpop.f32.mrf.mxu0
      %v2715 = vadd.f32 0.0, %v2714
      %2716 = vmatmul.bf16.gmra.mxu0 %v2647
      %v2717 = vpop.f32.mrf.mxu0
      %v2718 = vadd.f32 0.0, %v2717
      %v2719 = vpop.f32.mrf.mxu0
      %v2720 = vadd.f32 0.0, %v2719
      %2721 = vmatmul.bf16.gmra.mxu0 %v2650
      %v2722 = vpop.f32.mrf.mxu0
      %v2723 = vadd.f32 0.0, %v2722
      %v2724 = vpop.f32.mrf.mxu0
      %v2725 = vadd.f32 0.0, %v2724
      %2726 = vmatmul.bf16.gmra.mxu0 %v2653
      %v2727 = vpop.f32.mrf.mxu0
      %v2728 = vadd.f32 0.0, %v2727
      %v2729 = vpop.f32.mrf.mxu0
      %v2730 = vadd.f32 0.0, %v2729
      %2731 = vmatmul.bf16.gmra.mxu0 %v2656
      %v2732 = vpop.f32.mrf.mxu0
      %v2733 = vadd.f32 0.0, %v2732
      %v2734 = vpop.f32.mrf.mxu0
      %v2735 = vadd.f32 0.0, %v2734
      %2736 = vmatmul.bf16.gmra.mxu0 %v2659
      %v2737 = vpop.f32.mrf.mxu0
      %v2738 = vadd.f32 0.0, %v2737
      %v2739 = vpop.f32.mrf.mxu0
      %v2740 = vadd.f32 0.0, %v2739
      %2741 = vmatmul.bf16.gmra.mxu0 %v2662
      %v2742 = vpop.f32.mrf.mxu0
      %v2743 = vadd.f32 0.0, %v2742
      %v2744 = vpop.f32.mrf.mxu0
      %v2745 = vadd.f32 0.0, %v2744
      %2746 = vmatmul.bf16.gmra.mxu0 %v2665
      %v2747 = vpop.f32.mrf.mxu0
      %v2748 = vadd.f32 0.0, %v2747
      %v2749 = vpop.f32.mrf.mxu0
      %v2750 = vadd.f32 0.0, %v2749
      %2751 = vmatmul.bf16.gmra.mxu0 %v2668
      %v2752 = vpop.f32.mrf.mxu0
      %v2753 = vadd.f32 0.0, %v2752
      %v2754 = vpop.f32.mrf.mxu0
      %v2755 = vadd.f32 0.0, %v2754
      %2756 = vmatmul.bf16.gmra.mxu0 %v2671
      %v2757 = vpop.f32.mrf.mxu0
      %v2758 = vadd.f32 0.0, %v2757
      %v2759 = vpop.f32.mrf.mxu0
      %v2760 = vadd.f32 0.0, %v2759
      %2761 = vmatmul.bf16.gmra.mxu0 %v2674
      %v2762 = vpop.f32.mrf.mxu0
      %v2763 = vadd.f32 0.0, %v2762
      %v2764 = vpop.f32.mrf.mxu0
      %v2765 = vadd.f32 0.0, %v2764
      %2766 = vmatmul.bf16.gmra.mxu0 %v2677
      %v2767 = vpop.f32.mrf.mxu0
      %v2768 = vadd.f32 0.0, %v2767
      %v2769 = vpop.f32.mrf.mxu0
      %v2770 = vadd.f32 0.0, %v2769
      %2771 = vmatmul.bf16.gmra.mxu0 %v2680
      %v2772 = vpop.f32.mrf.mxu0
      %v2773 = vadd.f32 0.0, %v2772
      %v2774 = vpop.f32.mrf.mxu0
      %v2775 = vadd.f32 0.0, %v2774
      %2776 = vmatmul.bf16.gmra.mxu0 %v2683
      %v2777 = vpop.f32.mrf.mxu0
      %v2778 = vadd.f32 0.0, %v2777
      %v2779 = vpop.f32.mrf.mxu0
      %v2780 = vadd.f32 0.0, %v2779
      %2781 = vmatmul.bf16.gmra.mxu0 %v2686
      %v2782 = vpop.f32.mrf.mxu0
      %v2783 = vadd.f32 0.0, %v2782
      %v2784 = vpop.f32.mrf.mxu0
      %v2785 = vadd.f32 0.0, %v2784
      %2786 = vdwg.mxu0
      %v2787 = vadd.f32 %v2398, %v2698
      %v2788 = vadd.f32 %v2399, %v2700
      %v2789 = vadd.f32 %v2400, %v2703
      %v2790 = vadd.f32 %v2401, %v2705
      %v2791 = vadd.f32 %v2402, %v2708
      %v2792 = vadd.f32 %v2403, %v2710
      %v2793 = vadd.f32 %v2404, %v2713
      %v2794 = vadd.f32 %v2405, %v2715
      %v2795 = vadd.f32 %v2406, %v2718
      %v2796 = vadd.f32 %v2407, %v2720
      %v2797 = vadd.f32 %v2408, %v2723
      %v2798 = vadd.f32 %v2409, %v2725
      %v2799 = vadd.f32 %v2410, %v2728
      %v2800 = vadd.f32 %v2411, %v2730
      %v2801 = vadd.f32 %v2412, %v2733
      %v2802 = vadd.f32 %v2413, %v2735
      %v2803 = vadd.f32 %v2414, %v2738
      %v2804 = vadd.f32 %v2415, %v2740
      %v2805 = vadd.f32 %v2416, %v2743
      %v2806 = vadd.f32 %v2417, %v2745
      %v2807 = vadd.f32 %v2418, %v2748
      %v2808 = vadd.f32 %v2419, %v2750
      %v2809 = vadd.f32 %v2420, %v2753
      %v2810 = vadd.f32 %v2421, %v2755
      %v2811 = vadd.f32 %v2422, %v2758
      %v2812 = vadd.f32 %v2423, %v2760
      %v2813 = vadd.f32 %v2424, %v2763
      %v2814 = vadd.f32 %v2425, %v2765
      %v2815 = vadd.f32 %v2426, %v2768
      %v2816 = vadd.f32 %v2427, %v2770
      %v2817 = vadd.f32 %v2428, %v2773
      %v2818 = vadd.f32 %v2429, %v2775
      %v2819 = vadd.f32 %v2430, %v2778
      %v2820 = vadd.f32 %v2431, %v2780
      %v2821 = vadd.f32 %v2432, %v2783
      %v2822 = vadd.f32 %v2433, %v2785
      %v2823 = vld [vmem:[%s246 + $0xa0] sm:$0x7]
      %s2824 = scalar_lea.vmem %s1, 224
      %v2825 = vld [vmem:[%s2824] sm:$0xf]
      %v2826 = vld [vmem:[%s2824 + $0x4] sm:$0xf]
      %v2827 = vld [vmem:[%s2824 + $0x8] sm:$0xf]
      %v2828 = vld [vmem:[%s2824 + $0xc] sm:$0xf]
      %v2829 = vld [vmem:[%s2824 + $0x10] sm:$0xf]
      %v2830 = vld [vmem:[%s2824 + $0x14] sm:$0xf]
      %v2831 = vld [vmem:[%s2824 + $0x18] sm:$0xf]
      %v2832 = vld [vmem:[%s2824 + $0x1c] sm:$0xf]
      %v2834 = vunpack.c.l.b16 %v2823
      %v2835 = vpack.c.b16 %v2834, %v2834
      %vm2836 = vsmask.f32 5376
      %v2838 = vshrl.u32 %v2554, 16
      %v2840 = vrot.slane %v2838, 2
      %v2841 = vshll.u32 %v2554, 16
      %v2843 = vrot.slane %v2841, 3
      %v2844 = vor.u32 %v2840, %v2843
      %v2846 = vshrl.u32 %v2555, 16
      %v2848 = vrot.slane %v2846, 2
      %v2849 = vshll.u32 %v2555, 16
      %v2851 = vrot.slane %v2849, 3
      %v2852 = vor.u32 %v2848, %v2851
      %v2853 = vsel %vm2836, %v2844, %v2852
      %v2855 = vshrl.u32 %v2556, 16
      %v2857 = vrot.slane %v2855, 2
      %v2858 = vshll.u32 %v2556, 16
      %v2860 = vrot.slane %v2858, 3
      %v2861 = vor.u32 %v2857, %v2860
      %v2862 = vsel %vm2836, %v2852, %v2861
      %v2864 = vshrl.u32 %v2557, 16
      %v2866 = vrot.slane %v2864, 2
      %v2867 = vshll.u32 %v2557, 16
      %v2869 = vrot.slane %v2867, 3
      %v2870 = vor.u32 %v2866, %v2869
      %v2871 = vsel %vm2836, %v2861, %v2870
      %v2873 = vshrl.u32 %v2558, 16
      %v2875 = vrot.slane %v2873, 2
      %v2876 = vshll.u32 %v2558, 16
      %v2878 = vrot.slane %v2876, 3
      %v2879 = vor.u32 %v2875, %v2878
      %v2880 = vsel %vm2836, %v2870, %v2879
      %v2882 = vshrl.u32 %v2559, 16
      %v2884 = vrot.slane %v2882, 2
      %v2885 = vshll.u32 %v2559, 16
      %v2887 = vrot.slane %v2885, 3
      %v2888 = vor.u32 %v2884, %v2887
      %v2889 = vsel %vm2836, %v2879, %v2888
      %v2891 = vshrl.u32 %v2560, 16
      %v2893 = vrot.slane %v2891, 2
      %v2894 = vshll.u32 %v2560, 16
      %v2896 = vrot.slane %v2894, 3
      %v2897 = vor.u32 %v2893, %v2896
      %v2898 = vsel %vm2836, %v2888, %v2897
      %v2900 = vshrl.u32 %v2561, 16
      %v2902 = vrot.slane %v2900, 2
      %v2903 = vshll.u32 %v2561, 16
      %v2905 = vrot.slane %v2903, 3
      %v2906 = vor.u32 %v2902, %v2905
      %v2907 = vsel %vm2836, %v2897, %v2906
      %v2909 = vshrl.u32 %v2562, 16
      %v2911 = vrot.slane %v2909, 2
      %v2912 = vshll.u32 %v2562, 16
      %v2914 = vrot.slane %v2912, 3
      %v2915 = vor.u32 %v2911, %v2914
      %v2916 = vsel %vm2836, %v2906, %v2915
      %v2918 = vshrl.u32 %v2563, 16
      %v2920 = vrot.slane %v2918, 2
      %v2921 = vshll.u32 %v2563, 16
      %v2923 = vrot.slane %v2921, 3
      %v2924 = vor.u32 %v2920, %v2923
      %v2925 = vsel %vm2836, %v2915, %v2924
      %v2927 = vshrl.u32 %v2564, 16
      %v2929 = vrot.slane %v2927, 2
      %v2930 = vshll.u32 %v2564, 16
      %v2932 = vrot.slane %v2930, 3
      %v2933 = vor.u32 %v2929, %v2932
      %v2934 = vsel %vm2836, %v2924, %v2933
      %v2936 = vshrl.u32 %v2565, 16
      %v2938 = vrot.slane %v2936, 2
      %v2939 = vshll.u32 %v2565, 16
      %v2941 = vrot.slane %v2939, 3
      %v2942 = vor.u32 %v2938, %v2941
      %v2943 = vsel %vm2836, %v2933, %v2942
      %v2945 = vshrl.u32 %v2566, 16
      %v2947 = vrot.slane %v2945, 2
      %v2948 = vshll.u32 %v2566, 16
      %v2950 = vrot.slane %v2948, 3
      %v2951 = vor.u32 %v2947, %v2950
      %v2952 = vsel %vm2836, %v2942, %v2951
      %v2954 = vshrl.u32 %v2567, 16
      %v2956 = vrot.slane %v2954, 2
      %v2957 = vshll.u32 %v2567, 16
      %v2959 = vrot.slane %v2957, 3
      %v2960 = vor.u32 %v2956, %v2959
      %v2961 = vsel %vm2836, %v2951, %v2960
      %v2963 = vshrl.u32 %v2568, 16
      %v2965 = vrot.slane %v2963, 2
      %v2966 = vshll.u32 %v2568, 16
      %v2968 = vrot.slane %v2966, 3
      %v2969 = vor.u32 %v2965, %v2968
      %v2970 = vsel %vm2836, %v2960, %v2969
      %v2972 = vshrl.u32 %v2569, 16
      %v2974 = vrot.slane %v2972, 2
      %v2975 = vshll.u32 %v2569, 16
      %v2977 = vrot.slane %v2975, 3
      %v2978 = vor.u32 %v2974, %v2977
      %v2979 = vsel %vm2836, %v2969, %v2978
      %v2981 = vshrl.u32 %v2570, 16
      %v2983 = vrot.slane %v2981, 2
      %v2984 = vshll.u32 %v2570, 16
      %v2986 = vrot.slane %v2984, 3
      %v2987 = vor.u32 %v2983, %v2986
      %v2988 = vsel %vm2836, %v2978, %v2987
      %v2990 = vshrl.u32 %v2571, 16
      %v2992 = vrot.slane %v2990, 2
      %v2993 = vshll.u32 %v2571, 16
      %v2995 = vrot.slane %v2993, 3
      %v2996 = vor.u32 %v2992, %v2995
      %v2997 = vsel %vm2836, %v2987, %v2996
      %v2999 = vshrl.u32 %v2835, 16
      %v3001 = vrot.slane %v2999, 2
      %v3002 = vshll.u32 %v2835, 16
      %v3004 = vrot.slane %v3002, 3
      %v3005 = vor.u32 %v3001, %v3004
      %v3006 = vsel %vm2836, %v2996, %v3005
      %v3015 = vunpack.c.l.b16 %v2825
      %v3016 = vunpack.c.l.b16 %v2826
      %v3017 = vunpack.c.l.b16 %v2827
      %v3018 = vunpack.c.l.b16 %v2828
      %v3019 = vunpack.c.l.b16 %v2829
      %v3020 = vunpack.c.l.b16 %v2830
      %v3021 = vunpack.c.l.b16 %v2831
      %v3022 = vunpack.c.l.b16 %v2832
      %v3023 = vpack.c.b16 %v3016, %v3015
      %v3024 = vpack.c.b16 %v3018, %v3017
      %v3025 = vpack.c.b16 %v3020, %v3019
      %v3026 = vpack.c.b16 %v3022, %v3021
      %v3032 = vsel %vm429, %v2853, 0
      %v3035 = vsel %vm429, %v2862, 0
      %v3038 = vsel %vm429, %v2871, 0
      %v3041 = vsel %vm429, %v2880, 0
      %v3044 = vsel %vm429, %v2889, 0
      %v3047 = vsel %vm429, %v2898, 0
      %v3050 = vsel %vm429, %v2907, 0
      %v3053 = vsel %vm429, %v2916, 0
      %v3056 = vsel %vm429, %v2925, 0
      %v3059 = vsel %vm429, %v2934, 0
      %v3062 = vsel %vm429, %v2943, 0
      %v3065 = vsel %vm429, %v2952, 0
      %v3068 = vsel %vm429, %v2961, 0
      %v3071 = vsel %vm429, %v2970, 0
      %v3074 = vsel %vm429, %v2979, 0
      %v3077 = vsel %vm429, %v2988, 0
      %v3080 = vsel %vm429, %v2997, 0
      %v3083 = vsel %vm429, %v3006, 0
      %3085 = vmatpush.bf16.msra.mxu0 0
      %3086 = vmatpush.bf16.msra.mxu0 0
      %3087 = vmatpush.bf16.msra.mxu0 0
      %3088 = vmatpush.bf16.msra.mxu0 0
      %3089 = vmatpush.bf16.msra.mxu0 %v3026
      %3090 = vmatpush.bf16.msra.mxu0 %v3025
      %3091 = vmatpush.bf16.msra.mxu0 %v3024
      %3092 = vmatpush.bf16.msra.mxu0 %v3023
      %3093 = vmatmul.bf16.gmra.mxu0 %v3032
      %v3094 = vpop.f32.mrf.mxu0
      %v3095 = vadd.f32 0.0, %v3094
      %v3096 = vpop.f32.mrf.mxu0
      %v3097 = vadd.f32 0.0, %v3096
      %3098 = vmatmul.bf16.gmra.mxu0 %v3035
      %v3099 = vpop.f32.mrf.mxu0
      %v3100 = vadd.f32 0.0, %v3099
      %v3101 = vpop.f32.mrf.mxu0
      %v3102 = vadd.f32 0.0, %v3101
      %3103 = vmatmul.bf16.gmra.mxu0 %v3038
      %v3104 = vpop.f32.mrf.mxu0
      %v3105 = vadd.f32 0.0, %v3104
      %v3106 = vpop.f32.mrf.mxu0
      %v3107 = vadd.f32 0.0, %v3106
      %3108 = vmatmul.bf16.gmra.mxu0 %v3041
      %v3109 = vpop.f32.mrf.mxu0
      %v3110 = vadd.f32 0.0, %v3109
      %v3111 = vpop.f32.mrf.mxu0
      %v3112 = vadd.f32 0.0, %v3111
      %3113 = vmatmul.bf16.gmra.mxu0 %v3044
      %v3114 = vpop.f32.mrf.mxu0
      %v3115 = vadd.f32 0.0, %v3114
      %v3116 = vpop.f32.mrf.mxu0
      %v3117 = vadd.f32 0.0, %v3116
      %3118 = vmatmul.bf16.gmra.mxu0 %v3047
      %v3119 = vpop.f32.mrf.mxu0
      %v3120 = vadd.f32 0.0, %v3119
      %v3121 = vpop.f32.mrf.mxu0
      %v3122 = vadd.f32 0.0, %v3121
      %3123 = vmatmul.bf16.gmra.mxu0 %v3050
      %v3124 = vpop.f32.mrf.mxu0
      %v3125 = vadd.f32 0.0, %v3124
      %v3126 = vpop.f32.mrf.mxu0
      %v3127 = vadd.f32 0.0, %v3126
      %3128 = vmatmul.bf16.gmra.mxu0 %v3053
      %v3129 = vpop.f32.mrf.mxu0
      %v3130 = vadd.f32 0.0, %v3129
      %v3131 = vpop.f32.mrf.mxu0
      %v3132 = vadd.f32 0.0, %v3131
      %3133 = vmatmul.bf16.gmra.mxu0 %v3056
      %v3134 = vpop.f32.mrf.mxu0
      %v3135 = vadd.f32 0.0, %v3134
      %v3136 = vpop.f32.mrf.mxu0
      %v3137 = vadd.f32 0.0, %v3136
      %3138 = vmatmul.bf16.gmra.mxu0 %v3059
      %v3139 = vpop.f32.mrf.mxu0
      %v3140 = vadd.f32 0.0, %v3139
      %v3141 = vpop.f32.mrf.mxu0
      %v3142 = vadd.f32 0.0, %v3141
      %3143 = vmatmul.bf16.gmra.mxu0 %v3062
      %v3144 = vpop.f32.mrf.mxu0
      %v3145 = vadd.f32 0.0, %v3144
      %v3146 = vpop.f32.mrf.mxu0
      %v3147 = vadd.f32 0.0, %v3146
      %3148 = vmatmul.bf16.gmra.mxu0 %v3065
      %v3149 = vpop.f32.mrf.mxu0
      %v3150 = vadd.f32 0.0, %v3149
      %v3151 = vpop.f32.mrf.mxu0
      %v3152 = vadd.f32 0.0, %v3151
      %3153 = vmatmul.bf16.gmra.mxu0 %v3068
      %v3154 = vpop.f32.mrf.mxu0
      %v3155 = vadd.f32 0.0, %v3154
      %v3156 = vpop.f32.mrf.mxu0
      %v3157 = vadd.f32 0.0, %v3156
      %3158 = vmatmul.bf16.gmra.mxu0 %v3071
      %v3159 = vpop.f32.mrf.mxu0
      %v3160 = vadd.f32 0.0, %v3159
      %v3161 = vpop.f32.mrf.mxu0
      %v3162 = vadd.f32 0.0, %v3161
      %3163 = vmatmul.bf16.gmra.mxu0 %v3074
      %v3164 = vpop.f32.mrf.mxu0
      %v3165 = vadd.f32 0.0, %v3164
      %v3166 = vpop.f32.mrf.mxu0
      %v3167 = vadd.f32 0.0, %v3166
      %3168 = vmatmul.bf16.gmra.mxu0 %v3077
      %v3169 = vpop.f32.mrf.mxu0
      %v3170 = vadd.f32 0.0, %v3169
      %v3171 = vpop.f32.mrf.mxu0
      %v3172 = vadd.f32 0.0, %v3171
      %3173 = vmatmul.bf16.gmra.mxu0 %v3080
      %v3174 = vpop.f32.mrf.mxu0
      %v3175 = vadd.f32 0.0, %v3174
      %v3176 = vpop.f32.mrf.mxu0
      %v3177 = vadd.f32 0.0, %v3176
      %3178 = vmatmul.bf16.gmra.mxu0 %v3083
      %v3179 = vpop.f32.mrf.mxu0
      %v3180 = vadd.f32 0.0, %v3179
      %v3181 = vpop.f32.mrf.mxu0
      %v3182 = vadd.f32 0.0, %v3181
      %3183 = vdwg.mxu0
      %v3184 = vadd.f32 %v2787, %v3095
      %v3185 = vadd.f32 %v2788, %v3097
      %v3186 = vadd.f32 %v2789, %v3100
      %v3187 = vadd.f32 %v2790, %v3102
      %v3188 = vadd.f32 %v2791, %v3105
      %v3189 = vadd.f32 %v2792, %v3107
      %v3190 = vadd.f32 %v2793, %v3110
      %v3191 = vadd.f32 %v2794, %v3112
      %v3192 = vadd.f32 %v2795, %v3115
      %v3193 = vadd.f32 %v2796, %v3117
      %v3194 = vadd.f32 %v2797, %v3120
      %v3195 = vadd.f32 %v2798, %v3122
      %v3196 = vadd.f32 %v2799, %v3125
      %v3197 = vadd.f32 %v2800, %v3127
      %v3198 = vadd.f32 %v2801, %v3130
      %v3199 = vadd.f32 %v2802, %v3132
      %v3200 = vadd.f32 %v2803, %v3135
      %v3201 = vadd.f32 %v2804, %v3137
      %v3202 = vadd.f32 %v2805, %v3140
      %v3203 = vadd.f32 %v2806, %v3142
      %v3204 = vadd.f32 %v2807, %v3145
      %v3205 = vadd.f32 %v2808, %v3147
      %v3206 = vadd.f32 %v2809, %v3150
      %v3207 = vadd.f32 %v2810, %v3152
      %v3208 = vadd.f32 %v2811, %v3155
      %v3209 = vadd.f32 %v2812, %v3157
      %v3210 = vadd.f32 %v2813, %v3160
      %v3211 = vadd.f32 %v2814, %v3162
      %v3212 = vadd.f32 %v2815, %v3165
      %v3213 = vadd.f32 %v2816, %v3167
      %v3214 = vadd.f32 %v2817, %v3170
      %v3215 = vadd.f32 %v2818, %v3172
      %v3216 = vadd.f32 %v2819, %v3175
      %v3217 = vadd.f32 %v2820, %v3177
      %v3218 = vadd.f32 %v2821, %v3180
      %v3219 = vadd.f32 %v2822, %v3182
      %v3220 = vld [vmem:[%s246 + $0x10] sm:$0x8]
      %s3221 = scalar_lea.vmem %s1, 256
      %v3222 = vld [vmem:[%s3221] sm:$0xf]
      %v3223 = vld [vmem:[%s3221 + $0x4] sm:$0xf]
      %v3224 = vld [vmem:[%s3221 + $0x8] sm:$0xf]
      %v3225 = vld [vmem:[%s3221 + $0xc] sm:$0xf]
      %v3226 = vld [vmem:[%s3221 + $0x10] sm:$0xf]
      %v3227 = vld [vmem:[%s3221 + $0x14] sm:$0xf]
      %v3228 = vld [vmem:[%s3221 + $0x18] sm:$0xf]
      %v3229 = vld [vmem:[%s3221 + $0x1c] sm:$0xf]
      %v3231 = vunpack.c.l.b16 %v3220
      %v3232 = vpack.c.b16 %v2518, %v3231
      %vm3233 = vcmask 1044480
      %v3234 = vrot.slane %v3232, 3
      %v3235 = vrot.slane %v2555, 3
      %v3236 = vsel %vm3233, %v3234, %v3235
      %v3237 = vrot.slane %v2556, 3
      %v3238 = vsel %vm3233, %v3235, %v3237
      %v3239 = vrot.slane %v2557, 3
      %v3240 = vsel %vm3233, %v3237, %v3239
      %v3241 = vrot.slane %v2558, 3
      %v3242 = vsel %vm3233, %v3239, %v3241
      %v3243 = vrot.slane %v2559, 3
      %v3244 = vsel %vm3233, %v3241, %v3243
      %v3245 = vrot.slane %v2560, 3
      %v3246 = vsel %vm3233, %v3243, %v3245
      %v3247 = vrot.slane %v2561, 3
      %v3248 = vsel %vm3233, %v3245, %v3247
      %v3249 = vrot.slane %v2562, 3
      %v3250 = vsel %vm3233, %v3247, %v3249
      %v3251 = vrot.slane %v2563, 3
      %v3252 = vsel %vm3233, %v3249, %v3251
      %v3253 = vrot.slane %v2564, 3
      %v3254 = vsel %vm3233, %v3251, %v3253
      %v3255 = vrot.slane %v2565, 3
      %v3256 = vsel %vm3233, %v3253, %v3255
      %v3257 = vrot.slane %v2566, 3
      %v3258 = vsel %vm3233, %v3255, %v3257
      %v3259 = vrot.slane %v2567, 3
      %v3260 = vsel %vm3233, %v3257, %v3259
      %v3261 = vrot.slane %v2568, 3
      %v3262 = vsel %vm3233, %v3259, %v3261
      %v3263 = vrot.slane %v2569, 3
      %v3264 = vsel %vm3233, %v3261, %v3263
      %v3265 = vrot.slane %v2570, 3
      %v3266 = vsel %vm3233, %v3263, %v3265
      %v3267 = vrot.slane %v2571, 3
      %v3268 = vsel %vm3233, %v3265, %v3267
      %v3269 = vrot.slane %v2835, 3
      %v3270 = vsel %vm3233, %v3267, %v3269
      %v3279 = vunpack.c.l.b16 %v3222
      %v3280 = vunpack.c.l.b16 %v3223
      %v3281 = vunpack.c.l.b16 %v3224
      %v3282 = vunpack.c.l.b16 %v3225
      %v3283 = vunpack.c.l.b16 %v3226
      %v3284 = vunpack.c.l.b16 %v3227
      %v3285 = vunpack.c.l.b16 %v3228
      %v3286 = vunpack.c.l.b16 %v3229
      %v3287 = vpack.c.b16 %v3280, %v3279
      %v3288 = vpack.c.b16 %v3282, %v3281
      %v3289 = vpack.c.b16 %v3284, %v3283
      %v3290 = vpack.c.b16 %v3286, %v3285
      %v3296 = vsel %vm429, %v3236, 0
      %v3299 = vsel %vm429, %v3238, 0
      %v3302 = vsel %vm429, %v3240, 0
      %v3305 = vsel %vm429, %v3242, 0
      %v3308 = vsel %vm429, %v3244, 0
      %v3311 = vsel %vm429, %v3246, 0
      %v3314 = vsel %vm429, %v3248, 0
      %v3317 = vsel %vm429, %v3250, 0
      %v3320 = vsel %vm429, %v3252, 0
      %v3323 = vsel %vm429, %v3254, 0
      %v3326 = vsel %vm429, %v3256, 0
      %v3329 = vsel %vm429, %v3258, 0
      %v3332 = vsel %vm429, %v3260, 0
      %v3335 = vsel %vm429, %v3262, 0
      %v3338 = vsel %vm429, %v3264, 0
      %v3341 = vsel %vm429, %v3266, 0
      %v3344 = vsel %vm429, %v3268, 0
      %v3347 = vsel %vm429, %v3270, 0
      %3349 = vmatpush.bf16.msra.mxu0 0
      %3350 = vmatpush.bf16.msra.mxu0 0
      %3351 = vmatpush.bf16.msra.mxu0 0
      %3352 = vmatpush.bf16.msra.mxu0 0
      %3353 = vmatpush.bf16.msra.mxu0 %v3290
      %3354 = vmatpush.bf16.msra.mxu0 %v3289
      %3355 = vmatpush.bf16.msra.mxu0 %v3288
      %3356 = vmatpush.bf16.msra.mxu0 %v3287
      %3357 = vmatmul.bf16.gmra.mxu0 %v3296
      %v3358 = vpop.f32.mrf.mxu0
      %v3359 = vadd.f32 0.0, %v3358
      %v3360 = vpop.f32.mrf.mxu0
      %v3361 = vadd.f32 0.0, %v3360
      %3362 = vmatmul.bf16.gmra.mxu0 %v3299
      %v3363 = vpop.f32.mrf.mxu0
      %v3364 = vadd.f32 0.0, %v3363
      %v3365 = vpop.f32.mrf.mxu0
      %v3366 = vadd.f32 0.0, %v3365
      %3367 = vmatmul.bf16.gmra.mxu0 %v3302
      %v3368 = vpop.f32.mrf.mxu0
      %v3369 = vadd.f32 0.0, %v3368
      %v3370 = vpop.f32.mrf.mxu0
      %v3371 = vadd.f32 0.0, %v3370
      %3372 = vmatmul.bf16.gmra.mxu0 %v3305
      %v3373 = vpop.f32.mrf.mxu0
      %v3374 = vadd.f32 0.0, %v3373
      %v3375 = vpop.f32.mrf.mxu0
      %v3376 = vadd.f32 0.0, %v3375
      %3377 = vmatmul.bf16.gmra.mxu0 %v3308
      %v3378 = vpop.f32.mrf.mxu0
      %v3379 = vadd.f32 0.0, %v3378
      %v3380 = vpop.f32.mrf.mxu0
      %v3381 = vadd.f32 0.0, %v3380
      %3382 = vmatmul.bf16.gmra.mxu0 %v3311
      %v3383 = vpop.f32.mrf.mxu0
      %v3384 = vadd.f32 0.0, %v3383
      %v3385 = vpop.f32.mrf.mxu0
      %v3386 = vadd.f32 0.0, %v3385
      %3387 = vmatmul.bf16.gmra.mxu0 %v3314
      %v3388 = vpop.f32.mrf.mxu0
      %v3389 = vadd.f32 0.0, %v3388
      %v3390 = vpop.f32.mrf.mxu0
      %v3391 = vadd.f32 0.0, %v3390
      %3392 = vmatmul.bf16.gmra.mxu0 %v3317
      %v3393 = vpop.f32.mrf.mxu0
      %v3394 = vadd.f32 0.0, %v3393
      %v3395 = vpop.f32.mrf.mxu0
      %v3396 = vadd.f32 0.0, %v3395
      %3397 = vmatmul.bf16.gmra.mxu0 %v3320
      %v3398 = vpop.f32.mrf.mxu0
      %v3399 = vadd.f32 0.0, %v3398
      %v3400 = vpop.f32.mrf.mxu0
      %v3401 = vadd.f32 0.0, %v3400
      %3402 = vmatmul.bf16.gmra.mxu0 %v3323
      %v3403 = vpop.f32.mrf.mxu0
      %v3404 = vadd.f32 0.0, %v3403
      %v3405 = vpop.f32.mrf.mxu0
      %v3406 = vadd.f32 0.0, %v3405
      %3407 = vmatmul.bf16.gmra.mxu0 %v3326
      %v3408 = vpop.f32.mrf.mxu0
      %v3409 = vadd.f32 0.0, %v3408
      %v3410 = vpop.f32.mrf.mxu0
      %v3411 = vadd.f32 0.0, %v3410
      %3412 = vmatmul.bf16.gmra.mxu0 %v3329
      %v3413 = vpop.f32.mrf.mxu0
      %v3414 = vadd.f32 0.0, %v3413
      %v3415 = vpop.f32.mrf.mxu0
      %v3416 = vadd.f32 0.0, %v3415
      %3417 = vmatmul.bf16.gmra.mxu0 %v3332
      %v3418 = vpop.f32.mrf.mxu0
      %v3419 = vadd.f32 0.0, %v3418
      %v3420 = vpop.f32.mrf.mxu0
      %v3421 = vadd.f32 0.0, %v3420
      %3422 = vmatmul.bf16.gmra.mxu0 %v3335
      %v3423 = vpop.f32.mrf.mxu0
      %v3424 = vadd.f32 0.0, %v3423
      %v3425 = vpop.f32.mrf.mxu0
      %v3426 = vadd.f32 0.0, %v3425
      %3427 = vmatmul.bf16.gmra.mxu0 %v3338
      %v3428 = vpop.f32.mrf.mxu0
      %v3429 = vadd.f32 0.0, %v3428
      %v3430 = vpop.f32.mrf.mxu0
      %v3431 = vadd.f32 0.0, %v3430
      %3432 = vmatmul.bf16.gmra.mxu0 %v3341
      %v3433 = vpop.f32.mrf.mxu0
      %v3434 = vadd.f32 0.0, %v3433
      %v3435 = vpop.f32.mrf.mxu0
      %v3436 = vadd.f32 0.0, %v3435
      %3437 = vmatmul.bf16.gmra.mxu0 %v3344
      %v3438 = vpop.f32.mrf.mxu0
      %v3439 = vadd.f32 0.0, %v3438
      %v3440 = vpop.f32.mrf.mxu0
      %v3441 = vadd.f32 0.0, %v3440
      %3442 = vmatmul.bf16.gmra.mxu0 %v3347
      %v3443 = vpop.f32.mrf.mxu0
      %v3444 = vadd.f32 0.0, %v3443
      %v3445 = vpop.f32.mrf.mxu0
      %v3446 = vadd.f32 0.0, %v3445
      %3447 = vdwg.mxu0
      %v3448 = vadd.f32 %v3184, %v3359
      %v3449 = vadd.f32 %v3185, %v3361
      %v3450 = vadd.f32 %v3186, %v3364
      %v3451 = vadd.f32 %v3187, %v3366
      %v3452 = vadd.f32 %v3188, %v3369
      %v3453 = vadd.f32 %v3189, %v3371
      %v3454 = vadd.f32 %v3190, %v3374
      %v3455 = vadd.f32 %v3191, %v3376
      %v3456 = vadd.f32 %v3192, %v3379
      %v3457 = vadd.f32 %v3193, %v3381
      %v3458 = vadd.f32 %v3194, %v3384
      %v3459 = vadd.f32 %v3195, %v3386
      %v3460 = vadd.f32 %v3196, %v3389
      %v3461 = vadd.f32 %v3197, %v3391
      %v3462 = vadd.f32 %v3198, %v3394
      %v3463 = vadd.f32 %v3199, %v3396
      %v3464 = vadd.f32 %v3200, %v3399
      %v3465 = vadd.f32 %v3201, %v3401
      %v3466 = vadd.f32 %v3202, %v3404
      %v3467 = vadd.f32 %v3203, %v3406
      %v3468 = vadd.f32 %v3204, %v3409
      %v3469 = vadd.f32 %v3205, %v3411
      %v3470 = vadd.f32 %v3206, %v3414
      %v3471 = vadd.f32 %v3207, %v3416
      %v3472 = vadd.f32 %v3208, %v3419
      %v3473 = vadd.f32 %v3209, %v3421
      %v3474 = vadd.f32 %v3210, %v3424
      %v3475 = vadd.f32 %v3211, %v3426
      %v3476 = vadd.f32 %v3212, %v3429
      %v3477 = vadd.f32 %v3213, %v3431
      %v3478 = vadd.f32 %v3214, %v3434
      %v3479 = vadd.f32 %v3215, %v3436
      %v3480 = vadd.f32 %v3216, %v3439
      %v3481 = vadd.f32 %v3217, %v3441
      %v3482 = vadd.f32 %v3218, %v3444
      %v3483 = vadd.f32 %v3219, %v3446
      %v3484 = vmax.f32 %v3448, 0.0
      %v3485 = vmax.f32 %v3449, 0.0
      %v3486 = vmax.f32 %v3450, 0.0
      %v3487 = vmax.f32 %v3451, 0.0
      %v3488 = vmax.f32 %v3452, 0.0
      %v3489 = vmax.f32 %v3453, 0.0
      %v3490 = vmax.f32 %v3454, 0.0
      %v3491 = vmax.f32 %v3455, 0.0
      %v3492 = vmax.f32 %v3456, 0.0
      %v3493 = vmax.f32 %v3457, 0.0
      %v3494 = vmax.f32 %v3458, 0.0
      %v3495 = vmax.f32 %v3459, 0.0
      %v3496 = vmax.f32 %v3460, 0.0
      %v3497 = vmax.f32 %v3461, 0.0
      %v3498 = vmax.f32 %v3462, 0.0
      %v3499 = vmax.f32 %v3463, 0.0
      %v3500 = vmax.f32 %v3464, 0.0
      %v3501 = vmax.f32 %v3465, 0.0
      %v3502 = vmax.f32 %v3466, 0.0
      %v3503 = vmax.f32 %v3467, 0.0
      %v3504 = vmax.f32 %v3468, 0.0
      %v3505 = vmax.f32 %v3469, 0.0
      %v3506 = vmax.f32 %v3470, 0.0
      %v3507 = vmax.f32 %v3471, 0.0
      %v3508 = vmax.f32 %v3472, 0.0
      %v3509 = vmax.f32 %v3473, 0.0
      %v3510 = vmax.f32 %v3474, 0.0
      %v3511 = vmax.f32 %v3475, 0.0
      %v3512 = vmax.f32 %v3476, 0.0
      %v3513 = vmax.f32 %v3477, 0.0
      %v3514 = vmax.f32 %v3478, 0.0
      %v3515 = vmax.f32 %v3479, 0.0
      %v3516 = vmax.f32 %v3480, 0.0
      %v3517 = vmax.f32 %v3481, 0.0
      %v3518 = vmax.f32 %v3482, 0.0
      %v3519 = vmax.f32 %v3483, 0.0
      %v3520 = vld [vmem:[%s5] sm:$0xff]
      %v3521 = vld [vmem:[%s5 + $0x8] sm:$0xff]
      %v3522 = vld [vmem:[%s5 + $0x10] sm:$0xff]
      %v3523 = vld [vmem:[%s5 + $0x18] sm:$0xff]
      %v3524 = vld [vmem:[%s5 + $0x20] sm:$0xff]
      %v3525 = vld [vmem:[%s5 + $0x28] sm:$0xff]
      %v3526 = vld [vmem:[%s5 + $0x30] sm:$0xff]
      %v3527 = vld [vmem:[%s5 + $0x38] sm:$0xff]
      %v3528 = vld [vmem:[%s5 + $0x40] sm:$0xff]
      %v3529 = vld [vmem:[%s5 + $0x48] sm:$0xff]
      %v3530 = vld [vmem:[%s5 + $0x50] sm:$0xff]
      %v3531 = vld [vmem:[%s5 + $0x58] sm:$0xff]
      %v3532 = vld [vmem:[%s5 + $0x60] sm:$0xff]
      %v3533 = vld [vmem:[%s5 + $0x68] sm:$0xff]
      %v3534 = vld [vmem:[%s5 + $0x70] sm:$0xff]
      %v3535 = vld [vmem:[%s5 + $0x78] sm:$0xff]
      %v3536 = vld [vmem:[%s5 + $0x80] sm:$0xff]
      %v3537 = vld [vmem:[%s5 + $0x88] sm:$0xff]
      %v3538 = vld [vmem:[%s5 + $0x90] sm:$0xff]
      %v3539 = vld [vmem:[%s5 + $0x98] sm:$0xff]
      %v3540 = vld [vmem:[%s5 + $0xa0] sm:$0xff]
      %v3541 = vld [vmem:[%s5 + $0xa8] sm:$0xff]
      %v3542 = vld [vmem:[%s5 + $0xb0] sm:$0xff]
      %v3543 = vld [vmem:[%s5 + $0xb8] sm:$0xff]
      %v3544 = vld [vmem:[%s5 + $0xc0] sm:$0xff]
      %v3545 = vld [vmem:[%s5 + $0xc8] sm:$0xff]
      %v3546 = vld [vmem:[%s5 + $0xd0] sm:$0xff]
      %v3547 = vld [vmem:[%s5 + $0xd8] sm:$0xff]
      %v3548 = vld [vmem:[%s5 + $0xe0] sm:$0xff]
      %v3549 = vld [vmem:[%s5 + $0xe8] sm:$0xff]
      %v3550 = vld [vmem:[%s5 + $0xf0] sm:$0xff]
      %v3551 = vld [vmem:[%s5 + $0xf8] sm:$0xff]
      %v3552 = vld [vmem:[%s5 + $0x100] sm:$0xff]
      %v3553 = vld [vmem:[%s5 + $0x108] sm:$0xff]
      %v3554 = vld [vmem:[%s5 + $0x110] sm:$0xff]
      %v3555 = vld [vmem:[%s5 + $0x118] sm:$0xff]
      %3557 = vset.pattern.permute.xlu0 0
      %3558 = vperm.xlu0 %3557, %v3520
      %v3559 = vpop.permute.xlu0 %3558
      %3562 = vset.pattern.permute.xlu0 0
      %3563 = vperm.xlu0 %3562, %v3521
      %v3564 = vpop.permute.xlu0 %3563
      %3567 = vset.pattern.permute.xlu0 0
      %3568 = vperm.xlu0 %3567, %v3522
      %v3569 = vpop.permute.xlu0 %3568
      %3572 = vset.pattern.permute.xlu0 0
      %3573 = vperm.xlu0 %3572, %v3523
      %v3574 = vpop.permute.xlu0 %3573
      %3577 = vset.pattern.permute.xlu0 0
      %3578 = vperm.xlu0 %3577, %v3524
      %v3579 = vpop.permute.xlu0 %3578
      %3582 = vset.pattern.permute.xlu0 0
      %3583 = vperm.xlu0 %3582, %v3525
      %v3584 = vpop.permute.xlu0 %3583
      %3587 = vset.pattern.permute.xlu0 0
      %3588 = vperm.xlu0 %3587, %v3526
      %v3589 = vpop.permute.xlu0 %3588
      %3592 = vset.pattern.permute.xlu0 0
      %3593 = vperm.xlu0 %3592, %v3527
      %v3594 = vpop.permute.xlu0 %3593
      %3597 = vset.pattern.permute.xlu0 0
      %3598 = vperm.xlu0 %3597, %v3528
      %v3599 = vpop.permute.xlu0 %3598
      %3602 = vset.pattern.permute.xlu0 0
      %3603 = vperm.xlu0 %3602, %v3529
      %v3604 = vpop.permute.xlu0 %3603
      %3607 = vset.pattern.permute.xlu0 0
      %3608 = vperm.xlu0 %3607, %v3530
      %v3609 = vpop.permute.xlu0 %3608
      %3612 = vset.pattern.permute.xlu0 0
      %3613 = vperm.xlu0 %3612, %v3531
      %v3614 = vpop.permute.xlu0 %3613
      %3617 = vset.pattern.permute.xlu0 0
      %3618 = vperm.xlu0 %3617, %v3532
      %v3619 = vpop.permute.xlu0 %3618
      %3622 = vset.pattern.permute.xlu0 0
      %3623 = vperm.xlu0 %3622, %v3533
      %v3624 = vpop.permute.xlu0 %3623
      %3627 = vset.pattern.permute.xlu0 0
      %3628 = vperm.xlu0 %3627, %v3534
      %v3629 = vpop.permute.xlu0 %3628
      %3632 = vset.pattern.permute.xlu0 0
      %3633 = vperm.xlu0 %3632, %v3535
      %v3634 = vpop.permute.xlu0 %3633
      %3637 = vset.pattern.permute.xlu0 0
      %3638 = vperm.xlu0 %3637, %v3536
      %v3639 = vpop.permute.xlu0 %3638
      %3642 = vset.pattern.permute.xlu0 0
      %3643 = vperm.xlu0 %3642, %v3537
      %v3644 = vpop.permute.xlu0 %3643
      %3647 = vset.pattern.permute.xlu0 0
      %3648 = vperm.xlu0 %3647, %v3538
      %v3649 = vpop.permute.xlu0 %3648
      %3652 = vset.pattern.permute.xlu0 0
      %3653 = vperm.xlu0 %3652, %v3539
      %v3654 = vpop.permute.xlu0 %3653
      %3657 = vset.pattern.permute.xlu0 0
      %3658 = vperm.xlu0 %3657, %v3540
      %v3659 = vpop.permute.xlu0 %3658
      %3662 = vset.pattern.permute.xlu0 0
      %3663 = vperm.xlu0 %3662, %v3541
      %v3664 = vpop.permute.xlu0 %3663
      %3667 = vset.pattern.permute.xlu0 0
      %3668 = vperm.xlu0 %3667, %v3542
      %v3669 = vpop.permute.xlu0 %3668
      %3672 = vset.pattern.permute.xlu0 0
      %3673 = vperm.xlu0 %3672, %v3543
      %v3674 = vpop.permute.xlu0 %3673
      %3677 = vset.pattern.permute.xlu0 0
      %3678 = vperm.xlu0 %3677, %v3544
      %v3679 = vpop.permute.xlu0 %3678
      %3682 = vset.pattern.permute.xlu0 0
      %3683 = vperm.xlu0 %3682, %v3545
      %v3684 = vpop.permute.xlu0 %3683
      %3687 = vset.pattern.permute.xlu0 0
      %3688 = vperm.xlu0 %3687, %v3546
      %v3689 = vpop.permute.xlu0 %3688
      %3692 = vset.pattern.permute.xlu0 0
      %3693 = vperm.xlu0 %3692, %v3547
      %v3694 = vpop.permute.xlu0 %3693
      %3697 = vset.pattern.permute.xlu0 0
      %3698 = vperm.xlu0 %3697, %v3548
      %v3699 = vpop.permute.xlu0 %3698
      %3702 = vset.pattern.permute.xlu0 0
      %3703 = vperm.xlu0 %3702, %v3549
      %v3704 = vpop.permute.xlu0 %3703
      %3707 = vset.pattern.permute.xlu0 0
      %3708 = vperm.xlu0 %3707, %v3550
      %v3709 = vpop.permute.xlu0 %3708
      %3712 = vset.pattern.permute.xlu0 0
      %3713 = vperm.xlu0 %3712, %v3551
      %v3714 = vpop.permute.xlu0 %3713
      %3717 = vset.pattern.permute.xlu0 0
      %3718 = vperm.xlu0 %3717, %v3552
      %v3719 = vpop.permute.xlu0 %3718
      %3722 = vset.pattern.permute.xlu0 0
      %3723 = vperm.xlu0 %3722, %v3553
      %v3724 = vpop.permute.xlu0 %3723
      %3727 = vset.pattern.permute.xlu0 0
      %3728 = vperm.xlu0 %3727, %v3554
      %v3729 = vpop.permute.xlu0 %3728
      %3732 = vset.pattern.permute.xlu0 0
      %3733 = vperm.xlu0 %3732, %v3555
      %v3734 = vpop.permute.xlu0 %3733
      %v3736 = vmul.f32 %v3484, %v3559
      %v3737 = vmul.f32 %v3485, %v3564
      %v3738 = vmul.f32 %v3486, %v3569
      %v3739 = vmul.f32 %v3487, %v3574
      %v3740 = vmul.f32 %v3488, %v3579
      %v3741 = vmul.f32 %v3489, %v3584
      %v3742 = vmul.f32 %v3490, %v3589
      %v3743 = vmul.f32 %v3491, %v3594
      %v3744 = vmul.f32 %v3492, %v3599
      %v3745 = vmul.f32 %v3493, %v3604
      %v3746 = vmul.f32 %v3494, %v3609
      %v3747 = vmul.f32 %v3495, %v3614
      %v3748 = vmul.f32 %v3496, %v3619
      %v3749 = vmul.f32 %v3497, %v3624
      %v3750 = vmul.f32 %v3498, %v3629
      %v3751 = vmul.f32 %v3499, %v3634
      %v3752 = vmul.f32 %v3500, %v3639
      %v3753 = vmul.f32 %v3501, %v3644
      %v3754 = vmul.f32 %v3502, %v3649
      %v3755 = vmul.f32 %v3503, %v3654
      %v3756 = vmul.f32 %v3504, %v3659
      %v3757 = vmul.f32 %v3505, %v3664
      %v3758 = vmul.f32 %v3506, %v3669
      %v3759 = vmul.f32 %v3507, %v3674
      %v3760 = vmul.f32 %v3508, %v3679
      %v3761 = vmul.f32 %v3509, %v3684
      %v3762 = vmul.f32 %v3510, %v3689
      %v3763 = vmul.f32 %v3511, %v3694
      %v3764 = vmul.f32 %v3512, %v3699
      %v3765 = vmul.f32 %v3513, %v3704
      %v3766 = vmul.f32 %v3514, %v3709
      %v3767 = vmul.f32 %v3515, %v3714
      %v3768 = vmul.f32 %v3516, %v3719
      %v3769 = vmul.f32 %v3517, %v3724
      %v3770 = vmul.f32 %v3518, %v3729
      %v3771 = vmul.f32 %v3519, %v3734
      %v3772 = vpack.c.bf16 %v3736, %v3736
      %v3773 = vpack.c.bf16 %v3737, %v3737
      %v3774 = vpack.c.bf16 %v3738, %v3738
      %v3775 = vpack.c.bf16 %v3739, %v3739
      %v3776 = vpack.c.bf16 %v3740, %v3740
      %v3777 = vpack.c.bf16 %v3741, %v3741
      %v3778 = vpack.c.bf16 %v3742, %v3742
      %v3779 = vpack.c.bf16 %v3743, %v3743
      %v3780 = vpack.c.bf16 %v3744, %v3744
      %v3781 = vpack.c.bf16 %v3745, %v3745
      %v3782 = vpack.c.bf16 %v3746, %v3746
      %v3783 = vpack.c.bf16 %v3747, %v3747
      %v3784 = vpack.c.bf16 %v3748, %v3748
      %v3785 = vpack.c.bf16 %v3749, %v3749
      %v3786 = vpack.c.bf16 %v3750, %v3750
      %v3787 = vpack.c.bf16 %v3751, %v3751
      %v3788 = vpack.c.bf16 %v3752, %v3752
      %v3789 = vpack.c.bf16 %v3753, %v3753
      %v3790 = vpack.c.bf16 %v3754, %v3754
      %v3791 = vpack.c.bf16 %v3755, %v3755
      %v3792 = vpack.c.bf16 %v3756, %v3756
      %v3793 = vpack.c.bf16 %v3757, %v3757
      %v3794 = vpack.c.bf16 %v3758, %v3758
      %v3795 = vpack.c.bf16 %v3759, %v3759
      %v3796 = vpack.c.bf16 %v3760, %v3760
      %v3797 = vpack.c.bf16 %v3761, %v3761
      %v3798 = vpack.c.bf16 %v3762, %v3762
      %v3799 = vpack.c.bf16 %v3763, %v3763
      %v3800 = vpack.c.bf16 %v3764, %v3764
      %v3801 = vpack.c.bf16 %v3765, %v3765
      %v3802 = vpack.c.bf16 %v3766, %v3766
      %v3803 = vpack.c.bf16 %v3767, %v3767
      %v3804 = vpack.c.bf16 %v3768, %v3768
      %v3805 = vpack.c.bf16 %v3769, %v3769
      %v3806 = vpack.c.bf16 %v3770, %v3770
      %v3807 = vpack.c.bf16 %v3771, %v3771
      %3808 = vst.msk [vmem:[#allocation2 + $0x10] sm:$0xf] %vm253, %v3772
      %3809 = vst.msk [vmem:[#allocation2 + $0x14] sm:$0xf] %vm253, %v3773
      %3810 = vst.msk [vmem:[#allocation2 + $0x18] sm:$0xf] %vm253, %v3774
      %3811 = vst.msk [vmem:[#allocation2 + $0x1c] sm:$0xf] %vm253, %v3775
      %3812 = vst.msk [vmem:[#allocation2 + $0x20] sm:$0xf] %vm253, %v3776
      %3813 = vst.msk [vmem:[#allocation2 + $0x24] sm:$0xf] %vm253, %v3777
      %3814 = vst.msk [vmem:[#allocation2 + $0x28] sm:$0xf] %vm253, %v3778
      %3815 = vst.msk [vmem:[#allocation2 + $0x2c] sm:$0xf] %vm253, %v3779
      %3816 = vst.msk [vmem:[#allocation2 + $0x30] sm:$0xf] %vm253, %v3780
      %3817 = vst.msk [vmem:[#allocation2 + $0x34] sm:$0xf] %vm253, %v3781
      %3818 = vst.msk [vmem:[#allocation2 + $0x38] sm:$0xf] %vm253, %v3782
      %3819 = vst.msk [vmem:[#allocation2 + $0x3c] sm:$0xf] %vm253, %v3783
      %3820 = vst.msk [vmem:[#allocation2 + $0x40] sm:$0xf] %vm253, %v3784
      %3821 = vst.msk [vmem:[#allocation2 + $0x44] sm:$0xf] %vm253, %v3785
      %3822 = vst.msk [vmem:[#allocation2 + $0x48] sm:$0xf] %vm253, %v3786
      %3823 = vst.msk [vmem:[#allocation2 + $0x4c] sm:$0xf] %vm253, %v3787
      %3824 = vst.msk [vmem:[#allocation2 + $0x50] sm:$0xf] %vm253, %v3788
      %3825 = vst.msk [vmem:[#allocation2 + $0x54] sm:$0xf] %vm253, %v3789
      %3826 = vst.msk [vmem:[#allocation2 + $0x58] sm:$0xf] %vm253, %v3790
      %3827 = vst.msk [vmem:[#allocation2 + $0x5c] sm:$0xf] %vm253, %v3791
      %3828 = vst.msk [vmem:[#allocation2 + $0x60] sm:$0xf] %vm253, %v3792
      %3829 = vst.msk [vmem:[#allocation2 + $0x64] sm:$0xf] %vm253, %v3793
      %3830 = vst.msk [vmem:[#allocation2 + $0x68] sm:$0xf] %vm253, %v3794
      %3831 = vst.msk [vmem:[#allocation2 + $0x6c] sm:$0xf] %vm253, %v3795
      %3832 = vst.msk [vmem:[#allocation2 + $0x70] sm:$0xf] %vm253, %v3796
      %3833 = vst.msk [vmem:[#allocation2 + $0x74] sm:$0xf] %vm253, %v3797
      %3834 = vst.msk [vmem:[#allocation2 + $0x78] sm:$0xf] %vm253, %v3798
      %3835 = vst.msk [vmem:[#allocation2 + $0x7c] sm:$0xf] %vm253, %v3799
      %3836 = vst.msk [vmem:[#allocation2 + $0x80] sm:$0xf] %vm253, %v3800
      %3837 = vst.msk [vmem:[#allocation2 + $0x84] sm:$0xf] %vm253, %v3801
      %3838 = vst.msk [vmem:[#allocation2 + $0x88] sm:$0xf] %vm253, %v3802
      %3839 = vst.msk [vmem:[#allocation2 + $0x8c] sm:$0xf] %vm253, %v3803
      %3840 = vst.msk [vmem:[#allocation2 + $0x90] sm:$0xf] %vm253, %v3804
      %3841 = vst.msk [vmem:[#allocation2 + $0x94] sm:$0xf] %vm253, %v3805
      %3842 = vst.msk [vmem:[#allocation2 + $0x98] sm:$0xf] %vm253, %v3806
      %3843 = vst.msk [vmem:[#allocation2 + $0x9c] sm:$0xf] %vm253, %v3807
      %v3844 = vld [vmem:[%s246 + $0x8] sm:$0xe]
      %v3845 = vld [vmem:[%s246 + $0xc] sm:$0xf]
      %v3846 = vld [vmem:[%s246 + $0x10] sm:$0xf]
      %v3847 = vld [vmem:[%s246 + $0x14] sm:$0xf]
      %v3848 = vld [vmem:[%s246 + $0x18] sm:$0xf]
      %v3849 = vld [vmem:[%s246 + $0x1c] sm:$0xf]
      %v3850 = vld [vmem:[%s246 + $0x20] sm:$0xf]
      %v3851 = vld [vmem:[%s246 + $0x24] sm:$0xf]
      %v3852 = vld [vmem:[%s246 + $0x28] sm:$0xf]
      %v3853 = vld [vmem:[%s246 + $0x2c] sm:$0xf]
      %v3854 = vld [vmem:[%s246 + $0x30] sm:$0xf]
      %v3855 = vld [vmem:[%s246 + $0x34] sm:$0xf]
      %v3856 = vld [vmem:[%s246 + $0x38] sm:$0xf]
      %v3857 = vld [vmem:[%s246 + $0x3c] sm:$0xf]
      %v3858 = vld [vmem:[%s246 + $0x40] sm:$0xf]
      %v3859 = vld [vmem:[%s246 + $0x44] sm:$0xf]
      %v3860 = vld [vmem:[%s246 + $0x48] sm:$0xf]
      %v3861 = vld [vmem:[%s246 + $0x4c] sm:$0xf]
      %v3862 = vld [vmem:[%s246 + $0x50] sm:$0xf]
      %v3863 = vld [vmem:[%s246 + $0x54] sm:$0xf]
      %v3864 = vld [vmem:[%s246 + $0x58] sm:$0xf]
      %v3865 = vld [vmem:[%s246 + $0x5c] sm:$0xf]
      %v3866 = vld [vmem:[%s246 + $0x60] sm:$0xf]
      %v3867 = vld [vmem:[%s246 + $0x64] sm:$0xf]
      %v3868 = vld [vmem:[%s246 + $0x68] sm:$0xf]
      %v3869 = vld [vmem:[%s246 + $0x6c] sm:$0xf]
      %v3870 = vld [vmem:[%s246 + $0x70] sm:$0xf]
      %v3871 = vld [vmem:[%s246 + $0x74] sm:$0xf]
      %v3872 = vld [vmem:[%s246 + $0x78] sm:$0xf]
      %v3873 = vld [vmem:[%s246 + $0x7c] sm:$0xf]
      %v3874 = vld [vmem:[%s246 + $0x80] sm:$0xf]
      %v3875 = vld [vmem:[%s246 + $0x84] sm:$0xf]
      %v3876 = vld [vmem:[%s246 + $0x88] sm:$0xf]
      %v3877 = vld [vmem:[%s246 + $0x8c] sm:$0xf]
      %v3878 = vld [vmem:[%s246 + $0x90] sm:$0xf]
      %v3879 = vld [vmem:[%s246 + $0x94] sm:$0xf]
      %v3880 = vld [vmem:[%s246 + $0x98] sm:$0x3]
      %v3881 = vunpack.c.l.bf16 %v3844
      %v3882 = vunpack.c.l.bf16 %v3845
      %v3883 = vunpack.c.l.bf16 %v3846
      %v3884 = vunpack.c.l.bf16 %v3847
      %v3885 = vunpack.c.l.bf16 %v3848
      %v3886 = vunpack.c.l.bf16 %v3849
      %v3887 = vunpack.c.l.bf16 %v3850
      %v3888 = vunpack.c.l.bf16 %v3851
      %v3889 = vunpack.c.l.bf16 %v3852
      %v3890 = vunpack.c.l.bf16 %v3853
      %v3891 = vunpack.c.l.bf16 %v3854
      %v3892 = vunpack.c.l.bf16 %v3855
      %v3893 = vunpack.c.l.bf16 %v3856
      %v3894 = vunpack.c.l.bf16 %v3857
      %v3895 = vunpack.c.l.bf16 %v3858
      %v3896 = vunpack.c.l.bf16 %v3859
      %v3897 = vunpack.c.l.bf16 %v3860
      %v3898 = vunpack.c.l.bf16 %v3861
      %v3899 = vunpack.c.l.bf16 %v3862
      %v3900 = vunpack.c.l.bf16 %v3863
      %v3901 = vunpack.c.l.bf16 %v3864
      %v3902 = vunpack.c.l.bf16 %v3865
      %v3903 = vunpack.c.l.bf16 %v3866
      %v3904 = vunpack.c.l.bf16 %v3867
      %v3905 = vunpack.c.l.bf16 %v3868
      %v3906 = vunpack.c.l.bf16 %v3869
      %v3907 = vunpack.c.l.bf16 %v3870
      %v3908 = vunpack.c.l.bf16 %v3871
      %v3909 = vunpack.c.l.bf16 %v3872
      %v3910 = vunpack.c.l.bf16 %v3873
      %v3911 = vunpack.c.l.bf16 %v3874
      %v3912 = vunpack.c.l.bf16 %v3875
      %v3913 = vunpack.c.l.bf16 %v3876
      %v3914 = vunpack.c.l.bf16 %v3877
      %v3915 = vunpack.c.l.bf16 %v3878
      %v3916 = vunpack.c.l.bf16 %v3879
      %v3917 = vunpack.c.l.bf16 %v3880
      %v3918 = vld [vmem:[%s4] sm:$0x1]
      %v3920 = vperm.slane %v3918, 0
      %v3922 = vadd.f32 %v3881, %v3920
      %v3923 = vadd.f32 %v3882, %v3920
      %v3924 = vadd.f32 %v3883, %v3920
      %v3925 = vadd.f32 %v3884, %v3920
      %v3926 = vadd.f32 %v3885, %v3920
      %v3927 = vadd.f32 %v3886, %v3920
      %v3928 = vadd.f32 %v3887, %v3920
      %v3929 = vadd.f32 %v3888, %v3920
      %v3930 = vadd.f32 %v3889, %v3920
      %v3931 = vadd.f32 %v3890, %v3920
      %v3932 = vadd.f32 %v3891, %v3920
      %v3933 = vadd.f32 %v3892, %v3920
      %v3934 = vadd.f32 %v3893, %v3920
      %v3935 = vadd.f32 %v3894, %v3920
      %v3936 = vadd.f32 %v3895, %v3920
      %v3937 = vadd.f32 %v3896, %v3920
      %v3938 = vadd.f32 %v3897, %v3920
      %v3939 = vadd.f32 %v3898, %v3920
      %v3940 = vadd.f32 %v3899, %v3920
      %v3941 = vadd.f32 %v3900, %v3920
      %v3942 = vadd.f32 %v3901, %v3920
      %v3943 = vadd.f32 %v3902, %v3920
      %v3944 = vadd.f32 %v3903, %v3920
      %v3945 = vadd.f32 %v3904, %v3920
      %v3946 = vadd.f32 %v3905, %v3920
      %v3947 = vadd.f32 %v3906, %v3920
      %v3948 = vadd.f32 %v3907, %v3920
      %v3949 = vadd.f32 %v3908, %v3920
      %v3950 = vadd.f32 %v3909, %v3920
      %v3951 = vadd.f32 %v3910, %v3920
      %v3952 = vadd.f32 %v3911, %v3920
      %v3953 = vadd.f32 %v3912, %v3920
      %v3954 = vadd.f32 %v3913, %v3920
      %v3955 = vadd.f32 %v3914, %v3920
      %v3956 = vadd.f32 %v3915, %v3920
      %v3957 = vadd.f32 %v3916, %v3920
      %v3958 = vadd.f32 %v3917, %v3920
      %v3959 = vld [vmem:[#allocation2 + $0x4] sm:$0xc]
      %v3960 = vld [vmem:[#allocation2 + $0x8] sm:$0xf]
      %v3961 = vld [vmem:[#allocation2 + $0xc] sm:$0xf]
      %v3962 = vld [vmem:[#allocation2 + $0x10] sm:$0xf]
      %v3963 = vld [vmem:[#allocation2 + $0x14] sm:$0xf]
      %v3964 = vld [vmem:[#allocation2 + $0x18] sm:$0xf]
      %v3965 = vld [vmem:[#allocation2 + $0x1c] sm:$0xf]
      %v3966 = vld [vmem:[#allocation2 + $0x20] sm:$0xf]
      %v3967 = vld [vmem:[#allocation2 + $0x24] sm:$0xf]
      %v3968 = vld [vmem:[#allocation2 + $0x28] sm:$0xf]
      %v3969 = vld [vmem:[#allocation2 + $0x2c] sm:$0xf]
      %v3970 = vld [vmem:[#allocation2 + $0x30] sm:$0xf]
      %v3971 = vld [vmem:[#allocation2 + $0x34] sm:$0xf]
      %v3972 = vld [vmem:[#allocation2 + $0x38] sm:$0xf]
      %v3973 = vld [vmem:[#allocation2 + $0x3c] sm:$0xf]
      %v3974 = vld [vmem:[#allocation2 + $0x40] sm:$0xf]
      %v3975 = vld [vmem:[#allocation2 + $0x44] sm:$0xf]
      %v3976 = vld [vmem:[#allocation2 + $0x48] sm:$0xf]
      %v3977 = vld [vmem:[#allocation2 + $0x4c] sm:$0xf]
      %v3978 = vld [vmem:[#allocation2 + $0x50] sm:$0xf]
      %v3979 = vld [vmem:[#allocation2 + $0x54] sm:$0xf]
      %v3980 = vld [vmem:[#allocation2 + $0x58] sm:$0xf]
      %v3981 = vld [vmem:[#allocation2 + $0x5c] sm:$0xf]
      %v3982 = vld [vmem:[#allocation2 + $0x60] sm:$0xf]
      %v3983 = vld [vmem:[#allocation2 + $0x64] sm:$0xf]
      %v3984 = vld [vmem:[#allocation2 + $0x68] sm:$0xf]
      %v3985 = vld [vmem:[#allocation2 + $0x6c] sm:$0xf]
      %v3986 = vld [vmem:[#allocation2 + $0x70] sm:$0xf]
      %v3987 = vld [vmem:[#allocation2 + $0x74] sm:$0xf]
      %v3988 = vld [vmem:[#allocation2 + $0x78] sm:$0xf]
      %v3989 = vld [vmem:[#allocation2 + $0x7c] sm:$0xf]
      %v3990 = vld [vmem:[#allocation2 + $0x80] sm:$0xf]
      %v3991 = vld [vmem:[#allocation2 + $0x84] sm:$0xf]
      %v3992 = vld [vmem:[#allocation2 + $0x88] sm:$0xf]
      %v3993 = vld [vmem:[#allocation2 + $0x8c] sm:$0xf]
      %v3994 = vld [vmem:[#allocation2 + $0x90] sm:$0xf]
      %v3995 = vld [vmem:[#allocation2 + $0x94] sm:$0x7]
      %v3996 = vld [vmem:[%s3] sm:$0xf]
      %v3997 = vld [vmem:[%s3 + $0x4] sm:$0xf]
      %v3998 = vld [vmem:[%s3 + $0x8] sm:$0xf]
      %v3999 = vld [vmem:[%s3 + $0xc] sm:$0xf]
      %v4000 = vld [vmem:[%s3 + $0x10] sm:$0xf]
      %v4001 = vld [vmem:[%s3 + $0x14] sm:$0xf]
      %v4002 = vld [vmem:[%s3 + $0x18] sm:$0xf]
      %v4003 = vld [vmem:[%s3 + $0x1c] sm:$0xf]
      %v4041 = vunpack.c.l.b16 %v3959
      %v4042 = vunpack.c.l.b16 %v3960
      %v4043 = vunpack.c.l.b16 %v3961
      %v4044 = vunpack.c.l.b16 %v3962
      %v4045 = vunpack.c.l.b16 %v3963
      %v4046 = vunpack.c.l.b16 %v3964
      %v4047 = vunpack.c.l.b16 %v3965
      %v4048 = vunpack.c.l.b16 %v3966
      %v4049 = vunpack.c.l.b16 %v3967
      %v4050 = vunpack.c.l.b16 %v3968
      %v4051 = vunpack.c.l.b16 %v3969
      %v4052 = vunpack.c.l.b16 %v3970
      %v4053 = vunpack.c.l.b16 %v3971
      %v4054 = vunpack.c.l.b16 %v3972
      %v4055 = vunpack.c.l.b16 %v3973
      %v4056 = vunpack.c.l.b16 %v3974
      %v4057 = vunpack.c.l.b16 %v3975
      %v4058 = vunpack.c.l.b16 %v3976
      %v4059 = vunpack.c.l.b16 %v3977
      %v4060 = vunpack.c.l.b16 %v3978
      %v4061 = vunpack.c.l.b16 %v3979
      %v4062 = vunpack.c.l.b16 %v3980
      %v4063 = vunpack.c.l.b16 %v3981
      %v4064 = vunpack.c.l.b16 %v3982
      %v4065 = vunpack.c.l.b16 %v3983
      %v4066 = vunpack.c.l.b16 %v3984
      %v4067 = vunpack.c.l.b16 %v3985
      %v4068 = vunpack.c.l.b16 %v3986
      %v4069 = vunpack.c.l.b16 %v3987
      %v4070 = vunpack.c.l.b16 %v3988
      %v4071 = vunpack.c.l.b16 %v3989
      %v4072 = vunpack.c.l.b16 %v3990
      %v4073 = vunpack.c.l.b16 %v3991
      %v4074 = vunpack.c.l.b16 %v3992
      %v4075 = vunpack.c.l.b16 %v3993
      %v4076 = vunpack.c.l.b16 %v3994
      %v4077 = vunpack.c.l.b16 %v3995
      %v4078 = vpack.c.b16 %v4042, %v4041
      %v4079 = vpack.c.b16 %v4044, %v4043
      %v4080 = vpack.c.b16 %v4046, %v4045
      %v4081 = vpack.c.b16 %v4048, %v4047
      %v4082 = vpack.c.b16 %v4050, %v4049
      %v4083 = vpack.c.b16 %v4052, %v4051
      %v4084 = vpack.c.b16 %v4054, %v4053
      %v4085 = vpack.c.b16 %v4056, %v4055
      %v4086 = vpack.c.b16 %v4058, %v4057
      %v4087 = vpack.c.b16 %v4060, %v4059
      %v4088 = vpack.c.b16 %v4062, %v4061
      %v4089 = vpack.c.b16 %v4064, %v4063
      %v4090 = vpack.c.b16 %v4066, %v4065
      %v4091 = vpack.c.b16 %v4068, %v4067
      %v4092 = vpack.c.b16 %v4070, %v4069
      %v4093 = vpack.c.b16 %v4072, %v4071
      %v4094 = vpack.c.b16 %v4074, %v4073
      %v4095 = vpack.c.b16 %v4076, %v4075
      %v4096 = vpack.c.b16 %v4077, %v4077
      %v4098 = vshrl.u32 %v4078, 16
      %v4100 = vrot.slane %v4098, 2
      %v4101 = vshll.u32 %v4078, 16
      %v4103 = vrot.slane %v4101, 3
      %v4104 = vor.u32 %v4100, %v4103
      %v4106 = vshrl.u32 %v4079, 16
      %v4108 = vrot.slane %v4106, 2
      %v4109 = vshll.u32 %v4079, 16
      %v4111 = vrot.slane %v4109, 3
      %v4112 = vor.u32 %v4108, %v4111
      %v4113 = vsel %vm2836, %v4104, %v4112
      %v4115 = vshrl.u32 %v4080, 16
      %v4117 = vrot.slane %v4115, 2
      %v4118 = vshll.u32 %v4080, 16
      %v4120 = vrot.slane %v4118, 3
      %v4121 = vor.u32 %v4117, %v4120
      %v4122 = vsel %vm2836, %v4112, %v4121
      %v4124 = vshrl.u32 %v4081, 16
      %v4126 = vrot.slane %v4124, 2
      %v4127 = vshll.u32 %v4081, 16
      %v4129 = vrot.slane %v4127, 3
      %v4130 = vor.u32 %v4126, %v4129
      %v4131 = vsel %vm2836, %v4121, %v4130
      %v4133 = vshrl.u32 %v4082, 16
      %v4135 = vrot.slane %v4133, 2
      %v4136 = vshll.u32 %v4082, 16
      %v4138 = vrot.slane %v4136, 3
      %v4139 = vor.u32 %v4135, %v4138
      %v4140 = vsel %vm2836, %v4130, %v4139
      %v4142 = vshrl.u32 %v4083, 16
      %v4144 = vrot.slane %v4142, 2
      %v4145 = vshll.u32 %v4083, 16
      %v4147 = vrot.slane %v4145, 3
      %v4148 = vor.u32 %v4144, %v4147
      %v4149 = vsel %vm2836, %v4139, %v4148
      %v4151 = vshrl.u32 %v4084, 16
      %v4153 = vrot.slane %v4151, 2
      %v4154 = vshll.u32 %v4084, 16
      %v4156 = vrot.slane %v4154, 3
      %v4157 = vor.u32 %v4153, %v4156
      %v4158 = vsel %vm2836, %v4148, %v4157
      %v4160 = vshrl.u32 %v4085, 16
      %v4162 = vrot.slane %v4160, 2
      %v4163 = vshll.u32 %v4085, 16
      %v4165 = vrot.slane %v4163, 3
      %v4166 = vor.u32 %v4162, %v4165
      %v4167 = vsel %vm2836, %v4157, %v4166
      %v4169 = vshrl.u32 %v4086, 16
      %v4171 = vrot.slane %v4169, 2
      %v4172 = vshll.u32 %v4086, 16
      %v4174 = vrot.slane %v4172, 3
      %v4175 = vor.u32 %v4171, %v4174
      %v4176 = vsel %vm2836, %v4166, %v4175
      %v4178 = vshrl.u32 %v4087, 16
      %v4180 = vrot.slane %v4178, 2
      %v4181 = vshll.u32 %v4087, 16
      %v4183 = vrot.slane %v4181, 3
      %v4184 = vor.u32 %v4180, %v4183
      %v4185 = vsel %vm2836, %v4175, %v4184
      %v4187 = vshrl.u32 %v4088, 16
      %v4189 = vrot.slane %v4187, 2
      %v4190 = vshll.u32 %v4088, 16
      %v4192 = vrot.slane %v4190, 3
      %v4193 = vor.u32 %v4189, %v4192
      %v4194 = vsel %vm2836, %v4184, %v4193
      %v4196 = vshrl.u32 %v4089, 16
      %v4198 = vrot.slane %v4196, 2
      %v4199 = vshll.u32 %v4089, 16
      %v4201 = vrot.slane %v4199, 3
      %v4202 = vor.u32 %v4198, %v4201
      %v4203 = vsel %vm2836, %v4193, %v4202
      %v4205 = vshrl.u32 %v4090, 16
      %v4207 = vrot.slane %v4205, 2
      %v4208 = vshll.u32 %v4090, 16
      %v4210 = vrot.slane %v4208, 3
      %v4211 = vor.u32 %v4207, %v4210
      %v4212 = vsel %vm2836, %v4202, %v4211
      %v4214 = vshrl.u32 %v4091, 16
      %v4216 = vrot.slane %v4214, 2
      %v4217 = vshll.u32 %v4091, 16
      %v4219 = vrot.slane %v4217, 3
      %v4220 = vor.u32 %v4216, %v4219
      %v4221 = vsel %vm2836, %v4211, %v4220
      %v4223 = vshrl.u32 %v4092, 16
      %v4225 = vrot.slane %v4223, 2
      %v4226 = vshll.u32 %v4092, 16
      %v4228 = vrot.slane %v4226, 3
      %v4229 = vor.u32 %v4225, %v4228
      %v4230 = vsel %vm2836, %v4220, %v4229
      %v4232 = vshrl.u32 %v4093, 16
      %v4234 = vrot.slane %v4232, 2
      %v4235 = vshll.u32 %v4093, 16
      %v4237 = vrot.slane %v4235, 3
      %v4238 = vor.u32 %v4234, %v4237
      %v4239 = vsel %vm2836, %v4229, %v4238
      %v4241 = vshrl.u32 %v4094, 16
      %v4243 = vrot.slane %v4241, 2
      %v4244 = vshll.u32 %v4094, 16
      %v4246 = vrot.slane %v4244, 3
      %v4247 = vor.u32 %v4243, %v4246
      %v4248 = vsel %vm2836, %v4238, %v4247
      %v4250 = vshrl.u32 %v4095, 16
      %v4252 = vrot.slane %v4250, 2
      %v4253 = vshll.u32 %v4095, 16
      %v4255 = vrot.slane %v4253, 3
      %v4256 = vor.u32 %v4252, %v4255
      %v4257 = vsel %vm2836, %v4247, %v4256
      %v4259 = vshrl.u32 %v4096, 16
      %v4261 = vrot.slane %v4259, 2
      %v4262 = vshll.u32 %v4096, 16
      %v4264 = vrot.slane %v4262, 3
      %v4265 = vor.u32 %v4261, %v4264
      %v4266 = vsel %vm2836, %v4256, %v4265
      %v4275 = vunpack.c.l.b16 %v3996
      %v4276 = vunpack.c.l.b16 %v3997
      %v4277 = vunpack.c.l.b16 %v3998
      %v4278 = vunpack.c.l.b16 %v3999
      %v4279 = vunpack.c.l.b16 %v4000
      %v4280 = vunpack.c.l.b16 %v4001
      %v4281 = vunpack.c.l.b16 %v4002
      %v4282 = vunpack.c.l.b16 %v4003
      %v4283 = vpack.c.b16 %v4276, %v4275
      %v4284 = vpack.c.b16 %v4278, %v4277
      %v4285 = vpack.c.b16 %v4280, %v4279
      %v4286 = vpack.c.b16 %v4282, %v4281
      %v4292 = vsel %vm429, %v4113, 0
      %v4295 = vsel %vm429, %v4122, 0
      %v4298 = vsel %vm429, %v4131, 0
      %v4301 = vsel %vm429, %v4140, 0
      %v4304 = vsel %vm429, %v4149, 0
      %v4307 = vsel %vm429, %v4158, 0
      %v4310 = vsel %vm429, %v4167, 0
      %v4313 = vsel %vm429, %v4176, 0
      %v4316 = vsel %vm429, %v4185, 0
      %v4319 = vsel %vm429, %v4194, 0
      %v4322 = vsel %vm429, %v4203, 0
      %v4325 = vsel %vm429, %v4212, 0
      %v4328 = vsel %vm429, %v4221, 0
      %v4331 = vsel %vm429, %v4230, 0
      %v4334 = vsel %vm429, %v4239, 0
      %v4337 = vsel %vm429, %v4248, 0
      %v4340 = vsel %vm429, %v4257, 0
      %v4343 = vsel %vm429, %v4266, 0
      %4345 = vmatpush.bf16.msra.mxu0 0
      %4346 = vmatpush.bf16.msra.mxu0 0
      %4347 = vmatpush.bf16.msra.mxu0 0
      %4348 = vmatpush.bf16.msra.mxu0 0
      %4349 = vmatpush.bf16.msra.mxu0 %v4286
      %4350 = vmatpush.bf16.msra.mxu0 %v4285
      %4351 = vmatpush.bf16.msra.mxu0 %v4284
      %4352 = vmatpush.bf16.msra.mxu0 %v4283
      %4353 = vmatmul.bf16.gmra.mxu0 %v4292
      %v4354 = vpop.f32.mrf.mxu0
      %v4355 = vadd.f32 0.0, %v4354
      %v4356 = vpop.f32.mrf.mxu0
      %v4357 = vadd.f32 0.0, %v4356
      %4358 = vmatmul.bf16.gmra.mxu0 %v4295
      %v4359 = vpop.f32.mrf.mxu0
      %v4360 = vadd.f32 0.0, %v4359
      %v4361 = vpop.f32.mrf.mxu0
      %v4362 = vadd.f32 0.0, %v4361
      %4363 = vmatmul.bf16.gmra.mxu0 %v4298
      %v4364 = vpop.f32.mrf.mxu0
      %v4365 = vadd.f32 0.0, %v4364
      %v4366 = vpop.f32.mrf.mxu0
      %v4367 = vadd.f32 0.0, %v4366
      %4368 = vmatmul.bf16.gmra.mxu0 %v4301
      %v4369 = vpop.f32.mrf.mxu0
      %v4370 = vadd.f32 0.0, %v4369
      %v4371 = vpop.f32.mrf.mxu0
      %v4372 = vadd.f32 0.0, %v4371
      %4373 = vmatmul.bf16.gmra.mxu0 %v4304
      %v4374 = vpop.f32.mrf.mxu0
      %v4375 = vadd.f32 0.0, %v4374
      %v4376 = vpop.f32.mrf.mxu0
      %v4377 = vadd.f32 0.0, %v4376
      %4378 = vmatmul.bf16.gmra.mxu0 %v4307
      %v4379 = vpop.f32.mrf.mxu0
      %v4380 = vadd.f32 0.0, %v4379
      %v4381 = vpop.f32.mrf.mxu0
      %v4382 = vadd.f32 0.0, %v4381
      %4383 = vmatmul.bf16.gmra.mxu0 %v4310
      %v4384 = vpop.f32.mrf.mxu0
      %v4385 = vadd.f32 0.0, %v4384
      %v4386 = vpop.f32.mrf.mxu0
      %v4387 = vadd.f32 0.0, %v4386
      %4388 = vmatmul.bf16.gmra.mxu0 %v4313
      %v4389 = vpop.f32.mrf.mxu0
      %v4390 = vadd.f32 0.0, %v4389
      %v4391 = vpop.f32.mrf.mxu0
      %v4392 = vadd.f32 0.0, %v4391
      %4393 = vmatmul.bf16.gmra.mxu0 %v4316
      %v4394 = vpop.f32.mrf.mxu0
      %v4395 = vadd.f32 0.0, %v4394
      %v4396 = vpop.f32.mrf.mxu0
      %v4397 = vadd.f32 0.0, %v4396
      %4398 = vmatmul.bf16.gmra.mxu0 %v4319
      %v4399 = vpop.f32.mrf.mxu0
      %v4400 = vadd.f32 0.0, %v4399
      %v4401 = vpop.f32.mrf.mxu0
      %v4402 = vadd.f32 0.0, %v4401
      %4403 = vmatmul.bf16.gmra.mxu0 %v4322
      %v4404 = vpop.f32.mrf.mxu0
      %v4405 = vadd.f32 0.0, %v4404
      %v4406 = vpop.f32.mrf.mxu0
      %v4407 = vadd.f32 0.0, %v4406
      %4408 = vmatmul.bf16.gmra.mxu0 %v4325
      %v4409 = vpop.f32.mrf.mxu0
      %v4410 = vadd.f32 0.0, %v4409
      %v4411 = vpop.f32.mrf.mxu0
      %v4412 = vadd.f32 0.0, %v4411
      %4413 = vmatmul.bf16.gmra.mxu0 %v4328
      %v4414 = vpop.f32.mrf.mxu0
      %v4415 = vadd.f32 0.0, %v4414
      %v4416 = vpop.f32.mrf.mxu0
      %v4417 = vadd.f32 0.0, %v4416
      %4418 = vmatmul.bf16.gmra.mxu0 %v4331
      %v4419 = vpop.f32.mrf.mxu0
      %v4420 = vadd.f32 0.0, %v4419
      %v4421 = vpop.f32.mrf.mxu0
      %v4422 = vadd.f32 0.0, %v4421
      %4423 = vmatmul.bf16.gmra.mxu0 %v4334
      %v4424 = vpop.f32.mrf.mxu0
      %v4425 = vadd.f32 0.0, %v4424
      %v4426 = vpop.f32.mrf.mxu0
      %v4427 = vadd.f32 0.0, %v4426
      %4428 = vmatmul.bf16.gmra.mxu0 %v4337
      %v4429 = vpop.f32.mrf.mxu0
      %v4430 = vadd.f32 0.0, %v4429
      %v4431 = vpop.f32.mrf.mxu0
      %v4432 = vadd.f32 0.0, %v4431
      %4433 = vmatmul.bf16.gmra.mxu0 %v4340
      %v4434 = vpop.f32.mrf.mxu0
      %v4435 = vadd.f32 0.0, %v4434
      %v4436 = vpop.f32.mrf.mxu0
      %v4437 = vadd.f32 0.0, %v4436
      %4438 = vmatmul.bf16.gmra.mxu0 %v4343
      %v4439 = vpop.f32.mrf.mxu0
      %v4440 = vadd.f32 0.0, %v4439
      %v4441 = vpop.f32.mrf.mxu0
      %v4442 = vadd.f32 0.0, %v4441
      %4443 = vdwg.mxu0
      %vm4480 = vcmask 1042432
      %v4481 = vrot.slane %v4355, 5
      %v4482 = vrot.slane %v4357, 5
      %v4483 = vsel %vm4480, %v4481, %v4482
      %v4484 = vrot.slane %v4360, 5
      %v4485 = vsel %vm4480, %v4482, %v4484
      %v4486 = vrot.slane %v4362, 5
      %v4487 = vsel %vm4480, %v4484, %v4486
      %v4488 = vrot.slane %v4365, 5
      %v4489 = vsel %vm4480, %v4486, %v4488
      %v4490 = vrot.slane %v4367, 5
      %v4491 = vsel %vm4480, %v4488, %v4490
      %v4492 = vrot.slane %v4370, 5
      %v4493 = vsel %vm4480, %v4490, %v4492
      %v4494 = vrot.slane %v4372, 5
      %v4495 = vsel %vm4480, %v4492, %v4494
      %v4496 = vrot.slane %v4375, 5
      %v4497 = vsel %vm4480, %v4494, %v4496
      %v4498 = vrot.slane %v4377, 5
      %v4499 = vsel %vm4480, %v4496, %v4498
      %v4500 = vrot.slane %v4380, 5
      %v4501 = vsel %vm4480, %v4498, %v4500
      %v4502 = vrot.slane %v4382, 5
      %v4503 = vsel %vm4480, %v4500, %v4502
      %v4504 = vrot.slane %v4385, 5
      %v4505 = vsel %vm4480, %v4502, %v4504
      %v4506 = vrot.slane %v4387, 5
      %v4507 = vsel %vm4480, %v4504, %v4506
      %v4508 = vrot.slane %v4390, 5
      %v4509 = vsel %vm4480, %v4506, %v4508
      %v4510 = vrot.slane %v4392, 5
      %v4511 = vsel %vm4480, %v4508, %v4510
      %v4512 = vrot.slane %v4395, 5
      %v4513 = vsel %vm4480, %v4510, %v4512
      %v4514 = vrot.slane %v4397, 5
      %v4515 = vsel %vm4480, %v4512, %v4514
      %v4516 = vrot.slane %v4400, 5
      %v4517 = vsel %vm4480, %v4514, %v4516
      %v4518 = vrot.slane %v4402, 5
      %v4519 = vsel %vm4480, %v4516, %v4518
      %v4520 = vrot.slane %v4405, 5
      %v4521 = vsel %vm4480, %v4518, %v4520
      %v4522 = vrot.slane %v4407, 5
      %v4523 = vsel %vm4480, %v4520, %v4522
      %v4524 = vrot.slane %v4410, 5
      %v4525 = vsel %vm4480, %v4522, %v4524
      %v4526 = vrot.slane %v4412, 5
      %v4527 = vsel %vm4480, %v4524, %v4526
      %v4528 = vrot.slane %v4415, 5
      %v4529 = vsel %vm4480, %v4526, %v4528
      %v4530 = vrot.slane %v4417, 5
      %v4531 = vsel %vm4480, %v4528, %v4530
      %v4532 = vrot.slane %v4420, 5
      %v4533 = vsel %vm4480, %v4530, %v4532
      %v4534 = vrot.slane %v4422, 5
      %v4535 = vsel %vm4480, %v4532, %v4534
      %v4536 = vrot.slane %v4425, 5
      %v4537 = vsel %vm4480, %v4534, %v4536
      %v4538 = vrot.slane %v4427, 5
      %v4539 = vsel %vm4480, %v4536, %v4538
      %v4540 = vrot.slane %v4430, 5
      %v4541 = vsel %vm4480, %v4538, %v4540
      %v4542 = vrot.slane %v4432, 5
      %v4543 = vsel %vm4480, %v4540, %v4542
      %v4544 = vrot.slane %v4435, 5
      %v4545 = vsel %vm4480, %v4542, %v4544
      %v4546 = vrot.slane %v4437, 5
      %v4547 = vsel %vm4480, %v4544, %v4546
      %v4548 = vrot.slane %v4440, 5
      %v4549 = vsel %vm4480, %v4546, %v4548
      %v4550 = vrot.slane %v4442, 5
      %v4551 = vsel %vm4480, %v4548, %v4550
      %v4589 = vadd.f32 %v3922, %v4481
      %v4590 = vadd.f32 %v3923, %v4483
      %v4591 = vadd.f32 %v3924, %v4485
      %v4592 = vadd.f32 %v3925, %v4487
      %v4593 = vadd.f32 %v3926, %v4489
      %v4594 = vadd.f32 %v3927, %v4491
      %v4595 = vadd.f32 %v3928, %v4493
      %v4596 = vadd.f32 %v3929, %v4495
      %v4597 = vadd.f32 %v3930, %v4497
      %v4598 = vadd.f32 %v3931, %v4499
      %v4599 = vadd.f32 %v3932, %v4501
      %v4600 = vadd.f32 %v3933, %v4503
      %v4601 = vadd.f32 %v3934, %v4505
      %v4602 = vadd.f32 %v3935, %v4507
      %v4603 = vadd.f32 %v3936, %v4509
      %v4604 = vadd.f32 %v3937, %v4511
      %v4605 = vadd.f32 %v3938, %v4513
      %v4606 = vadd.f32 %v3939, %v4515
      %v4607 = vadd.f32 %v3940, %v4517
      %v4608 = vadd.f32 %v3941, %v4519
      %v4609 = vadd.f32 %v3942, %v4521
      %v4610 = vadd.f32 %v3943, %v4523
      %v4611 = vadd.f32 %v3944, %v4525
      %v4612 = vadd.f32 %v3945, %v4527
      %v4613 = vadd.f32 %v3946, %v4529
      %v4614 = vadd.f32 %v3947, %v4531
      %v4615 = vadd.f32 %v3948, %v4533
      %v4616 = vadd.f32 %v3949, %v4535
      %v4617 = vadd.f32 %v3950, %v4537
      %v4618 = vadd.f32 %v3951, %v4539
      %v4619 = vadd.f32 %v3952, %v4541
      %v4620 = vadd.f32 %v3953, %v4543
      %v4621 = vadd.f32 %v3954, %v4545
      %v4622 = vadd.f32 %v3955, %v4547
      %v4623 = vadd.f32 %v3956, %v4549
      %v4624 = vadd.f32 %v3957, %v4551
      %v4625 = vadd.f32 %v3958, %v4550
      %v4626 = vld [vmem:[#allocation2 + $0x4] sm:$0x8]
      %s4627 = scalar_lea.vmem %s3, 32
      %v4628 = vld [vmem:[%s4627] sm:$0xf]
      %v4629 = vld [vmem:[%s4627 + $0x4] sm:$0xf]
      %v4630 = vld [vmem:[%s4627 + $0x8] sm:$0xf]
      %v4631 = vld [vmem:[%s4627 + $0xc] sm:$0xf]
      %v4632 = vld [vmem:[%s4627 + $0x10] sm:$0xf]
      %v4633 = vld [vmem:[%s4627 + $0x14] sm:$0xf]
      %v4634 = vld [vmem:[%s4627 + $0x18] sm:$0xf]
      %v4635 = vld [vmem:[%s4627 + $0x1c] sm:$0xf]
      %v4637 = vunpack.c.l.b16 %v4626
      %v4638 = vpack.c.b16 %v4042, %v4637
      %v4639 = vrot.slane %v4638, 3
      %v4640 = vrot.slane %v4079, 3
      %v4641 = vsel %vm3233, %v4639, %v4640
      %v4642 = vrot.slane %v4080, 3
      %v4643 = vsel %vm3233, %v4640, %v4642
      %v4644 = vrot.slane %v4081, 3
      %v4645 = vsel %vm3233, %v4642, %v4644
      %v4646 = vrot.slane %v4082, 3
      %v4647 = vsel %vm3233, %v4644, %v4646
      %v4648 = vrot.slane %v4083, 3
      %v4649 = vsel %vm3233, %v4646, %v4648
      %v4650 = vrot.slane %v4084, 3
      %v4651 = vsel %vm3233, %v4648, %v4650
      %v4652 = vrot.slane %v4085, 3
      %v4653 = vsel %vm3233, %v4650, %v4652
      %v4654 = vrot.slane %v4086, 3
      %v4655 = vsel %vm3233, %v4652, %v4654
      %v4656 = vrot.slane %v4087, 3
      %v4657 = vsel %vm3233, %v4654, %v4656
      %v4658 = vrot.slane %v4088, 3
      %v4659 = vsel %vm3233, %v4656, %v4658
      %v4660 = vrot.slane %v4089, 3
      %v4661 = vsel %vm3233, %v4658, %v4660
      %v4662 = vrot.slane %v4090, 3
      %v4663 = vsel %vm3233, %v4660, %v4662
      %v4664 = vrot.slane %v4091, 3
      %v4665 = vsel %vm3233, %v4662, %v4664
      %v4666 = vrot.slane %v4092, 3
      %v4667 = vsel %vm3233, %v4664, %v4666
      %v4668 = vrot.slane %v4093, 3
      %v4669 = vsel %vm3233, %v4666, %v4668
      %v4670 = vrot.slane %v4094, 3
      %v4671 = vsel %vm3233, %v4668, %v4670
      %v4672 = vrot.slane %v4095, 3
      %v4673 = vsel %vm3233, %v4670, %v4672
      %v4674 = vrot.slane %v4096, 3
      %v4675 = vsel %vm3233, %v4672, %v4674
      %v4684 = vunpack.c.l.b16 %v4628
      %v4685 = vunpack.c.l.b16 %v4629
      %v4686 = vunpack.c.l.b16 %v4630
      %v4687 = vunpack.c.l.b16 %v4631
      %v4688 = vunpack.c.l.b16 %v4632
      %v4689 = vunpack.c.l.b16 %v4633
      %v4690 = vunpack.c.l.b16 %v4634
      %v4691 = vunpack.c.l.b16 %v4635
      %v4692 = vpack.c.b16 %v4685, %v4684
      %v4693 = vpack.c.b16 %v4687, %v4686
      %v4694 = vpack.c.b16 %v4689, %v4688
      %v4695 = vpack.c.b16 %v4691, %v4690
      %v4701 = vsel %vm429, %v4641, 0
      %v4704 = vsel %vm429, %v4643, 0
      %v4707 = vsel %vm429, %v4645, 0
      %v4710 = vsel %vm429, %v4647, 0
      %v4713 = vsel %vm429, %v4649, 0
      %v4716 = vsel %vm429, %v4651, 0
      %v4719 = vsel %vm429, %v4653, 0
      %v4722 = vsel %vm429, %v4655, 0
      %v4725 = vsel %vm429, %v4657, 0
      %v4728 = vsel %vm429, %v4659, 0
      %v4731 = vsel %vm429, %v4661, 0
      %v4734 = vsel %vm429, %v4663, 0
      %v4737 = vsel %vm429, %v4665, 0
      %v4740 = vsel %vm429, %v4667, 0
      %v4743 = vsel %vm429, %v4669, 0
      %v4746 = vsel %vm429, %v4671, 0
      %v4749 = vsel %vm429, %v4673, 0
      %v4752 = vsel %vm429, %v4675, 0
      %4754 = vmatpush.bf16.msra.mxu0 0
      %4755 = vmatpush.bf16.msra.mxu0 0
      %4756 = vmatpush.bf16.msra.mxu0 0
      %4757 = vmatpush.bf16.msra.mxu0 0
      %4758 = vmatpush.bf16.msra.mxu0 %v4695
      %4759 = vmatpush.bf16.msra.mxu0 %v4694
      %4760 = vmatpush.bf16.msra.mxu0 %v4693
      %4761 = vmatpush.bf16.msra.mxu0 %v4692
      %4762 = vmatmul.bf16.gmra.mxu0 %v4701
      %v4763 = vpop.f32.mrf.mxu0
      %v4764 = vadd.f32 0.0, %v4763
      %v4765 = vpop.f32.mrf.mxu0
      %v4766 = vadd.f32 0.0, %v4765
      %4767 = vmatmul.bf16.gmra.mxu0 %v4704
      %v4768 = vpop.f32.mrf.mxu0
      %v4769 = vadd.f32 0.0, %v4768
      %v4770 = vpop.f32.mrf.mxu0
      %v4771 = vadd.f32 0.0, %v4770
      %4772 = vmatmul.bf16.gmra.mxu0 %v4707
      %v4773 = vpop.f32.mrf.mxu0
      %v4774 = vadd.f32 0.0, %v4773
      %v4775 = vpop.f32.mrf.mxu0
      %v4776 = vadd.f32 0.0, %v4775
      %4777 = vmatmul.bf16.gmra.mxu0 %v4710
      %v4778 = vpop.f32.mrf.mxu0
      %v4779 = vadd.f32 0.0, %v4778
      %v4780 = vpop.f32.mrf.mxu0
      %v4781 = vadd.f32 0.0, %v4780
      %4782 = vmatmul.bf16.gmra.mxu0 %v4713
      %v4783 = vpop.f32.mrf.mxu0
      %v4784 = vadd.f32 0.0, %v4783
      %v4785 = vpop.f32.mrf.mxu0
      %v4786 = vadd.f32 0.0, %v4785
      %4787 = vmatmul.bf16.gmra.mxu0 %v4716
      %v4788 = vpop.f32.mrf.mxu0
      %v4789 = vadd.f32 0.0, %v4788
      %v4790 = vpop.f32.mrf.mxu0
      %v4791 = vadd.f32 0.0, %v4790
      %4792 = vmatmul.bf16.gmra.mxu0 %v4719
      %v4793 = vpop.f32.mrf.mxu0
      %v4794 = vadd.f32 0.0, %v4793
      %v4795 = vpop.f32.mrf.mxu0
      %v4796 = vadd.f32 0.0, %v4795
      %4797 = vmatmul.bf16.gmra.mxu0 %v4722
      %v4798 = vpop.f32.mrf.mxu0
      %v4799 = vadd.f32 0.0, %v4798
      %v4800 = vpop.f32.mrf.mxu0
      %v4801 = vadd.f32 0.0, %v4800
      %4802 = vmatmul.bf16.gmra.mxu0 %v4725
      %v4803 = vpop.f32.mrf.mxu0
      %v4804 = vadd.f32 0.0, %v4803
      %v4805 = vpop.f32.mrf.mxu0
      %v4806 = vadd.f32 0.0, %v4805
      %4807 = vmatmul.bf16.gmra.mxu0 %v4728
      %v4808 = vpop.f32.mrf.mxu0
      %v4809 = vadd.f32 0.0, %v4808
      %v4810 = vpop.f32.mrf.mxu0
      %v4811 = vadd.f32 0.0, %v4810
      %4812 = vmatmul.bf16.gmra.mxu0 %v4731
      %v4813 = vpop.f32.mrf.mxu0
      %v4814 = vadd.f32 0.0, %v4813
      %v4815 = vpop.f32.mrf.mxu0
      %v4816 = vadd.f32 0.0, %v4815
      %4817 = vmatmul.bf16.gmra.mxu0 %v4734
      %v4818 = vpop.f32.mrf.mxu0
      %v4819 = vadd.f32 0.0, %v4818
      %v4820 = vpop.f32.mrf.mxu0
      %v4821 = vadd.f32 0.0, %v4820
      %4822 = vmatmul.bf16.gmra.mxu0 %v4737
      %v4823 = vpop.f32.mrf.mxu0
      %v4824 = vadd.f32 0.0, %v4823
      %v4825 = vpop.f32.mrf.mxu0
      %v4826 = vadd.f32 0.0, %v4825
      %4827 = vmatmul.bf16.gmra.mxu0 %v4740
      %v4828 = vpop.f32.mrf.mxu0
      %v4829 = vadd.f32 0.0, %v4828
      %v4830 = vpop.f32.mrf.mxu0
      %v4831 = vadd.f32 0.0, %v4830
      %4832 = vmatmul.bf16.gmra.mxu0 %v4743
      %v4833 = vpop.f32.mrf.mxu0
      %v4834 = vadd.f32 0.0, %v4833
      %v4835 = vpop.f32.mrf.mxu0
      %v4836 = vadd.f32 0.0, %v4835
      %4837 = vmatmul.bf16.gmra.mxu0 %v4746
      %v4838 = vpop.f32.mrf.mxu0
      %v4839 = vadd.f32 0.0, %v4838
      %v4840 = vpop.f32.mrf.mxu0
      %v4841 = vadd.f32 0.0, %v4840
      %4842 = vmatmul.bf16.gmra.mxu0 %v4749
      %v4843 = vpop.f32.mrf.mxu0
      %v4844 = vadd.f32 0.0, %v4843
      %v4845 = vpop.f32.mrf.mxu0
      %v4846 = vadd.f32 0.0, %v4845
      %4847 = vmatmul.bf16.gmra.mxu0 %v4752
      %v4848 = vpop.f32.mrf.mxu0
      %v4849 = vadd.f32 0.0, %v4848
      %v4850 = vpop.f32.mrf.mxu0
      %v4851 = vadd.f32 0.0, %v4850
      %4852 = vdwg.mxu0
      %v4889 = vrot.slane %v4764, 5
      %v4890 = vrot.slane %v4766, 5
      %v4891 = vsel %vm4480, %v4889, %v4890
      %v4892 = vrot.slane %v4769, 5
      %v4893 = vsel %vm4480, %v4890, %v4892
      %v4894 = vrot.slane %v4771, 5
      %v4895 = vsel %vm4480, %v4892, %v4894
      %v4896 = vrot.slane %v4774, 5
      %v4897 = vsel %vm4480, %v4894, %v4896
      %v4898 = vrot.slane %v4776, 5
      %v4899 = vsel %vm4480, %v4896, %v4898
      %v4900 = vrot.slane %v4779, 5
      %v4901 = vsel %vm4480, %v4898, %v4900
      %v4902 = vrot.slane %v4781, 5
      %v4903 = vsel %vm4480, %v4900, %v4902
      %v4904 = vrot.slane %v4784, 5
      %v4905 = vsel %vm4480, %v4902, %v4904
      %v4906 = vrot.slane %v4786, 5
      %v4907 = vsel %vm4480, %v4904, %v4906
      %v4908 = vrot.slane %v4789, 5
      %v4909 = vsel %vm4480, %v4906, %v4908
      %v4910 = vrot.slane %v4791, 5
      %v4911 = vsel %vm4480, %v4908, %v4910
      %v4912 = vrot.slane %v4794, 5
      %v4913 = vsel %vm4480, %v4910, %v4912
      %v4914 = vrot.slane %v4796, 5
      %v4915 = vsel %vm4480, %v4912, %v4914
      %v4916 = vrot.slane %v4799, 5
      %v4917 = vsel %vm4480, %v4914, %v4916
      %v4918 = vrot.slane %v4801, 5
      %v4919 = vsel %vm4480, %v4916, %v4918
      %v4920 = vrot.slane %v4804, 5
      %v4921 = vsel %vm4480, %v4918, %v4920
      %v4922 = vrot.slane %v4806, 5
      %v4923 = vsel %vm4480, %v4920, %v4922
      %v4924 = vrot.slane %v4809, 5
      %v4925 = vsel %vm4480, %v4922, %v4924
      %v4926 = vrot.slane %v4811, 5
      %v4927 = vsel %vm4480, %v4924, %v4926
      %v4928 = vrot.slane %v4814, 5
      %v4929 = vsel %vm4480, %v4926, %v4928
      %v4930 = vrot.slane %v4816, 5
      %v4931 = vsel %vm4480, %v4928, %v4930
      %v4932 = vrot.slane %v4819, 5
      %v4933 = vsel %vm4480, %v4930, %v4932
      %v4934 = vrot.slane %v4821, 5
      %v4935 = vsel %vm4480, %v4932, %v4934
      %v4936 = vrot.slane %v4824, 5
      %v4937 = vsel %vm4480, %v4934, %v4936
      %v4938 = vrot.slane %v4826, 5
      %v4939 = vsel %vm4480, %v4936, %v4938
      %v4940 = vrot.slane %v4829, 5
      %v4941 = vsel %vm4480, %v4938, %v4940
      %v4942 = vrot.slane %v4831, 5
      %v4943 = vsel %vm4480, %v4940, %v4942
      %v4944 = vrot.slane %v4834, 5
      %v4945 = vsel %vm4480, %v4942, %v4944
      %v4946 = vrot.slane %v4836, 5
      %v4947 = vsel %vm4480, %v4944, %v4946
      %v4948 = vrot.slane %v4839, 5
      %v4949 = vsel %vm4480, %v4946, %v4948
      %v4950 = vrot.slane %v4841, 5
      %v4951 = vsel %vm4480, %v4948, %v4950
      %v4952 = vrot.slane %v4844, 5
      %v4953 = vsel %vm4480, %v4950, %v4952
      %v4954 = vrot.slane %v4846, 5
      %v4955 = vsel %vm4480, %v4952, %v4954
      %v4956 = vrot.slane %v4849, 5
      %v4957 = vsel %vm4480, %v4954, %v4956
      %v4958 = vrot.slane %v4851, 5
      %v4959 = vsel %vm4480, %v4956, %v4958
      %v4997 = vadd.f32 %v4589, %v4889
      %v4998 = vadd.f32 %v4590, %v4891
      %v4999 = vadd.f32 %v4591, %v4893
      %v5000 = vadd.f32 %v4592, %v4895
      %v5001 = vadd.f32 %v4593, %v4897
      %v5002 = vadd.f32 %v4594, %v4899
      %v5003 = vadd.f32 %v4595, %v4901
      %v5004 = vadd.f32 %v4596, %v4903
      %v5005 = vadd.f32 %v4597, %v4905
      %v5006 = vadd.f32 %v4598, %v4907
      %v5007 = vadd.f32 %v4599, %v4909
      %v5008 = vadd.f32 %v4600, %v4911
      %v5009 = vadd.f32 %v4601, %v4913
      %v5010 = vadd.f32 %v4602, %v4915
      %v5011 = vadd.f32 %v4603, %v4917
      %v5012 = vadd.f32 %v4604, %v4919
      %v5013 = vadd.f32 %v4605, %v4921
      %v5014 = vadd.f32 %v4606, %v4923
      %v5015 = vadd.f32 %v4607, %v4925
      %v5016 = vadd.f32 %v4608, %v4927
      %v5017 = vadd.f32 %v4609, %v4929
      %v5018 = vadd.f32 %v4610, %v4931
      %v5019 = vadd.f32 %v4611, %v4933
      %v5020 = vadd.f32 %v4612, %v4935
      %v5021 = vadd.f32 %v4613, %v4937
      %v5022 = vadd.f32 %v4614, %v4939
      %v5023 = vadd.f32 %v4615, %v4941
      %v5024 = vadd.f32 %v4616, %v4943
      %v5025 = vadd.f32 %v4617, %v4945
      %v5026 = vadd.f32 %v4618, %v4947
      %v5027 = vadd.f32 %v4619, %v4949
      %v5028 = vadd.f32 %v4620, %v4951
      %v5029 = vadd.f32 %v4621, %v4953
      %v5030 = vadd.f32 %v4622, %v4955
      %v5031 = vadd.f32 %v4623, %v4957
      %v5032 = vadd.f32 %v4624, %v4959
      %v5033 = vadd.f32 %v4625, %v4958
      %v5034 = vld [vmem:[#allocation2 + $0x94] sm:$0xf]
      %s5035 = scalar_lea.vmem %s3, 64
      %v5036 = vld [vmem:[%s5035] sm:$0xf]
      %v5037 = vld [vmem:[%s5035 + $0x4] sm:$0xf]
      %v5038 = vld [vmem:[%s5035 + $0x8] sm:$0xf]
      %v5039 = vld [vmem:[%s5035 + $0xc] sm:$0xf]
      %v5040 = vld [vmem:[%s5035 + $0x10] sm:$0xf]
      %v5041 = vld [vmem:[%s5035 + $0x14] sm:$0xf]
      %v5042 = vld [vmem:[%s5035 + $0x18] sm:$0xf]
      %v5043 = vld [vmem:[%s5035 + $0x1c] sm:$0xf]
      %v5045 = vunpack.c.l.b16 %v5034
      %v5046 = vpack.c.b16 %v5045, %v5045
      %vm5047 = vsmask.f32 4352
      %v5049 = vshrl.u32 %v4638, 16
      %v5051 = vrot.slane %v5049, 3
      %v5052 = vshll.u32 %v4638, 16
      %v5054 = vrot.slane %v5052, 4
      %v5055 = vor.u32 %v5051, %v5054
      %v5056 = vrot.slane %v4106, 3
      %v5057 = vrot.slane %v4109, 4
      %v5058 = vor.u32 %v5056, %v5057
      %v5059 = vsel %vm5047, %v5055, %v5058
      %v5060 = vrot.slane %v4115, 3
      %v5061 = vrot.slane %v4118, 4
      %v5062 = vor.u32 %v5060, %v5061
      %v5063 = vsel %vm5047, %v5058, %v5062
      %v5064 = vrot.slane %v4124, 3
      %v5065 = vrot.slane %v4127, 4
      %v5066 = vor.u32 %v5064, %v5065
      %v5067 = vsel %vm5047, %v5062, %v5066
      %v5068 = vrot.slane %v4133, 3
      %v5069 = vrot.slane %v4136, 4
      %v5070 = vor.u32 %v5068, %v5069
      %v5071 = vsel %vm5047, %v5066, %v5070
      %v5072 = vrot.slane %v4142, 3
      %v5073 = vrot.slane %v4145, 4
      %v5074 = vor.u32 %v5072, %v5073
      %v5075 = vsel %vm5047, %v5070, %v5074
      %v5076 = vrot.slane %v4151, 3
      %v5077 = vrot.slane %v4154, 4
      %v5078 = vor.u32 %v5076, %v5077
      %v5079 = vsel %vm5047, %v5074, %v5078
      %v5080 = vrot.slane %v4160, 3
      %v5081 = vrot.slane %v4163, 4
      %v5082 = vor.u32 %v5080, %v5081
      %v5083 = vsel %vm5047, %v5078, %v5082
      %v5084 = vrot.slane %v4169, 3
      %v5085 = vrot.slane %v4172, 4
      %v5086 = vor.u32 %v5084, %v5085
      %v5087 = vsel %vm5047, %v5082, %v5086
      %v5088 = vrot.slane %v4178, 3
      %v5089 = vrot.slane %v4181, 4
      %v5090 = vor.u32 %v5088, %v5089
      %v5091 = vsel %vm5047, %v5086, %v5090
      %v5092 = vrot.slane %v4187, 3
      %v5093 = vrot.slane %v4190, 4
      %v5094 = vor.u32 %v5092, %v5093
      %v5095 = vsel %vm5047, %v5090, %v5094
      %v5096 = vrot.slane %v4196, 3
      %v5097 = vrot.slane %v4199, 4
      %v5098 = vor.u32 %v5096, %v5097
      %v5099 = vsel %vm5047, %v5094, %v5098
      %v5100 = vrot.slane %v4205, 3
      %v5101 = vrot.slane %v4208, 4
      %v5102 = vor.u32 %v5100, %v5101
      %v5103 = vsel %vm5047, %v5098, %v5102
      %v5104 = vrot.slane %v4214, 3
      %v5105 = vrot.slane %v4217, 4
      %v5106 = vor.u32 %v5104, %v5105
      %v5107 = vsel %vm5047, %v5102, %v5106
      %v5108 = vrot.slane %v4223, 3
      %v5109 = vrot.slane %v4226, 4
      %v5110 = vor.u32 %v5108, %v5109
      %v5111 = vsel %vm5047, %v5106, %v5110
      %v5112 = vrot.slane %v4232, 3
      %v5113 = vrot.slane %v4235, 4
      %v5114 = vor.u32 %v5112, %v5113
      %v5115 = vsel %vm5047, %v5110, %v5114
      %v5116 = vrot.slane %v4241, 3
      %v5117 = vrot.slane %v4244, 4
      %v5118 = vor.u32 %v5116, %v5117
      %v5119 = vsel %vm5047, %v5114, %v5118
      %v5120 = vrot.slane %v4250, 3
      %v5121 = vrot.slane %v4253, 4
      %v5122 = vor.u32 %v5120, %v5121
      %v5123 = vsel %vm5047, %v5118, %v5122
      %v5125 = vshrl.u32 %v5046, 16
      %v5127 = vrot.slane %v5125, 3
      %v5128 = vshll.u32 %v5046, 16
      %v5130 = vrot.slane %v5128, 4
      %v5131 = vor.u32 %v5127, %v5130
      %v5132 = vsel %vm5047, %v5122, %v5131
      %v5141 = vunpack.c.l.b16 %v5036
      %v5142 = vunpack.c.l.b16 %v5037
      %v5143 = vunpack.c.l.b16 %v5038
      %v5144 = vunpack.c.l.b16 %v5039
      %v5145 = vunpack.c.l.b16 %v5040
      %v5146 = vunpack.c.l.b16 %v5041
      %v5147 = vunpack.c.l.b16 %v5042
      %v5148 = vunpack.c.l.b16 %v5043
      %v5149 = vpack.c.b16 %v5142, %v5141
      %v5150 = vpack.c.b16 %v5144, %v5143
      %v5151 = vpack.c.b16 %v5146, %v5145
      %v5152 = vpack.c.b16 %v5148, %v5147
      %v5158 = vsel %vm429, %v5059, 0
      %v5161 = vsel %vm429, %v5063, 0
      %v5164 = vsel %vm429, %v5067, 0
      %v5167 = vsel %vm429, %v5071, 0
      %v5170 = vsel %vm429, %v5075, 0
      %v5173 = vsel %vm429, %v5079, 0
      %v5176 = vsel %vm429, %v5083, 0
      %v5179 = vsel %vm429, %v5087, 0
      %v5182 = vsel %vm429, %v5091, 0
      %v5185 = vsel %vm429, %v5095, 0
      %v5188 = vsel %vm429, %v5099, 0
      %v5191 = vsel %vm429, %v5103, 0
      %v5194 = vsel %vm429, %v5107, 0
      %v5197 = vsel %vm429, %v5111, 0
      %v5200 = vsel %vm429, %v5115, 0
      %v5203 = vsel %vm429, %v5119, 0
      %v5206 = vsel %vm429, %v5123, 0
      %v5209 = vsel %vm429, %v5132, 0
      %5211 = vmatpush.bf16.msra.mxu0 0
      %5212 = vmatpush.bf16.msra.mxu0 0
      %5213 = vmatpush.bf16.msra.mxu0 0
      %5214 = vmatpush.bf16.msra.mxu0 0
      %5215 = vmatpush.bf16.msra.mxu0 %v5152
      %5216 = vmatpush.bf16.msra.mxu0 %v5151
      %5217 = vmatpush.bf16.msra.mxu0 %v5150
      %5218 = vmatpush.bf16.msra.mxu0 %v5149
      %5219 = vmatmul.bf16.gmra.mxu0 %v5158
      %v5220 = vpop.f32.mrf.mxu0
      %v5221 = vadd.f32 0.0, %v5220
      %v5222 = vpop.f32.mrf.mxu0
      %v5223 = vadd.f32 0.0, %v5222
      %5224 = vmatmul.bf16.gmra.mxu0 %v5161
      %v5225 = vpop.f32.mrf.mxu0
      %v5226 = vadd.f32 0.0, %v5225
      %v5227 = vpop.f32.mrf.mxu0
      %v5228 = vadd.f32 0.0, %v5227
      %5229 = vmatmul.bf16.gmra.mxu0 %v5164
      %v5230 = vpop.f32.mrf.mxu0
      %v5231 = vadd.f32 0.0, %v5230
      %v5232 = vpop.f32.mrf.mxu0
      %v5233 = vadd.f32 0.0, %v5232
      %5234 = vmatmul.bf16.gmra.mxu0 %v5167
      %v5235 = vpop.f32.mrf.mxu0
      %v5236 = vadd.f32 0.0, %v5235
      %v5237 = vpop.f32.mrf.mxu0
      %v5238 = vadd.f32 0.0, %v5237
      %5239 = vmatmul.bf16.gmra.mxu0 %v5170
      %v5240 = vpop.f32.mrf.mxu0
      %v5241 = vadd.f32 0.0, %v5240
      %v5242 = vpop.f32.mrf.mxu0
      %v5243 = vadd.f32 0.0, %v5242
      %5244 = vmatmul.bf16.gmra.mxu0 %v5173
      %v5245 = vpop.f32.mrf.mxu0
      %v5246 = vadd.f32 0.0, %v5245
      %v5247 = vpop.f32.mrf.mxu0
      %v5248 = vadd.f32 0.0, %v5247
      %5249 = vmatmul.bf16.gmra.mxu0 %v5176
      %v5250 = vpop.f32.mrf.mxu0
      %v5251 = vadd.f32 0.0, %v5250
      %v5252 = vpop.f32.mrf.mxu0
      %v5253 = vadd.f32 0.0, %v5252
      %5254 = vmatmul.bf16.gmra.mxu0 %v5179
      %v5255 = vpop.f32.mrf.mxu0
      %v5256 = vadd.f32 0.0, %v5255
      %v5257 = vpop.f32.mrf.mxu0
      %v5258 = vadd.f32 0.0, %v5257
      %5259 = vmatmul.bf16.gmra.mxu0 %v5182
      %v5260 = vpop.f32.mrf.mxu0
      %v5261 = vadd.f32 0.0, %v5260
      %v5262 = vpop.f32.mrf.mxu0
      %v5263 = vadd.f32 0.0, %v5262
      %5264 = vmatmul.bf16.gmra.mxu0 %v5185
      %v5265 = vpop.f32.mrf.mxu0
      %v5266 = vadd.f32 0.0, %v5265
      %v5267 = vpop.f32.mrf.mxu0
      %v5268 = vadd.f32 0.0, %v5267
      %5269 = vmatmul.bf16.gmra.mxu0 %v5188
      %v5270 = vpop.f32.mrf.mxu0
      %v5271 = vadd.f32 0.0, %v5270
      %v5272 = vpop.f32.mrf.mxu0
      %v5273 = vadd.f32 0.0, %v5272
      %5274 = vmatmul.bf16.gmra.mxu0 %v5191
      %v5275 = vpop.f32.mrf.mxu0
      %v5276 = vadd.f32 0.0, %v5275
      %v5277 = vpop.f32.mrf.mxu0
      %v5278 = vadd.f32 0.0, %v5277
      %5279 = vmatmul.bf16.gmra.mxu0 %v5194
      %v5280 = vpop.f32.mrf.mxu0
      %v5281 = vadd.f32 0.0, %v5280
      %v5282 = vpop.f32.mrf.mxu0
      %v5283 = vadd.f32 0.0, %v5282
      %5284 = vmatmul.bf16.gmra.mxu0 %v5197
      %v5285 = vpop.f32.mrf.mxu0
      %v5286 = vadd.f32 0.0, %v5285
      %v5287 = vpop.f32.mrf.mxu0
      %v5288 = vadd.f32 0.0, %v5287
      %5289 = vmatmul.bf16.gmra.mxu0 %v5200
      %v5290 = vpop.f32.mrf.mxu0
      %v5291 = vadd.f32 0.0, %v5290
      %v5292 = vpop.f32.mrf.mxu0
      %v5293 = vadd.f32 0.0, %v5292
      %5294 = vmatmul.bf16.gmra.mxu0 %v5203
      %v5295 = vpop.f32.mrf.mxu0
      %v5296 = vadd.f32 0.0, %v5295
      %v5297 = vpop.f32.mrf.mxu0
      %v5298 = vadd.f32 0.0, %v5297
      %5299 = vmatmul.bf16.gmra.mxu0 %v5206
      %v5300 = vpop.f32.mrf.mxu0
      %v5301 = vadd.f32 0.0, %v5300
      %v5302 = vpop.f32.mrf.mxu0
      %v5303 = vadd.f32 0.0, %v5302
      %5304 = vmatmul.bf16.gmra.mxu0 %v5209
      %v5305 = vpop.f32.mrf.mxu0
      %v5306 = vadd.f32 0.0, %v5305
      %v5307 = vpop.f32.mrf.mxu0
      %v5308 = vadd.f32 0.0, %v5307
      %5309 = vdwg.mxu0
      %v5346 = vrot.slane %v5221, 5
      %v5347 = vrot.slane %v5223, 5
      %v5348 = vsel %vm4480, %v5346, %v5347
      %v5349 = vrot.slane %v5226, 5
      %v5350 = vsel %vm4480, %v5347, %v5349
      %v5351 = vrot.slane %v5228, 5
      %v5352 = vsel %vm4480, %v5349, %v5351
      %v5353 = vrot.slane %v5231, 5
      %v5354 = vsel %vm4480, %v5351, %v5353
      %v5355 = vrot.slane %v5233, 5
      %v5356 = vsel %vm4480, %v5353, %v5355
      %v5357 = vrot.slane %v5236, 5
      %v5358 = vsel %vm4480, %v5355, %v5357
      %v5359 = vrot.slane %v5238, 5
      %v5360 = vsel %vm4480, %v5357, %v5359
      %v5361 = vrot.slane %v5241, 5
      %v5362 = vsel %vm4480, %v5359, %v5361
      %v5363 = vrot.slane %v5243, 5
      %v5364 = vsel %vm4480, %v5361, %v5363
      %v5365 = vrot.slane %v5246, 5
      %v5366 = vsel %vm4480, %v5363, %v5365
      %v5367 = vrot.slane %v5248, 5
      %v5368 = vsel %vm4480, %v5365, %v5367
      %v5369 = vrot.slane %v5251, 5
      %v5370 = vsel %vm4480, %v5367, %v5369
      %v5371 = vrot.slane %v5253, 5
      %v5372 = vsel %vm4480, %v5369, %v5371
      %v5373 = vrot.slane %v5256, 5
      %v5374 = vsel %vm4480, %v5371, %v5373
      %v5375 = vrot.slane %v5258, 5
      %v5376 = vsel %vm4480, %v5373, %v5375
      %v5377 = vrot.slane %v5261, 5
      %v5378 = vsel %vm4480, %v5375, %v5377
      %v5379 = vrot.slane %v5263, 5
      %v5380 = vsel %vm4480, %v5377, %v5379
      %v5381 = vrot.slane %v5266, 5
      %v5382 = vsel %vm4480, %v5379, %v5381
      %v5383 = vrot.slane %v5268, 5
      %v5384 = vsel %vm4480, %v5381, %v5383
      %v5385 = vrot.slane %v5271, 5
      %v5386 = vsel %vm4480, %v5383, %v5385
      %v5387 = vrot.slane %v5273, 5
      %v5388 = vsel %vm4480, %v5385, %v5387
      %v5389 = vrot.slane %v5276, 5
      %v5390 = vsel %vm4480, %v5387, %v5389
      %v5391 = vrot.slane %v5278, 5
      %v5392 = vsel %vm4480, %v5389, %v5391
      %v5393 = vrot.slane %v5281, 5
      %v5394 = vsel %vm4480, %v5391, %v5393
      %v5395 = vrot.slane %v5283, 5
      %v5396 = vsel %vm4480, %v5393, %v5395
      %v5397 = vrot.slane %v5286, 5
      %v5398 = vsel %vm4480, %v5395, %v5397
      %v5399 = vrot.slane %v5288, 5
      %v5400 = vsel %vm4480, %v5397, %v5399
      %v5401 = vrot.slane %v5291, 5
      %v5402 = vsel %vm4480, %v5399, %v5401
      %v5403 = vrot.slane %v5293, 5
      %v5404 = vsel %vm4480, %v5401, %v5403
      %v5405 = vrot.slane %v5296, 5
      %v5406 = vsel %vm4480, %v5403, %v5405
      %v5407 = vrot.slane %v5298, 5
      %v5408 = vsel %vm4480, %v5405, %v5407
      %v5409 = vrot.slane %v5301, 5
      %v5410 = vsel %vm4480, %v5407, %v5409
      %v5411 = vrot.slane %v5303, 5
      %v5412 = vsel %vm4480, %v5409, %v5411
      %v5413 = vrot.slane %v5306, 5
      %v5414 = vsel %vm4480, %v5411, %v5413
      %v5415 = vrot.slane %v5308, 5
      %v5416 = vsel %vm4480, %v5413, %v5415
      %v5454 = vadd.f32 %v4997, %v5346
      %v5455 = vadd.f32 %v4998, %v5348
      %v5456 = vadd.f32 %v4999, %v5350
      %v5457 = vadd.f32 %v5000, %v5352
      %v5458 = vadd.f32 %v5001, %v5354
      %v5459 = vadd.f32 %v5002, %v5356
      %v5460 = vadd.f32 %v5003, %v5358
      %v5461 = vadd.f32 %v5004, %v5360
      %v5462 = vadd.f32 %v5005, %v5362
      %v5463 = vadd.f32 %v5006, %v5364
      %v5464 = vadd.f32 %v5007, %v5366
      %v5465 = vadd.f32 %v5008, %v5368
      %v5466 = vadd.f32 %v5009, %v5370
      %v5467 = vadd.f32 %v5010, %v5372
      %v5468 = vadd.f32 %v5011, %v5374
      %v5469 = vadd.f32 %v5012, %v5376
      %v5470 = vadd.f32 %v5013, %v5378
      %v5471 = vadd.f32 %v5014, %v5380
      %v5472 = vadd.f32 %v5015, %v5382
      %v5473 = vadd.f32 %v5016, %v5384
      %v5474 = vadd.f32 %v5017, %v5386
      %v5475 = vadd.f32 %v5018, %v5388
      %v5476 = vadd.f32 %v5019, %v5390
      %v5477 = vadd.f32 %v5020, %v5392
      %v5478 = vadd.f32 %v5021, %v5394
      %v5479 = vadd.f32 %v5022, %v5396
      %v5480 = vadd.f32 %v5023, %v5398
      %v5481 = vadd.f32 %v5024, %v5400
      %v5482 = vadd.f32 %v5025, %v5402
      %v5483 = vadd.f32 %v5026, %v5404
      %v5484 = vadd.f32 %v5027, %v5406
      %v5485 = vadd.f32 %v5028, %v5408
      %v5486 = vadd.f32 %v5029, %v5410
      %v5487 = vadd.f32 %v5030, %v5412
      %v5488 = vadd.f32 %v5031, %v5414
      %v5489 = vadd.f32 %v5032, %v5416
      %v5490 = vadd.f32 %v5033, %v5415
      %v5491 = vld [vmem:[#allocation2 + $0xc] sm:$0x8]
      %v5492 = vld [vmem:[#allocation2 + $0x10] sm:$0xf]
      %v5493 = vld [vmem:[#allocation2 + $0x14] sm:$0xf]
      %v5494 = vld [vmem:[#allocation2 + $0x18] sm:$0xf]
      %v5495 = vld [vmem:[#allocation2 + $0x1c] sm:$0xf]
      %v5496 = vld [vmem:[#allocation2 + $0x20] sm:$0xf]
      %v5497 = vld [vmem:[#allocation2 + $0x24] sm:$0xf]
      %v5498 = vld [vmem:[#allocation2 + $0x28] sm:$0xf]
      %v5499 = vld [vmem:[#allocation2 + $0x2c] sm:$0xf]
      %v5500 = vld [vmem:[#allocation2 + $0x30] sm:$0xf]
      %v5501 = vld [vmem:[#allocation2 + $0x34] sm:$0xf]
      %v5502 = vld [vmem:[#allocation2 + $0x38] sm:$0xf]
      %v5503 = vld [vmem:[#allocation2 + $0x3c] sm:$0xf]
      %v5504 = vld [vmem:[#allocation2 + $0x40] sm:$0xf]
      %v5505 = vld [vmem:[#allocation2 + $0x44] sm:$0xf]
      %v5506 = vld [vmem:[#allocation2 + $0x48] sm:$0xf]
      %v5507 = vld [vmem:[#allocation2 + $0x4c] sm:$0xf]
      %v5508 = vld [vmem:[#allocation2 + $0x50] sm:$0xf]
      %v5509 = vld [vmem:[#allocation2 + $0x54] sm:$0xf]
      %v5510 = vld [vmem:[#allocation2 + $0x58] sm:$0xf]
      %v5511 = vld [vmem:[#allocation2 + $0x5c] sm:$0xf]
      %v5512 = vld [vmem:[#allocation2 + $0x60] sm:$0xf]
      %v5513 = vld [vmem:[#allocation2 + $0x64] sm:$0xf]
      %v5514 = vld [vmem:[#allocation2 + $0x68] sm:$0xf]
      %v5515 = vld [vmem:[#allocation2 + $0x6c] sm:$0xf]
      %v5516 = vld [vmem:[#allocation2 + $0x70] sm:$0xf]
      %v5517 = vld [vmem:[#allocation2 + $0x74] sm:$0xf]
      %v5518 = vld [vmem:[#allocation2 + $0x78] sm:$0xf]
      %v5519 = vld [vmem:[#allocation2 + $0x7c] sm:$0xf]
      %v5520 = vld [vmem:[#allocation2 + $0x80] sm:$0xf]
      %v5521 = vld [vmem:[#allocation2 + $0x84] sm:$0xf]
      %v5522 = vld [vmem:[#allocation2 + $0x88] sm:$0xf]
      %v5523 = vld [vmem:[#allocation2 + $0x8c] sm:$0xf]
      %v5524 = vld [vmem:[#allocation2 + $0x90] sm:$0xf]
      %v5525 = vld [vmem:[#allocation2 + $0x94] sm:$0xf]
      %v5526 = vld [vmem:[#allocation2 + $0x98] sm:$0xf]
      %v5527 = vld [vmem:[#allocation2 + $0x9c] sm:$0xf]
      %s5528 = scalar_lea.vmem %s3, 96
      %v5529 = vld [vmem:[%s5528] sm:$0xf]
      %v5530 = vld [vmem:[%s5528 + $0x4] sm:$0xf]
      %v5531 = vld [vmem:[%s5528 + $0x8] sm:$0xf]
      %v5532 = vld [vmem:[%s5528 + $0xc] sm:$0xf]
      %v5533 = vld [vmem:[%s5528 + $0x10] sm:$0xf]
      %v5534 = vld [vmem:[%s5528 + $0x14] sm:$0xf]
      %v5535 = vld [vmem:[%s5528 + $0x18] sm:$0xf]
      %v5536 = vld [vmem:[%s5528 + $0x1c] sm:$0xf]
      %v5574 = vunpack.c.l.b16 %v5491
      %v5575 = vunpack.c.l.b16 %v5492
      %v5576 = vunpack.c.l.b16 %v5493
      %v5577 = vunpack.c.l.b16 %v5494
      %v5578 = vunpack.c.l.b16 %v5495
      %v5579 = vunpack.c.l.b16 %v5496
      %v5580 = vunpack.c.l.b16 %v5497
      %v5581 = vunpack.c.l.b16 %v5498
      %v5582 = vunpack.c.l.b16 %v5499
      %v5583 = vunpack.c.l.b16 %v5500
      %v5584 = vunpack.c.l.b16 %v5501
      %v5585 = vunpack.c.l.b16 %v5502
      %v5586 = vunpack.c.l.b16 %v5503
      %v5587 = vunpack.c.l.b16 %v5504
      %v5588 = vunpack.c.l.b16 %v5505
      %v5589 = vunpack.c.l.b16 %v5506
      %v5590 = vunpack.c.l.b16 %v5507
      %v5591 = vunpack.c.l.b16 %v5508
      %v5592 = vunpack.c.l.b16 %v5509
      %v5593 = vunpack.c.l.b16 %v5510
      %v5594 = vunpack.c.l.b16 %v5511
      %v5595 = vunpack.c.l.b16 %v5512
      %v5596 = vunpack.c.l.b16 %v5513
      %v5597 = vunpack.c.l.b16 %v5514
      %v5598 = vunpack.c.l.b16 %v5515
      %v5599 = vunpack.c.l.b16 %v5516
      %v5600 = vunpack.c.l.b16 %v5517
      %v5601 = vunpack.c.l.b16 %v5518
      %v5602 = vunpack.c.l.b16 %v5519
      %v5603 = vunpack.c.l.b16 %v5520
      %v5604 = vunpack.c.l.b16 %v5521
      %v5605 = vunpack.c.l.b16 %v5522
      %v5606 = vunpack.c.l.b16 %v5523
      %v5607 = vunpack.c.l.b16 %v5524
      %v5608 = vunpack.c.l.b16 %v5525
      %v5609 = vunpack.c.l.b16 %v5526
      %v5610 = vunpack.c.l.b16 %v5527
      %v5611 = vpack.c.b16 %v5575, %v5574
      %v5612 = vpack.c.b16 %v5577, %v5576
      %v5613 = vpack.c.b16 %v5579, %v5578
      %v5614 = vpack.c.b16 %v5581, %v5580
      %v5615 = vpack.c.b16 %v5583, %v5582
      %v5616 = vpack.c.b16 %v5585, %v5584
      %v5617 = vpack.c.b16 %v5587, %v5586
      %v5618 = vpack.c.b16 %v5589, %v5588
      %v5619 = vpack.c.b16 %v5591, %v5590
      %v5620 = vpack.c.b16 %v5593, %v5592
      %v5621 = vpack.c.b16 %v5595, %v5594
      %v5622 = vpack.c.b16 %v5597, %v5596
      %v5623 = vpack.c.b16 %v5599, %v5598
      %v5624 = vpack.c.b16 %v5601, %v5600
      %v5625 = vpack.c.b16 %v5603, %v5602
      %v5626 = vpack.c.b16 %v5605, %v5604
      %v5627 = vpack.c.b16 %v5607, %v5606
      %v5628 = vpack.c.b16 %v5609, %v5608
      %v5629 = vpack.c.b16 %v5610, %v5610
      %v5631 = vshrl.u32 %v5611, 16
      %v5633 = vrot.slane %v5631, 3
      %v5634 = vshll.u32 %v5611, 16
      %v5636 = vrot.slane %v5634, 4
      %v5637 = vor.u32 %v5633, %v5636
      %v5639 = vshrl.u32 %v5612, 16
      %v5641 = vrot.slane %v5639, 3
      %v5642 = vshll.u32 %v5612, 16
      %v5644 = vrot.slane %v5642, 4
      %v5645 = vor.u32 %v5641, %v5644
      %v5646 = vsel %vm5047, %v5637, %v5645
      %v5648 = vshrl.u32 %v5613, 16
      %v5650 = vrot.slane %v5648, 3
      %v5651 = vshll.u32 %v5613, 16
      %v5653 = vrot.slane %v5651, 4
      %v5654 = vor.u32 %v5650, %v5653
      %v5655 = vsel %vm5047, %v5645, %v5654
      %v5657 = vshrl.u32 %v5614, 16
      %v5659 = vrot.slane %v5657, 3
      %v5660 = vshll.u32 %v5614, 16
      %v5662 = vrot.slane %v5660, 4
      %v5663 = vor.u32 %v5659, %v5662
      %v5664 = vsel %vm5047, %v5654, %v5663
      %v5666 = vshrl.u32 %v5615, 16
      %v5668 = vrot.slane %v5666, 3
      %v5669 = vshll.u32 %v5615, 16
      %v5671 = vrot.slane %v5669, 4
      %v5672 = vor.u32 %v5668, %v5671
      %v5673 = vsel %vm5047, %v5663, %v5672
      %v5675 = vshrl.u32 %v5616, 16
      %v5677 = vrot.slane %v5675, 3
      %v5678 = vshll.u32 %v5616, 16
      %v5680 = vrot.slane %v5678, 4
      %v5681 = vor.u32 %v5677, %v5680
      %v5682 = vsel %vm5047, %v5672, %v5681
      %v5684 = vshrl.u32 %v5617, 16
      %v5686 = vrot.slane %v5684, 3
      %v5687 = vshll.u32 %v5617, 16
      %v5689 = vrot.slane %v5687, 4
      %v5690 = vor.u32 %v5686, %v5689
      %v5691 = vsel %vm5047, %v5681, %v5690
      %v5693 = vshrl.u32 %v5618, 16
      %v5695 = vrot.slane %v5693, 3
      %v5696 = vshll.u32 %v5618, 16
      %v5698 = vrot.slane %v5696, 4
      %v5699 = vor.u32 %v5695, %v5698
      %v5700 = vsel %vm5047, %v5690, %v5699
      %v5702 = vshrl.u32 %v5619, 16
      %v5704 = vrot.slane %v5702, 3
      %v5705 = vshll.u32 %v5619, 16
      %v5707 = vrot.slane %v5705, 4
      %v5708 = vor.u32 %v5704, %v5707
      %v5709 = vsel %vm5047, %v5699, %v5708
      %v5711 = vshrl.u32 %v5620, 16
      %v5713 = vrot.slane %v5711, 3
      %v5714 = vshll.u32 %v5620, 16
      %v5716 = vrot.slane %v5714, 4
      %v5717 = vor.u32 %v5713, %v5716
      %v5718 = vsel %vm5047, %v5708, %v5717
      %v5720 = vshrl.u32 %v5621, 16
      %v5722 = vrot.slane %v5720, 3
      %v5723 = vshll.u32 %v5621, 16
      %v5725 = vrot.slane %v5723, 4
      %v5726 = vor.u32 %v5722, %v5725
      %v5727 = vsel %vm5047, %v5717, %v5726
      %v5729 = vshrl.u32 %v5622, 16
      %v5731 = vrot.slane %v5729, 3
      %v5732 = vshll.u32 %v5622, 16
      %v5734 = vrot.slane %v5732, 4
      %v5735 = vor.u32 %v5731, %v5734
      %v5736 = vsel %vm5047, %v5726, %v5735
      %v5738 = vshrl.u32 %v5623, 16
      %v5740 = vrot.slane %v5738, 3
      %v5741 = vshll.u32 %v5623, 16
      %v5743 = vrot.slane %v5741, 4
      %v5744 = vor.u32 %v5740, %v5743
      %v5745 = vsel %vm5047, %v5735, %v5744
      %v5747 = vshrl.u32 %v5624, 16
      %v5749 = vrot.slane %v5747, 3
      %v5750 = vshll.u32 %v5624, 16
      %v5752 = vrot.slane %v5750, 4
      %v5753 = vor.u32 %v5749, %v5752
      %v5754 = vsel %vm5047, %v5744, %v5753
      %v5756 = vshrl.u32 %v5625, 16
      %v5758 = vrot.slane %v5756, 3
      %v5759 = vshll.u32 %v5625, 16
      %v5761 = vrot.slane %v5759, 4
      %v5762 = vor.u32 %v5758, %v5761
      %v5763 = vsel %vm5047, %v5753, %v5762
      %v5765 = vshrl.u32 %v5626, 16
      %v5767 = vrot.slane %v5765, 3
      %v5768 = vshll.u32 %v5626, 16
      %v5770 = vrot.slane %v5768, 4
      %v5771 = vor.u32 %v5767, %v5770
      %v5772 = vsel %vm5047, %v5762, %v5771
      %v5774 = vshrl.u32 %v5627, 16
      %v5776 = vrot.slane %v5774, 3
      %v5777 = vshll.u32 %v5627, 16
      %v5779 = vrot.slane %v5777, 4
      %v5780 = vor.u32 %v5776, %v5779
      %v5781 = vsel %vm5047, %v5771, %v5780
      %v5783 = vshrl.u32 %v5628, 16
      %v5785 = vrot.slane %v5783, 3
      %v5786 = vshll.u32 %v5628, 16
      %v5788 = vrot.slane %v5786, 4
      %v5789 = vor.u32 %v5785, %v5788
      %v5790 = vsel %vm5047, %v5780, %v5789
      %v5792 = vshrl.u32 %v5629, 16
      %v5794 = vrot.slane %v5792, 3
      %v5795 = vshll.u32 %v5629, 16
      %v5797 = vrot.slane %v5795, 4
      %v5798 = vor.u32 %v5794, %v5797
      %v5799 = vsel %vm5047, %v5789, %v5798
      %v5808 = vunpack.c.l.b16 %v5529
      %v5809 = vunpack.c.l.b16 %v5530
      %v5810 = vunpack.c.l.b16 %v5531
      %v5811 = vunpack.c.l.b16 %v5532
      %v5812 = vunpack.c.l.b16 %v5533
      %v5813 = vunpack.c.l.b16 %v5534
      %v5814 = vunpack.c.l.b16 %v5535
      %v5815 = vunpack.c.l.b16 %v5536
      %v5816 = vpack.c.b16 %v5809, %v5808
      %v5817 = vpack.c.b16 %v5811, %v5810
      %v5818 = vpack.c.b16 %v5813, %v5812
      %v5819 = vpack.c.b16 %v5815, %v5814
      %v5825 = vsel %vm429, %v5646, 0
      %v5828 = vsel %vm429, %v5655, 0
      %v5831 = vsel %vm429, %v5664, 0
      %v5834 = vsel %vm429, %v5673, 0
      %v5837 = vsel %vm429, %v5682, 0
      %v5840 = vsel %vm429, %v5691, 0
      %v5843 = vsel %vm429, %v5700, 0
      %v5846 = vsel %vm429, %v5709, 0
      %v5849 = vsel %vm429, %v5718, 0
      %v5852 = vsel %vm429, %v5727, 0
      %v5855 = vsel %vm429, %v5736, 0
      %v5858 = vsel %vm429, %v5745, 0
      %v5861 = vsel %vm429, %v5754, 0
      %v5864 = vsel %vm429, %v5763, 0
      %v5867 = vsel %vm429, %v5772, 0
      %v5870 = vsel %vm429, %v5781, 0
      %v5873 = vsel %vm429, %v5790, 0
      %v5876 = vsel %vm429, %v5799, 0
      %5878 = vmatpush.bf16.msra.mxu0 0
      %5879 = vmatpush.bf16.msra.mxu0 0
      %5880 = vmatpush.bf16.msra.mxu0 0
      %5881 = vmatpush.bf16.msra.mxu0 0
      %5882 = vmatpush.bf16.msra.mxu0 %v5819
      %5883 = vmatpush.bf16.msra.mxu0 %v5818
      %5884 = vmatpush.bf16.msra.mxu0 %v5817
      %5885 = vmatpush.bf16.msra.mxu0 %v5816
      %5886 = vmatmul.bf16.gmra.mxu0 %v5825
      %v5887 = vpop.f32.mrf.mxu0
      %v5888 = vadd.f32 0.0, %v5887
      %v5889 = vpop.f32.mrf.mxu0
      %v5890 = vadd.f32 0.0, %v5889
      %5891 = vmatmul.bf16.gmra.mxu0 %v5828
      %v5892 = vpop.f32.mrf.mxu0
      %v5893 = vadd.f32 0.0, %v5892
      %v5894 = vpop.f32.mrf.mxu0
      %v5895 = vadd.f32 0.0, %v5894
      %5896 = vmatmul.bf16.gmra.mxu0 %v5831
      %v5897 = vpop.f32.mrf.mxu0
      %v5898 = vadd.f32 0.0, %v5897
      %v5899 = vpop.f32.mrf.mxu0
      %v5900 = vadd.f32 0.0, %v5899
      %5901 = vmatmul.bf16.gmra.mxu0 %v5834
      %v5902 = vpop.f32.mrf.mxu0
      %v5903 = vadd.f32 0.0, %v5902
      %v5904 = vpop.f32.mrf.mxu0
      %v5905 = vadd.f32 0.0, %v5904
      %5906 = vmatmul.bf16.gmra.mxu0 %v5837
      %v5907 = vpop.f32.mrf.mxu0
      %v5908 = vadd.f32 0.0, %v5907
      %v5909 = vpop.f32.mrf.mxu0
      %v5910 = vadd.f32 0.0, %v5909
      %5911 = vmatmul.bf16.gmra.mxu0 %v5840
      %v5912 = vpop.f32.mrf.mxu0
      %v5913 = vadd.f32 0.0, %v5912
      %v5914 = vpop.f32.mrf.mxu0
      %v5915 = vadd.f32 0.0, %v5914
      %5916 = vmatmul.bf16.gmra.mxu0 %v5843
      %v5917 = vpop.f32.mrf.mxu0
      %v5918 = vadd.f32 0.0, %v5917
      %v5919 = vpop.f32.mrf.mxu0
      %v5920 = vadd.f32 0.0, %v5919
      %5921 = vmatmul.bf16.gmra.mxu0 %v5846
      %v5922 = vpop.f32.mrf.mxu0
      %v5923 = vadd.f32 0.0, %v5922
      %v5924 = vpop.f32.mrf.mxu0
      %v5925 = vadd.f32 0.0, %v5924
      %5926 = vmatmul.bf16.gmra.mxu0 %v5849
      %v5927 = vpop.f32.mrf.mxu0
      %v5928 = vadd.f32 0.0, %v5927
      %v5929 = vpop.f32.mrf.mxu0
      %v5930 = vadd.f32 0.0, %v5929
      %5931 = vmatmul.bf16.gmra.mxu0 %v5852
      %v5932 = vpop.f32.mrf.mxu0
      %v5933 = vadd.f32 0.0, %v5932
      %v5934 = vpop.f32.mrf.mxu0
      %v5935 = vadd.f32 0.0, %v5934
      %5936 = vmatmul.bf16.gmra.mxu0 %v5855
      %v5937 = vpop.f32.mrf.mxu0
      %v5938 = vadd.f32 0.0, %v5937
      %v5939 = vpop.f32.mrf.mxu0
      %v5940 = vadd.f32 0.0, %v5939
      %5941 = vmatmul.bf16.gmra.mxu0 %v5858
      %v5942 = vpop.f32.mrf.mxu0
      %v5943 = vadd.f32 0.0, %v5942
      %v5944 = vpop.f32.mrf.mxu0
      %v5945 = vadd.f32 0.0, %v5944
      %5946 = vmatmul.bf16.gmra.mxu0 %v5861
      %v5947 = vpop.f32.mrf.mxu0
      %v5948 = vadd.f32 0.0, %v5947
      %v5949 = vpop.f32.mrf.mxu0
      %v5950 = vadd.f32 0.0, %v5949
      %5951 = vmatmul.bf16.gmra.mxu0 %v5864
      %v5952 = vpop.f32.mrf.mxu0
      %v5953 = vadd.f32 0.0, %v5952
      %v5954 = vpop.f32.mrf.mxu0
      %v5955 = vadd.f32 0.0, %v5954
      %5956 = vmatmul.bf16.gmra.mxu0 %v5867
      %v5957 = vpop.f32.mrf.mxu0
      %v5958 = vadd.f32 0.0, %v5957
      %v5959 = vpop.f32.mrf.mxu0
      %v5960 = vadd.f32 0.0, %v5959
      %5961 = vmatmul.bf16.gmra.mxu0 %v5870
      %v5962 = vpop.f32.mrf.mxu0
      %v5963 = vadd.f32 0.0, %v5962
      %v5964 = vpop.f32.mrf.mxu0
      %v5965 = vadd.f32 0.0, %v5964
      %5966 = vmatmul.bf16.gmra.mxu0 %v5873
      %v5967 = vpop.f32.mrf.mxu0
      %v5968 = vadd.f32 0.0, %v5967
      %v5969 = vpop.f32.mrf.mxu0
      %v5970 = vadd.f32 0.0, %v5969
      %5971 = vmatmul.bf16.gmra.mxu0 %v5876
      %v5972 = vpop.f32.mrf.mxu0
      %v5973 = vadd.f32 0.0, %v5972
      %v5974 = vpop.f32.mrf.mxu0
      %v5975 = vadd.f32 0.0, %v5974
      %5976 = vdwg.mxu0
      %v6013 = vrot.slane %v5888, 5
      %v6014 = vrot.slane %v5890, 5
      %v6015 = vsel %vm4480, %v6013, %v6014
      %v6016 = vrot.slane %v5893, 5
      %v6017 = vsel %vm4480, %v6014, %v6016
      %v6018 = vrot.slane %v5895, 5
      %v6019 = vsel %vm4480, %v6016, %v6018
      %v6020 = vrot.slane %v5898, 5
      %v6021 = vsel %vm4480, %v6018, %v6020
      %v6022 = vrot.slane %v5900, 5
      %v6023 = vsel %vm4480, %v6020, %v6022
      %v6024 = vrot.slane %v5903, 5
      %v6025 = vsel %vm4480, %v6022, %v6024
      %v6026 = vrot.slane %v5905, 5
      %v6027 = vsel %vm4480, %v6024, %v6026
      %v6028 = vrot.slane %v5908, 5
      %v6029 = vsel %vm4480, %v6026, %v6028
      %v6030 = vrot.slane %v5910, 5
      %v6031 = vsel %vm4480, %v6028, %v6030
      %v6032 = vrot.slane %v5913, 5
      %v6033 = vsel %vm4480, %v6030, %v6032
      %v6034 = vrot.slane %v5915, 5
      %v6035 = vsel %vm4480, %v6032, %v6034
      %v6036 = vrot.slane %v5918, 5
      %v6037 = vsel %vm4480, %v6034, %v6036
      %v6038 = vrot.slane %v5920, 5
      %v6039 = vsel %vm4480, %v6036, %v6038
      %v6040 = vrot.slane %v5923, 5
      %v6041 = vsel %vm4480, %v6038, %v6040
      %v6042 = vrot.slane %v5925, 5
      %v6043 = vsel %vm4480, %v6040, %v6042
      %v6044 = vrot.slane %v5928, 5
      %v6045 = vsel %vm4480, %v6042, %v6044
      %v6046 = vrot.slane %v5930, 5
      %v6047 = vsel %vm4480, %v6044, %v6046
      %v6048 = vrot.slane %v5933, 5
      %v6049 = vsel %vm4480, %v6046, %v6048
      %v6050 = vrot.slane %v5935, 5
      %v6051 = vsel %vm4480, %v6048, %v6050
      %v6052 = vrot.slane %v5938, 5
      %v6053 = vsel %vm4480, %v6050, %v6052
      %v6054 = vrot.slane %v5940, 5
      %v6055 = vsel %vm4480, %v6052, %v6054
      %v6056 = vrot.slane %v5943, 5
      %v6057 = vsel %vm4480, %v6054, %v6056
      %v6058 = vrot.slane %v5945, 5
      %v6059 = vsel %vm4480, %v6056, %v6058
      %v6060 = vrot.slane %v5948, 5
      %v6061 = vsel %vm4480, %v6058, %v6060
      %v6062 = vrot.slane %v5950, 5
      %v6063 = vsel %vm4480, %v6060, %v6062
      %v6064 = vrot.slane %v5953, 5
      %v6065 = vsel %vm4480, %v6062, %v6064
      %v6066 = vrot.slane %v5955, 5
      %v6067 = vsel %vm4480, %v6064, %v6066
      %v6068 = vrot.slane %v5958, 5
      %v6069 = vsel %vm4480, %v6066, %v6068
      %v6070 = vrot.slane %v5960, 5
      %v6071 = vsel %vm4480, %v6068, %v6070
      %v6072 = vrot.slane %v5963, 5
      %v6073 = vsel %vm4480, %v6070, %v6072
      %v6074 = vrot.slane %v5965, 5
      %v6075 = vsel %vm4480, %v6072, %v6074
      %v6076 = vrot.slane %v5968, 5
      %v6077 = vsel %vm4480, %v6074, %v6076
      %v6078 = vrot.slane %v5970, 5
      %v6079 = vsel %vm4480, %v6076, %v6078
      %v6080 = vrot.slane %v5973, 5
      %v6081 = vsel %vm4480, %v6078, %v6080
      %v6082 = vrot.slane %v5975, 5
      %v6083 = vsel %vm4480, %v6080, %v6082
      %v6121 = vadd.f32 %v5454, %v6013
      %v6122 = vadd.f32 %v5455, %v6015
      %v6123 = vadd.f32 %v5456, %v6017
      %v6124 = vadd.f32 %v5457, %v6019
      %v6125 = vadd.f32 %v5458, %v6021
      %v6126 = vadd.f32 %v5459, %v6023
      %v6127 = vadd.f32 %v5460, %v6025
      %v6128 = vadd.f32 %v5461, %v6027
      %v6129 = vadd.f32 %v5462, %v6029
      %v6130 = vadd.f32 %v5463, %v6031
      %v6131 = vadd.f32 %v5464, %v6033
      %v6132 = vadd.f32 %v5465, %v6035
      %v6133 = vadd.f32 %v5466, %v6037
      %v6134 = vadd.f32 %v5467, %v6039
      %v6135 = vadd.f32 %v5468, %v6041
      %v6136 = vadd.f32 %v5469, %v6043
      %v6137 = vadd.f32 %v5470, %v6045
      %v6138 = vadd.f32 %v5471, %v6047
      %v6139 = vadd.f32 %v5472, %v6049
      %v6140 = vadd.f32 %v5473, %v6051
      %v6141 = vadd.f32 %v5474, %v6053
      %v6142 = vadd.f32 %v5475, %v6055
      %v6143 = vadd.f32 %v5476, %v6057
      %v6144 = vadd.f32 %v5477, %v6059
      %v6145 = vadd.f32 %v5478, %v6061
      %v6146 = vadd.f32 %v5479, %v6063
      %v6147 = vadd.f32 %v5480, %v6065
      %v6148 = vadd.f32 %v5481, %v6067
      %v6149 = vadd.f32 %v5482, %v6069
      %v6150 = vadd.f32 %v5483, %v6071
      %v6151 = vadd.f32 %v5484, %v6073
      %v6152 = vadd.f32 %v5485, %v6075
      %v6153 = vadd.f32 %v5486, %v6077
      %v6154 = vadd.f32 %v5487, %v6079
      %v6155 = vadd.f32 %v5488, %v6081
      %v6156 = vadd.f32 %v5489, %v6083
      %v6157 = vadd.f32 %v5490, %v6082
      %s6158 = scalar_lea.vmem %s3, 128
      %v6159 = vld [vmem:[%s6158] sm:$0xf]
      %v6160 = vld [vmem:[%s6158 + $0x4] sm:$0xf]
      %v6161 = vld [vmem:[%s6158 + $0x8] sm:$0xf]
      %v6162 = vld [vmem:[%s6158 + $0xc] sm:$0xf]
      %v6163 = vld [vmem:[%s6158 + $0x10] sm:$0xf]
      %v6164 = vld [vmem:[%s6158 + $0x14] sm:$0xf]
      %v6165 = vld [vmem:[%s6158 + $0x18] sm:$0xf]
      %v6166 = vld [vmem:[%s6158 + $0x1c] sm:$0xf]
      %v6167 = vpack.c.b16 %v5576, %v5575
      %v6168 = vpack.c.b16 %v5578, %v5577
      %v6169 = vpack.c.b16 %v5580, %v5579
      %v6170 = vpack.c.b16 %v5582, %v5581
      %v6171 = vpack.c.b16 %v5584, %v5583
      %v6172 = vpack.c.b16 %v5586, %v5585
      %v6173 = vpack.c.b16 %v5588, %v5587
      %v6174 = vpack.c.b16 %v5590, %v5589
      %v6175 = vpack.c.b16 %v5592, %v5591
      %v6176 = vpack.c.b16 %v5594, %v5593
      %v6177 = vpack.c.b16 %v5596, %v5595
      %v6178 = vpack.c.b16 %v5598, %v5597
      %v6179 = vpack.c.b16 %v5600, %v5599
      %v6180 = vpack.c.b16 %v5602, %v5601
      %v6181 = vpack.c.b16 %v5604, %v5603
      %v6182 = vpack.c.b16 %v5606, %v5605
      %v6183 = vpack.c.b16 %v5608, %v5607
      %v6184 = vpack.c.b16 %v5610, %v5609
      %v6193 = vunpack.c.l.b16 %v6159
      %v6194 = vunpack.c.l.b16 %v6160
      %v6195 = vunpack.c.l.b16 %v6161
      %v6196 = vunpack.c.l.b16 %v6162
      %v6197 = vunpack.c.l.b16 %v6163
      %v6198 = vunpack.c.l.b16 %v6164
      %v6199 = vunpack.c.l.b16 %v6165
      %v6200 = vunpack.c.l.b16 %v6166
      %v6201 = vpack.c.b16 %v6194, %v6193
      %v6202 = vpack.c.b16 %v6196, %v6195
      %v6203 = vpack.c.b16 %v6198, %v6197
      %v6204 = vpack.c.b16 %v6200, %v6199
      %v6210 = vsel %vm429, %v6167, 0
      %v6213 = vsel %vm429, %v6168, 0
      %v6216 = vsel %vm429, %v6169, 0
      %v6219 = vsel %vm429, %v6170, 0
      %v6222 = vsel %vm429, %v6171, 0
      %v6225 = vsel %vm429, %v6172, 0
      %v6228 = vsel %vm429, %v6173, 0
      %v6231 = vsel %vm429, %v6174, 0
      %v6234 = vsel %vm429, %v6175, 0
      %v6237 = vsel %vm429, %v6176, 0
      %v6240 = vsel %vm429, %v6177, 0
      %v6243 = vsel %vm429, %v6178, 0
      %v6246 = vsel %vm429, %v6179, 0
      %v6249 = vsel %vm429, %v6180, 0
      %v6252 = vsel %vm429, %v6181, 0
      %v6255 = vsel %vm429, %v6182, 0
      %v6258 = vsel %vm429, %v6183, 0
      %v6261 = vsel %vm429, %v6184, 0
      %6263 = vmatpush.bf16.msra.mxu0 0
      %6264 = vmatpush.bf16.msra.mxu0 0
      %6265 = vmatpush.bf16.msra.mxu0 0
      %6266 = vmatpush.bf16.msra.mxu0 0
      %6267 = vmatpush.bf16.msra.mxu0 %v6204
      %6268 = vmatpush.bf16.msra.mxu0 %v6203
      %6269 = vmatpush.bf16.msra.mxu0 %v6202
      %6270 = vmatpush.bf16.msra.mxu0 %v6201
      %6271 = vmatmul.bf16.gmra.mxu0 %v6210
      %v6272 = vpop.f32.mrf.mxu0
      %v6273 = vadd.f32 0.0, %v6272
      %v6274 = vpop.f32.mrf.mxu0
      %v6275 = vadd.f32 0.0, %v6274
      %6276 = vmatmul.bf16.gmra.mxu0 %v6213
      %v6277 = vpop.f32.mrf.mxu0
      %v6278 = vadd.f32 0.0, %v6277
      %v6279 = vpop.f32.mrf.mxu0
      %v6280 = vadd.f32 0.0, %v6279
      %6281 = vmatmul.bf16.gmra.mxu0 %v6216
      %v6282 = vpop.f32.mrf.mxu0
      %v6283 = vadd.f32 0.0, %v6282
      %v6284 = vpop.f32.mrf.mxu0
      %v6285 = vadd.f32 0.0, %v6284
      %6286 = vmatmul.bf16.gmra.mxu0 %v6219
      %v6287 = vpop.f32.mrf.mxu0
      %v6288 = vadd.f32 0.0, %v6287
      %v6289 = vpop.f32.mrf.mxu0
      %v6290 = vadd.f32 0.0, %v6289
      %6291 = vmatmul.bf16.gmra.mxu0 %v6222
      %v6292 = vpop.f32.mrf.mxu0
      %v6293 = vadd.f32 0.0, %v6292
      %v6294 = vpop.f32.mrf.mxu0
      %v6295 = vadd.f32 0.0, %v6294
      %6296 = vmatmul.bf16.gmra.mxu0 %v6225
      %v6297 = vpop.f32.mrf.mxu0
      %v6298 = vadd.f32 0.0, %v6297
      %v6299 = vpop.f32.mrf.mxu0
      %v6300 = vadd.f32 0.0, %v6299
      %6301 = vmatmul.bf16.gmra.mxu0 %v6228
      %v6302 = vpop.f32.mrf.mxu0
      %v6303 = vadd.f32 0.0, %v6302
      %v6304 = vpop.f32.mrf.mxu0
      %v6305 = vadd.f32 0.0, %v6304
      %6306 = vmatmul.bf16.gmra.mxu0 %v6231
      %v6307 = vpop.f32.mrf.mxu0
      %v6308 = vadd.f32 0.0, %v6307
      %v6309 = vpop.f32.mrf.mxu0
      %v6310 = vadd.f32 0.0, %v6309
      %6311 = vmatmul.bf16.gmra.mxu0 %v6234
      %v6312 = vpop.f32.mrf.mxu0
      %v6313 = vadd.f32 0.0, %v6312
      %v6314 = vpop.f32.mrf.mxu0
      %v6315 = vadd.f32 0.0, %v6314
      %6316 = vmatmul.bf16.gmra.mxu0 %v6237
      %v6317 = vpop.f32.mrf.mxu0
      %v6318 = vadd.f32 0.0, %v6317
      %v6319 = vpop.f32.mrf.mxu0
      %v6320 = vadd.f32 0.0, %v6319
      %6321 = vmatmul.bf16.gmra.mxu0 %v6240
      %v6322 = vpop.f32.mrf.mxu0
      %v6323 = vadd.f32 0.0, %v6322
      %v6324 = vpop.f32.mrf.mxu0
      %v6325 = vadd.f32 0.0, %v6324
      %6326 = vmatmul.bf16.gmra.mxu0 %v6243
      %v6327 = vpop.f32.mrf.mxu0
      %v6328 = vadd.f32 0.0, %v6327
      %v6329 = vpop.f32.mrf.mxu0
      %v6330 = vadd.f32 0.0, %v6329
      %6331 = vmatmul.bf16.gmra.mxu0 %v6246
      %v6332 = vpop.f32.mrf.mxu0
      %v6333 = vadd.f32 0.0, %v6332
      %v6334 = vpop.f32.mrf.mxu0
      %v6335 = vadd.f32 0.0, %v6334
      %6336 = vmatmul.bf16.gmra.mxu0 %v6249
      %v6337 = vpop.f32.mrf.mxu0
      %v6338 = vadd.f32 0.0, %v6337
      %v6339 = vpop.f32.mrf.mxu0
      %v6340 = vadd.f32 0.0, %v6339
      %6341 = vmatmul.bf16.gmra.mxu0 %v6252
      %v6342 = vpop.f32.mrf.mxu0
      %v6343 = vadd.f32 0.0, %v6342
      %v6344 = vpop.f32.mrf.mxu0
      %v6345 = vadd.f32 0.0, %v6344
      %6346 = vmatmul.bf16.gmra.mxu0 %v6255
      %v6347 = vpop.f32.mrf.mxu0
      %v6348 = vadd.f32 0.0, %v6347
      %v6349 = vpop.f32.mrf.mxu0
      %v6350 = vadd.f32 0.0, %v6349
      %6351 = vmatmul.bf16.gmra.mxu0 %v6258
      %v6352 = vpop.f32.mrf.mxu0
      %v6353 = vadd.f32 0.0, %v6352
      %v6354 = vpop.f32.mrf.mxu0
      %v6355 = vadd.f32 0.0, %v6354
      %6356 = vmatmul.bf16.gmra.mxu0 %v6261
      %v6357 = vpop.f32.mrf.mxu0
      %v6358 = vadd.f32 0.0, %v6357
      %v6359 = vpop.f32.mrf.mxu0
      %v6360 = vadd.f32 0.0, %v6359
      %6361 = vdwg.mxu0
      %v6398 = vrot.slane %v6273, 5
      %v6399 = vrot.slane %v6275, 5
      %v6400 = vsel %vm4480, %v6398, %v6399
      %v6401 = vrot.slane %v6278, 5
      %v6402 = vsel %vm4480, %v6399, %v6401
      %v6403 = vrot.slane %v6280, 5
      %v6404 = vsel %vm4480, %v6401, %v6403
      %v6405 = vrot.slane %v6283, 5
      %v6406 = vsel %vm4480, %v6403, %v6405
      %v6407 = vrot.slane %v6285, 5
      %v6408 = vsel %vm4480, %v6405, %v6407
      %v6409 = vrot.slane %v6288, 5
      %v6410 = vsel %vm4480, %v6407, %v6409
      %v6411 = vrot.slane %v6290, 5
      %v6412 = vsel %vm4480, %v6409, %v6411
      %v6413 = vrot.slane %v6293, 5
      %v6414 = vsel %vm4480, %v6411, %v6413
      %v6415 = vrot.slane %v6295, 5
      %v6416 = vsel %vm4480, %v6413, %v6415
      %v6417 = vrot.slane %v6298, 5
      %v6418 = vsel %vm4480, %v6415, %v6417
      %v6419 = vrot.slane %v6300, 5
      %v6420 = vsel %vm4480, %v6417, %v6419
      %v6421 = vrot.slane %v6303, 5
      %v6422 = vsel %vm4480, %v6419, %v6421
      %v6423 = vrot.slane %v6305, 5
      %v6424 = vsel %vm4480, %v6421, %v6423
      %v6425 = vrot.slane %v6308, 5
      %v6426 = vsel %vm4480, %v6423, %v6425
      %v6427 = vrot.slane %v6310, 5
      %v6428 = vsel %vm4480, %v6425, %v6427
      %v6429 = vrot.slane %v6313, 5
      %v6430 = vsel %vm4480, %v6427, %v6429
      %v6431 = vrot.slane %v6315, 5
      %v6432 = vsel %vm4480, %v6429, %v6431
      %v6433 = vrot.slane %v6318, 5
      %v6434 = vsel %vm4480, %v6431, %v6433
      %v6435 = vrot.slane %v6320, 5
      %v6436 = vsel %vm4480, %v6433, %v6435
      %v6437 = vrot.slane %v6323, 5
      %v6438 = vsel %vm4480, %v6435, %v6437
      %v6439 = vrot.slane %v6325, 5
      %v6440 = vsel %vm4480, %v6437, %v6439
      %v6441 = vrot.slane %v6328, 5
      %v6442 = vsel %vm4480, %v6439, %v6441
      %v6443 = vrot.slane %v6330, 5
      %v6444 = vsel %vm4480, %v6441, %v6443
      %v6445 = vrot.slane %v6333, 5
      %v6446 = vsel %vm4480, %v6443, %v6445
      %v6447 = vrot.slane %v6335, 5
      %v6448 = vsel %vm4480, %v6445, %v6447
      %v6449 = vrot.slane %v6338, 5
      %v6450 = vsel %vm4480, %v6447, %v6449
      %v6451 = vrot.slane %v6340, 5
      %v6452 = vsel %vm4480, %v6449, %v6451
      %v6453 = vrot.slane %v6343, 5
      %v6454 = vsel %vm4480, %v6451, %v6453
      %v6455 = vrot.slane %v6345, 5
      %v6456 = vsel %vm4480, %v6453, %v6455
      %v6457 = vrot.slane %v6348, 5
      %v6458 = vsel %vm4480, %v6455, %v6457
      %v6459 = vrot.slane %v6350, 5
      %v6460 = vsel %vm4480, %v6457, %v6459
      %v6461 = vrot.slane %v6353, 5
      %v6462 = vsel %vm4480, %v6459, %v6461
      %v6463 = vrot.slane %v6355, 5
      %v6464 = vsel %vm4480, %v6461, %v6463
      %v6465 = vrot.slane %v6358, 5
      %v6466 = vsel %vm4480, %v6463, %v6465
      %v6467 = vrot.slane %v6360, 5
      %v6468 = vsel %vm4480, %v6465, %v6467
      %v6506 = vadd.f32 %v6121, %v6398
      %v6507 = vadd.f32 %v6122, %v6400
      %v6508 = vadd.f32 %v6123, %v6402
      %v6509 = vadd.f32 %v6124, %v6404
      %v6510 = vadd.f32 %v6125, %v6406
      %v6511 = vadd.f32 %v6126, %v6408
      %v6512 = vadd.f32 %v6127, %v6410
      %v6513 = vadd.f32 %v6128, %v6412
      %v6514 = vadd.f32 %v6129, %v6414
      %v6515 = vadd.f32 %v6130, %v6416
      %v6516 = vadd.f32 %v6131, %v6418
      %v6517 = vadd.f32 %v6132, %v6420
      %v6518 = vadd.f32 %v6133, %v6422
      %v6519 = vadd.f32 %v6134, %v6424
      %v6520 = vadd.f32 %v6135, %v6426
      %v6521 = vadd.f32 %v6136, %v6428
      %v6522 = vadd.f32 %v6137, %v6430
      %v6523 = vadd.f32 %v6138, %v6432
      %v6524 = vadd.f32 %v6139, %v6434
      %v6525 = vadd.f32 %v6140, %v6436
      %v6526 = vadd.f32 %v6141, %v6438
      %v6527 = vadd.f32 %v6142, %v6440
      %v6528 = vadd.f32 %v6143, %v6442
      %v6529 = vadd.f32 %v6144, %v6444
      %v6530 = vadd.f32 %v6145, %v6446
      %v6531 = vadd.f32 %v6146, %v6448
      %v6532 = vadd.f32 %v6147, %v6450
      %v6533 = vadd.f32 %v6148, %v6452
      %v6534 = vadd.f32 %v6149, %v6454
      %v6535 = vadd.f32 %v6150, %v6456
      %v6536 = vadd.f32 %v6151, %v6458
      %v6537 = vadd.f32 %v6152, %v6460
      %v6538 = vadd.f32 %v6153, %v6462
      %v6539 = vadd.f32 %v6154, %v6464
      %v6540 = vadd.f32 %v6155, %v6466
      %v6541 = vadd.f32 %v6156, %v6468
      %v6542 = vadd.f32 %v6157, %v6467
      %v6543 = vld [vmem:[#allocation2 + $0x10] sm:$0xf]
      %v6544 = vld [vmem:[#allocation2 + $0x14] sm:$0xf]
      %v6545 = vld [vmem:[#allocation2 + $0x18] sm:$0xf]
      %v6546 = vld [vmem:[#allocation2 + $0x1c] sm:$0xf]
      %v6547 = vld [vmem:[#allocation2 + $0x20] sm:$0xf]
      %v6548 = vld [vmem:[#allocation2 + $0x24] sm:$0xf]
      %v6549 = vld [vmem:[#allocation2 + $0x28] sm:$0xf]
      %v6550 = vld [vmem:[#allocation2 + $0x2c] sm:$0xf]
      %v6551 = vld [vmem:[#allocation2 + $0x30] sm:$0xf]
      %v6552 = vld [vmem:[#allocation2 + $0x34] sm:$0xf]
      %v6553 = vld [vmem:[#allocation2 + $0x38] sm:$0xf]
      %v6554 = vld [vmem:[#allocation2 + $0x3c] sm:$0xf]
      %v6555 = vld [vmem:[#allocation2 + $0x40] sm:$0xf]
      %v6556 = vld [vmem:[#allocation2 + $0x44] sm:$0xf]
      %v6557 = vld [vmem:[#allocation2 + $0x48] sm:$0xf]
      %v6558 = vld [vmem:[#allocation2 + $0x4c] sm:$0xf]
      %v6559 = vld [vmem:[#allocation2 + $0x50] sm:$0xf]
      %v6560 = vld [vmem:[#allocation2 + $0x54] sm:$0xf]
      %v6561 = vld [vmem:[#allocation2 + $0x58] sm:$0xf]
      %v6562 = vld [vmem:[#allocation2 + $0x5c] sm:$0xf]
      %v6563 = vld [vmem:[#allocation2 + $0x60] sm:$0xf]
      %v6564 = vld [vmem:[#allocation2 + $0x64] sm:$0xf]
      %v6565 = vld [vmem:[#allocation2 + $0x68] sm:$0xf]
      %v6566 = vld [vmem:[#allocation2 + $0x6c] sm:$0xf]
      %v6567 = vld [vmem:[#allocation2 + $0x70] sm:$0xf]
      %v6568 = vld [vmem:[#allocation2 + $0x74] sm:$0xf]
      %v6569 = vld [vmem:[#allocation2 + $0x78] sm:$0xf]
      %v6570 = vld [vmem:[#allocation2 + $0x7c] sm:$0xf]
      %v6571 = vld [vmem:[#allocation2 + $0x80] sm:$0xf]
      %v6572 = vld [vmem:[#allocation2 + $0x84] sm:$0xf]
      %v6573 = vld [vmem:[#allocation2 + $0x88] sm:$0xf]
      %v6574 = vld [vmem:[#allocation2 + $0x8c] sm:$0xf]
      %v6575 = vld [vmem:[#allocation2 + $0x90] sm:$0xf]
      %v6576 = vld [vmem:[#allocation2 + $0x94] sm:$0xf]
      %v6577 = vld [vmem:[#allocation2 + $0x98] sm:$0xf]
      %v6578 = vld [vmem:[#allocation2 + $0x9c] sm:$0xf]
      %v6579 = vld [vmem:[#allocation2 + $0xa0] sm:$0x1]
      %s6580 = scalar_lea.vmem %s3, 160
      %v6581 = vld [vmem:[%s6580] sm:$0xf]
      %v6582 = vld [vmem:[%s6580 + $0x4] sm:$0xf]
      %v6583 = vld [vmem:[%s6580 + $0x8] sm:$0xf]
      %v6584 = vld [vmem:[%s6580 + $0xc] sm:$0xf]
      %v6585 = vld [vmem:[%s6580 + $0x10] sm:$0xf]
      %v6586 = vld [vmem:[%s6580 + $0x14] sm:$0xf]
      %v6587 = vld [vmem:[%s6580 + $0x18] sm:$0xf]
      %v6588 = vld [vmem:[%s6580 + $0x1c] sm:$0xf]
      %v6626 = vunpack.c.l.b16 %v6543
      %v6627 = vunpack.c.l.b16 %v6544
      %v6628 = vunpack.c.l.b16 %v6545
      %v6629 = vunpack.c.l.b16 %v6546
      %v6630 = vunpack.c.l.b16 %v6547
      %v6631 = vunpack.c.l.b16 %v6548
      %v6632 = vunpack.c.l.b16 %v6549
      %v6633 = vunpack.c.l.b16 %v6550
      %v6634 = vunpack.c.l.b16 %v6551
      %v6635 = vunpack.c.l.b16 %v6552
      %v6636 = vunpack.c.l.b16 %v6553
      %v6637 = vunpack.c.l.b16 %v6554
      %v6638 = vunpack.c.l.b16 %v6555
      %v6639 = vunpack.c.l.b16 %v6556
      %v6640 = vunpack.c.l.b16 %v6557
      %v6641 = vunpack.c.l.b16 %v6558
      %v6642 = vunpack.c.l.b16 %v6559
      %v6643 = vunpack.c.l.b16 %v6560
      %v6644 = vunpack.c.l.b16 %v6561
      %v6645 = vunpack.c.l.b16 %v6562
      %v6646 = vunpack.c.l.b16 %v6563
      %v6647 = vunpack.c.l.b16 %v6564
      %v6648 = vunpack.c.l.b16 %v6565
      %v6649 = vunpack.c.l.b16 %v6566
      %v6650 = vunpack.c.l.b16 %v6567
      %v6651 = vunpack.c.l.b16 %v6568
      %v6652 = vunpack.c.l.b16 %v6569
      %v6653 = vunpack.c.l.b16 %v6570
      %v6654 = vunpack.c.l.b16 %v6571
      %v6655 = vunpack.c.l.b16 %v6572
      %v6656 = vunpack.c.l.b16 %v6573
      %v6657 = vunpack.c.l.b16 %v6574
      %v6658 = vunpack.c.l.b16 %v6575
      %v6659 = vunpack.c.l.b16 %v6576
      %v6660 = vunpack.c.l.b16 %v6577
      %v6661 = vunpack.c.l.b16 %v6578
      %v6662 = vunpack.c.l.b16 %v6579
      %v6663 = vpack.c.b16 %v6627, %v6626
      %v6664 = vpack.c.b16 %v6629, %v6628
      %v6665 = vpack.c.b16 %v6631, %v6630
      %v6666 = vpack.c.b16 %v6633, %v6632
      %v6667 = vpack.c.b16 %v6635, %v6634
      %v6668 = vpack.c.b16 %v6637, %v6636
      %v6669 = vpack.c.b16 %v6639, %v6638
      %v6670 = vpack.c.b16 %v6641, %v6640
      %v6671 = vpack.c.b16 %v6643, %v6642
      %v6672 = vpack.c.b16 %v6645, %v6644
      %v6673 = vpack.c.b16 %v6647, %v6646
      %v6674 = vpack.c.b16 %v6649, %v6648
      %v6675 = vpack.c.b16 %v6651, %v6650
      %v6676 = vpack.c.b16 %v6653, %v6652
      %v6677 = vpack.c.b16 %v6655, %v6654
      %v6678 = vpack.c.b16 %v6657, %v6656
      %v6679 = vpack.c.b16 %v6659, %v6658
      %v6680 = vpack.c.b16 %v6661, %v6660
      %v6681 = vpack.c.b16 %v6662, %v6662
      %v6683 = vshrl.u32 %v6663, 16
      %v6685 = vshll.u32 %v6663, 16
      %v6687 = vrot.slane %v6685, 1
      %v6688 = vor.u32 %v6683, %v6687
      %v6690 = vshll.u32 %v6664, 16
      %v6692 = vrot.slane %v6690, 1
      %v6693 = vsel %vm758, %v6688, %v6692
      %v6694 = vshrl.u32 %v6664, 16
      %v6696 = vor.u32 %v6694, %v6692
      %v6698 = vshll.u32 %v6665, 16
      %v6700 = vrot.slane %v6698, 1
      %v6701 = vsel %vm758, %v6696, %v6700
      %v6702 = vshrl.u32 %v6665, 16
      %v6704 = vor.u32 %v6702, %v6700
      %v6706 = vshll.u32 %v6666, 16
      %v6708 = vrot.slane %v6706, 1
      %v6709 = vsel %vm758, %v6704, %v6708
      %v6710 = vshrl.u32 %v6666, 16
      %v6712 = vor.u32 %v6710, %v6708
      %v6714 = vshll.u32 %v6667, 16
      %v6716 = vrot.slane %v6714, 1
      %v6717 = vsel %vm758, %v6712, %v6716
      %v6718 = vshrl.u32 %v6667, 16
      %v6720 = vor.u32 %v6718, %v6716
      %v6722 = vshll.u32 %v6668, 16
      %v6724 = vrot.slane %v6722, 1
      %v6725 = vsel %vm758, %v6720, %v6724
      %v6726 = vshrl.u32 %v6668, 16
      %v6728 = vor.u32 %v6726, %v6724
      %v6730 = vshll.u32 %v6669, 16
      %v6732 = vrot.slane %v6730, 1
      %v6733 = vsel %vm758, %v6728, %v6732
      %v6734 = vshrl.u32 %v6669, 16
      %v6736 = vor.u32 %v6734, %v6732
      %v6738 = vshll.u32 %v6670, 16
      %v6740 = vrot.slane %v6738, 1
      %v6741 = vsel %vm758, %v6736, %v6740
      %v6742 = vshrl.u32 %v6670, 16
      %v6744 = vor.u32 %v6742, %v6740
      %v6746 = vshll.u32 %v6671, 16
      %v6748 = vrot.slane %v6746, 1
      %v6749 = vsel %vm758, %v6744, %v6748
      %v6750 = vshrl.u32 %v6671, 16
      %v6752 = vor.u32 %v6750, %v6748
      %v6754 = vshll.u32 %v6672, 16
      %v6756 = vrot.slane %v6754, 1
      %v6757 = vsel %vm758, %v6752, %v6756
      %v6758 = vshrl.u32 %v6672, 16
      %v6760 = vor.u32 %v6758, %v6756
      %v6762 = vshll.u32 %v6673, 16
      %v6764 = vrot.slane %v6762, 1
      %v6765 = vsel %vm758, %v6760, %v6764
      %v6766 = vshrl.u32 %v6673, 16
      %v6768 = vor.u32 %v6766, %v6764
      %v6770 = vshll.u32 %v6674, 16
      %v6772 = vrot.slane %v6770, 1
      %v6773 = vsel %vm758, %v6768, %v6772
      %v6774 = vshrl.u32 %v6674, 16
      %v6776 = vor.u32 %v6774, %v6772
      %v6778 = vshll.u32 %v6675, 16
      %v6780 = vrot.slane %v6778, 1
      %v6781 = vsel %vm758, %v6776, %v6780
      %v6782 = vshrl.u32 %v6675, 16
      %v6784 = vor.u32 %v6782, %v6780
      %v6786 = vshll.u32 %v6676, 16
      %v6788 = vrot.slane %v6786, 1
      %v6789 = vsel %vm758, %v6784, %v6788
      %v6790 = vshrl.u32 %v6676, 16
      %v6792 = vor.u32 %v6790, %v6788
      %v6794 = vshll.u32 %v6677, 16
      %v6796 = vrot.slane %v6794, 1
      %v6797 = vsel %vm758, %v6792, %v6796
      %v6798 = vshrl.u32 %v6677, 16
      %v6800 = vor.u32 %v6798, %v6796
      %v6802 = vshll.u32 %v6678, 16
      %v6804 = vrot.slane %v6802, 1
      %v6805 = vsel %vm758, %v6800, %v6804
      %v6806 = vshrl.u32 %v6678, 16
      %v6808 = vor.u32 %v6806, %v6804
      %v6810 = vshll.u32 %v6679, 16
      %v6812 = vrot.slane %v6810, 1
      %v6813 = vsel %vm758, %v6808, %v6812
      %v6814 = vshrl.u32 %v6679, 16
      %v6816 = vor.u32 %v6814, %v6812
      %v6818 = vshll.u32 %v6680, 16
      %v6820 = vrot.slane %v6818, 1
      %v6821 = vsel %vm758, %v6816, %v6820
      %v6822 = vshrl.u32 %v6680, 16
      %v6824 = vor.u32 %v6822, %v6820
      %v6826 = vshll.u32 %v6681, 16
      %v6828 = vrot.slane %v6826, 1
      %v6829 = vsel %vm758, %v6824, %v6828
      %v6838 = vunpack.c.l.b16 %v6581
      %v6839 = vunpack.c.l.b16 %v6582
      %v6840 = vunpack.c.l.b16 %v6583
      %v6841 = vunpack.c.l.b16 %v6584
      %v6842 = vunpack.c.l.b16 %v6585
      %v6843 = vunpack.c.l.b16 %v6586
      %v6844 = vunpack.c.l.b16 %v6587
      %v6845 = vunpack.c.l.b16 %v6588
      %v6846 = vpack.c.b16 %v6839, %v6838
      %v6847 = vpack.c.b16 %v6841, %v6840
      %v6848 = vpack.c.b16 %v6843, %v6842
      %v6849 = vpack.c.b16 %v6845, %v6844
      %v6855 = vsel %vm429, %v6693, 0
      %v6858 = vsel %vm429, %v6701, 0
      %v6861 = vsel %vm429, %v6709, 0
      %v6864 = vsel %vm429, %v6717, 0
      %v6867 = vsel %vm429, %v6725, 0
      %v6870 = vsel %vm429, %v6733, 0
      %v6873 = vsel %vm429, %v6741, 0
      %v6876 = vsel %vm429, %v6749, 0
      %v6879 = vsel %vm429, %v6757, 0
      %v6882 = vsel %vm429, %v6765, 0
      %v6885 = vsel %vm429, %v6773, 0
      %v6888 = vsel %vm429, %v6781, 0
      %v6891 = vsel %vm429, %v6789, 0
      %v6894 = vsel %vm429, %v6797, 0
      %v6897 = vsel %vm429, %v6805, 0
      %v6900 = vsel %vm429, %v6813, 0
      %v6903 = vsel %vm429, %v6821, 0
      %v6906 = vsel %vm429, %v6829, 0
      %6908 = vmatpush.bf16.msra.mxu0 0
      %6909 = vmatpush.bf16.msra.mxu0 0
      %6910 = vmatpush.bf16.msra.mxu0 0
      %6911 = vmatpush.bf16.msra.mxu0 0
      %6912 = vmatpush.bf16.msra.mxu0 %v6849
      %6913 = vmatpush.bf16.msra.mxu0 %v6848
      %6914 = vmatpush.bf16.msra.mxu0 %v6847
      %6915 = vmatpush.bf16.msra.mxu0 %v6846
      %6916 = vmatmul.bf16.gmra.mxu0 %v6855
      %v6917 = vpop.f32.mrf.mxu0
      %v6918 = vadd.f32 0.0, %v6917
      %v6919 = vpop.f32.mrf.mxu0
      %v6920 = vadd.f32 0.0, %v6919
      %6921 = vmatmul.bf16.gmra.mxu0 %v6858
      %v6922 = vpop.f32.mrf.mxu0
      %v6923 = vadd.f32 0.0, %v6922
      %v6924 = vpop.f32.mrf.mxu0
      %v6925 = vadd.f32 0.0, %v6924
      %6926 = vmatmul.bf16.gmra.mxu0 %v6861
      %v6927 = vpop.f32.mrf.mxu0
      %v6928 = vadd.f32 0.0, %v6927
      %v6929 = vpop.f32.mrf.mxu0
      %v6930 = vadd.f32 0.0, %v6929
      %6931 = vmatmul.bf16.gmra.mxu0 %v6864
      %v6932 = vpop.f32.mrf.mxu0
      %v6933 = vadd.f32 0.0, %v6932
      %v6934 = vpop.f32.mrf.mxu0
      %v6935 = vadd.f32 0.0, %v6934
      %6936 = vmatmul.bf16.gmra.mxu0 %v6867
      %v6937 = vpop.f32.mrf.mxu0
      %v6938 = vadd.f32 0.0, %v6937
      %v6939 = vpop.f32.mrf.mxu0
      %v6940 = vadd.f32 0.0, %v6939
      %6941 = vmatmul.bf16.gmra.mxu0 %v6870
      %v6942 = vpop.f32.mrf.mxu0
      %v6943 = vadd.f32 0.0, %v6942
      %v6944 = vpop.f32.mrf.mxu0
      %v6945 = vadd.f32 0.0, %v6944
      %6946 = vmatmul.bf16.gmra.mxu0 %v6873
      %v6947 = vpop.f32.mrf.mxu0
      %v6948 = vadd.f32 0.0, %v6947
      %v6949 = vpop.f32.mrf.mxu0
      %v6950 = vadd.f32 0.0, %v6949
      %6951 = vmatmul.bf16.gmra.mxu0 %v6876
      %v6952 = vpop.f32.mrf.mxu0
      %v6953 = vadd.f32 0.0, %v6952
      %v6954 = vpop.f32.mrf.mxu0
      %v6955 = vadd.f32 0.0, %v6954
      %6956 = vmatmul.bf16.gmra.mxu0 %v6879
      %v6957 = vpop.f32.mrf.mxu0
      %v6958 = vadd.f32 0.0, %v6957
      %v6959 = vpop.f32.mrf.mxu0
      %v6960 = vadd.f32 0.0, %v6959
      %6961 = vmatmul.bf16.gmra.mxu0 %v6882
      %v6962 = vpop.f32.mrf.mxu0
      %v6963 = vadd.f32 0.0, %v6962
      %v6964 = vpop.f32.mrf.mxu0
      %v6965 = vadd.f32 0.0, %v6964
      %6966 = vmatmul.bf16.gmra.mxu0 %v6885
      %v6967 = vpop.f32.mrf.mxu0
      %v6968 = vadd.f32 0.0, %v6967
      %v6969 = vpop.f32.mrf.mxu0
      %v6970 = vadd.f32 0.0, %v6969
      %6971 = vmatmul.bf16.gmra.mxu0 %v6888
      %v6972 = vpop.f32.mrf.mxu0
      %v6973 = vadd.f32 0.0, %v6972
      %v6974 = vpop.f32.mrf.mxu0
      %v6975 = vadd.f32 0.0, %v6974
      %6976 = vmatmul.bf16.gmra.mxu0 %v6891
      %v6977 = vpop.f32.mrf.mxu0
      %v6978 = vadd.f32 0.0, %v6977
      %v6979 = vpop.f32.mrf.mxu0
      %v6980 = vadd.f32 0.0, %v6979
      %6981 = vmatmul.bf16.gmra.mxu0 %v6894
      %v6982 = vpop.f32.mrf.mxu0
      %v6983 = vadd.f32 0.0, %v6982
      %v6984 = vpop.f32.mrf.mxu0
      %v6985 = vadd.f32 0.0, %v6984
      %6986 = vmatmul.bf16.gmra.mxu0 %v6897
      %v6987 = vpop.f32.mrf.mxu0
      %v6988 = vadd.f32 0.0, %v6987
      %v6989 = vpop.f32.mrf.mxu0
      %v6990 = vadd.f32 0.0, %v6989
      %6991 = vmatmul.bf16.gmra.mxu0 %v6900
      %v6992 = vpop.f32.mrf.mxu0
      %v6993 = vadd.f32 0.0, %v6992
      %v6994 = vpop.f32.mrf.mxu0
      %v6995 = vadd.f32 0.0, %v6994
      %6996 = vmatmul.bf16.gmra.mxu0 %v6903
      %v6997 = vpop.f32.mrf.mxu0
      %v6998 = vadd.f32 0.0, %v6997
      %v6999 = vpop.f32.mrf.mxu0
      %v7000 = vadd.f32 0.0, %v6999
      %7001 = vmatmul.bf16.gmra.mxu0 %v6906
      %v7002 = vpop.f32.mrf.mxu0
      %v7003 = vadd.f32 0.0, %v7002
      %v7004 = vpop.f32.mrf.mxu0
      %v7005 = vadd.f32 0.0, %v7004
      %7006 = vdwg.mxu0
      %v7043 = vrot.slane %v6918, 5
      %v7044 = vrot.slane %v6920, 5
      %v7045 = vsel %vm4480, %v7043, %v7044
      %v7046 = vrot.slane %v6923, 5
      %v7047 = vsel %vm4480, %v7044, %v7046
      %v7048 = vrot.slane %v6925, 5
      %v7049 = vsel %vm4480, %v7046, %v7048
      %v7050 = vrot.slane %v6928, 5
      %v7051 = vsel %vm4480, %v7048, %v7050
      %v7052 = vrot.slane %v6930, 5
      %v7053 = vsel %vm4480, %v7050, %v7052
      %v7054 = vrot.slane %v6933, 5
      %v7055 = vsel %vm4480, %v7052, %v7054
      %v7056 = vrot.slane %v6935, 5
      %v7057 = vsel %vm4480, %v7054, %v7056
      %v7058 = vrot.slane %v6938, 5
      %v7059 = vsel %vm4480, %v7056, %v7058
      %v7060 = vrot.slane %v6940, 5
      %v7061 = vsel %vm4480, %v7058, %v7060
      %v7062 = vrot.slane %v6943, 5
      %v7063 = vsel %vm4480, %v7060, %v7062
      %v7064 = vrot.slane %v6945, 5
      %v7065 = vsel %vm4480, %v7062, %v7064
      %v7066 = vrot.slane %v6948, 5
      %v7067 = vsel %vm4480, %v7064, %v7066
      %v7068 = vrot.slane %v6950, 5
      %v7069 = vsel %vm4480, %v7066, %v7068
      %v7070 = vrot.slane %v6953, 5
      %v7071 = vsel %vm4480, %v7068, %v7070
      %v7072 = vrot.slane %v6955, 5
      %v7073 = vsel %vm4480, %v7070, %v7072
      %v7074 = vrot.slane %v6958, 5
      %v7075 = vsel %vm4480, %v7072, %v7074
      %v7076 = vrot.slane %v6960, 5
      %v7077 = vsel %vm4480, %v7074, %v7076
      %v7078 = vrot.slane %v6963, 5
      %v7079 = vsel %vm4480, %v7076, %v7078
      %v7080 = vrot.slane %v6965, 5
      %v7081 = vsel %vm4480, %v7078, %v7080
      %v7082 = vrot.slane %v6968, 5
      %v7083 = vsel %vm4480, %v7080, %v7082
      %v7084 = vrot.slane %v6970, 5
      %v7085 = vsel %vm4480, %v7082, %v7084
      %v7086 = vrot.slane %v6973, 5
      %v7087 = vsel %vm4480, %v7084, %v7086
      %v7088 = vrot.slane %v6975, 5
      %v7089 = vsel %vm4480, %v7086, %v7088
      %v7090 = vrot.slane %v6978, 5
      %v7091 = vsel %vm4480, %v7088, %v7090
      %v7092 = vrot.slane %v6980, 5
      %v7093 = vsel %vm4480, %v7090, %v7092
      %v7094 = vrot.slane %v6983, 5
      %v7095 = vsel %vm4480, %v7092, %v7094
      %v7096 = vrot.slane %v6985, 5
      %v7097 = vsel %vm4480, %v7094, %v7096
      %v7098 = vrot.slane %v6988, 5
      %v7099 = vsel %vm4480, %v7096, %v7098
      %v7100 = vrot.slane %v6990, 5
      %v7101 = vsel %vm4480, %v7098, %v7100
      %v7102 = vrot.slane %v6993, 5
      %v7103 = vsel %vm4480, %v7100, %v7102
      %v7104 = vrot.slane %v6995, 5
      %v7105 = vsel %vm4480, %v7102, %v7104
      %v7106 = vrot.slane %v6998, 5
      %v7107 = vsel %vm4480, %v7104, %v7106
      %v7108 = vrot.slane %v7000, 5
      %v7109 = vsel %vm4480, %v7106, %v7108
      %v7110 = vrot.slane %v7003, 5
      %v7111 = vsel %vm4480, %v7108, %v7110
      %v7112 = vrot.slane %v7005, 5
      %v7113 = vsel %vm4480, %v7110, %v7112
      %v7151 = vadd.f32 %v6506, %v7043
      %v7152 = vadd.f32 %v6507, %v7045
      %v7153 = vadd.f32 %v6508, %v7047
      %v7154 = vadd.f32 %v6509, %v7049
      %v7155 = vadd.f32 %v6510, %v7051
      %v7156 = vadd.f32 %v6511, %v7053
      %v7157 = vadd.f32 %v6512, %v7055
      %v7158 = vadd.f32 %v6513, %v7057
      %v7159 = vadd.f32 %v6514, %v7059
      %v7160 = vadd.f32 %v6515, %v7061
      %v7161 = vadd.f32 %v6516, %v7063
      %v7162 = vadd.f32 %v6517, %v7065
      %v7163 = vadd.f32 %v6518, %v7067
      %v7164 = vadd.f32 %v6519, %v7069
      %v7165 = vadd.f32 %v6520, %v7071
      %v7166 = vadd.f32 %v6521, %v7073
      %v7167 = vadd.f32 %v6522, %v7075
      %v7168 = vadd.f32 %v6523, %v7077
      %v7169 = vadd.f32 %v6524, %v7079
      %v7170 = vadd.f32 %v6525, %v7081
      %v7171 = vadd.f32 %v6526, %v7083
      %v7172 = vadd.f32 %v6527, %v7085
      %v7173 = vadd.f32 %v6528, %v7087
      %v7174 = vadd.f32 %v6529, %v7089
      %v7175 = vadd.f32 %v6530, %v7091
      %v7176 = vadd.f32 %v6531, %v7093
      %v7177 = vadd.f32 %v6532, %v7095
      %v7178 = vadd.f32 %v6533, %v7097
      %v7179 = vadd.f32 %v6534, %v7099
      %v7180 = vadd.f32 %v6535, %v7101
      %v7181 = vadd.f32 %v6536, %v7103
      %v7182 = vadd.f32 %v6537, %v7105
      %v7183 = vadd.f32 %v6538, %v7107
      %v7184 = vadd.f32 %v6539, %v7109
      %v7185 = vadd.f32 %v6540, %v7111
      %v7186 = vadd.f32 %v6541, %v7113
      %v7187 = vadd.f32 %v6542, %v7112
      %v7188 = vld [vmem:[#allocation2 + $0x18] sm:$0xf]
      %v7189 = vld [vmem:[#allocation2 + $0x1c] sm:$0xf]
      %v7190 = vld [vmem:[#allocation2 + $0x20] sm:$0xf]
      %v7191 = vld [vmem:[#allocation2 + $0x24] sm:$0xf]
      %v7192 = vld [vmem:[#allocation2 + $0x28] sm:$0xf]
      %v7193 = vld [vmem:[#allocation2 + $0x2c] sm:$0xf]
      %v7194 = vld [vmem:[#allocation2 + $0x30] sm:$0xf]
      %v7195 = vld [vmem:[#allocation2 + $0x34] sm:$0xf]
      %v7196 = vld [vmem:[#allocation2 + $0x38] sm:$0xf]
      %v7197 = vld [vmem:[#allocation2 + $0x3c] sm:$0xf]
      %v7198 = vld [vmem:[#allocation2 + $0x40] sm:$0xf]
      %v7199 = vld [vmem:[#allocation2 + $0x44] sm:$0xf]
      %v7200 = vld [vmem:[#allocation2 + $0x48] sm:$0xf]
      %v7201 = vld [vmem:[#allocation2 + $0x4c] sm:$0xf]
      %v7202 = vld [vmem:[#allocation2 + $0x50] sm:$0xf]
      %v7203 = vld [vmem:[#allocation2 + $0x54] sm:$0xf]
      %v7204 = vld [vmem:[#allocation2 + $0x58] sm:$0xf]
      %v7205 = vld [vmem:[#allocation2 + $0x5c] sm:$0xf]
      %v7206 = vld [vmem:[#allocation2 + $0x60] sm:$0xf]
      %v7207 = vld [vmem:[#allocation2 + $0x64] sm:$0xf]
      %v7208 = vld [vmem:[#allocation2 + $0x68] sm:$0xf]
      %v7209 = vld [vmem:[#allocation2 + $0x6c] sm:$0xf]
      %v7210 = vld [vmem:[#allocation2 + $0x70] sm:$0xf]
      %v7211 = vld [vmem:[#allocation2 + $0x74] sm:$0xf]
      %v7212 = vld [vmem:[#allocation2 + $0x78] sm:$0xf]
      %v7213 = vld [vmem:[#allocation2 + $0x7c] sm:$0xf]
      %v7214 = vld [vmem:[#allocation2 + $0x80] sm:$0xf]
      %v7215 = vld [vmem:[#allocation2 + $0x84] sm:$0xf]
      %v7216 = vld [vmem:[#allocation2 + $0x88] sm:$0xf]
      %v7217 = vld [vmem:[#allocation2 + $0x8c] sm:$0xf]
      %v7218 = vld [vmem:[#allocation2 + $0x90] sm:$0xf]
      %v7219 = vld [vmem:[#allocation2 + $0x94] sm:$0xf]
      %v7220 = vld [vmem:[#allocation2 + $0x98] sm:$0xf]
      %v7221 = vld [vmem:[#allocation2 + $0x9c] sm:$0xf]
      %v7222 = vld [vmem:[#allocation2 + $0xa0] sm:$0xf]
      %v7223 = vld [vmem:[#allocation2 + $0xa4] sm:$0xf]
      %v7224 = vld [vmem:[#allocation2 + $0xa8] sm:$0x1]
      %s7225 = scalar_lea.vmem %s3, 192
      %v7226 = vld [vmem:[%s7225] sm:$0xf]
      %v7227 = vld [vmem:[%s7225 + $0x4] sm:$0xf]
      %v7228 = vld [vmem:[%s7225 + $0x8] sm:$0xf]
      %v7229 = vld [vmem:[%s7225 + $0xc] sm:$0xf]
      %v7230 = vld [vmem:[%s7225 + $0x10] sm:$0xf]
      %v7231 = vld [vmem:[%s7225 + $0x14] sm:$0xf]
      %v7232 = vld [vmem:[%s7225 + $0x18] sm:$0xf]
      %v7233 = vld [vmem:[%s7225 + $0x1c] sm:$0xf]
      %v7271 = vunpack.c.l.b16 %v7188
      %v7272 = vunpack.c.l.b16 %v7189
      %v7273 = vunpack.c.l.b16 %v7190
      %v7274 = vunpack.c.l.b16 %v7191
      %v7275 = vunpack.c.l.b16 %v7192
      %v7276 = vunpack.c.l.b16 %v7193
      %v7277 = vunpack.c.l.b16 %v7194
      %v7278 = vunpack.c.l.b16 %v7195
      %v7279 = vunpack.c.l.b16 %v7196
      %v7280 = vunpack.c.l.b16 %v7197
      %v7281 = vunpack.c.l.b16 %v7198
      %v7282 = vunpack.c.l.b16 %v7199
      %v7283 = vunpack.c.l.b16 %v7200
      %v7284 = vunpack.c.l.b16 %v7201
      %v7285 = vunpack.c.l.b16 %v7202
      %v7286 = vunpack.c.l.b16 %v7203
      %v7287 = vunpack.c.l.b16 %v7204
      %v7288 = vunpack.c.l.b16 %v7205
      %v7289 = vunpack.c.l.b16 %v7206
      %v7290 = vunpack.c.l.b16 %v7207
      %v7291 = vunpack.c.l.b16 %v7208
      %v7292 = vunpack.c.l.b16 %v7209
      %v7293 = vunpack.c.l.b16 %v7210
      %v7294 = vunpack.c.l.b16 %v7211
      %v7295 = vunpack.c.l.b16 %v7212
      %v7296 = vunpack.c.l.b16 %v7213
      %v7297 = vunpack.c.l.b16 %v7214
      %v7298 = vunpack.c.l.b16 %v7215
      %v7299 = vunpack.c.l.b16 %v7216
      %v7300 = vunpack.c.l.b16 %v7217
      %v7301 = vunpack.c.l.b16 %v7218
      %v7302 = vunpack.c.l.b16 %v7219
      %v7303 = vunpack.c.l.b16 %v7220
      %v7304 = vunpack.c.l.b16 %v7221
      %v7305 = vunpack.c.l.b16 %v7222
      %v7306 = vunpack.c.l.b16 %v7223
      %v7307 = vunpack.c.l.b16 %v7224
      %v7308 = vpack.c.b16 %v7272, %v7271
      %v7309 = vpack.c.b16 %v7274, %v7273
      %v7310 = vpack.c.b16 %v7276, %v7275
      %v7311 = vpack.c.b16 %v7278, %v7277
      %v7312 = vpack.c.b16 %v7280, %v7279
      %v7313 = vpack.c.b16 %v7282, %v7281
      %v7314 = vpack.c.b16 %v7284, %v7283
      %v7315 = vpack.c.b16 %v7286, %v7285
      %v7316 = vpack.c.b16 %v7288, %v7287
      %v7317 = vpack.c.b16 %v7290, %v7289
      %v7318 = vpack.c.b16 %v7292, %v7291
      %v7319 = vpack.c.b16 %v7294, %v7293
      %v7320 = vpack.c.b16 %v7296, %v7295
      %v7321 = vpack.c.b16 %v7298, %v7297
      %v7322 = vpack.c.b16 %v7300, %v7299
      %v7323 = vpack.c.b16 %v7302, %v7301
      %v7324 = vpack.c.b16 %v7304, %v7303
      %v7325 = vpack.c.b16 %v7306, %v7305
      %v7326 = vpack.c.b16 %v7307, %v7307
      %v7328 = vshrl.u32 %v7308, 16
      %v7330 = vshll.u32 %v7308, 16
      %v7332 = vrot.slane %v7330, 1
      %v7333 = vor.u32 %v7328, %v7332
      %v7335 = vshll.u32 %v7309, 16
      %v7337 = vrot.slane %v7335, 1
      %v7338 = vsel %vm758, %v7333, %v7337
      %v7339 = vshrl.u32 %v7309, 16
      %v7341 = vor.u32 %v7339, %v7337
      %v7343 = vshll.u32 %v7310, 16
      %v7345 = vrot.slane %v7343, 1
      %v7346 = vsel %vm758, %v7341, %v7345
      %v7347 = vshrl.u32 %v7310, 16
      %v7349 = vor.u32 %v7347, %v7345
      %v7351 = vshll.u32 %v7311, 16
      %v7353 = vrot.slane %v7351, 1
      %v7354 = vsel %vm758, %v7349, %v7353
      %v7355 = vshrl.u32 %v7311, 16
      %v7357 = vor.u32 %v7355, %v7353
      %v7359 = vshll.u32 %v7312, 16
      %v7361 = vrot.slane %v7359, 1
      %v7362 = vsel %vm758, %v7357, %v7361
      %v7363 = vshrl.u32 %v7312, 16
      %v7365 = vor.u32 %v7363, %v7361
      %v7367 = vshll.u32 %v7313, 16
      %v7369 = vrot.slane %v7367, 1
      %v7370 = vsel %vm758, %v7365, %v7369
      %v7371 = vshrl.u32 %v7313, 16
      %v7373 = vor.u32 %v7371, %v7369
      %v7375 = vshll.u32 %v7314, 16
      %v7377 = vrot.slane %v7375, 1
      %v7378 = vsel %vm758, %v7373, %v7377
      %v7379 = vshrl.u32 %v7314, 16
      %v7381 = vor.u32 %v7379, %v7377
      %v7383 = vshll.u32 %v7315, 16
      %v7385 = vrot.slane %v7383, 1
      %v7386 = vsel %vm758, %v7381, %v7385
      %v7387 = vshrl.u32 %v7315, 16
      %v7389 = vor.u32 %v7387, %v7385
      %v7391 = vshll.u32 %v7316, 16
      %v7393 = vrot.slane %v7391, 1
      %v7394 = vsel %vm758, %v7389, %v7393
      %v7395 = vshrl.u32 %v7316, 16
      %v7397 = vor.u32 %v7395, %v7393
      %v7399 = vshll.u32 %v7317, 16
      %v7401 = vrot.slane %v7399, 1
      %v7402 = vsel %vm758, %v7397, %v7401
      %v7403 = vshrl.u32 %v7317, 16
      %v7405 = vor.u32 %v7403, %v7401
      %v7407 = vshll.u32 %v7318, 16
      %v7409 = vrot.slane %v7407, 1
      %v7410 = vsel %vm758, %v7405, %v7409
      %v7411 = vshrl.u32 %v7318, 16
      %v7413 = vor.u32 %v7411, %v7409
      %v7415 = vshll.u32 %v7319, 16
      %v7417 = vrot.slane %v7415, 1
      %v7418 = vsel %vm758, %v7413, %v7417
      %v7419 = vshrl.u32 %v7319, 16
      %v7421 = vor.u32 %v7419, %v7417
      %v7423 = vshll.u32 %v7320, 16
      %v7425 = vrot.slane %v7423, 1
      %v7426 = vsel %vm758, %v7421, %v7425
      %v7427 = vshrl.u32 %v7320, 16
      %v7429 = vor.u32 %v7427, %v7425
      %v7431 = vshll.u32 %v7321, 16
      %v7433 = vrot.slane %v7431, 1
      %v7434 = vsel %vm758, %v7429, %v7433
      %v7435 = vshrl.u32 %v7321, 16
      %v7437 = vor.u32 %v7435, %v7433
      %v7439 = vshll.u32 %v7322, 16
      %v7441 = vrot.slane %v7439, 1
      %v7442 = vsel %vm758, %v7437, %v7441
      %v7443 = vshrl.u32 %v7322, 16
      %v7445 = vor.u32 %v7443, %v7441
      %v7447 = vshll.u32 %v7323, 16
      %v7449 = vrot.slane %v7447, 1
      %v7450 = vsel %vm758, %v7445, %v7449
      %v7451 = vshrl.u32 %v7323, 16
      %v7453 = vor.u32 %v7451, %v7449
      %v7455 = vshll.u32 %v7324, 16
      %v7457 = vrot.slane %v7455, 1
      %v7458 = vsel %vm758, %v7453, %v7457
      %v7459 = vshrl.u32 %v7324, 16
      %v7461 = vor.u32 %v7459, %v7457
      %v7463 = vshll.u32 %v7325, 16
      %v7465 = vrot.slane %v7463, 1
      %v7466 = vsel %vm758, %v7461, %v7465
      %v7467 = vshrl.u32 %v7325, 16
      %v7469 = vor.u32 %v7467, %v7465
      %v7471 = vshll.u32 %v7326, 16
      %v7473 = vrot.slane %v7471, 1
      %v7474 = vsel %vm758, %v7469, %v7473
      %v7483 = vunpack.c.l.b16 %v7226
      %v7484 = vunpack.c.l.b16 %v7227
      %v7485 = vunpack.c.l.b16 %v7228
      %v7486 = vunpack.c.l.b16 %v7229
      %v7487 = vunpack.c.l.b16 %v7230
      %v7488 = vunpack.c.l.b16 %v7231
      %v7489 = vunpack.c.l.b16 %v7232
      %v7490 = vunpack.c.l.b16 %v7233
      %v7491 = vpack.c.b16 %v7484, %v7483
      %v7492 = vpack.c.b16 %v7486, %v7485
      %v7493 = vpack.c.b16 %v7488, %v7487
      %v7494 = vpack.c.b16 %v7490, %v7489
      %v7500 = vsel %vm429, %v7338, 0
      %v7503 = vsel %vm429, %v7346, 0
      %v7506 = vsel %vm429, %v7354, 0
      %v7509 = vsel %vm429, %v7362, 0
      %v7512 = vsel %vm429, %v7370, 0
      %v7515 = vsel %vm429, %v7378, 0
      %v7518 = vsel %vm429, %v7386, 0
      %v7521 = vsel %vm429, %v7394, 0
      %v7524 = vsel %vm429, %v7402, 0
      %v7527 = vsel %vm429, %v7410, 0
      %v7530 = vsel %vm429, %v7418, 0
      %v7533 = vsel %vm429, %v7426, 0
      %v7536 = vsel %vm429, %v7434, 0
      %v7539 = vsel %vm429, %v7442, 0
      %v7542 = vsel %vm429, %v7450, 0
      %v7545 = vsel %vm429, %v7458, 0
      %v7548 = vsel %vm429, %v7466, 0
      %v7551 = vsel %vm429, %v7474, 0
      %7553 = vmatpush.bf16.msra.mxu0 0
      %7554 = vmatpush.bf16.msra.mxu0 0
      %7555 = vmatpush.bf16.msra.mxu0 0
      %7556 = vmatpush.bf16.msra.mxu0 0
      %7557 = vmatpush.bf16.msra.mxu0 %v7494
      %7558 = vmatpush.bf16.msra.mxu0 %v7493
      %7559 = vmatpush.bf16.msra.mxu0 %v7492
      %7560 = vmatpush.bf16.msra.mxu0 %v7491
      %7561 = vmatmul.bf16.gmra.mxu0 %v7500
      %v7562 = vpop.f32.mrf.mxu0
      %v7563 = vadd.f32 0.0, %v7562
      %v7564 = vpop.f32.mrf.mxu0
      %v7565 = vadd.f32 0.0, %v7564
      %7566 = vmatmul.bf16.gmra.mxu0 %v7503
      %v7567 = vpop.f32.mrf.mxu0
      %v7568 = vadd.f32 0.0, %v7567
      %v7569 = vpop.f32.mrf.mxu0
      %v7570 = vadd.f32 0.0, %v7569
      %7571 = vmatmul.bf16.gmra.mxu0 %v7506
      %v7572 = vpop.f32.mrf.mxu0
      %v7573 = vadd.f32 0.0, %v7572
      %v7574 = vpop.f32.mrf.mxu0
      %v7575 = vadd.f32 0.0, %v7574
      %7576 = vmatmul.bf16.gmra.mxu0 %v7509
      %v7577 = vpop.f32.mrf.mxu0
      %v7578 = vadd.f32 0.0, %v7577
      %v7579 = vpop.f32.mrf.mxu0
      %v7580 = vadd.f32 0.0, %v7579
      %7581 = vmatmul.bf16.gmra.mxu0 %v7512
      %v7582 = vpop.f32.mrf.mxu0
      %v7583 = vadd.f32 0.0, %v7582
      %v7584 = vpop.f32.mrf.mxu0
      %v7585 = vadd.f32 0.0, %v7584
      %7586 = vmatmul.bf16.gmra.mxu0 %v7515
      %v7587 = vpop.f32.mrf.mxu0
      %v7588 = vadd.f32 0.0, %v7587
      %v7589 = vpop.f32.mrf.mxu0
      %v7590 = vadd.f32 0.0, %v7589
      %7591 = vmatmul.bf16.gmra.mxu0 %v7518
      %v7592 = vpop.f32.mrf.mxu0
      %v7593 = vadd.f32 0.0, %v7592
      %v7594 = vpop.f32.mrf.mxu0
      %v7595 = vadd.f32 0.0, %v7594
      %7596 = vmatmul.bf16.gmra.mxu0 %v7521
      %v7597 = vpop.f32.mrf.mxu0
      %v7598 = vadd.f32 0.0, %v7597
      %v7599 = vpop.f32.mrf.mxu0
      %v7600 = vadd.f32 0.0, %v7599
      %7601 = vmatmul.bf16.gmra.mxu0 %v7524
      %v7602 = vpop.f32.mrf.mxu0
      %v7603 = vadd.f32 0.0, %v7602
      %v7604 = vpop.f32.mrf.mxu0
      %v7605 = vadd.f32 0.0, %v7604
      %7606 = vmatmul.bf16.gmra.mxu0 %v7527
      %v7607 = vpop.f32.mrf.mxu0
      %v7608 = vadd.f32 0.0, %v7607
      %v7609 = vpop.f32.mrf.mxu0
      %v7610 = vadd.f32 0.0, %v7609
      %7611 = vmatmul.bf16.gmra.mxu0 %v7530
      %v7612 = vpop.f32.mrf.mxu0
      %v7613 = vadd.f32 0.0, %v7612
      %v7614 = vpop.f32.mrf.mxu0
      %v7615 = vadd.f32 0.0, %v7614
      %7616 = vmatmul.bf16.gmra.mxu0 %v7533
      %v7617 = vpop.f32.mrf.mxu0
      %v7618 = vadd.f32 0.0, %v7617
      %v7619 = vpop.f32.mrf.mxu0
      %v7620 = vadd.f32 0.0, %v7619
      %7621 = vmatmul.bf16.gmra.mxu0 %v7536
      %v7622 = vpop.f32.mrf.mxu0
      %v7623 = vadd.f32 0.0, %v7622
      %v7624 = vpop.f32.mrf.mxu0
      %v7625 = vadd.f32 0.0, %v7624
      %7626 = vmatmul.bf16.gmra.mxu0 %v7539
      %v7627 = vpop.f32.mrf.mxu0
      %v7628 = vadd.f32 0.0, %v7627
      %v7629 = vpop.f32.mrf.mxu0
      %v7630 = vadd.f32 0.0, %v7629
      %7631 = vmatmul.bf16.gmra.mxu0 %v7542
      %v7632 = vpop.f32.mrf.mxu0
      %v7633 = vadd.f32 0.0, %v7632
      %v7634 = vpop.f32.mrf.mxu0
      %v7635 = vadd.f32 0.0, %v7634
      %7636 = vmatmul.bf16.gmra.mxu0 %v7545
      %v7637 = vpop.f32.mrf.mxu0
      %v7638 = vadd.f32 0.0, %v7637
      %v7639 = vpop.f32.mrf.mxu0
      %v7640 = vadd.f32 0.0, %v7639
      %7641 = vmatmul.bf16.gmra.mxu0 %v7548
      %v7642 = vpop.f32.mrf.mxu0
      %v7643 = vadd.f32 0.0, %v7642
      %v7644 = vpop.f32.mrf.mxu0
      %v7645 = vadd.f32 0.0, %v7644
      %7646 = vmatmul.bf16.gmra.mxu0 %v7551
      %v7647 = vpop.f32.mrf.mxu0
      %v7648 = vadd.f32 0.0, %v7647
      %v7649 = vpop.f32.mrf.mxu0
      %v7650 = vadd.f32 0.0, %v7649
      %7651 = vdwg.mxu0
      %v7688 = vrot.slane %v7563, 5
      %v7689 = vrot.slane %v7565, 5
      %v7690 = vsel %vm4480, %v7688, %v7689
      %v7691 = vrot.slane %v7568, 5
      %v7692 = vsel %vm4480, %v7689, %v7691
      %v7693 = vrot.slane %v7570, 5
      %v7694 = vsel %vm4480, %v7691, %v7693
      %v7695 = vrot.slane %v7573, 5
      %v7696 = vsel %vm4480, %v7693, %v7695
      %v7697 = vrot.slane %v7575, 5
      %v7698 = vsel %vm4480, %v7695, %v7697
      %v7699 = vrot.slane %v7578, 5
      %v7700 = vsel %vm4480, %v7697, %v7699
      %v7701 = vrot.slane %v7580, 5
      %v7702 = vsel %vm4480, %v7699, %v7701
      %v7703 = vrot.slane %v7583, 5
      %v7704 = vsel %vm4480, %v7701, %v7703
      %v7705 = vrot.slane %v7585, 5
      %v7706 = vsel %vm4480, %v7703, %v7705
      %v7707 = vrot.slane %v7588, 5
      %v7708 = vsel %vm4480, %v7705, %v7707
      %v7709 = vrot.slane %v7590, 5
      %v7710 = vsel %vm4480, %v7707, %v7709
      %v7711 = vrot.slane %v7593, 5
      %v7712 = vsel %vm4480, %v7709, %v7711
      %v7713 = vrot.slane %v7595, 5
      %v7714 = vsel %vm4480, %v7711, %v7713
      %v7715 = vrot.slane %v7598, 5
      %v7716 = vsel %vm4480, %v7713, %v7715
      %v7717 = vrot.slane %v7600, 5
      %v7718 = vsel %vm4480, %v7715, %v7717
      %v7719 = vrot.slane %v7603, 5
      %v7720 = vsel %vm4480, %v7717, %v7719
      %v7721 = vrot.slane %v7605, 5
      %v7722 = vsel %vm4480, %v7719, %v7721
      %v7723 = vrot.slane %v7608, 5
      %v7724 = vsel %vm4480, %v7721, %v7723
      %v7725 = vrot.slane %v7610, 5
      %v7726 = vsel %vm4480, %v7723, %v7725
      %v7727 = vrot.slane %v7613, 5
      %v7728 = vsel %vm4480, %v7725, %v7727
      %v7729 = vrot.slane %v7615, 5
      %v7730 = vsel %vm4480, %v7727, %v7729
      %v7731 = vrot.slane %v7618, 5
      %v7732 = vsel %vm4480, %v7729, %v7731
      %v7733 = vrot.slane %v7620, 5
      %v7734 = vsel %vm4480, %v7731, %v7733
      %v7735 = vrot.slane %v7623, 5
      %v7736 = vsel %vm4480, %v7733, %v7735
      %v7737 = vrot.slane %v7625, 5
      %v7738 = vsel %vm4480, %v7735, %v7737
      %v7739 = vrot.slane %v7628, 5
      %v7740 = vsel %vm4480, %v7737, %v7739
      %v7741 = vrot.slane %v7630, 5
      %v7742 = vsel %vm4480, %v7739, %v7741
      %v7743 = vrot.slane %v7633, 5
      %v7744 = vsel %vm4480, %v7741, %v7743
      %v7745 = vrot.slane %v7635, 5
      %v7746 = vsel %vm4480, %v7743, %v7745
      %v7747 = vrot.slane %v7638, 5
      %v7748 = vsel %vm4480, %v7745, %v7747
      %v7749 = vrot.slane %v7640, 5
      %v7750 = vsel %vm4480, %v7747, %v7749
      %v7751 = vrot.slane %v7643, 5
      %v7752 = vsel %vm4480, %v7749, %v7751
      %v7753 = vrot.slane %v7645, 5
      %v7754 = vsel %vm4480, %v7751, %v7753
      %v7755 = vrot.slane %v7648, 5
      %v7756 = vsel %vm4480, %v7753, %v7755
      %v7757 = vrot.slane %v7650, 5
      %v7758 = vsel %vm4480, %v7755, %v7757
      %v7796 = vadd.f32 %v7151, %v7688
      %v7797 = vadd.f32 %v7152, %v7690
      %v7798 = vadd.f32 %v7153, %v7692
      %v7799 = vadd.f32 %v7154, %v7694
      %v7800 = vadd.f32 %v7155, %v7696
      %v7801 = vadd.f32 %v7156, %v7698
      %v7802 = vadd.f32 %v7157, %v7700
      %v7803 = vadd.f32 %v7158, %v7702
      %v7804 = vadd.f32 %v7159, %v7704
      %v7805 = vadd.f32 %v7160, %v7706
      %v7806 = vadd.f32 %v7161, %v7708
      %v7807 = vadd.f32 %v7162, %v7710
      %v7808 = vadd.f32 %v7163, %v7712
      %v7809 = vadd.f32 %v7164, %v7714
      %v7810 = vadd.f32 %v7165, %v7716
      %v7811 = vadd.f32 %v7166, %v7718
      %v7812 = vadd.f32 %v7167, %v7720
      %v7813 = vadd.f32 %v7168, %v7722
      %v7814 = vadd.f32 %v7169, %v7724
      %v7815 = vadd.f32 %v7170, %v7726
      %v7816 = vadd.f32 %v7171, %v7728
      %v7817 = vadd.f32 %v7172, %v7730
      %v7818 = vadd.f32 %v7173, %v7732
      %v7819 = vadd.f32 %v7174, %v7734
      %v7820 = vadd.f32 %v7175, %v7736
      %v7821 = vadd.f32 %v7176, %v7738
      %v7822 = vadd.f32 %v7177, %v7740
      %v7823 = vadd.f32 %v7178, %v7742
      %v7824 = vadd.f32 %v7179, %v7744
      %v7825 = vadd.f32 %v7180, %v7746
      %v7826 = vadd.f32 %v7181, %v7748
      %v7827 = vadd.f32 %v7182, %v7750
      %v7828 = vadd.f32 %v7183, %v7752
      %v7829 = vadd.f32 %v7184, %v7754
      %v7830 = vadd.f32 %v7185, %v7756
      %v7831 = vadd.f32 %v7186, %v7758
      %v7832 = vadd.f32 %v7187, %v7757
      %v7833 = vld [vmem:[#allocation2 + $0x18] sm:$0xe]
      %s7834 = scalar_lea.vmem %s3, 224
      %v7835 = vld [vmem:[%s7834] sm:$0xf]
      %v7836 = vld [vmem:[%s7834 + $0x4] sm:$0xf]
      %v7837 = vld [vmem:[%s7834 + $0x8] sm:$0xf]
      %v7838 = vld [vmem:[%s7834 + $0xc] sm:$0xf]
      %v7839 = vld [vmem:[%s7834 + $0x10] sm:$0xf]
      %v7840 = vld [vmem:[%s7834 + $0x14] sm:$0xf]
      %v7841 = vld [vmem:[%s7834 + $0x18] sm:$0xf]
      %v7842 = vld [vmem:[%s7834 + $0x1c] sm:$0xf]
      %v7844 = vunpack.c.l.b16 %v7833
      %v7845 = vpack.c.b16 %v7272, %v7844
      %v7846 = vrot.slane %v7845, 1
      %v7847 = vrot.slane %v7309, 1
      %v7848 = vsel %vm1133, %v7846, %v7847
      %v7849 = vrot.slane %v7310, 1
      %v7850 = vsel %vm1133, %v7847, %v7849
      %v7851 = vrot.slane %v7311, 1
      %v7852 = vsel %vm1133, %v7849, %v7851
      %v7853 = vrot.slane %v7312, 1
      %v7854 = vsel %vm1133, %v7851, %v7853
      %v7855 = vrot.slane %v7313, 1
      %v7856 = vsel %vm1133, %v7853, %v7855
      %v7857 = vrot.slane %v7314, 1
      %v7858 = vsel %vm1133, %v7855, %v7857
      %v7859 = vrot.slane %v7315, 1
      %v7860 = vsel %vm1133, %v7857, %v7859
      %v7861 = vrot.slane %v7316, 1
      %v7862 = vsel %vm1133, %v7859, %v7861
      %v7863 = vrot.slane %v7317, 1
      %v7864 = vsel %vm1133, %v7861, %v7863
      %v7865 = vrot.slane %v7318, 1
      %v7866 = vsel %vm1133, %v7863, %v7865
      %v7867 = vrot.slane %v7319, 1
      %v7868 = vsel %vm1133, %v7865, %v7867
      %v7869 = vrot.slane %v7320, 1
      %v7870 = vsel %vm1133, %v7867, %v7869
      %v7871 = vrot.slane %v7321, 1
      %v7872 = vsel %vm1133, %v7869, %v7871
      %v7873 = vrot.slane %v7322, 1
      %v7874 = vsel %vm1133, %v7871, %v7873
      %v7875 = vrot.slane %v7323, 1
      %v7876 = vsel %vm1133, %v7873, %v7875
      %v7877 = vrot.slane %v7324, 1
      %v7878 = vsel %vm1133, %v7875, %v7877
      %v7879 = vrot.slane %v7325, 1
      %v7880 = vsel %vm1133, %v7877, %v7879
      %v7881 = vrot.slane %v7326, 1
      %v7882 = vsel %vm1133, %v7879, %v7881
      %v7891 = vunpack.c.l.b16 %v7835
      %v7892 = vunpack.c.l.b16 %v7836
      %v7893 = vunpack.c.l.b16 %v7837
      %v7894 = vunpack.c.l.b16 %v7838
      %v7895 = vunpack.c.l.b16 %v7839
      %v7896 = vunpack.c.l.b16 %v7840
      %v7897 = vunpack.c.l.b16 %v7841
      %v7898 = vunpack.c.l.b16 %v7842
      %v7899 = vpack.c.b16 %v7892, %v7891
      %v7900 = vpack.c.b16 %v7894, %v7893
      %v7901 = vpack.c.b16 %v7896, %v7895
      %v7902 = vpack.c.b16 %v7898, %v7897
      %v7908 = vsel %vm429, %v7848, 0
      %v7911 = vsel %vm429, %v7850, 0
      %v7914 = vsel %vm429, %v7852, 0
      %v7917 = vsel %vm429, %v7854, 0
      %v7920 = vsel %vm429, %v7856, 0
      %v7923 = vsel %vm429, %v7858, 0
      %v7926 = vsel %vm429, %v7860, 0
      %v7929 = vsel %vm429, %v7862, 0
      %v7932 = vsel %vm429, %v7864, 0
      %v7935 = vsel %vm429, %v7866, 0
      %v7938 = vsel %vm429, %v7868, 0
      %v7941 = vsel %vm429, %v7870, 0
      %v7944 = vsel %vm429, %v7872, 0
      %v7947 = vsel %vm429, %v7874, 0
      %v7950 = vsel %vm429, %v7876, 0
      %v7953 = vsel %vm429, %v7878, 0
      %v7956 = vsel %vm429, %v7880, 0
      %v7959 = vsel %vm429, %v7882, 0
      %7961 = vmatpush.bf16.msra.mxu0 0
      %7962 = vmatpush.bf16.msra.mxu0 0
      %7963 = vmatpush.bf16.msra.mxu0 0
      %7964 = vmatpush.bf16.msra.mxu0 0
      %7965 = vmatpush.bf16.msra.mxu0 %v7902
      %7966 = vmatpush.bf16.msra.mxu0 %v7901
      %7967 = vmatpush.bf16.msra.mxu0 %v7900
      %7968 = vmatpush.bf16.msra.mxu0 %v7899
      %7969 = vmatmul.bf16.gmra.mxu0 %v7908
      %v7970 = vpop.f32.mrf.mxu0
      %v7971 = vadd.f32 0.0, %v7970
      %v7972 = vpop.f32.mrf.mxu0
      %v7973 = vadd.f32 0.0, %v7972
      %7974 = vmatmul.bf16.gmra.mxu0 %v7911
      %v7975 = vpop.f32.mrf.mxu0
      %v7976 = vadd.f32 0.0, %v7975
      %v7977 = vpop.f32.mrf.mxu0
      %v7978 = vadd.f32 0.0, %v7977
      %7979 = vmatmul.bf16.gmra.mxu0 %v7914
      %v7980 = vpop.f32.mrf.mxu0
      %v7981 = vadd.f32 0.0, %v7980
      %v7982 = vpop.f32.mrf.mxu0
      %v7983 = vadd.f32 0.0, %v7982
      %7984 = vmatmul.bf16.gmra.mxu0 %v7917
      %v7985 = vpop.f32.mrf.mxu0
      %v7986 = vadd.f32 0.0, %v7985
      %v7987 = vpop.f32.mrf.mxu0
      %v7988 = vadd.f32 0.0, %v7987
      %7989 = vmatmul.bf16.gmra.mxu0 %v7920
      %v7990 = vpop.f32.mrf.mxu0
      %v7991 = vadd.f32 0.0, %v7990
      %v7992 = vpop.f32.mrf.mxu0
      %v7993 = vadd.f32 0.0, %v7992
      %7994 = vmatmul.bf16.gmra.mxu0 %v7923
      %v7995 = vpop.f32.mrf.mxu0
      %v7996 = vadd.f32 0.0, %v7995
      %v7997 = vpop.f32.mrf.mxu0
      %v7998 = vadd.f32 0.0, %v7997
      %7999 = vmatmul.bf16.gmra.mxu0 %v7926
      %v8000 = vpop.f32.mrf.mxu0
      %v8001 = vadd.f32 0.0, %v8000
      %v8002 = vpop.f32.mrf.mxu0
      %v8003 = vadd.f32 0.0, %v8002
      %8004 = vmatmul.bf16.gmra.mxu0 %v7929
      %v8005 = vpop.f32.mrf.mxu0
      %v8006 = vadd.f32 0.0, %v8005
      %v8007 = vpop.f32.mrf.mxu0
      %v8008 = vadd.f32 0.0, %v8007
      %8009 = vmatmul.bf16.gmra.mxu0 %v7932
      %v8010 = vpop.f32.mrf.mxu0
      %v8011 = vadd.f32 0.0, %v8010
      %v8012 = vpop.f32.mrf.mxu0
      %v8013 = vadd.f32 0.0, %v8012
      %8014 = vmatmul.bf16.gmra.mxu0 %v7935
      %v8015 = vpop.f32.mrf.mxu0
      %v8016 = vadd.f32 0.0, %v8015
      %v8017 = vpop.f32.mrf.mxu0
      %v8018 = vadd.f32 0.0, %v8017
      %8019 = vmatmul.bf16.gmra.mxu0 %v7938
      %v8020 = vpop.f32.mrf.mxu0
      %v8021 = vadd.f32 0.0, %v8020
      %v8022 = vpop.f32.mrf.mxu0
      %v8023 = vadd.f32 0.0, %v8022
      %8024 = vmatmul.bf16.gmra.mxu0 %v7941
      %v8025 = vpop.f32.mrf.mxu0
      %v8026 = vadd.f32 0.0, %v8025
      %v8027 = vpop.f32.mrf.mxu0
      %v8028 = vadd.f32 0.0, %v8027
      %8029 = vmatmul.bf16.gmra.mxu0 %v7944
      %v8030 = vpop.f32.mrf.mxu0
      %v8031 = vadd.f32 0.0, %v8030
      %v8032 = vpop.f32.mrf.mxu0
      %v8033 = vadd.f32 0.0, %v8032
      %8034 = vmatmul.bf16.gmra.mxu0 %v7947
      %v8035 = vpop.f32.mrf.mxu0
      %v8036 = vadd.f32 0.0, %v8035
      %v8037 = vpop.f32.mrf.mxu0
      %v8038 = vadd.f32 0.0, %v8037
      %8039 = vmatmul.bf16.gmra.mxu0 %v7950
      %v8040 = vpop.f32.mrf.mxu0
      %v8041 = vadd.f32 0.0, %v8040
      %v8042 = vpop.f32.mrf.mxu0
      %v8043 = vadd.f32 0.0, %v8042
      %8044 = vmatmul.bf16.gmra.mxu0 %v7953
      %v8045 = vpop.f32.mrf.mxu0
      %v8046 = vadd.f32 0.0, %v8045
      %v8047 = vpop.f32.mrf.mxu0
      %v8048 = vadd.f32 0.0, %v8047
      %8049 = vmatmul.bf16.gmra.mxu0 %v7956
      %v8050 = vpop.f32.mrf.mxu0
      %v8051 = vadd.f32 0.0, %v8050
      %v8052 = vpop.f32.mrf.mxu0
      %v8053 = vadd.f32 0.0, %v8052
      %8054 = vmatmul.bf16.gmra.mxu0 %v7959
      %v8055 = vpop.f32.mrf.mxu0
      %v8056 = vadd.f32 0.0, %v8055
      %v8057 = vpop.f32.mrf.mxu0
      %v8058 = vadd.f32 0.0, %v8057
      %8059 = vdwg.mxu0
      %v8096 = vrot.slane %v7971, 5
      %v8097 = vrot.slane %v7973, 5
      %v8098 = vsel %vm4480, %v8096, %v8097
      %v8099 = vrot.slane %v7976, 5
      %v8100 = vsel %vm4480, %v8097, %v8099
      %v8101 = vrot.slane %v7978, 5
      %v8102 = vsel %vm4480, %v8099, %v8101
      %v8103 = vrot.slane %v7981, 5
      %v8104 = vsel %vm4480, %v8101, %v8103
      %v8105 = vrot.slane %v7983, 5
      %v8106 = vsel %vm4480, %v8103, %v8105
      %v8107 = vrot.slane %v7986, 5
      %v8108 = vsel %vm4480, %v8105, %v8107
      %v8109 = vrot.slane %v7988, 5
      %v8110 = vsel %vm4480, %v8107, %v8109
      %v8111 = vrot.slane %v7991, 5
      %v8112 = vsel %vm4480, %v8109, %v8111
      %v8113 = vrot.slane %v7993, 5
      %v8114 = vsel %vm4480, %v8111, %v8113
      %v8115 = vrot.slane %v7996, 5
      %v8116 = vsel %vm4480, %v8113, %v8115
      %v8117 = vrot.slane %v7998, 5
      %v8118 = vsel %vm4480, %v8115, %v8117
      %v8119 = vrot.slane %v8001, 5
      %v8120 = vsel %vm4480, %v8117, %v8119
      %v8121 = vrot.slane %v8003, 5
      %v8122 = vsel %vm4480, %v8119, %v8121
      %v8123 = vrot.slane %v8006, 5
      %v8124 = vsel %vm4480, %v8121, %v8123
      %v8125 = vrot.slane %v8008, 5
      %v8126 = vsel %vm4480, %v8123, %v8125
      %v8127 = vrot.slane %v8011, 5
      %v8128 = vsel %vm4480, %v8125, %v8127
      %v8129 = vrot.slane %v8013, 5
      %v8130 = vsel %vm4480, %v8127, %v8129
      %v8131 = vrot.slane %v8016, 5
      %v8132 = vsel %vm4480, %v8129, %v8131
      %v8133 = vrot.slane %v8018, 5
      %v8134 = vsel %vm4480, %v8131, %v8133
      %v8135 = vrot.slane %v8021, 5
      %v8136 = vsel %vm4480, %v8133, %v8135
      %v8137 = vrot.slane %v8023, 5
      %v8138 = vsel %vm4480, %v8135, %v8137
      %v8139 = vrot.slane %v8026, 5
      %v8140 = vsel %vm4480, %v8137, %v8139
      %v8141 = vrot.slane %v8028, 5
      %v8142 = vsel %vm4480, %v8139, %v8141
      %v8143 = vrot.slane %v8031, 5
      %v8144 = vsel %vm4480, %v8141, %v8143
      %v8145 = vrot.slane %v8033, 5
      %v8146 = vsel %vm4480, %v8143, %v8145
      %v8147 = vrot.slane %v8036, 5
      %v8148 = vsel %vm4480, %v8145, %v8147
      %v8149 = vrot.slane %v8038, 5
      %v8150 = vsel %vm4480, %v8147, %v8149
      %v8151 = vrot.slane %v8041, 5
      %v8152 = vsel %vm4480, %v8149, %v8151
      %v8153 = vrot.slane %v8043, 5
      %v8154 = vsel %vm4480, %v8151, %v8153
      %v8155 = vrot.slane %v8046, 5
      %v8156 = vsel %vm4480, %v8153, %v8155
      %v8157 = vrot.slane %v8048, 5
      %v8158 = vsel %vm4480, %v8155, %v8157
      %v8159 = vrot.slane %v8051, 5
      %v8160 = vsel %vm4480, %v8157, %v8159
      %v8161 = vrot.slane %v8053, 5
      %v8162 = vsel %vm4480, %v8159, %v8161
      %v8163 = vrot.slane %v8056, 5
      %v8164 = vsel %vm4480, %v8161, %v8163
      %v8165 = vrot.slane %v8058, 5
      %v8166 = vsel %vm4480, %v8163, %v8165
      %v8204 = vadd.f32 %v7796, %v8096
      %v8205 = vadd.f32 %v7797, %v8098
      %v8206 = vadd.f32 %v7798, %v8100
      %v8207 = vadd.f32 %v7799, %v8102
      %v8208 = vadd.f32 %v7800, %v8104
      %v8209 = vadd.f32 %v7801, %v8106
      %v8210 = vadd.f32 %v7802, %v8108
      %v8211 = vadd.f32 %v7803, %v8110
      %v8212 = vadd.f32 %v7804, %v8112
      %v8213 = vadd.f32 %v7805, %v8114
      %v8214 = vadd.f32 %v7806, %v8116
      %v8215 = vadd.f32 %v7807, %v8118
      %v8216 = vadd.f32 %v7808, %v8120
      %v8217 = vadd.f32 %v7809, %v8122
      %v8218 = vadd.f32 %v7810, %v8124
      %v8219 = vadd.f32 %v7811, %v8126
      %v8220 = vadd.f32 %v7812, %v8128
      %v8221 = vadd.f32 %v7813, %v8130
      %v8222 = vadd.f32 %v7814, %v8132
      %v8223 = vadd.f32 %v7815, %v8134
      %v8224 = vadd.f32 %v7816, %v8136
      %v8225 = vadd.f32 %v7817, %v8138
      %v8226 = vadd.f32 %v7818, %v8140
      %v8227 = vadd.f32 %v7819, %v8142
      %v8228 = vadd.f32 %v7820, %v8144
      %v8229 = vadd.f32 %v7821, %v8146
      %v8230 = vadd.f32 %v7822, %v8148
      %v8231 = vadd.f32 %v7823, %v8150
      %v8232 = vadd.f32 %v7824, %v8152
      %v8233 = vadd.f32 %v7825, %v8154
      %v8234 = vadd.f32 %v7826, %v8156
      %v8235 = vadd.f32 %v7827, %v8158
      %v8236 = vadd.f32 %v7828, %v8160
      %v8237 = vadd.f32 %v7829, %v8162
      %v8238 = vadd.f32 %v7830, %v8164
      %v8239 = vadd.f32 %v7831, %v8166
      %v8240 = vadd.f32 %v7832, %v8165
      %v8241 = vld [vmem:[#allocation2 + $0xa8] sm:$0x3]
      %s8242 = scalar_lea.vmem %s3, 256
      %v8243 = vld [vmem:[%s8242] sm:$0xf]
      %v8244 = vld [vmem:[%s8242 + $0x4] sm:$0xf]
      %v8245 = vld [vmem:[%s8242 + $0x8] sm:$0xf]
      %v8246 = vld [vmem:[%s8242 + $0xc] sm:$0xf]
      %v8247 = vld [vmem:[%s8242 + $0x10] sm:$0xf]
      %v8248 = vld [vmem:[%s8242 + $0x14] sm:$0xf]
      %v8249 = vld [vmem:[%s8242 + $0x18] sm:$0xf]
      %v8250 = vld [vmem:[%s8242 + $0x1c] sm:$0xf]
      %v8252 = vunpack.c.l.b16 %v8241
      %v8253 = vpack.c.b16 %v8252, %v8252
      %v8255 = vshrl.u32 %v7845, 16
      %v8257 = vrot.slane %v8255, 1
      %v8258 = vshll.u32 %v7845, 16
      %v8260 = vrot.slane %v8258, 2
      %v8261 = vor.u32 %v8257, %v8260
      %v8262 = vrot.slane %v7339, 1
      %v8263 = vrot.slane %v7335, 2
      %v8264 = vor.u32 %v8262, %v8263
      %v8265 = vsel %vm1786, %v8261, %v8264
      %v8266 = vrot.slane %v7347, 1
      %v8267 = vrot.slane %v7343, 2
      %v8268 = vor.u32 %v8266, %v8267
      %v8269 = vsel %vm1786, %v8264, %v8268
      %v8270 = vrot.slane %v7355, 1
      %v8271 = vrot.slane %v7351, 2
      %v8272 = vor.u32 %v8270, %v8271
      %v8273 = vsel %vm1786, %v8268, %v8272
      %v8274 = vrot.slane %v7363, 1
      %v8275 = vrot.slane %v7359, 2
      %v8276 = vor.u32 %v8274, %v8275
      %v8277 = vsel %vm1786, %v8272, %v8276
      %v8278 = vrot.slane %v7371, 1
      %v8279 = vrot.slane %v7367, 2
      %v8280 = vor.u32 %v8278, %v8279
      %v8281 = vsel %vm1786, %v8276, %v8280
      %v8282 = vrot.slane %v7379, 1
      %v8283 = vrot.slane %v7375, 2
      %v8284 = vor.u32 %v8282, %v8283
      %v8285 = vsel %vm1786, %v8280, %v8284
      %v8286 = vrot.slane %v7387, 1
      %v8287 = vrot.slane %v7383, 2
      %v8288 = vor.u32 %v8286, %v8287
      %v8289 = vsel %vm1786, %v8284, %v8288
      %v8290 = vrot.slane %v7395, 1
      %v8291 = vrot.slane %v7391, 2
      %v8292 = vor.u32 %v8290, %v8291
      %v8293 = vsel %vm1786, %v8288, %v8292
      %v8294 = vrot.slane %v7403, 1
      %v8295 = vrot.slane %v7399, 2
      %v8296 = vor.u32 %v8294, %v8295
      %v8297 = vsel %vm1786, %v8292, %v8296
      %v8298 = vrot.slane %v7411, 1
      %v8299 = vrot.slane %v7407, 2
      %v8300 = vor.u32 %v8298, %v8299
      %v8301 = vsel %vm1786, %v8296, %v8300
      %v8302 = vrot.slane %v7419, 1
      %v8303 = vrot.slane %v7415, 2
      %v8304 = vor.u32 %v8302, %v8303
      %v8305 = vsel %vm1786, %v8300, %v8304
      %v8306 = vrot.slane %v7427, 1
      %v8307 = vrot.slane %v7423, 2
      %v8308 = vor.u32 %v8306, %v8307
      %v8309 = vsel %vm1786, %v8304, %v8308
      %v8310 = vrot.slane %v7435, 1
      %v8311 = vrot.slane %v7431, 2
      %v8312 = vor.u32 %v8310, %v8311
      %v8313 = vsel %vm1786, %v8308, %v8312
      %v8314 = vrot.slane %v7443, 1
      %v8315 = vrot.slane %v7439, 2
      %v8316 = vor.u32 %v8314, %v8315
      %v8317 = vsel %vm1786, %v8312, %v8316
      %v8318 = vrot.slane %v7451, 1
      %v8319 = vrot.slane %v7447, 2
      %v8320 = vor.u32 %v8318, %v8319
      %v8321 = vsel %vm1786, %v8316, %v8320
      %v8322 = vrot.slane %v7459, 1
      %v8323 = vrot.slane %v7455, 2
      %v8324 = vor.u32 %v8322, %v8323
      %v8325 = vsel %vm1786, %v8320, %v8324
      %v8326 = vrot.slane %v7467, 1
      %v8327 = vrot.slane %v7463, 2
      %v8328 = vor.u32 %v8326, %v8327
      %v8329 = vsel %vm1786, %v8324, %v8328
      %v8331 = vshrl.u32 %v8253, 16
      %v8333 = vrot.slane %v8331, 1
      %v8334 = vshll.u32 %v8253, 16
      %v8336 = vrot.slane %v8334, 2
      %v8337 = vor.u32 %v8333, %v8336
      %v8338 = vsel %vm1786, %v8328, %v8337
      %v8347 = vunpack.c.l.b16 %v8243
      %v8348 = vunpack.c.l.b16 %v8244
      %v8349 = vunpack.c.l.b16 %v8245
      %v8350 = vunpack.c.l.b16 %v8246
      %v8351 = vunpack.c.l.b16 %v8247
      %v8352 = vunpack.c.l.b16 %v8248
      %v8353 = vunpack.c.l.b16 %v8249
      %v8354 = vunpack.c.l.b16 %v8250
      %v8355 = vpack.c.b16 %v8348, %v8347
      %v8356 = vpack.c.b16 %v8350, %v8349
      %v8357 = vpack.c.b16 %v8352, %v8351
      %v8358 = vpack.c.b16 %v8354, %v8353
      %v8364 = vsel %vm429, %v8265, 0
      %v8367 = vsel %vm429, %v8269, 0
      %v8370 = vsel %vm429, %v8273, 0
      %v8373 = vsel %vm429, %v8277, 0
      %v8376 = vsel %vm429, %v8281, 0
      %v8379 = vsel %vm429, %v8285, 0
      %v8382 = vsel %vm429, %v8289, 0
      %v8385 = vsel %vm429, %v8293, 0
      %v8388 = vsel %vm429, %v8297, 0
      %v8391 = vsel %vm429, %v8301, 0
      %v8394 = vsel %vm429, %v8305, 0
      %v8397 = vsel %vm429, %v8309, 0
      %v8400 = vsel %vm429, %v8313, 0
      %v8403 = vsel %vm429, %v8317, 0
      %v8406 = vsel %vm429, %v8321, 0
      %v8409 = vsel %vm429, %v8325, 0
      %v8412 = vsel %vm429, %v8329, 0
      %v8415 = vsel %vm429, %v8338, 0
      %8417 = vmatpush.bf16.msra.mxu0 0
      %8418 = vmatpush.bf16.msra.mxu0 0
      %8419 = vmatpush.bf16.msra.mxu0 0
      %8420 = vmatpush.bf16.msra.mxu0 0
      %8421 = vmatpush.bf16.msra.mxu0 %v8358
      %8422 = vmatpush.bf16.msra.mxu0 %v8357
      %8423 = vmatpush.bf16.msra.mxu0 %v8356
      %8424 = vmatpush.bf16.msra.mxu0 %v8355
      %8425 = vmatmul.bf16.gmra.mxu0 %v8364
      %v8426 = vpop.f32.mrf.mxu0
      %v8427 = vadd.f32 0.0, %v8426
      %v8428 = vpop.f32.mrf.mxu0
      %v8429 = vadd.f32 0.0, %v8428
      %8430 = vmatmul.bf16.gmra.mxu0 %v8367
      %v8431 = vpop.f32.mrf.mxu0
      %v8432 = vadd.f32 0.0, %v8431
      %v8433 = vpop.f32.mrf.mxu0
      %v8434 = vadd.f32 0.0, %v8433
      %8435 = vmatmul.bf16.gmra.mxu0 %v8370
      %v8436 = vpop.f32.mrf.mxu0
      %v8437 = vadd.f32 0.0, %v8436
      %v8438 = vpop.f32.mrf.mxu0
      %v8439 = vadd.f32 0.0, %v8438
      %8440 = vmatmul.bf16.gmra.mxu0 %v8373
      %v8441 = vpop.f32.mrf.mxu0
      %v8442 = vadd.f32 0.0, %v8441
      %v8443 = vpop.f32.mrf.mxu0
      %v8444 = vadd.f32 0.0, %v8443
      %8445 = vmatmul.bf16.gmra.mxu0 %v8376
      %v8446 = vpop.f32.mrf.mxu0
      %v8447 = vadd.f32 0.0, %v8446
      %v8448 = vpop.f32.mrf.mxu0
      %v8449 = vadd.f32 0.0, %v8448
      %8450 = vmatmul.bf16.gmra.mxu0 %v8379
      %v8451 = vpop.f32.mrf.mxu0
      %v8452 = vadd.f32 0.0, %v8451
      %v8453 = vpop.f32.mrf.mxu0
      %v8454 = vadd.f32 0.0, %v8453
      %8455 = vmatmul.bf16.gmra.mxu0 %v8382
      %v8456 = vpop.f32.mrf.mxu0
      %v8457 = vadd.f32 0.0, %v8456
      %v8458 = vpop.f32.mrf.mxu0
      %v8459 = vadd.f32 0.0, %v8458
      %8460 = vmatmul.bf16.gmra.mxu0 %v8385
      %v8461 = vpop.f32.mrf.mxu0
      %v8462 = vadd.f32 0.0, %v8461
      %v8463 = vpop.f32.mrf.mxu0
      %v8464 = vadd.f32 0.0, %v8463
      %8465 = vmatmul.bf16.gmra.mxu0 %v8388
      %v8466 = vpop.f32.mrf.mxu0
      %v8467 = vadd.f32 0.0, %v8466
      %v8468 = vpop.f32.mrf.mxu0
      %v8469 = vadd.f32 0.0, %v8468
      %8470 = vmatmul.bf16.gmra.mxu0 %v8391
      %v8471 = vpop.f32.mrf.mxu0
      %v8472 = vadd.f32 0.0, %v8471
      %v8473 = vpop.f32.mrf.mxu0
      %v8474 = vadd.f32 0.0, %v8473
      %8475 = vmatmul.bf16.gmra.mxu0 %v8394
      %v8476 = vpop.f32.mrf.mxu0
      %v8477 = vadd.f32 0.0, %v8476
      %v8478 = vpop.f32.mrf.mxu0
      %v8479 = vadd.f32 0.0, %v8478
      %8480 = vmatmul.bf16.gmra.mxu0 %v8397
      %v8481 = vpop.f32.mrf.mxu0
      %v8482 = vadd.f32 0.0, %v8481
      %v8483 = vpop.f32.mrf.mxu0
      %v8484 = vadd.f32 0.0, %v8483
      %8485 = vmatmul.bf16.gmra.mxu0 %v8400
      %v8486 = vpop.f32.mrf.mxu0
      %v8487 = vadd.f32 0.0, %v8486
      %v8488 = vpop.f32.mrf.mxu0
      %v8489 = vadd.f32 0.0, %v8488
      %8490 = vmatmul.bf16.gmra.mxu0 %v8403
      %v8491 = vpop.f32.mrf.mxu0
      %v8492 = vadd.f32 0.0, %v8491
      %v8493 = vpop.f32.mrf.mxu0
      %v8494 = vadd.f32 0.0, %v8493
      %8495 = vmatmul.bf16.gmra.mxu0 %v8406
      %v8496 = vpop.f32.mrf.mxu0
      %v8497 = vadd.f32 0.0, %v8496
      %v8498 = vpop.f32.mrf.mxu0
      %v8499 = vadd.f32 0.0, %v8498
      %8500 = vmatmul.bf16.gmra.mxu0 %v8409
      %v8501 = vpop.f32.mrf.mxu0
      %v8502 = vadd.f32 0.0, %v8501
      %v8503 = vpop.f32.mrf.mxu0
      %v8504 = vadd.f32 0.0, %v8503
      %8505 = vmatmul.bf16.gmra.mxu0 %v8412
      %v8506 = vpop.f32.mrf.mxu0
      %v8507 = vadd.f32 0.0, %v8506
      %v8508 = vpop.f32.mrf.mxu0
      %v8509 = vadd.f32 0.0, %v8508
      %8510 = vmatmul.bf16.gmra.mxu0 %v8415
      %v8511 = vpop.f32.mrf.mxu0
      %v8512 = vadd.f32 0.0, %v8511
      %v8513 = vpop.f32.mrf.mxu0
      %v8514 = vadd.f32 0.0, %v8513
      %8515 = vdwg.mxu0
      %v8552 = vrot.slane %v8427, 5
      %v8553 = vrot.slane %v8429, 5
      %v8554 = vsel %vm4480, %v8552, %v8553
      %v8555 = vrot.slane %v8432, 5
      %v8556 = vsel %vm4480, %v8553, %v8555
      %v8557 = vrot.slane %v8434, 5
      %v8558 = vsel %vm4480, %v8555, %v8557
      %v8559 = vrot.slane %v8437, 5
      %v8560 = vsel %vm4480, %v8557, %v8559
      %v8561 = vrot.slane %v8439, 5
      %v8562 = vsel %vm4480, %v8559, %v8561
      %v8563 = vrot.slane %v8442, 5
      %v8564 = vsel %vm4480, %v8561, %v8563
      %v8565 = vrot.slane %v8444, 5
      %v8566 = vsel %vm4480, %v8563, %v8565
      %v8567 = vrot.slane %v8447, 5
      %v8568 = vsel %vm4480, %v8565, %v8567
      %v8569 = vrot.slane %v8449, 5
      %v8570 = vsel %vm4480, %v8567, %v8569
      %v8571 = vrot.slane %v8452, 5
      %v8572 = vsel %vm4480, %v8569, %v8571
      %v8573 = vrot.slane %v8454, 5
      %v8574 = vsel %vm4480, %v8571, %v8573
      %v8575 = vrot.slane %v8457, 5
      %v8576 = vsel %vm4480, %v8573, %v8575
      %v8577 = vrot.slane %v8459, 5
      %v8578 = vsel %vm4480, %v8575, %v8577
      %v8579 = vrot.slane %v8462, 5
      %v8580 = vsel %vm4480, %v8577, %v8579
      %v8581 = vrot.slane %v8464, 5
      %v8582 = vsel %vm4480, %v8579, %v8581
      %v8583 = vrot.slane %v8467, 5
      %v8584 = vsel %vm4480, %v8581, %v8583
      %v8585 = vrot.slane %v8469, 5
      %v8586 = vsel %vm4480, %v8583, %v8585
      %v8587 = vrot.slane %v8472, 5
      %v8588 = vsel %vm4480, %v8585, %v8587
      %v8589 = vrot.slane %v8474, 5
      %v8590 = vsel %vm4480, %v8587, %v8589
      %v8591 = vrot.slane %v8477, 5
      %v8592 = vsel %vm4480, %v8589, %v8591
      %v8593 = vrot.slane %v8479, 5
      %v8594 = vsel %vm4480, %v8591, %v8593
      %v8595 = vrot.slane %v8482, 5
      %v8596 = vsel %vm4480, %v8593, %v8595
      %v8597 = vrot.slane %v8484, 5
      %v8598 = vsel %vm4480, %v8595, %v8597
      %v8599 = vrot.slane %v8487, 5
      %v8600 = vsel %vm4480, %v8597, %v8599
      %v8601 = vrot.slane %v8489, 5
      %v8602 = vsel %vm4480, %v8599, %v8601
      %v8603 = vrot.slane %v8492, 5
      %v8604 = vsel %vm4480, %v8601, %v8603
      %v8605 = vrot.slane %v8494, 5
      %v8606 = vsel %vm4480, %v8603, %v8605
      %v8607 = vrot.slane %v8497, 5
      %v8608 = vsel %vm4480, %v8605, %v8607
      %v8609 = vrot.slane %v8499, 5
      %v8610 = vsel %vm4480, %v8607, %v8609
      %v8611 = vrot.slane %v8502, 5
      %v8612 = vsel %vm4480, %v8609, %v8611
      %v8613 = vrot.slane %v8504, 5
      %v8614 = vsel %vm4480, %v8611, %v8613
      %v8615 = vrot.slane %v8507, 5
      %v8616 = vsel %vm4480, %v8613, %v8615
      %v8617 = vrot.slane %v8509, 5
      %v8618 = vsel %vm4480, %v8615, %v8617
      %v8619 = vrot.slane %v8512, 5
      %v8620 = vsel %vm4480, %v8617, %v8619
      %v8621 = vrot.slane %v8514, 5
      %v8622 = vsel %vm4480, %v8619, %v8621
      %v8660 = vadd.f32 %v8204, %v8552
      %v8661 = vadd.f32 %v8205, %v8554
      %v8662 = vadd.f32 %v8206, %v8556
      %v8663 = vadd.f32 %v8207, %v8558
      %v8664 = vadd.f32 %v8208, %v8560
      %v8665 = vadd.f32 %v8209, %v8562
      %v8666 = vadd.f32 %v8210, %v8564
      %v8667 = vadd.f32 %v8211, %v8566
      %v8668 = vadd.f32 %v8212, %v8568
      %v8669 = vadd.f32 %v8213, %v8570
      %v8670 = vadd.f32 %v8214, %v8572
      %v8671 = vadd.f32 %v8215, %v8574
      %v8672 = vadd.f32 %v8216, %v8576
      %v8673 = vadd.f32 %v8217, %v8578
      %v8674 = vadd.f32 %v8218, %v8580
      %v8675 = vadd.f32 %v8219, %v8582
      %v8676 = vadd.f32 %v8220, %v8584
      %v8677 = vadd.f32 %v8221, %v8586
      %v8678 = vadd.f32 %v8222, %v8588
      %v8679 = vadd.f32 %v8223, %v8590
      %v8680 = vadd.f32 %v8224, %v8592
      %v8681 = vadd.f32 %v8225, %v8594
      %v8682 = vadd.f32 %v8226, %v8596
      %v8683 = vadd.f32 %v8227, %v8598
      %v8684 = vadd.f32 %v8228, %v8600
      %v8685 = vadd.f32 %v8229, %v8602
      %v8686 = vadd.f32 %v8230, %v8604
      %v8687 = vadd.f32 %v8231, %v8606
      %v8688 = vadd.f32 %v8232, %v8608
      %v8689 = vadd.f32 %v8233, %v8610
      %v8690 = vadd.f32 %v8234, %v8612
      %v8691 = vadd.f32 %v8235, %v8614
      %v8692 = vadd.f32 %v8236, %v8616
      %v8693 = vadd.f32 %v8237, %v8618
      %v8694 = vadd.f32 %v8238, %v8620
      %v8695 = vadd.f32 %v8239, %v8622
      %v8696 = vadd.f32 %v8240, %v8621
      %vm8697 = vcmask 523267
      %8698 = vst.msk [vmem:[%s251 - $0x3] sm:$0xf8] %vm8697, %v8660
      %8699 = vst.msk [vmem:[%s251 + $0x5] sm:$0xff] %vm429, %v8661
      %8700 = vst.msk [vmem:[%s251 + $0xd] sm:$0xff] %vm429, %v8662
      %8701 = vst.msk [vmem:[%s251 + $0x15] sm:$0xff] %vm429, %v8663
      %8702 = vst.msk [vmem:[%s251 + $0x1d] sm:$0xff] %vm429, %v8664
      %8703 = vst.msk [vmem:[%s251 + $0x25] sm:$0xff] %vm429, %v8665
      %8704 = vst.msk [vmem:[%s251 + $0x2d] sm:$0xff] %vm429, %v8666
      %8705 = vst.msk [vmem:[%s251 + $0x35] sm:$0xff] %vm429, %v8667
      %8706 = vst.msk [vmem:[%s251 + $0x3d] sm:$0xff] %vm429, %v8668
      %8707 = vst.msk [vmem:[%s251 + $0x45] sm:$0xff] %vm429, %v8669
      %8708 = vst.msk [vmem:[%s251 + $0x4d] sm:$0xff] %vm429, %v8670
      %8709 = vst.msk [vmem:[%s251 + $0x55] sm:$0xff] %vm429, %v8671
      %8710 = vst.msk [vmem:[%s251 + $0x5d] sm:$0xff] %vm429, %v8672
      %8711 = vst.msk [vmem:[%s251 + $0x65] sm:$0xff] %vm429, %v8673
      %8712 = vst.msk [vmem:[%s251 + $0x6d] sm:$0xff] %vm429, %v8674
      %8713 = vst.msk [vmem:[%s251 + $0x75] sm:$0xff] %vm429, %v8675
      %8714 = vst.msk [vmem:[%s251 + $0x7d] sm:$0xff] %vm429, %v8676
      %8715 = vst.msk [vmem:[%s251 + $0x85] sm:$0xff] %vm429, %v8677
      %8716 = vst.msk [vmem:[%s251 + $0x8d] sm:$0xff] %vm429, %v8678
      %8717 = vst.msk [vmem:[%s251 + $0x95] sm:$0xff] %vm429, %v8679
      %8718 = vst.msk [vmem:[%s251 + $0x9d] sm:$0xff] %vm429, %v8680
      %8719 = vst.msk [vmem:[%s251 + $0xa5] sm:$0xff] %vm429, %v8681
      %8720 = vst.msk [vmem:[%s251 + $0xad] sm:$0xff] %vm429, %v8682
      %8721 = vst.msk [vmem:[%s251 + $0xb5] sm:$0xff] %vm429, %v8683
      %8722 = vst.msk [vmem:[%s251 + $0xbd] sm:$0xff] %vm429, %v8684
      %8723 = vst.msk [vmem:[%s251 + $0xc5] sm:$0xff] %vm429, %v8685
      %8724 = vst.msk [vmem:[%s251 + $0xcd] sm:$0xff] %vm429, %v8686
      %8725 = vst.msk [vmem:[%s251 + $0xd5] sm:$0xff] %vm429, %v8687
      %8726 = vst.msk [vmem:[%s251 + $0xdd] sm:$0xff] %vm429, %v8688
      %8727 = vst.msk [vmem:[%s251 + $0xe5] sm:$0xff] %vm429, %v8689
      %8728 = vst.msk [vmem:[%s251 + $0xed] sm:$0xff] %vm429, %v8690
      %8729 = vst.msk [vmem:[%s251 + $0xf5] sm:$0xff] %vm429, %v8691
      %8730 = vst.msk [vmem:[%s251 + $0xfd] sm:$0xff] %vm429, %v8692
      %8731 = vst.msk [vmem:[%s251 + $0x105] sm:$0xff] %vm429, %v8693
      %8732 = vst.msk [vmem:[%s251 + $0x10d] sm:$0xff] %vm429, %v8694
      %8733 = vst.msk [vmem:[%s251 + $0x115] sm:$0xff] %vm429, %v8695
      %vm8734 = vcmask 518144
      %8735 = vst.msk [vmem:[%s251 + $0x11d] sm:$0x7] %vm8734, %v8696
      %p8736 = scmp.lt.s32.totalorder %s17, 1
      %s8737 = scalar_select %p8736, %s17, 1
      %s8738 = smul.addr %s8737, 36
      %s8739 = smul.addr %s8738, 8
      %s8740 = scalar_lea.vmem %s6, %s8739
      // Predicated region
      $region45: #{tpu_custom_call.1} parent=43 // pred_check
        %p8741 = pneg %p166
      $region46: #{tpu_custom_call.1} parent=43 // pred_check_branch
        %8743 = sbr.rel (%p8741) target = $region48
      $region47: #{tpu_custom_call.1} parent=43 // pred_region
        _
      $region48: #{tpu_custom_call.1} parent=43 // pred_fallthru
        _
    $region44: #{tpu_custom_call.1} parent=5 // pred_fallthru
      _
    %p8744 = scmp.le.s32.totalorder 2, %s12
    // Predicated region
    $region49: #{tpu_custom_call.1} parent=5 // pred_check
      %p8745 = pneg %p8744
    $region50: #{tpu_custom_call.1} parent=5 // pred_check_branch
      %8747 = sbr.rel (%p8745) target = $region52
    $region51: #{tpu_custom_call.1} parent=5 // pred_region
      %s8748 = ssub.s32 %s12, 2
      // Predicated region
      $region53: #{tpu_custom_call.1} parent=51 // pred_check
        %p8749 = pneg %p172
      $region54: #{tpu_custom_call.1} parent=51 // pred_check_branch
        %8751 = sbr.rel (%p8749) target = $region56
      $region55: #{tpu_custom_call.1} parent=51 // pred_region
        %p8752 = scmp.lt.s32.totalorder %s18, 1
        %s8753 = scalar_select %p8752, %s18, 1
        %s8754 = smul.addr %s8753, 36
        %s8755 = smul.addr %s8754, 8
        %s8756 = scalar_lea.vmem %s6, %s8755
      $region56: #{tpu_custom_call.1} parent=51 // pred_fallthru
        _
    $region52: #{tpu_custom_call.1} parent=5 // pred_fallthru
      _
  $region6: #{tpu_custom_call.1} parent=0 // loop_footer
    %s16 = sadd.s32 1, %s12
  $region7: #{tpu_custom_call.1} parent=0 // loop_footer_branch
    %11 = sbr.rel target = $region3
  $region8: #{tpu_custom_call.1} parent=0 // loop_exit
    _

</llo_original>
